<compile_context>
chip_gen: v7x
topology: tpu7x:2x2x1
jax: 0.10.0
libtpu: 0.0.40
codegen_flags: <defaults>
</compile_context>

<pallas_src>
import functools

import jax
import jax.numpy as jnp
from jax.experimental import pallas as pl
from jax.experimental.pallas import tpu as pltpu

HIDDEN = 128      # LSTM hidden size (fixed by the PyTorch module)
CONV_CH = 64      # conv channel count (fixed by the PyTorch module)
KSIZE = 5         # conv kernel size (fixed by the PyTorch module)


# ---------------------------------------------------------------------------
# Fused Pallas kernel: conv1..4 + 2-layer LSTM (wavefront) + fc.
# ---------------------------------------------------------------------------
def fused_kernel(xc1_ref, w1_ref, b1_ref, w2_ref, b2_ref, w3_ref, b3_ref,
                 w4_ref, b4_ref, wih0_ref, bl0_ref, wstack_ref, bl1_ref,
                 wfc_ref, bfc_ref, out_ref, gx_ref, *, batch):
    B = batch
    H = HIDDEN
    f32 = jnp.float32
    bf16 = jnp.bfloat16

    # --- conv1: single im2col matmul (im2col built wrapper-side) + ReLU ----
    a = jnp.maximum(
        jnp.dot(xc1_ref[...], w1_ref[...], preferred_element_type=f32)
        + b1_ref[...], 0.0)                         # ((T-4)*B, 64) f32

    # --- conv2..4: Conv1d(k=5, no pad) + ReLU as 5 shifted-row matmuls -----
    # Rows are time-major (t*B + b), so tap k is the contiguous row window
    # [k*B : k*B + rows_out].  bf16 operands, f32 accumulation.
    def conv_relu(x2d, w_ref, b_ref):
        K = w_ref.shape[0]
        rows_out = x2d.shape[0] - (K - 1) * B
        acc = jnp.zeros((rows_out, w_ref.shape[2]), f32)
        for k in range(K):                          # K = 5, static
            acc = acc + jnp.dot(x2d[k * B:k * B + rows_out, :].astype(bf16),
                                w_ref[k], preferred_element_type=f32)
        return jnp.maximum(acc + b_ref[...], 0.0)

    a = conv_relu(a, w2_ref, b2_ref)
    a = conv_relu(a, w3_ref, b3_ref)
    a = conv_relu(a, w4_ref, b4_ref)                # (T_lstm*B, 64) f32

    t_lstm = a.shape[0] // B

    # --- LSTM layer-0 input projection for ALL timesteps, one matmul, ------
    # staged through VMEM scratch (not held live across the unrolled loop).
    gx_ref[...] = (jnp.dot(a.astype(bf16), wih0_ref[...],
                           preferred_element_type=f32) + bl0_ref[...])

    # Hoisted bias broadcast (JAX does not CSE broadcast_in_dim).
    b1b = jnp.broadcast_to(bl1_ref[...], (B, 4 * H))

    def sig(v):                                     # exact: sigma(x)=0.5*tanh(x/2)+0.5
        return 0.5 * jnp.tanh(0.5 * v) + 0.5

    def cell(gates, c):                             # gate columns [i, f, o, g]
        s3 = sig(gates[:, :3 * H])                  # one wide EUP slab (i,f,o)
        i, f, o = s3[:, :H], s3[:, H:2 * H], s3[:, 2 * H:]
        g = jnp.tanh(gates[:, 3 * H:])
        c_new = f * c + i * g
        return o * jnp.tanh(c_new), c_new

    zeros = jnp.zeros((B, H), f32)

    # Wavefront prologue: cell0(t=0).  h0(-1)=0 -> recurrent term is exactly 0.
    h0, c0 = cell(gx_ref[0:B, :], zeros)
    h1, c1 = zeros, zeros                           # h1(-1), c1(-1)

    # Wavefront steps s = 1..T-1: cell0(s) and cell1(s-1) are independent and
    # share ONE fused matmul.  Weights read from the ref each step (no vreg-
    # resident 512 KiB value).  Loop is static -> fully unrolled for the LLO.
    for s in range(1, t_lstm):
        hcat = jnp.concatenate([h0, h1], axis=1).astype(bf16)   # [h0(s-1)|h1(s-2)]
        fused = jnp.dot(hcat, wstack_ref[...], preferred_element_type=f32)
        h0, c0 = cell(fused[:, :4 * H] + gx_ref[s * B:(s + 1) * B, :], c0)
        h1, c1 = cell(fused[:, 4 * H:] + b1b, c1)

    # Wavefront epilogue: cell1(T-1) from h0(T-1), h1(T-2).
    hcat = jnp.concatenate([h0, h1], axis=1).astype(bf16)
    gates1 = jnp.dot(hcat, wstack_ref[:, 4 * H:],
                     preferred_element_type=f32) + b1b
    h1, c1 = cell(gates1, c1)                       # h1 == h[-1]

    # Dropout(0.5) is identity in eval.  Lane-padded fc output (unmasked vst).
    out_ref[...] = (jnp.dot(h1.astype(bf16), wfc_ref[...],
                            preferred_element_type=f32) + bfc_ref[...])


# ---------------------------------------------------------------------------
# Wrapper: layout / weight prep in plain JAX (reorder, stack, pad, bf16 cast),
# then one pallas_call.
# ---------------------------------------------------------------------------
def har_convlstm_forward(x, p):
    """x: (B, C, T) float32, like the PyTorch module.  Returns (B, n_classes)."""
    B, C, T = x.shape
    assert T > 4 * (KSIZE - 1), "sequence too short for 4 valid convs"
    H = HIDDEN
    f32, bf16 = jnp.float32, jnp.bfloat16

    # (B, C, T) -> (T, B, C) -> (T*B, C): rows ordered t*B + b (time-major).
    x_tm = jnp.transpose(x, (2, 0, 1)).reshape(T * B, C).astype(f32)

    # conv1 im2col built wrapper-side (layout plumbing): ((T-4)*B, 5*C).
    rows1 = (T - (KSIZE - 1)) * B
    x_col1 = jnp.concatenate(
        [x_tm[k * B:k * B + rows1, :] for k in range(KSIZE)], axis=1).astype(bf16)
    w1_col = p["w1"].reshape(KSIZE * C, CONV_CH).astype(bf16)   # k-major, matches x_col1

    # Gate-column reorder: PyTorch [i, f, g, o] -> kernel [i, f, o, g]
    # (puts the three sigmoid gates contiguous).
    def reorder(w):
        i, f, g, o = jnp.split(w, 4, axis=-1)
        return jnp.concatenate([i, f, o, g], axis=-1)

    wih0 = reorder(p["w_ih_l0"]).astype(bf16)       # (64, 4H)
    bl0 = reorder(p["b_l0"])                        # (1, 4H) f32 (b_ih + b_hh)
    whh0_r = reorder(p["w_hh_l0"])                  # (H, 4H)
    wih1_r = reorder(p["w_ih_l1"])                  # (H, 4H)
    whh1_r = reorder(p["w_hh_l1"])                  # (H, 4H)
    bl1 = reorder(p["b_l1"])                        # (1, 4H) f32

    # Stacked per-step recurrent weight: [h0 | h1] @ [[whh0, wih1], [0, whh1]].
    wstack = jnp.concatenate(
        [jnp.concatenate([whh0_r, wih1_r], axis=1),
         jnp.concatenate([jnp.zeros((H, 4 * H), f32), whh1_r], axis=1)],
        axis=0).astype(bf16)                        # (2H, 8H) bf16

    n_classes = p["b_fc"].shape[0]
    n_pad = pl.cdiv(n_classes, 128) * 128
    w_fc_pad = (jnp.zeros((H, n_pad), f32).at[:, :n_classes]
                .set(p["w_fc"]).astype(bf16))
    b_fc_pad = jnp.zeros((1, n_pad), f32).at[0, :n_classes].set(p["b_fc"])

    t_lstm = T - 4 * (KSIZE - 1)

    out_pad = pl.pallas_call(
        functools.partial(fused_kernel, batch=B),
        out_shape=jax.ShapeDtypeStruct((B, n_pad), jnp.float32),
        scratch_shapes=[pltpu.VMEM((t_lstm * B, 4 * H), jnp.float32)],
    )(x_col1, w1_col, p["b1"],
      p["w2"].astype(bf16), p["b2"],
      p["w3"].astype(bf16), p["b3"],
      p["w4"].astype(bf16), p["b4"],
      wih0, bl0, wstack, bl1, w_fc_pad, b_fc_pad)

    return out_pad[:, :n_classes]


# ---------------------------------------------------------------------------
# Deterministic parameter init (shapes follow nn.Conv1d / nn.LSTM / nn.Linear,
# stored pre-transposed, PyTorch [i,f,g,o] gate column order):
#   conv w: (K, Cin, Cout) == torch weight.transpose(2,1,0);  conv b: (1, Cout)
#   lstm w_ih: (Din, 4H) == weight_ih.T;  w_hh: (H, 4H) == weight_hh.T
#   lstm b: (1, 4H) == (b_ih + b_hh);  fc w: (H, n_classes) == fc.weight.T
# ---------------------------------------------------------------------------
def init_params(key, nc_input, n_classes):
    H = HIDDEN
    ks = jax.random.split(key, 24)
    it = iter(range(24))
    scale = 0.1

    def w(shape):
        return scale * jax.random.normal(ks[next(it)], shape, jnp.float32)

    p = {}
    # conv stack
    p["w1"], p["b1"] = w((KSIZE, nc_input, CONV_CH)), w((1, CONV_CH))
    p["w2"], p["b2"] = w((KSIZE, CONV_CH, CONV_CH)), w((1, CONV_CH))
    p["w3"], p["b3"] = w((KSIZE, CONV_CH, CONV_CH)), w((1, CONV_CH))
    p["w4"], p["b4"] = w((KSIZE, CONV_CH, CONV_CH)), w((1, CONV_CH))
    # lstm layer 0 (input 64) and layer 1 (input 128)
    p["w_ih_l0"] = w((CONV_CH, 4 * H))
    p["w_hh_l0"] = w((H, 4 * H))
    p["b_l0"] = w((1, 4 * H)) + w((1, 4 * H))
    p["w_ih_l1"] = w((H, 4 * H))
    p["w_hh_l1"] = w((H, 4 * H))
    p["b_l1"] = w((1, 4 * H)) + w((1, 4 * H))
    # fc
    p["w_fc"] = w((H, n_classes))
    p["b_fc"] = w((n_classes,))
    return p


if __name__ == "__main__":
    key = jax.random.PRNGKey(0)
    k_x, k_p = jax.random.split(key)

    B, C, T = 2, 4, 32          # batch, nc_input channels, time (T-16 LSTM steps)
    n_classes = 6

    x = jax.random.normal(k_x, (B, C, T), jnp.float32)
    params = init_params(k_p, C, n_classes)

    logits = har_convlstm_forward(x, params)
    jax.block_until_ready(logits)
    assert logits.shape == (B, n_classes)
    print("KERNEL_OK")
</pallas_src>

<mosaic_0001>
module attributes {stable_mosaic.version = 11 : i64} {
  func.func @fused_kernel(%arg0: memref<56x20xbf16, #tpu.memory_space<vmem>>, %arg1: memref<20x64xbf16, #tpu.memory_space<vmem>>, %arg2: memref<1x64xf32, #tpu.memory_space<vmem>>, %arg3: memref<5x64x64xbf16, #tpu.memory_space<vmem>>, %arg4: memref<1x64xf32, #tpu.memory_space<vmem>>, %arg5: memref<5x64x64xbf16, #tpu.memory_space<vmem>>, %arg6: memref<1x64xf32, #tpu.memory_space<vmem>>, %arg7: memref<5x64x64xbf16, #tpu.memory_space<vmem>>, %arg8: memref<1x64xf32, #tpu.memory_space<vmem>>, %arg9: memref<64x512xbf16, #tpu.memory_space<vmem>>, %arg10: memref<1x512xf32, #tpu.memory_space<vmem>>, %arg11: memref<256x1024xbf16, #tpu.memory_space<vmem>>, %arg12: memref<1x512xf32, #tpu.memory_space<vmem>>, %arg13: memref<128x128xbf16, #tpu.memory_space<vmem>>, %arg14: memref<1x128xf32, #tpu.memory_space<vmem>>, %arg15: memref<2x128xf32, #tpu.memory_space<vmem>>, %arg16: memref<32x512xf32, #tpu.memory_space<vmem>>) attributes {dimension_semantics = [], scalar_prefetch = 0 : i64, scratch_operands = 1 : i64, tpu.core_type = #tpu.core_type<tc>} {
    %c0 = arith.constant 0 : index
    %c0_0 = arith.constant 0 : index
    %0 = vector.load %arg0[%c0, %c0_0] : memref<56x20xbf16, #tpu.memory_space<vmem>>, vector<56x20xbf16>
    %c0_1 = arith.constant 0 : index
    %c0_2 = arith.constant 0 : index
    %1 = vector.load %arg1[%c0_1, %c0_2] : memref<20x64xbf16, #tpu.memory_space<vmem>>, vector<20x64xbf16>
    %cst = arith.constant dense<0.000000e+00> : vector<56x64xf32>
    %2 = tpu.matmul %0, %1, %cst {dimension_numbers = #tpu.dot_dimension_numbers<[1], [0], [0], [1], [0, 0, 1, 1], [], []>} : vector<56x20xbf16>, vector<20x64xbf16>, vector<56x64xf32> -> vector<56x64xf32>
    %c0_3 = arith.constant 0 : index
    %c0_4 = arith.constant 0 : index
    %3 = vector.load %arg2[%c0_3, %c0_4] : memref<1x64xf32, #tpu.memory_space<vmem>>, vector<1x64xf32>
    %4 = vector.broadcast %3 : vector<1x64xf32> to vector<56x64xf32>
    %5 = arith.addf %2, %4 : vector<56x64xf32>
    %cst_5 = arith.constant 0.000000e+00 : f32
    %6 = vector.broadcast %cst_5 : f32 to vector<56x64xf32>
    %7 = arith.maximumf %5, %6 : vector<56x64xf32>
    %cst_6 = arith.constant 0.000000e+00 : f32
    %8 = vector.broadcast %cst_6 : f32 to vector<48x64xf32>
    %9 = vector.extract_strided_slice %7 {offsets = [0, 0], sizes = [48, 64], strides = [1, 1]} : vector<56x64xf32> to vector<48x64xf32>
    %10 = arith.truncf %9 : vector<48x64xf32> to vector<48x64xbf16>
    %c0_7 = arith.constant 0 : index
    %c0_8 = arith.constant 0 : index
    %c0_9 = arith.constant 0 : index
    %11 = vector.load %arg3[%c0_7, %c0_8, %c0_9] : memref<5x64x64xbf16, #tpu.memory_space<vmem>>, vector<1x64x64xbf16>
    %12 = vector.shape_cast %11 : vector<1x64x64xbf16> to vector<64x64xbf16>
    %cst_10 = arith.constant dense<0.000000e+00> : vector<48x64xf32>
    %13 = tpu.matmul %10, %12, %cst_10 {dimension_numbers = #tpu.dot_dimension_numbers<[1], [0], [0], [1], [0, 0, 1, 1], [], []>} : vector<48x64xbf16>, vector<64x64xbf16>, vector<48x64xf32> -> vector<48x64xf32>
    %14 = arith.addf %8, %13 : vector<48x64xf32>
    %15 = vector.extract_strided_slice %7 {offsets = [2, 0], sizes = [48, 64], strides = [1, 1]} : vector<56x64xf32> to vector<48x64xf32>
    %16 = arith.truncf %15 : vector<48x64xf32> to vector<48x64xbf16>
    %c1 = arith.constant 1 : index
    %c0_11 = arith.constant 0 : index
    %c0_12 = arith.constant 0 : index
    %17 = vector.load %arg3[%c1, %c0_11, %c0_12] : memref<5x64x64xbf16, #tpu.memory_space<vmem>>, vector<1x64x64xbf16>
    %18 = vector.shape_cast %17 : vector<1x64x64xbf16> to vector<64x64xbf16>
    %cst_13 = arith.constant dense<0.000000e+00> : vector<48x64xf32>
    %19 = tpu.matmul %16, %18, %cst_13 {dimension_numbers = #tpu.dot_dimension_numbers<[1], [0], [0], [1], [0, 0, 1, 1], [], []>} : vector<48x64xbf16>, vector<64x64xbf16>, vector<48x64xf32> -> vector<48x64xf32>
    %20 = arith.addf %14, %19 : vector<48x64xf32>
    %21 = vector.extract_strided_slice %7 {offsets = [4, 0], sizes = [48, 64], strides = [1, 1]} : vector<56x64xf32> to vector<48x64xf32>
    %22 = arith.truncf %21 : vector<48x64xf32> to vector<48x64xbf16>
    %c2 = arith.constant 2 : index
    %c0_14 = arith.constant 0 : index
    %c0_15 = arith.constant 0 : index
    %23 = vector.load %arg3[%c2, %c0_14, %c0_15] : memref<5x64x64xbf16, #tpu.memory_space<vmem>>, vector<1x64x64xbf16>
    %24 = vector.shape_cast %23 : vector<1x64x64xbf16> to vector<64x64xbf16>
    %cst_16 = arith.constant dense<0.000000e+00> : vector<48x64xf32>
    %25 = tpu.matmul %22, %24, %cst_16 {dimension_numbers = #tpu.dot_dimension_numbers<[1], [0], [0], [1], [0, 0, 1, 1], [], []>} : vector<48x64xbf16>, vector<64x64xbf16>, vector<48x64xf32> -> vector<48x64xf32>
    %26 = arith.addf %20, %25 : vector<48x64xf32>
    %27 = vector.extract_strided_slice %7 {offsets = [6, 0], sizes = [48, 64], strides = [1, 1]} : vector<56x64xf32> to vector<48x64xf32>
    %28 = arith.truncf %27 : vector<48x64xf32> to vector<48x64xbf16>
    %c3 = arith.constant 3 : index
    %c0_17 = arith.constant 0 : index
    %c0_18 = arith.constant 0 : index
    %29 = vector.load %arg3[%c3, %c0_17, %c0_18] : memref<5x64x64xbf16, #tpu.memory_space<vmem>>, vector<1x64x64xbf16>
    %30 = vector.shape_cast %29 : vector<1x64x64xbf16> to vector<64x64xbf16>
    %cst_19 = arith.constant dense<0.000000e+00> : vector<48x64xf32>
    %31 = tpu.matmul %28, %30, %cst_19 {dimension_numbers = #tpu.dot_dimension_numbers<[1], [0], [0], [1], [0, 0, 1, 1], [], []>} : vector<48x64xbf16>, vector<64x64xbf16>, vector<48x64xf32> -> vector<48x64xf32>
    %32 = arith.addf %26, %31 : vector<48x64xf32>
    %33 = vector.extract_strided_slice %7 {offsets = [8, 0], sizes = [48, 64], strides = [1, 1]} : vector<56x64xf32> to vector<48x64xf32>
    %34 = arith.truncf %33 : vector<48x64xf32> to vector<48x64xbf16>
    %c4 = arith.constant 4 : index
    %c0_20 = arith.constant 0 : index
    %c0_21 = arith.constant 0 : index
    %35 = vector.load %arg3[%c4, %c0_20, %c0_21] : memref<5x64x64xbf16, #tpu.memory_space<vmem>>, vector<1x64x64xbf16>
    %36 = vector.shape_cast %35 : vector<1x64x64xbf16> to vector<64x64xbf16>
    %cst_22 = arith.constant dense<0.000000e+00> : vector<48x64xf32>
    %37 = tpu.matmul %34, %36, %cst_22 {dimension_numbers = #tpu.dot_dimension_numbers<[1], [0], [0], [1], [0, 0, 1, 1], [], []>} : vector<48x64xbf16>, vector<64x64xbf16>, vector<48x64xf32> -> vector<48x64xf32>
    %38 = arith.addf %32, %37 : vector<48x64xf32>
    %c0_23 = arith.constant 0 : index
    %c0_24 = arith.constant 0 : index
    %39 = vector.load %arg4[%c0_23, %c0_24] : memref<1x64xf32, #tpu.memory_space<vmem>>, vector<1x64xf32>
    %40 = vector.broadcast %39 : vector<1x64xf32> to vector<48x64xf32>
    %41 = arith.addf %38, %40 : vector<48x64xf32>
    %cst_25 = arith.constant 0.000000e+00 : f32
    %42 = vector.broadcast %cst_25 : f32 to vector<48x64xf32>
    %43 = arith.maximumf %41, %42 : vector<48x64xf32>
    %cst_26 = arith.constant 0.000000e+00 : f32
    %44 = vector.broadcast %cst_26 : f32 to vector<40x64xf32>
    %45 = vector.extract_strided_slice %43 {offsets = [0, 0], sizes = [40, 64], strides = [1, 1]} : vector<48x64xf32> to vector<40x64xf32>
    %46 = arith.truncf %45 : vector<40x64xf32> to vector<40x64xbf16>
    %c0_27 = arith.constant 0 : index
    %c0_28 = arith.constant 0 : index
    %c0_29 = arith.constant 0 : index
    %47 = vector.load %arg5[%c0_27, %c0_28, %c0_29] : memref<5x64x64xbf16, #tpu.memory_space<vmem>>, vector<1x64x64xbf16>
    %48 = vector.shape_cast %47 : vector<1x64x64xbf16> to vector<64x64xbf16>
    %cst_30 = arith.constant dense<0.000000e+00> : vector<40x64xf32>
    %49 = tpu.matmul %46, %48, %cst_30 {dimension_numbers = #tpu.dot_dimension_numbers<[1], [0], [0], [1], [0, 0, 1, 1], [], []>} : vector<40x64xbf16>, vector<64x64xbf16>, vector<40x64xf32> -> vector<40x64xf32>
    %50 = arith.addf %44, %49 : vector<40x64xf32>
    %51 = vector.extract_strided_slice %43 {offsets = [2, 0], sizes = [40, 64], strides = [1, 1]} : vector<48x64xf32> to vector<40x64xf32>
    %52 = arith.truncf %51 : vector<40x64xf32> to vector<40x64xbf16>
    %c1_31 = arith.constant 1 : index
    %c0_32 = arith.constant 0 : index
    %c0_33 = arith.constant 0 : index
    %53 = vector.load %arg5[%c1_31, %c0_32, %c0_33] : memref<5x64x64xbf16, #tpu.memory_space<vmem>>, vector<1x64x64xbf16>
    %54 = vector.shape_cast %53 : vector<1x64x64xbf16> to vector<64x64xbf16>
    %cst_34 = arith.constant dense<0.000000e+00> : vector<40x64xf32>
    %55 = tpu.matmul %52, %54, %cst_34 {dimension_numbers = #tpu.dot_dimension_numbers<[1], [0], [0], [1], [0, 0, 1, 1], [], []>} : vector<40x64xbf16>, vector<64x64xbf16>, vector<40x64xf32> -> vector<40x64xf32>
    %56 = arith.addf %50, %55 : vector<40x64xf32>
    %57 = vector.extract_strided_slice %43 {offsets = [4, 0], sizes = [40, 64], strides = [1, 1]} : vector<48x64xf32> to vector<40x64xf32>
    %58 = arith.truncf %57 : vector<40x64xf32> to vector<40x64xbf16>
    %c2_35 = arith.constant 2 : index
    %c0_36 = arith.constant 0 : index
    %c0_37 = arith.constant 0 : index
    %59 = vector.load %arg5[%c2_35, %c0_36, %c0_37] : memref<5x64x64xbf16, #tpu.memory_space<vmem>>, vector<1x64x64xbf16>
    %60 = vector.shape_cast %59 : vector<1x64x64xbf16> to vector<64x64xbf16>
    %cst_38 = arith.constant dense<0.000000e+00> : vector<40x64xf32>
    %61 = tpu.matmul %58, %60, %cst_38 {dimension_numbers = #tpu.dot_dimension_numbers<[1], [0], [0], [1], [0, 0, 1, 1], [], []>} : vector<40x64xbf16>, vector<64x64xbf16>, vector<40x64xf32> -> vector<40x64xf32>
    %62 = arith.addf %56, %61 : vector<40x64xf32>
    %63 = vector.extract_strided_slice %43 {offsets = [6, 0], sizes = [40, 64], strides = [1, 1]} : vector<48x64xf32> to vector<40x64xf32>
    %64 = arith.truncf %63 : vector<40x64xf32> to vector<40x64xbf16>
    %c3_39 = arith.constant 3 : index
    %c0_40 = arith.constant 0 : index
    %c0_41 = arith.constant 0 : index
    %65 = vector.load %arg5[%c3_39, %c0_40, %c0_41] : memref<5x64x64xbf16, #tpu.memory_space<vmem>>, vector<1x64x64xbf16>
    %66 = vector.shape_cast %65 : vector<1x64x64xbf16> to vector<64x64xbf16>
    %cst_42 = arith.constant dense<0.000000e+00> : vector<40x64xf32>
    %67 = tpu.matmul %64, %66, %cst_42 {dimension_numbers = #tpu.dot_dimension_numbers<[1], [0], [0], [1], [0, 0, 1, 1], [], []>} : vector<40x64xbf16>, vector<64x64xbf16>, vector<40x64xf32> -> vector<40x64xf32>
    %68 = arith.addf %62, %67 : vector<40x64xf32>
    %69 = vector.extract_strided_slice %43 {offsets = [8, 0], sizes = [40, 64], strides = [1, 1]} : vector<48x64xf32> to vector<40x64xf32>
    %70 = arith.truncf %69 : vector<40x64xf32> to vector<40x64xbf16>
    %c4_43 = arith.constant 4 : index
    %c0_44 = arith.constant 0 : index
    %c0_45 = arith.constant 0 : index
    %71 = vector.load %arg5[%c4_43, %c0_44, %c0_45] : memref<5x64x64xbf16, #tpu.memory_space<vmem>>, vector<1x64x64xbf16>
    %72 = vector.shape_cast %71 : vector<1x64x64xbf16> to vector<64x64xbf16>
    %cst_46 = arith.constant dense<0.000000e+00> : vector<40x64xf32>
    %73 = tpu.matmul %70, %72, %cst_46 {dimension_numbers = #tpu.dot_dimension_numbers<[1], [0], [0], [1], [0, 0, 1, 1], [], []>} : vector<40x64xbf16>, vector<64x64xbf16>, vector<40x64xf32> -> vector<40x64xf32>
    %74 = arith.addf %68, %73 : vector<40x64xf32>
    %c0_47 = arith.constant 0 : index
    %c0_48 = arith.constant 0 : index
    %75 = vector.load %arg6[%c0_47, %c0_48] : memref<1x64xf32, #tpu.memory_space<vmem>>, vector<1x64xf32>
    %76 = vector.broadcast %75 : vector<1x64xf32> to vector<40x64xf32>
    %77 = arith.addf %74, %76 : vector<40x64xf32>
    %cst_49 = arith.constant 0.000000e+00 : f32
    %78 = vector.broadcast %cst_49 : f32 to vector<40x64xf32>
    %79 = arith.maximumf %77, %78 : vector<40x64xf32>
    %cst_50 = arith.constant 0.000000e+00 : f32
    %80 = vector.broadcast %cst_50 : f32 to vector<32x64xf32>
    %81 = vector.extract_strided_slice %79 {offsets = [0, 0], sizes = [32, 64], strides = [1, 1]} : vector<40x64xf32> to vector<32x64xf32>
    %82 = arith.truncf %81 : vector<32x64xf32> to vector<32x64xbf16>
    %c0_51 = arith.constant 0 : index
    %c0_52 = arith.constant 0 : index
    %c0_53 = arith.constant 0 : index
    %83 = vector.load %arg7[%c0_51, %c0_52, %c0_53] : memref<5x64x64xbf16, #tpu.memory_space<vmem>>, vector<1x64x64xbf16>
    %84 = vector.shape_cast %83 : vector<1x64x64xbf16> to vector<64x64xbf16>
    %cst_54 = arith.constant dense<0.000000e+00> : vector<32x64xf32>
    %85 = tpu.matmul %82, %84, %cst_54 {dimension_numbers = #tpu.dot_dimension_numbers<[1], [0], [0], [1], [0, 0, 1, 1], [], []>} : vector<32x64xbf16>, vector<64x64xbf16>, vector<32x64xf32> -> vector<32x64xf32>
    %86 = arith.addf %80, %85 : vector<32x64xf32>
    %87 = vector.extract_strided_slice %79 {offsets = [2, 0], sizes = [32, 64], strides = [1, 1]} : vector<40x64xf32> to vector<32x64xf32>
    %88 = arith.truncf %87 : vector<32x64xf32> to vector<32x64xbf16>
    %c1_55 = arith.constant 1 : index
    %c0_56 = arith.constant 0 : index
    %c0_57 = arith.constant 0 : index
    %89 = vector.load %arg7[%c1_55, %c0_56, %c0_57] : memref<5x64x64xbf16, #tpu.memory_space<vmem>>, vector<1x64x64xbf16>
    %90 = vector.shape_cast %89 : vector<1x64x64xbf16> to vector<64x64xbf16>
    %cst_58 = arith.constant dense<0.000000e+00> : vector<32x64xf32>
    %91 = tpu.matmul %88, %90, %cst_58 {dimension_numbers = #tpu.dot_dimension_numbers<[1], [0], [0], [1], [0, 0, 1, 1], [], []>} : vector<32x64xbf16>, vector<64x64xbf16>, vector<32x64xf32> -> vector<32x64xf32>
    %92 = arith.addf %86, %91 : vector<32x64xf32>
    %93 = vector.extract_strided_slice %79 {offsets = [4, 0], sizes = [32, 64], strides = [1, 1]} : vector<40x64xf32> to vector<32x64xf32>
    %94 = arith.truncf %93 : vector<32x64xf32> to vector<32x64xbf16>
    %c2_59 = arith.constant 2 : index
    %c0_60 = arith.constant 0 : index
    %c0_61 = arith.constant 0 : index
    %95 = vector.load %arg7[%c2_59, %c0_60, %c0_61] : memref<5x64x64xbf16, #tpu.memory_space<vmem>>, vector<1x64x64xbf16>
    %96 = vector.shape_cast %95 : vector<1x64x64xbf16> to vector<64x64xbf16>
    %cst_62 = arith.constant dense<0.000000e+00> : vector<32x64xf32>
    %97 = tpu.matmul %94, %96, %cst_62 {dimension_numbers = #tpu.dot_dimension_numbers<[1], [0], [0], [1], [0, 0, 1, 1], [], []>} : vector<32x64xbf16>, vector<64x64xbf16>, vector<32x64xf32> -> vector<32x64xf32>
    %98 = arith.addf %92, %97 : vector<32x64xf32>
    %99 = vector.extract_strided_slice %79 {offsets = [6, 0], sizes = [32, 64], strides = [1, 1]} : vector<40x64xf32> to vector<32x64xf32>
    %100 = arith.truncf %99 : vector<32x64xf32> to vector<32x64xbf16>
    %c3_63 = arith.constant 3 : index
    %c0_64 = arith.constant 0 : index
    %c0_65 = arith.constant 0 : index
    %101 = vector.load %arg7[%c3_63, %c0_64, %c0_65] : memref<5x64x64xbf16, #tpu.memory_space<vmem>>, vector<1x64x64xbf16>
    %102 = vector.shape_cast %101 : vector<1x64x64xbf16> to vector<64x64xbf16>
    %cst_66 = arith.constant dense<0.000000e+00> : vector<32x64xf32>
    %103 = tpu.matmul %100, %102, %cst_66 {dimension_numbers = #tpu.dot_dimension_numbers<[1], [0], [0], [1], [0, 0, 1, 1], [], []>} : vector<32x64xbf16>, vector<64x64xbf16>, vector<32x64xf32> -> vector<32x64xf32>
    %104 = arith.addf %98, %103 : vector<32x64xf32>
    %105 = vector.extract_strided_slice %79 {offsets = [8, 0], sizes = [32, 64], strides = [1, 1]} : vector<40x64xf32> to vector<32x64xf32>
    %106 = arith.truncf %105 : vector<32x64xf32> to vector<32x64xbf16>
    %c4_67 = arith.constant 4 : index
    %c0_68 = arith.constant 0 : index
    %c0_69 = arith.constant 0 : index
    %107 = vector.load %arg7[%c4_67, %c0_68, %c0_69] : memref<5x64x64xbf16, #tpu.memory_space<vmem>>, vector<1x64x64xbf16>
    %108 = vector.shape_cast %107 : vector<1x64x64xbf16> to vector<64x64xbf16>
    %cst_70 = arith.constant dense<0.000000e+00> : vector<32x64xf32>
    %109 = tpu.matmul %106, %108, %cst_70 {dimension_numbers = #tpu.dot_dimension_numbers<[1], [0], [0], [1], [0, 0, 1, 1], [], []>} : vector<32x64xbf16>, vector<64x64xbf16>, vector<32x64xf32> -> vector<32x64xf32>
    %110 = arith.addf %104, %109 : vector<32x64xf32>
    %c0_71 = arith.constant 0 : index
    %c0_72 = arith.constant 0 : index
    %111 = vector.load %arg8[%c0_71, %c0_72] : memref<1x64xf32, #tpu.memory_space<vmem>>, vector<1x64xf32>
    %112 = vector.broadcast %111 : vector<1x64xf32> to vector<32x64xf32>
    %113 = arith.addf %110, %112 : vector<32x64xf32>
    %cst_73 = arith.constant 0.000000e+00 : f32
    %114 = vector.broadcast %cst_73 : f32 to vector<32x64xf32>
    %115 = arith.maximumf %113, %114 : vector<32x64xf32>
    %116 = arith.truncf %115 : vector<32x64xf32> to vector<32x64xbf16>
    %c0_74 = arith.constant 0 : index
    %c0_75 = arith.constant 0 : index
    %117 = vector.load %arg9[%c0_74, %c0_75] : memref<64x512xbf16, #tpu.memory_space<vmem>>, vector<64x512xbf16>
    %cst_76 = arith.constant dense<0.000000e+00> : vector<32x512xf32>
    %118 = tpu.matmul %116, %117, %cst_76 {dimension_numbers = #tpu.dot_dimension_numbers<[1], [0], [0], [1], [0, 0, 1, 1], [], []>} : vector<32x64xbf16>, vector<64x512xbf16>, vector<32x512xf32> -> vector<32x512xf32>
    %c0_77 = arith.constant 0 : index
    %c0_78 = arith.constant 0 : index
    %119 = vector.load %arg10[%c0_77, %c0_78] : memref<1x512xf32, #tpu.memory_space<vmem>>, vector<1x512xf32>
    %120 = vector.broadcast %119 : vector<1x512xf32> to vector<32x512xf32>
    %121 = arith.addf %118, %120 : vector<32x512xf32>
    %c0_79 = arith.constant 0 : index
    %c0_80 = arith.constant 0 : index
    %122 = vector.load %arg16[%c0_79, %c0_80] : memref<32x512xf32, #tpu.memory_space<vmem>>, vector<32x512xf32>
    tpu.vector_store %arg16[%c0_79, %c0_80], %121 {strides = array<i32>} : memref<32x512xf32, #tpu.memory_space<vmem>>, vector<32x512xf32>,
    %c0_81 = arith.constant 0 : index
    %c0_82 = arith.constant 0 : index
    %123 = vector.load %arg12[%c0_81, %c0_82] : memref<1x512xf32, #tpu.memory_space<vmem>>, vector<1x512xf32>
    %124 = vector.shape_cast %123 : vector<1x512xf32> to vector<1x512xf32>
    %125 = vector.broadcast %124 : vector<1x512xf32> to vector<2x512xf32>
    %cst_83 = arith.constant 0.000000e+00 : f32
    %126 = vector.broadcast %cst_83 : f32 to vector<2x128xf32>
    %c0_84 = arith.constant 0 : index
    %c0_85 = arith.constant 0 : index
    %127 = vector.load %arg16[%c0_84, %c0_85] : memref<32x512xf32, #tpu.memory_space<vmem>>, vector<2x512xf32>
    %128 = vector.extract_strided_slice %127 {offsets = [0, 0], sizes = [2, 384], strides = [1, 1]} : vector<2x512xf32> to vector<2x384xf32>
    %cst_86 = arith.constant 5.000000e-01 : f32
    %129 = vector.broadcast %cst_86 : f32 to vector<2x384xf32>
    %130 = arith.mulf %129, %128 : vector<2x384xf32>
    %131 = math.tanh %130 : vector<2x384xf32>
    %cst_87 = arith.constant 5.000000e-01 : f32
    %132 = vector.broadcast %cst_87 : f32 to vector<2x384xf32>
    %133 = arith.mulf %132, %131 : vector<2x384xf32>
    %cst_88 = arith.constant 5.000000e-01 : f32
    %134 = vector.broadcast %cst_88 : f32 to vector<2x384xf32>
    %135 = arith.addf %133, %134 : vector<2x384xf32>
    %136 = vector.extract_strided_slice %135 {offsets = [0, 0], sizes = [2, 128], strides = [1, 1]} : vector<2x384xf32> to vector<2x128xf32>
    %137 = vector.extract_strided_slice %135 {offsets = [0, 128], sizes = [2, 128], strides = [1, 1]} : vector<2x384xf32> to vector<2x128xf32>
    %138 = vector.extract_strided_slice %135 {offsets = [0, 256], sizes = [2, 128], strides = [1, 1]} : vector<2x384xf32> to vector<2x128xf32>
    %139 = vector.extract_strided_slice %127 {offsets = [0, 384], sizes = [2, 128], strides = [1, 1]} : vector<2x512xf32> to vector<2x128xf32>
    %140 = math.tanh %139 : vector<2x128xf32>
    %141 = arith.mulf %137, %126 : vector<2x128xf32>
    %142 = arith.mulf %136, %140 : vector<2x128xf32>
    %143 = arith.addf %141, %142 : vector<2x128xf32>
    %144 = math.tanh %143 : vector<2x128xf32>
    %145 = arith.mulf %138, %144 : vector<2x128xf32>
    %146 = tpu.concatenate %145, %126 in 1 : vector<2x128xf32>, vector<2x128xf32> -> vector<2x256xf32>
    %147 = arith.truncf %146 : vector<2x256xf32> to vector<2x256xbf16>
    %c0_89 = arith.constant 0 : index
    %c0_90 = arith.constant 0 : index
    %148 = vector.load %arg11[%c0_89, %c0_90] : memref<256x1024xbf16, #tpu.memory_space<vmem>>, vector<256x1024xbf16>
    %cst_91 = arith.constant dense<0.000000e+00> : vector<2x1024xf32>
    %149 = tpu.matmul %147, %148, %cst_91 {dimension_numbers = #tpu.dot_dimension_numbers<[1], [0], [0], [1], [0, 0, 1, 1], [], []>} : vector<2x256xbf16>, vector<256x1024xbf16>, vector<2x1024xf32> -> vector<2x1024xf32>
    %150 = vector.extract_strided_slice %149 {offsets = [0, 0], sizes = [2, 512], strides = [1, 1]} : vector<2x1024xf32> to vector<2x512xf32>
    %c2_92 = arith.constant 2 : index
    %c0_93 = arith.constant 0 : index
    %151 = vector.load %arg16[%c2_92, %c0_93] : memref<32x512xf32, #tpu.memory_space<vmem>>, vector<2x512xf32>
    %152 = arith.addf %150, %151 : vector<2x512xf32>
    %153 = vector.extract_strided_slice %152 {offsets = [0, 0], sizes = [2, 384], strides = [1, 1]} : vector<2x512xf32> to vector<2x384xf32>
    %cst_94 = arith.constant 5.000000e-01 : f32
    %154 = vector.broadcast %cst_94 : f32 to vector<2x384xf32>
    %155 = arith.mulf %154, %153 : vector<2x384xf32>
    %156 = math.tanh %155 : vector<2x384xf32>
    %cst_95 = arith.constant 5.000000e-01 : f32
    %157 = vector.broadcast %cst_95 : f32 to vector<2x384xf32>
    %158 = arith.mulf %157, %156 : vector<2x384xf32>
    %cst_96 = arith.constant 5.000000e-01 : f32
    %159 = vector.broadcast %cst_96 : f32 to vector<2x384xf32>
    %160 = arith.addf %158, %159 : vector<2x384xf32>
    %161 = vector.extract_strided_slice %160 {offsets = [0, 0], sizes = [2, 128], strides = [1, 1]} : vector<2x384xf32> to vector<2x128xf32>
    %162 = vector.extract_strided_slice %160 {offsets = [0, 128], sizes = [2, 128], strides = [1, 1]} : vector<2x384xf32> to vector<2x128xf32>
    %163 = vector.extract_strided_slice %160 {offsets = [0, 256], sizes = [2, 128], strides = [1, 1]} : vector<2x384xf32> to vector<2x128xf32>
    %164 = vector.extract_strided_slice %152 {offsets = [0, 384], sizes = [2, 128], strides = [1, 1]} : vector<2x512xf32> to vector<2x128xf32>
    %165 = math.tanh %164 : vector<2x128xf32>
    %166 = arith.mulf %162, %143 : vector<2x128xf32>
    %167 = arith.mulf %161, %165 : vector<2x128xf32>
    %168 = arith.addf %166, %167 : vector<2x128xf32>
    %169 = math.tanh %168 : vector<2x128xf32>
    %170 = arith.mulf %163, %169 : vector<2x128xf32>
    %171 = vector.extract_strided_slice %149 {offsets = [0, 512], sizes = [2, 512], strides = [1, 1]} : vector<2x1024xf32> to vector<2x512xf32>
    %172 = arith.addf %171, %125 : vector<2x512xf32>
    %173 = vector.extract_strided_slice %172 {offsets = [0, 0], sizes = [2, 384], strides = [1, 1]} : vector<2x512xf32> to vector<2x384xf32>
    %cst_97 = arith.constant 5.000000e-01 : f32
    %174 = vector.broadcast %cst_97 : f32 to vector<2x384xf32>
    %175 = arith.mulf %174, %173 : vector<2x384xf32>
    %176 = math.tanh %175 : vector<2x384xf32>
    %cst_98 = arith.constant 5.000000e-01 : f32
    %177 = vector.broadcast %cst_98 : f32 to vector<2x384xf32>
    %178 = arith.mulf %177, %176 : vector<2x384xf32>
    %cst_99 = arith.constant 5.000000e-01 : f32
    %179 = vector.broadcast %cst_99 : f32 to vector<2x384xf32>
    %180 = arith.addf %178, %179 : vector<2x384xf32>
    %181 = vector.extract_strided_slice %180 {offsets = [0, 0], sizes = [2, 128], strides = [1, 1]} : vector<2x384xf32> to vector<2x128xf32>
    %182 = vector.extract_strided_slice %180 {offsets = [0, 128], sizes = [2, 128], strides = [1, 1]} : vector<2x384xf32> to vector<2x128xf32>
    %183 = vector.extract_strided_slice %180 {offsets = [0, 256], sizes = [2, 128], strides = [1, 1]} : vector<2x384xf32> to vector<2x128xf32>
    %184 = vector.extract_strided_slice %172 {offsets = [0, 384], sizes = [2, 128], strides = [1, 1]} : vector<2x512xf32> to vector<2x128xf32>
    %185 = math.tanh %184 : vector<2x128xf32>
    %186 = arith.mulf %182, %126 : vector<2x128xf32>
    %187 = arith.mulf %181, %185 : vector<2x128xf32>
    %188 = arith.addf %186, %187 : vector<2x128xf32>
    %189 = math.tanh %188 : vector<2x128xf32>
    %190 = arith.mulf %183, %189 : vector<2x128xf32>
    %191 = tpu.concatenate %170, %190 in 1 : vector<2x128xf32>, vector<2x128xf32> -> vector<2x256xf32>
    %192 = arith.truncf %191 : vector<2x256xf32> to vector<2x256xbf16>
    %c0_100 = arith.constant 0 : index
    %c0_101 = arith.constant 0 : index
    %193 = vector.load %arg11[%c0_100, %c0_101] : memref<256x1024xbf16, #tpu.memory_space<vmem>>, vector<256x1024xbf16>
    %cst_102 = arith.constant dense<0.000000e+00> : vector<2x1024xf32>
    %194 = tpu.matmul %192, %193, %cst_102 {dimension_numbers = #tpu.dot_dimension_numbers<[1], [0], [0], [1], [0, 0, 1, 1], [], []>} : vector<2x256xbf16>, vector<256x1024xbf16>, vector<2x1024xf32> -> vector<2x1024xf32>
    %195 = vector.extract_strided_slice %194 {offsets = [0, 0], sizes = [2, 512], strides = [1, 1]} : vector<2x1024xf32> to vector<2x512xf32>
    %c4_103 = arith.constant 4 : index
    %c0_104 = arith.constant 0 : index
    %196 = vector.load %arg16[%c4_103, %c0_104] : memref<32x512xf32, #tpu.memory_space<vmem>>, vector<2x512xf32>
    %197 = arith.addf %195, %196 : vector<2x512xf32>
    %198 = vector.extract_strided_slice %197 {offsets = [0, 0], sizes = [2, 384], strides = [1, 1]} : vector<2x512xf32> to vector<2x384xf32>
    %cst_105 = arith.constant 5.000000e-01 : f32
    %199 = vector.broadcast %cst_105 : f32 to vector<2x384xf32>
    %200 = arith.mulf %199, %198 : vector<2x384xf32>
    %201 = math.tanh %200 : vector<2x384xf32>
    %cst_106 = arith.constant 5.000000e-01 : f32
    %202 = vector.broadcast %cst_106 : f32 to vector<2x384xf32>
    %203 = arith.mulf %202, %201 : vector<2x384xf32>
    %cst_107 = arith.constant 5.000000e-01 : f32
    %204 = vector.broadcast %cst_107 : f32 to vector<2x384xf32>
    %205 = arith.addf %203, %204 : vector<2x384xf32>
    %206 = vector.extract_strided_slice %205 {offsets = [0, 0], sizes = [2, 128], strides = [1, 1]} : vector<2x384xf32> to vector<2x128xf32>
    %207 = vector.extract_strided_slice %205 {offsets = [0, 128], sizes = [2, 128], strides = [1, 1]} : vector<2x384xf32> to vector<2x128xf32>
    %208 = vector.extract_strided_slice %205 {offsets = [0, 256], sizes = [2, 128], strides = [1, 1]} : vector<2x384xf32> to vector<2x128xf32>
    %209 = vector.extract_strided_slice %197 {offsets = [0, 384], sizes = [2, 128], strides = [1, 1]} : vector<2x512xf32> to vector<2x128xf32>
    %210 = math.tanh %209 : vector<2x128xf32>
    %211 = arith.mulf %207, %168 : vector<2x128xf32>
    %212 = arith.mulf %206, %210 : vector<2x128xf32>
    %213 = arith.addf %211, %212 : vector<2x128xf32>
    %214 = math.tanh %213 : vector<2x128xf32>
    %215 = arith.mulf %208, %214 : vector<2x128xf32>
    %216 = vector.extract_strided_slice %194 {offsets = [0, 512], sizes = [2, 512], strides = [1, 1]} : vector<2x1024xf32> to vector<2x512xf32>
    %217 = arith.addf %216, %125 : vector<2x512xf32>
    %218 = vector.extract_strided_slice %217 {offsets = [0, 0], sizes = [2, 384], strides = [1, 1]} : vector<2x512xf32> to vector<2x384xf32>
    %cst_108 = arith.constant 5.000000e-01 : f32
    %219 = vector.broadcast %cst_108 : f32 to vector<2x384xf32>
    %220 = arith.mulf %219, %218 : vector<2x384xf32>
    %221 = math.tanh %220 : vector<2x384xf32>
    %cst_109 = arith.constant 5.000000e-01 : f32
    %222 = vector.broadcast %cst_109 : f32 to vector<2x384xf32>
    %223 = arith.mulf %222, %221 : vector<2x384xf32>
    %cst_110 = arith.constant 5.000000e-01 : f32
    %224 = vector.broadcast %cst_110 : f32 to vector<2x384xf32>
    %225 = arith.addf %223, %224 : vector<2x384xf32>
    %226 = vector.extract_strided_slice %225 {offsets = [0, 0], sizes = [2, 128], strides = [1, 1]} : vector<2x384xf32> to vector<2x128xf32>
    %227 = vector.extract_strided_slice %225 {offsets = [0, 128], sizes = [2, 128], strides = [1, 1]} : vector<2x384xf32> to vector<2x128xf32>
    %228 = vector.extract_strided_slice %225 {offsets = [0, 256], sizes = [2, 128], strides = [1, 1]} : vector<2x384xf32> to vector<2x128xf32>
    %229 = vector.extract_strided_slice %217 {offsets = [0, 384], sizes = [2, 128], strides = [1, 1]} : vector<2x512xf32> to vector<2x128xf32>
    %230 = math.tanh %229 : vector<2x128xf32>
    %231 = arith.mulf %227, %188 : vector<2x128xf32>
    %232 = arith.mulf %226, %230 : vector<2x128xf32>
    %233 = arith.addf %231, %232 : vector<2x128xf32>
    %234 = math.tanh %233 : vector<2x128xf32>
    %235 = arith.mulf %228, %234 : vector<2x128xf32>
    %236 = tpu.concatenate %215, %235 in 1 : vector<2x128xf32>, vector<2x128xf32> -> vector<2x256xf32>
    %237 = arith.truncf %236 : vector<2x256xf32> to vector<2x256xbf16>
    %c0_111 = arith.constant 0 : index
    %c0_112 = arith.constant 0 : index
    %238 = vector.load %arg11[%c0_111, %c0_112] : memref<256x1024xbf16, #tpu.memory_space<vmem>>, vector<256x1024xbf16>
    %cst_113 = arith.constant dense<0.000000e+00> : vector<2x1024xf32>
    %239 = tpu.matmul %237, %238, %cst_113 {dimension_numbers = #tpu.dot_dimension_numbers<[1], [0], [0], [1], [0, 0, 1, 1], [], []>} : vector<2x256xbf16>, vector<256x1024xbf16>, vector<2x1024xf32> -> vector<2x1024xf32>
    %240 = vector.extract_strided_slice %239 {offsets = [0, 0], sizes = [2, 512], strides = [1, 1]} : vector<2x1024xf32> to vector<2x512xf32>
    %c6 = arith.constant 6 : index
    %c0_114 = arith.constant 0 : index
    %241 = vector.load %arg16[%c6, %c0_114] : memref<32x512xf32, #tpu.memory_space<vmem>>, vector<2x512xf32>
    %242 = arith.addf %240, %241 : vector<2x512xf32>
    %243 = vector.extract_strided_slice %242 {offsets = [0, 0], sizes = [2, 384], strides = [1, 1]} : vector<2x512xf32> to vector<2x384xf32>
    %cst_115 = arith.constant 5.000000e-01 : f32
    %244 = vector.broadcast %cst_115 : f32 to vector<2x384xf32>
    %245 = arith.mulf %244, %243 : vector<2x384xf32>
    %246 = math.tanh %245 : vector<2x384xf32>
    %cst_116 = arith.constant 5.000000e-01 : f32
    %247 = vector.broadcast %cst_116 : f32 to vector<2x384xf32>
    %248 = arith.mulf %247, %246 : vector<2x384xf32>
    %cst_117 = arith.constant 5.000000e-01 : f32
    %249 = vector.broadcast %cst_117 : f32 to vector<2x384xf32>
    %250 = arith.addf %248, %249 : vector<2x384xf32>
    %251 = vector.extract_strided_slice %250 {offsets = [0, 0], sizes = [2, 128], strides = [1, 1]} : vector<2x384xf32> to vector<2x128xf32>
    %252 = vector.extract_strided_slice %250 {offsets = [0, 128], sizes = [2, 128], strides = [1, 1]} : vector<2x384xf32> to vector<2x128xf32>
    %253 = vector.extract_strided_slice %250 {offsets = [0, 256], sizes = [2, 128], strides = [1, 1]} : vector<2x384xf32> to vector<2x128xf32>
    %254 = vector.extract_strided_slice %242 {offsets = [0, 384], sizes = [2, 128], strides = [1, 1]} : vector<2x512xf32> to vector<2x128xf32>
    %255 = math.tanh %254 : vector<2x128xf32>
    %256 = arith.mulf %252, %213 : vector<2x128xf32>
    %257 = arith.mulf %251, %255 : vector<2x128xf32>
    %258 = arith.addf %256, %257 : vector<2x128xf32>
    %259 = math.tanh %258 : vector<2x128xf32>
    %260 = arith.mulf %253, %259 : vector<2x128xf32>
    %261 = vector.extract_strided_slice %239 {offsets = [0, 512], sizes = [2, 512], strides = [1, 1]} : vector<2x1024xf32> to vector<2x512xf32>
    %262 = arith.addf %261, %125 : vector<2x512xf32>
    %263 = vector.extract_strided_slice %262 {offsets = [0, 0], sizes = [2, 384], strides = [1, 1]} : vector<2x512xf32> to vector<2x384xf32>
    %cst_118 = arith.constant 5.000000e-01 : f32
    %264 = vector.broadcast %cst_118 : f32 to vector<2x384xf32>
    %265 = arith.mulf %264, %263 : vector<2x384xf32>
    %266 = math.tanh %265 : vector<2x384xf32>
    %cst_119 = arith.constant 5.000000e-01 : f32
    %267 = vector.broadcast %cst_119 : f32 to vector<2x384xf32>
    %268 = arith.mulf %267, %266 : vector<2x384xf32>
    %cst_120 = arith.constant 5.000000e-01 : f32
    %269 = vector.broadcast %cst_120 : f32 to vector<2x384xf32>
    %270 = arith.addf %268, %269 : vector<2x384xf32>
    %271 = vector.extract_strided_slice %270 {offsets = [0, 0], sizes = [2, 128], strides = [1, 1]} : vector<2x384xf32> to vector<2x128xf32>
    %272 = vector.extract_strided_slice %270 {offsets = [0, 128], sizes = [2, 128], strides = [1, 1]} : vector<2x384xf32> to vector<2x128xf32>
    %273 = vector.extract_strided_slice %270 {offsets = [0, 256], sizes = [2, 128], strides = [1, 1]} : vector<2x384xf32> to vector<2x128xf32>
    %274 = vector.extract_strided_slice %262 {offsets = [0, 384], sizes = [2, 128], strides = [1, 1]} : vector<2x512xf32> to vector<2x128xf32>
    %275 = math.tanh %274 : vector<2x128xf32>
    %276 = arith.mulf %272, %233 : vector<2x128xf32>
    %277 = arith.mulf %271, %275 : vector<2x128xf32>
    %278 = arith.addf %276, %277 : vector<2x128xf32>
    %279 = math.tanh %278 : vector<2x128xf32>
    %280 = arith.mulf %273, %279 : vector<2x128xf32>
    %281 = tpu.concatenate %260, %280 in 1 : vector<2x128xf32>, vector<2x128xf32> -> vector<2x256xf32>
    %282 = arith.truncf %281 : vector<2x256xf32> to vector<2x256xbf16>
    %c0_121 = arith.constant 0 : index
    %c0_122 = arith.constant 0 : index
    %283 = vector.load %arg11[%c0_121, %c0_122] : memref<256x1024xbf16, #tpu.memory_space<vmem>>, vector<256x1024xbf16>
    %cst_123 = arith.constant dense<0.000000e+00> : vector<2x1024xf32>
    %284 = tpu.matmul %282, %283, %cst_123 {dimension_numbers = #tpu.dot_dimension_numbers<[1], [0], [0], [1], [0, 0, 1, 1], [], []>} : vector<2x256xbf16>, vector<256x1024xbf16>, vector<2x1024xf32> -> vector<2x1024xf32>
    %285 = vector.extract_strided_slice %284 {offsets = [0, 0], sizes = [2, 512], strides = [1, 1]} : vector<2x1024xf32> to vector<2x512xf32>
    %c8 = arith.constant 8 : index
    %c0_124 = arith.constant 0 : index
    %286 = vector.load %arg16[%c8, %c0_124] : memref<32x512xf32, #tpu.memory_space<vmem>>, vector<2x512xf32>
    %287 = arith.addf %285, %286 : vector<2x512xf32>
    %288 = vector.extract_strided_slice %287 {offsets = [0, 0], sizes = [2, 384], strides = [1, 1]} : vector<2x512xf32> to vector<2x384xf32>
    %cst_125 = arith.constant 5.000000e-01 : f32
    %289 = vector.broadcast %cst_125 : f32 to vector<2x384xf32>
    %290 = arith.mulf %289, %288 : vector<2x384xf32>
    %291 = math.tanh %290 : vector<2x384xf32>
    %cst_126 = arith.constant 5.000000e-01 : f32
    %292 = vector.broadcast %cst_126 : f32 to vector<2x384xf32>
    %293 = arith.mulf %292, %291 : vector<2x384xf32>
    %cst_127 = arith.constant 5.000000e-01 : f32
    %294 = vector.broadcast %cst_127 : f32 to vector<2x384xf32>
    %295 = arith.addf %293, %294 : vector<2x384xf32>
    %296 = vector.extract_strided_slice %295 {offsets = [0, 0], sizes = [2, 128], strides = [1, 1]} : vector<2x384xf32> to vector<2x128xf32>
    %297 = vector.extract_strided_slice %295 {offsets = [0, 128], sizes = [2, 128], strides = [1, 1]} : vector<2x384xf32> to vector<2x128xf32>
    %298 = vector.extract_strided_slice %295 {offsets = [0, 256], sizes = [2, 128], strides = [1, 1]} : vector<2x384xf32> to vector<2x128xf32>
    %299 = vector.extract_strided_slice %287 {offsets = [0, 384], sizes = [2, 128], strides = [1, 1]} : vector<2x512xf32> to vector<2x128xf32>
    %300 = math.tanh %299 : vector<2x128xf32>
    %301 = arith.mulf %297, %258 : vector<2x128xf32>
    %302 = arith.mulf %296, %300 : vector<2x128xf32>
    %303 = arith.addf %301, %302 : vector<2x128xf32>
    %304 = math.tanh %303 : vector<2x128xf32>
    %305 = arith.mulf %298, %304 : vector<2x128xf32>
    %306 = vector.extract_strided_slice %284 {offsets = [0, 512], sizes = [2, 512], strides = [1, 1]} : vector<2x1024xf32> to vector<2x512xf32>
    %307 = arith.addf %306, %125 : vector<2x512xf32>
    %308 = vector.extract_strided_slice %307 {offsets = [0, 0], sizes = [2, 384], strides = [1, 1]} : vector<2x512xf32> to vector<2x384xf32>
    %cst_128 = arith.constant 5.000000e-01 : f32
    %309 = vector.broadcast %cst_128 : f32 to vector<2x384xf32>
    %310 = arith.mulf %309, %308 : vector<2x384xf32>
    %311 = math.tanh %310 : vector<2x384xf32>
    %cst_129 = arith.constant 5.000000e-01 : f32
    %312 = vector.broadcast %cst_129 : f32 to vector<2x384xf32>
    %313 = arith.mulf %312, %311 : vector<2x384xf32>
    %cst_130 = arith.constant 5.000000e-01 : f32
    %314 = vector.broadcast %cst_130 : f32 to vector<2x384xf32>
    %315 = arith.addf %313, %314 : vector<2x384xf32>
    %316 = vector.extract_strided_slice %315 {offsets = [0, 0], sizes = [2, 128], strides = [1, 1]} : vector<2x384xf32> to vector<2x128xf32>
    %317 = vector.extract_strided_slice %315 {offsets = [0, 128], sizes = [2, 128], strides = [1, 1]} : vector<2x384xf32> to vector<2x128xf32>
    %318 = vector.extract_strided_slice %315 {offsets = [0, 256], sizes = [2, 128], strides = [1, 1]} : vector<2x384xf32> to vector<2x128xf32>
    %319 = vector.extract_strided_slice %307 {offsets = [0, 384], sizes = [2, 128], strides = [1, 1]} : vector<2x512xf32> to vector<2x128xf32>
    %320 = math.tanh %319 : vector<2x128xf32>
    %321 = arith.mulf %317, %278 : vector<2x128xf32>
    %322 = arith.mulf %316, %320 : vector<2x128xf32>
    %323 = arith.addf %321, %322 : vector<2x128xf32>
    %324 = math.tanh %323 : vector<2x128xf32>
    %325 = arith.mulf %318, %324 : vector<2x128xf32>
    %326 = tpu.concatenate %305, %325 in 1 : vector<2x128xf32>, vector<2x128xf32> -> vector<2x256xf32>
    %327 = arith.truncf %326 : vector<2x256xf32> to vector<2x256xbf16>
    %c0_131 = arith.constant 0 : index
    %c0_132 = arith.constant 0 : index
    %328 = vector.load %arg11[%c0_131, %c0_132] : memref<256x1024xbf16, #tpu.memory_space<vmem>>, vector<256x1024xbf16>
    %cst_133 = arith.constant dense<0.000000e+00> : vector<2x1024xf32>
    %329 = tpu.matmul %327, %328, %cst_133 {dimension_numbers = #tpu.dot_dimension_numbers<[1], [0], [0], [1], [0, 0, 1, 1], [], []>} : vector<2x256xbf16>, vector<256x1024xbf16>, vector<2x1024xf32> -> vector<2x1024xf32>
    %330 = vector.extract_strided_slice %329 {offsets = [0, 0], sizes = [2, 512], strides = [1, 1]} : vector<2x1024xf32> to vector<2x512xf32>
    %c10 = arith.constant 10 : index
    %c0_134 = arith.constant 0 : index
    %331 = vector.load %arg16[%c10, %c0_134] : memref<32x512xf32, #tpu.memory_space<vmem>>, vector<2x512xf32>
    %332 = arith.addf %330, %331 : vector<2x512xf32>
    %333 = vector.extract_strided_slice %332 {offsets = [0, 0], sizes = [2, 384], strides = [1, 1]} : vector<2x512xf32> to vector<2x384xf32>
    %cst_135 = arith.constant 5.000000e-01 : f32
    %334 = vector.broadcast %cst_135 : f32 to vector<2x384xf32>
    %335 = arith.mulf %334, %333 : vector<2x384xf32>
    %336 = math.tanh %335 : vector<2x384xf32>
    %cst_136 = arith.constant 5.000000e-01 : f32
    %337 = vector.broadcast %cst_136 : f32 to vector<2x384xf32>
    %338 = arith.mulf %337, %336 : vector<2x384xf32>
    %cst_137 = arith.constant 5.000000e-01 : f32
    %339 = vector.broadcast %cst_137 : f32 to vector<2x384xf32>
    %340 = arith.addf %338, %339 : vector<2x384xf32>
    %341 = vector.extract_strided_slice %340 {offsets = [0, 0], sizes = [2, 128], strides = [1, 1]} : vector<2x384xf32> to vector<2x128xf32>
    %342 = vector.extract_strided_slice %340 {offsets = [0, 128], sizes = [2, 128], strides = [1, 1]} : vector<2x384xf32> to vector<2x128xf32>
    %343 = vector.extract_strided_slice %340 {offsets = [0, 256], sizes = [2, 128], strides = [1, 1]} : vector<2x384xf32> to vector<2x128xf32>
    %344 = vector.extract_strided_slice %332 {offsets = [0, 384], sizes = [2, 128], strides = [1, 1]} : vector<2x512xf32> to vector<2x128xf32>
    %345 = math.tanh %344 : vector<2x128xf32>
    %346 = arith.mulf %342, %303 : vector<2x128xf32>
    %347 = arith.mulf %341, %345 : vector<2x128xf32>
    %348 = arith.addf %346, %347 : vector<2x128xf32>
    %349 = math.tanh %348 : vector<2x128xf32>
    %350 = arith.mulf %343, %349 : vector<2x128xf32>
    %351 = vector.extract_strided_slice %329 {offsets = [0, 512], sizes = [2, 512], strides = [1, 1]} : vector<2x1024xf32> to vector<2x512xf32>
    %352 = arith.addf %351, %125 : vector<2x512xf32>
    %353 = vector.extract_strided_slice %352 {offsets = [0, 0], sizes = [2, 384], strides = [1, 1]} : vector<2x512xf32> to vector<2x384xf32>
    %cst_138 = arith.constant 5.000000e-01 : f32
    %354 = vector.broadcast %cst_138 : f32 to vector<2x384xf32>
    %355 = arith.mulf %354, %353 : vector<2x384xf32>
    %356 = math.tanh %355 : vector<2x384xf32>
    %cst_139 = arith.constant 5.000000e-01 : f32
    %357 = vector.broadcast %cst_139 : f32 to vector<2x384xf32>
    %358 = arith.mulf %357, %356 : vector<2x384xf32>
    %cst_140 = arith.constant 5.000000e-01 : f32
    %359 = vector.broadcast %cst_140 : f32 to vector<2x384xf32>
    %360 = arith.addf %358, %359 : vector<2x384xf32>
    %361 = vector.extract_strided_slice %360 {offsets = [0, 0], sizes = [2, 128], strides = [1, 1]} : vector<2x384xf32> to vector<2x128xf32>
    %362 = vector.extract_strided_slice %360 {offsets = [0, 128], sizes = [2, 128], strides = [1, 1]} : vector<2x384xf32> to vector<2x128xf32>
    %363 = vector.extract_strided_slice %360 {offsets = [0, 256], sizes = [2, 128], strides = [1, 1]} : vector<2x384xf32> to vector<2x128xf32>
    %364 = vector.extract_strided_slice %352 {offsets = [0, 384], sizes = [2, 128], strides = [1, 1]} : vector<2x512xf32> to vector<2x128xf32>
    %365 = math.tanh %364 : vector<2x128xf32>
    %366 = arith.mulf %362, %323 : vector<2x128xf32>
    %367 = arith.mulf %361, %365 : vector<2x128xf32>
    %368 = arith.addf %366, %367 : vector<2x128xf32>
    %369 = math.tanh %368 : vector<2x128xf32>
    %370 = arith.mulf %363, %369 : vector<2x128xf32>
    %371 = tpu.concatenate %350, %370 in 1 : vector<2x128xf32>, vector<2x128xf32> -> vector<2x256xf32>
    %372 = arith.truncf %371 : vector<2x256xf32> to vector<2x256xbf16>
    %c0_141 = arith.constant 0 : index
    %c0_142 = arith.constant 0 : index
    %373 = vector.load %arg11[%c0_141, %c0_142] : memref<256x1024xbf16, #tpu.memory_space<vmem>>, vector<256x1024xbf16>
    %cst_143 = arith.constant dense<0.000000e+00> : vector<2x1024xf32>
    %374 = tpu.matmul %372, %373, %cst_143 {dimension_numbers = #tpu.dot_dimension_numbers<[1], [0], [0], [1], [0, 0, 1, 1], [], []>} : vector<2x256xbf16>, vector<256x1024xbf16>, vector<2x1024xf32> -> vector<2x1024xf32>
    %375 = vector.extract_strided_slice %374 {offsets = [0, 0], sizes = [2, 512], strides = [1, 1]} : vector<2x1024xf32> to vector<2x512xf32>
    %c12 = arith.constant 12 : index
    %c0_144 = arith.constant 0 : index
    %376 = vector.load %arg16[%c12, %c0_144] : memref<32x512xf32, #tpu.memory_space<vmem>>, vector<2x512xf32>
    %377 = arith.addf %375, %376 : vector<2x512xf32>
    %378 = vector.extract_strided_slice %377 {offsets = [0, 0], sizes = [2, 384], strides = [1, 1]} : vector<2x512xf32> to vector<2x384xf32>
    %cst_145 = arith.constant 5.000000e-01 : f32
    %379 = vector.broadcast %cst_145 : f32 to vector<2x384xf32>
    %380 = arith.mulf %379, %378 : vector<2x384xf32>
    %381 = math.tanh %380 : vector<2x384xf32>
    %cst_146 = arith.constant 5.000000e-01 : f32
    %382 = vector.broadcast %cst_146 : f32 to vector<2x384xf32>
    %383 = arith.mulf %382, %381 : vector<2x384xf32>
    %cst_147 = arith.constant 5.000000e-01 : f32
    %384 = vector.broadcast %cst_147 : f32 to vector<2x384xf32>
    %385 = arith.addf %383, %384 : vector<2x384xf32>
    %386 = vector.extract_strided_slice %385 {offsets = [0, 0], sizes = [2, 128], strides = [1, 1]} : vector<2x384xf32> to vector<2x128xf32>
    %387 = vector.extract_strided_slice %385 {offsets = [0, 128], sizes = [2, 128], strides = [1, 1]} : vector<2x384xf32> to vector<2x128xf32>
    %388 = vector.extract_strided_slice %385 {offsets = [0, 256], sizes = [2, 128], strides = [1, 1]} : vector<2x384xf32> to vector<2x128xf32>
    %389 = vector.extract_strided_slice %377 {offsets = [0, 384], sizes = [2, 128], strides = [1, 1]} : vector<2x512xf32> to vector<2x128xf32>
    %390 = math.tanh %389 : vector<2x128xf32>
    %391 = arith.mulf %387, %348 : vector<2x128xf32>
    %392 = arith.mulf %386, %390 : vector<2x128xf32>
    %393 = arith.addf %391, %392 : vector<2x128xf32>
    %394 = math.tanh %393 : vector<2x128xf32>
    %395 = arith.mulf %388, %394 : vector<2x128xf32>
    %396 = vector.extract_strided_slice %374 {offsets = [0, 512], sizes = [2, 512], strides = [1, 1]} : vector<2x1024xf32> to vector<2x512xf32>
    %397 = arith.addf %396, %125 : vector<2x512xf32>
    %398 = vector.extract_strided_slice %397 {offsets = [0, 0], sizes = [2, 384], strides = [1, 1]} : vector<2x512xf32> to vector<2x384xf32>
    %cst_148 = arith.constant 5.000000e-01 : f32
    %399 = vector.broadcast %cst_148 : f32 to vector<2x384xf32>
    %400 = arith.mulf %399, %398 : vector<2x384xf32>
    %401 = math.tanh %400 : vector<2x384xf32>
    %cst_149 = arith.constant 5.000000e-01 : f32
    %402 = vector.broadcast %cst_149 : f32 to vector<2x384xf32>
    %403 = arith.mulf %402, %401 : vector<2x384xf32>
    %cst_150 = arith.constant 5.000000e-01 : f32
    %404 = vector.broadcast %cst_150 : f32 to vector<2x384xf32>
    %405 = arith.addf %403, %404 : vector<2x384xf32>
    %406 = vector.extract_strided_slice %405 {offsets = [0, 0], sizes = [2, 128], strides = [1, 1]} : vector<2x384xf32> to vector<2x128xf32>
    %407 = vector.extract_strided_slice %405 {offsets = [0, 128], sizes = [2, 128], strides = [1, 1]} : vector<2x384xf32> to vector<2x128xf32>
    %408 = vector.extract_strided_slice %405 {offsets = [0, 256], sizes = [2, 128], strides = [1, 1]} : vector<2x384xf32> to vector<2x128xf32>
    %409 = vector.extract_strided_slice %397 {offsets = [0, 384], sizes = [2, 128], strides = [1, 1]} : vector<2x512xf32> to vector<2x128xf32>
    %410 = math.tanh %409 : vector<2x128xf32>
    %411 = arith.mulf %407, %368 : vector<2x128xf32>
    %412 = arith.mulf %406, %410 : vector<2x128xf32>
    %413 = arith.addf %411, %412 : vector<2x128xf32>
    %414 = math.tanh %413 : vector<2x128xf32>
    %415 = arith.mulf %408, %414 : vector<2x128xf32>
    %416 = tpu.concatenate %395, %415 in 1 : vector<2x128xf32>, vector<2x128xf32> -> vector<2x256xf32>
    %417 = arith.truncf %416 : vector<2x256xf32> to vector<2x256xbf16>
    %c0_151 = arith.constant 0 : index
    %c0_152 = arith.constant 0 : index
    %418 = vector.load %arg11[%c0_151, %c0_152] : memref<256x1024xbf16, #tpu.memory_space<vmem>>, vector<256x1024xbf16>
    %cst_153 = arith.constant dense<0.000000e+00> : vector<2x1024xf32>
    %419 = tpu.matmul %417, %418, %cst_153 {dimension_numbers = #tpu.dot_dimension_numbers<[1], [0], [0], [1], [0, 0, 1, 1], [], []>} : vector<2x256xbf16>, vector<256x1024xbf16>, vector<2x1024xf32> -> vector<2x1024xf32>
    %420 = vector.extract_strided_slice %419 {offsets = [0, 0], sizes = [2, 512], strides = [1, 1]} : vector<2x1024xf32> to vector<2x512xf32>
    %c14 = arith.constant 14 : index
    %c0_154 = arith.constant 0 : index
    %421 = vector.load %arg16[%c14, %c0_154] : memref<32x512xf32, #tpu.memory_space<vmem>>, vector<2x512xf32>
    %422 = arith.addf %420, %421 : vector<2x512xf32>
    %423 = vector.extract_strided_slice %422 {offsets = [0, 0], sizes = [2, 384], strides = [1, 1]} : vector<2x512xf32> to vector<2x384xf32>
    %cst_155 = arith.constant 5.000000e-01 : f32
    %424 = vector.broadcast %cst_155 : f32 to vector<2x384xf32>
    %425 = arith.mulf %424, %423 : vector<2x384xf32>
    %426 = math.tanh %425 : vector<2x384xf32>
    %cst_156 = arith.constant 5.000000e-01 : f32
    %427 = vector.broadcast %cst_156 : f32 to vector<2x384xf32>
    %428 = arith.mulf %427, %426 : vector<2x384xf32>
    %cst_157 = arith.constant 5.000000e-01 : f32
    %429 = vector.broadcast %cst_157 : f32 to vector<2x384xf32>
    %430 = arith.addf %428, %429 : vector<2x384xf32>
    %431 = vector.extract_strided_slice %430 {offsets = [0, 0], sizes = [2, 128], strides = [1, 1]} : vector<2x384xf32> to vector<2x128xf32>
    %432 = vector.extract_strided_slice %430 {offsets = [0, 128], sizes = [2, 128], strides = [1, 1]} : vector<2x384xf32> to vector<2x128xf32>
    %433 = vector.extract_strided_slice %430 {offsets = [0, 256], sizes = [2, 128], strides = [1, 1]} : vector<2x384xf32> to vector<2x128xf32>
    %434 = vector.extract_strided_slice %422 {offsets = [0, 384], sizes = [2, 128], strides = [1, 1]} : vector<2x512xf32> to vector<2x128xf32>
    %435 = math.tanh %434 : vector<2x128xf32>
    %436 = arith.mulf %432, %393 : vector<2x128xf32>
    %437 = arith.mulf %431, %435 : vector<2x128xf32>
    %438 = arith.addf %436, %437 : vector<2x128xf32>
    %439 = math.tanh %438 : vector<2x128xf32>
    %440 = arith.mulf %433, %439 : vector<2x128xf32>
    %441 = vector.extract_strided_slice %419 {offsets = [0, 512], sizes = [2, 512], strides = [1, 1]} : vector<2x1024xf32> to vector<2x512xf32>
    %442 = arith.addf %441, %125 : vector<2x512xf32>
    %443 = vector.extract_strided_slice %442 {offsets = [0, 0], sizes = [2, 384], strides = [1, 1]} : vector<2x512xf32> to vector<2x384xf32>
    %cst_158 = arith.constant 5.000000e-01 : f32
    %444 = vector.broadcast %cst_158 : f32 to vector<2x384xf32>
    %445 = arith.mulf %444, %443 : vector<2x384xf32>
    %446 = math.tanh %445 : vector<2x384xf32>
    %cst_159 = arith.constant 5.000000e-01 : f32
    %447 = vector.broadcast %cst_159 : f32 to vector<2x384xf32>
    %448 = arith.mulf %447, %446 : vector<2x384xf32>
    %cst_160 = arith.constant 5.000000e-01 : f32
    %449 = vector.broadcast %cst_160 : f32 to vector<2x384xf32>
    %450 = arith.addf %448, %449 : vector<2x384xf32>
    %451 = vector.extract_strided_slice %450 {offsets = [0, 0], sizes = [2, 128], strides = [1, 1]} : vector<2x384xf32> to vector<2x128xf32>
    %452 = vector.extract_strided_slice %450 {offsets = [0, 128], sizes = [2, 128], strides = [1, 1]} : vector<2x384xf32> to vector<2x128xf32>
    %453 = vector.extract_strided_slice %450 {offsets = [0, 256], sizes = [2, 128], strides = [1, 1]} : vector<2x384xf32> to vector<2x128xf32>
    %454 = vector.extract_strided_slice %442 {offsets = [0, 384], sizes = [2, 128], strides = [1, 1]} : vector<2x512xf32> to vector<2x128xf32>
    %455 = math.tanh %454 : vector<2x128xf32>
    %456 = arith.mulf %452, %413 : vector<2x128xf32>
    %457 = arith.mulf %451, %455 : vector<2x128xf32>
    %458 = arith.addf %456, %457 : vector<2x128xf32>
    %459 = math.tanh %458 : vector<2x128xf32>
    %460 = arith.mulf %453, %459 : vector<2x128xf32>
    %461 = tpu.concatenate %440, %460 in 1 : vector<2x128xf32>, vector<2x128xf32> -> vector<2x256xf32>
    %462 = arith.truncf %461 : vector<2x256xf32> to vector<2x256xbf16>
    %c0_161 = arith.constant 0 : index
    %c0_162 = arith.constant 0 : index
    %463 = vector.load %arg11[%c0_161, %c0_162] : memref<256x1024xbf16, #tpu.memory_space<vmem>>, vector<256x1024xbf16>
    %cst_163 = arith.constant dense<0.000000e+00> : vector<2x1024xf32>
    %464 = tpu.matmul %462, %463, %cst_163 {dimension_numbers = #tpu.dot_dimension_numbers<[1], [0], [0], [1], [0, 0, 1, 1], [], []>} : vector<2x256xbf16>, vector<256x1024xbf16>, vector<2x1024xf32> -> vector<2x1024xf32>
    %465 = vector.extract_strided_slice %464 {offsets = [0, 0], sizes = [2, 512], strides = [1, 1]} : vector<2x1024xf32> to vector<2x512xf32>
    %c16 = arith.constant 16 : index
    %c0_164 = arith.constant 0 : index
    %466 = vector.load %arg16[%c16, %c0_164] : memref<32x512xf32, #tpu.memory_space<vmem>>, vector<2x512xf32>
    %467 = arith.addf %465, %466 : vector<2x512xf32>
    %468 = vector.extract_strided_slice %467 {offsets = [0, 0], sizes = [2, 384], strides = [1, 1]} : vector<2x512xf32> to vector<2x384xf32>
    %cst_165 = arith.constant 5.000000e-01 : f32
    %469 = vector.broadcast %cst_165 : f32 to vector<2x384xf32>
    %470 = arith.mulf %469, %468 : vector<2x384xf32>
    %471 = math.tanh %470 : vector<2x384xf32>
    %cst_166 = arith.constant 5.000000e-01 : f32
    %472 = vector.broadcast %cst_166 : f32 to vector<2x384xf32>
    %473 = arith.mulf %472, %471 : vector<2x384xf32>
    %cst_167 = arith.constant 5.000000e-01 : f32
    %474 = vector.broadcast %cst_167 : f32 to vector<2x384xf32>
    %475 = arith.addf %473, %474 : vector<2x384xf32>
    %476 = vector.extract_strided_slice %475 {offsets = [0, 0], sizes = [2, 128], strides = [1, 1]} : vector<2x384xf32> to vector<2x128xf32>
    %477 = vector.extract_strided_slice %475 {offsets = [0, 128], sizes = [2, 128], strides = [1, 1]} : vector<2x384xf32> to vector<2x128xf32>
    %478 = vector.extract_strided_slice %475 {offsets = [0, 256], sizes = [2, 128], strides = [1, 1]} : vector<2x384xf32> to vector<2x128xf32>
    %479 = vector.extract_strided_slice %467 {offsets = [0, 384], sizes = [2, 128], strides = [1, 1]} : vector<2x512xf32> to vector<2x128xf32>
    %480 = math.tanh %479 : vector<2x128xf32>
    %481 = arith.mulf %477, %438 : vector<2x128xf32>
    %482 = arith.mulf %476, %480 : vector<2x128xf32>
    %483 = arith.addf %481, %482 : vector<2x128xf32>
    %484 = math.tanh %483 : vector<2x128xf32>
    %485 = arith.mulf %478, %484 : vector<2x128xf32>
    %486 = vector.extract_strided_slice %464 {offsets = [0, 512], sizes = [2, 512], strides = [1, 1]} : vector<2x1024xf32> to vector<2x512xf32>
    %487 = arith.addf %486, %125 : vector<2x512xf32>
    %488 = vector.extract_strided_slice %487 {offsets = [0, 0], sizes = [2, 384], strides = [1, 1]} : vector<2x512xf32> to vector<2x384xf32>
    %cst_168 = arith.constant 5.000000e-01 : f32
    %489 = vector.broadcast %cst_168 : f32 to vector<2x384xf32>
    %490 = arith.mulf %489, %488 : vector<2x384xf32>
    %491 = math.tanh %490 : vector<2x384xf32>
    %cst_169 = arith.constant 5.000000e-01 : f32
    %492 = vector.broadcast %cst_169 : f32 to vector<2x384xf32>
    %493 = arith.mulf %492, %491 : vector<2x384xf32>
    %cst_170 = arith.constant 5.000000e-01 : f32
    %494 = vector.broadcast %cst_170 : f32 to vector<2x384xf32>
    %495 = arith.addf %493, %494 : vector<2x384xf32>
    %496 = vector.extract_strided_slice %495 {offsets = [0, 0], sizes = [2, 128], strides = [1, 1]} : vector<2x384xf32> to vector<2x128xf32>
    %497 = vector.extract_strided_slice %495 {offsets = [0, 128], sizes = [2, 128], strides = [1, 1]} : vector<2x384xf32> to vector<2x128xf32>
    %498 = vector.extract_strided_slice %495 {offsets = [0, 256], sizes = [2, 128], strides = [1, 1]} : vector<2x384xf32> to vector<2x128xf32>
    %499 = vector.extract_strided_slice %487 {offsets = [0, 384], sizes = [2, 128], strides = [1, 1]} : vector<2x512xf32> to vector<2x128xf32>
    %500 = math.tanh %499 : vector<2x128xf32>
    %501 = arith.mulf %497, %458 : vector<2x128xf32>
    %502 = arith.mulf %496, %500 : vector<2x128xf32>
    %503 = arith.addf %501, %502 : vector<2x128xf32>
    %504 = math.tanh %503 : vector<2x128xf32>
    %505 = arith.mulf %498, %504 : vector<2x128xf32>
    %506 = tpu.concatenate %485, %505 in 1 : vector<2x128xf32>, vector<2x128xf32> -> vector<2x256xf32>
    %507 = arith.truncf %506 : vector<2x256xf32> to vector<2x256xbf16>
    %c0_171 = arith.constant 0 : index
    %c0_172 = arith.constant 0 : index
    %508 = vector.load %arg11[%c0_171, %c0_172] : memref<256x1024xbf16, #tpu.memory_space<vmem>>, vector<256x1024xbf16>
    %cst_173 = arith.constant dense<0.000000e+00> : vector<2x1024xf32>
    %509 = tpu.matmul %507, %508, %cst_173 {dimension_numbers = #tpu.dot_dimension_numbers<[1], [0], [0], [1], [0, 0, 1, 1], [], []>} : vector<2x256xbf16>, vector<256x1024xbf16>, vector<2x1024xf32> -> vector<2x1024xf32>
    %510 = vector.extract_strided_slice %509 {offsets = [0, 0], sizes = [2, 512], strides = [1, 1]} : vector<2x1024xf32> to vector<2x512xf32>
    %c18 = arith.constant 18 : index
    %c0_174 = arith.constant 0 : index
    %511 = vector.load %arg16[%c18, %c0_174] : memref<32x512xf32, #tpu.memory_space<vmem>>, vector<2x512xf32>
    %512 = arith.addf %510, %511 : vector<2x512xf32>
    %513 = vector.extract_strided_slice %512 {offsets = [0, 0], sizes = [2, 384], strides = [1, 1]} : vector<2x512xf32> to vector<2x384xf32>
    %cst_175 = arith.constant 5.000000e-01 : f32
    %514 = vector.broadcast %cst_175 : f32 to vector<2x384xf32>
    %515 = arith.mulf %514, %513 : vector<2x384xf32>
    %516 = math.tanh %515 : vector<2x384xf32>
    %cst_176 = arith.constant 5.000000e-01 : f32
    %517 = vector.broadcast %cst_176 : f32 to vector<2x384xf32>
    %518 = arith.mulf %517, %516 : vector<2x384xf32>
    %cst_177 = arith.constant 5.000000e-01 : f32
    %519 = vector.broadcast %cst_177 : f32 to vector<2x384xf32>
    %520 = arith.addf %518, %519 : vector<2x384xf32>
    %521 = vector.extract_strided_slice %520 {offsets = [0, 0], sizes = [2, 128], strides = [1, 1]} : vector<2x384xf32> to vector<2x128xf32>
    %522 = vector.extract_strided_slice %520 {offsets = [0, 128], sizes = [2, 128], strides = [1, 1]} : vector<2x384xf32> to vector<2x128xf32>
    %523 = vector.extract_strided_slice %520 {offsets = [0, 256], sizes = [2, 128], strides = [1, 1]} : vector<2x384xf32> to vector<2x128xf32>
    %524 = vector.extract_strided_slice %512 {offsets = [0, 384], sizes = [2, 128], strides = [1, 1]} : vector<2x512xf32> to vector<2x128xf32>
    %525 = math.tanh %524 : vector<2x128xf32>
    %526 = arith.mulf %522, %483 : vector<2x128xf32>
    %527 = arith.mulf %521, %525 : vector<2x128xf32>
    %528 = arith.addf %526, %527 : vector<2x128xf32>
    %529 = math.tanh %528 : vector<2x128xf32>
    %530 = arith.mulf %523, %529 : vector<2x128xf32>
    %531 = vector.extract_strided_slice %509 {offsets = [0, 512], sizes = [2, 512], strides = [1, 1]} : vector<2x1024xf32> to vector<2x512xf32>
    %532 = arith.addf %531, %125 : vector<2x512xf32>
    %533 = vector.extract_strided_slice %532 {offsets = [0, 0], sizes = [2, 384], strides = [1, 1]} : vector<2x512xf32> to vector<2x384xf32>
    %cst_178 = arith.constant 5.000000e-01 : f32
    %534 = vector.broadcast %cst_178 : f32 to vector<2x384xf32>
    %535 = arith.mulf %534, %533 : vector<2x384xf32>
    %536 = math.tanh %535 : vector<2x384xf32>
    %cst_179 = arith.constant 5.000000e-01 : f32
    %537 = vector.broadcast %cst_179 : f32 to vector<2x384xf32>
    %538 = arith.mulf %537, %536 : vector<2x384xf32>
    %cst_180 = arith.constant 5.000000e-01 : f32
    %539 = vector.broadcast %cst_180 : f32 to vector<2x384xf32>
    %540 = arith.addf %538, %539 : vector<2x384xf32>
    %541 = vector.extract_strided_slice %540 {offsets = [0, 0], sizes = [2, 128], strides = [1, 1]} : vector<2x384xf32> to vector<2x128xf32>
    %542 = vector.extract_strided_slice %540 {offsets = [0, 128], sizes = [2, 128], strides = [1, 1]} : vector<2x384xf32> to vector<2x128xf32>
    %543 = vector.extract_strided_slice %540 {offsets = [0, 256], sizes = [2, 128], strides = [1, 1]} : vector<2x384xf32> to vector<2x128xf32>
    %544 = vector.extract_strided_slice %532 {offsets = [0, 384], sizes = [2, 128], strides = [1, 1]} : vector<2x512xf32> to vector<2x128xf32>
    %545 = math.tanh %544 : vector<2x128xf32>
    %546 = arith.mulf %542, %503 : vector<2x128xf32>
    %547 = arith.mulf %541, %545 : vector<2x128xf32>
    %548 = arith.addf %546, %547 : vector<2x128xf32>
    %549 = math.tanh %548 : vector<2x128xf32>
    %550 = arith.mulf %543, %549 : vector<2x128xf32>
    %551 = tpu.concatenate %530, %550 in 1 : vector<2x128xf32>, vector<2x128xf32> -> vector<2x256xf32>
    %552 = arith.truncf %551 : vector<2x256xf32> to vector<2x256xbf16>
    %c0_181 = arith.constant 0 : index
    %c0_182 = arith.constant 0 : index
    %553 = vector.load %arg11[%c0_181, %c0_182] : memref<256x1024xbf16, #tpu.memory_space<vmem>>, vector<256x1024xbf16>
    %cst_183 = arith.constant dense<0.000000e+00> : vector<2x1024xf32>
    %554 = tpu.matmul %552, %553, %cst_183 {dimension_numbers = #tpu.dot_dimension_numbers<[1], [0], [0], [1], [0, 0, 1, 1], [], []>} : vector<2x256xbf16>, vector<256x1024xbf16>, vector<2x1024xf32> -> vector<2x1024xf32>
    %555 = vector.extract_strided_slice %554 {offsets = [0, 0], sizes = [2, 512], strides = [1, 1]} : vector<2x1024xf32> to vector<2x512xf32>
    %c20 = arith.constant 20 : index
    %c0_184 = arith.constant 0 : index
    %556 = vector.load %arg16[%c20, %c0_184] : memref<32x512xf32, #tpu.memory_space<vmem>>, vector<2x512xf32>
    %557 = arith.addf %555, %556 : vector<2x512xf32>
    %558 = vector.extract_strided_slice %557 {offsets = [0, 0], sizes = [2, 384], strides = [1, 1]} : vector<2x512xf32> to vector<2x384xf32>
    %cst_185 = arith.constant 5.000000e-01 : f32
    %559 = vector.broadcast %cst_185 : f32 to vector<2x384xf32>
    %560 = arith.mulf %559, %558 : vector<2x384xf32>
    %561 = math.tanh %560 : vector<2x384xf32>
    %cst_186 = arith.constant 5.000000e-01 : f32
    %562 = vector.broadcast %cst_186 : f32 to vector<2x384xf32>
    %563 = arith.mulf %562, %561 : vector<2x384xf32>
    %cst_187 = arith.constant 5.000000e-01 : f32
    %564 = vector.broadcast %cst_187 : f32 to vector<2x384xf32>
    %565 = arith.addf %563, %564 : vector<2x384xf32>
    %566 = vector.extract_strided_slice %565 {offsets = [0, 0], sizes = [2, 128], strides = [1, 1]} : vector<2x384xf32> to vector<2x128xf32>
    %567 = vector.extract_strided_slice %565 {offsets = [0, 128], sizes = [2, 128], strides = [1, 1]} : vector<2x384xf32> to vector<2x128xf32>
    %568 = vector.extract_strided_slice %565 {offsets = [0, 256], sizes = [2, 128], strides = [1, 1]} : vector<2x384xf32> to vector<2x128xf32>
    %569 = vector.extract_strided_slice %557 {offsets = [0, 384], sizes = [2, 128], strides = [1, 1]} : vector<2x512xf32> to vector<2x128xf32>
    %570 = math.tanh %569 : vector<2x128xf32>
    %571 = arith.mulf %567, %528 : vector<2x128xf32>
    %572 = arith.mulf %566, %570 : vector<2x128xf32>
    %573 = arith.addf %571, %572 : vector<2x128xf32>
    %574 = math.tanh %573 : vector<2x128xf32>
    %575 = arith.mulf %568, %574 : vector<2x128xf32>
    %576 = vector.extract_strided_slice %554 {offsets = [0, 512], sizes = [2, 512], strides = [1, 1]} : vector<2x1024xf32> to vector<2x512xf32>
    %577 = arith.addf %576, %125 : vector<2x512xf32>
    %578 = vector.extract_strided_slice %577 {offsets = [0, 0], sizes = [2, 384], strides = [1, 1]} : vector<2x512xf32> to vector<2x384xf32>
    %cst_188 = arith.constant 5.000000e-01 : f32
    %579 = vector.broadcast %cst_188 : f32 to vector<2x384xf32>
    %580 = arith.mulf %579, %578 : vector<2x384xf32>
    %581 = math.tanh %580 : vector<2x384xf32>
    %cst_189 = arith.constant 5.000000e-01 : f32
    %582 = vector.broadcast %cst_189 : f32 to vector<2x384xf32>
    %583 = arith.mulf %582, %581 : vector<2x384xf32>
    %cst_190 = arith.constant 5.000000e-01 : f32
    %584 = vector.broadcast %cst_190 : f32 to vector<2x384xf32>
    %585 = arith.addf %583, %584 : vector<2x384xf32>
    %586 = vector.extract_strided_slice %585 {offsets = [0, 0], sizes = [2, 128], strides = [1, 1]} : vector<2x384xf32> to vector<2x128xf32>
    %587 = vector.extract_strided_slice %585 {offsets = [0, 128], sizes = [2, 128], strides = [1, 1]} : vector<2x384xf32> to vector<2x128xf32>
    %588 = vector.extract_strided_slice %585 {offsets = [0, 256], sizes = [2, 128], strides = [1, 1]} : vector<2x384xf32> to vector<2x128xf32>
    %589 = vector.extract_strided_slice %577 {offsets = [0, 384], sizes = [2, 128], strides = [1, 1]} : vector<2x512xf32> to vector<2x128xf32>
    %590 = math.tanh %589 : vector<2x128xf32>
    %591 = arith.mulf %587, %548 : vector<2x128xf32>
    %592 = arith.mulf %586, %590 : vector<2x128xf32>
    %593 = arith.addf %591, %592 : vector<2x128xf32>
    %594 = math.tanh %593 : vector<2x128xf32>
    %595 = arith.mulf %588, %594 : vector<2x128xf32>
    %596 = tpu.concatenate %575, %595 in 1 : vector<2x128xf32>, vector<2x128xf32> -> vector<2x256xf32>
    %597 = arith.truncf %596 : vector<2x256xf32> to vector<2x256xbf16>
    %c0_191 = arith.constant 0 : index
    %c0_192 = arith.constant 0 : index
    %598 = vector.load %arg11[%c0_191, %c0_192] : memref<256x1024xbf16, #tpu.memory_space<vmem>>, vector<256x1024xbf16>
    %cst_193 = arith.constant dense<0.000000e+00> : vector<2x1024xf32>
    %599 = tpu.matmul %597, %598, %cst_193 {dimension_numbers = #tpu.dot_dimension_numbers<[1], [0], [0], [1], [0, 0, 1, 1], [], []>} : vector<2x256xbf16>, vector<256x1024xbf16>, vector<2x1024xf32> -> vector<2x1024xf32>
    %600 = vector.extract_strided_slice %599 {offsets = [0, 0], sizes = [2, 512], strides = [1, 1]} : vector<2x1024xf32> to vector<2x512xf32>
    %c22 = arith.constant 22 : index
    %c0_194 = arith.constant 0 : index
    %601 = vector.load %arg16[%c22, %c0_194] : memref<32x512xf32, #tpu.memory_space<vmem>>, vector<2x512xf32>
    %602 = arith.addf %600, %601 : vector<2x512xf32>
    %603 = vector.extract_strided_slice %602 {offsets = [0, 0], sizes = [2, 384], strides = [1, 1]} : vector<2x512xf32> to vector<2x384xf32>
    %cst_195 = arith.constant 5.000000e-01 : f32
    %604 = vector.broadcast %cst_195 : f32 to vector<2x384xf32>
    %605 = arith.mulf %604, %603 : vector<2x384xf32>
    %606 = math.tanh %605 : vector<2x384xf32>
    %cst_196 = arith.constant 5.000000e-01 : f32
    %607 = vector.broadcast %cst_196 : f32 to vector<2x384xf32>
    %608 = arith.mulf %607, %606 : vector<2x384xf32>
    %cst_197 = arith.constant 5.000000e-01 : f32
    %609 = vector.broadcast %cst_197 : f32 to vector<2x384xf32>
    %610 = arith.addf %608, %609 : vector<2x384xf32>
    %611 = vector.extract_strided_slice %610 {offsets = [0, 0], sizes = [2, 128], strides = [1, 1]} : vector<2x384xf32> to vector<2x128xf32>
    %612 = vector.extract_strided_slice %610 {offsets = [0, 128], sizes = [2, 128], strides = [1, 1]} : vector<2x384xf32> to vector<2x128xf32>
    %613 = vector.extract_strided_slice %610 {offsets = [0, 256], sizes = [2, 128], strides = [1, 1]} : vector<2x384xf32> to vector<2x128xf32>
    %614 = vector.extract_strided_slice %602 {offsets = [0, 384], sizes = [2, 128], strides = [1, 1]} : vector<2x512xf32> to vector<2x128xf32>
    %615 = math.tanh %614 : vector<2x128xf32>
    %616 = arith.mulf %612, %573 : vector<2x128xf32>
    %617 = arith.mulf %611, %615 : vector<2x128xf32>
    %618 = arith.addf %616, %617 : vector<2x128xf32>
    %619 = math.tanh %618 : vector<2x128xf32>
    %620 = arith.mulf %613, %619 : vector<2x128xf32>
    %621 = vector.extract_strided_slice %599 {offsets = [0, 512], sizes = [2, 512], strides = [1, 1]} : vector<2x1024xf32> to vector<2x512xf32>
    %622 = arith.addf %621, %125 : vector<2x512xf32>
    %623 = vector.extract_strided_slice %622 {offsets = [0, 0], sizes = [2, 384], strides = [1, 1]} : vector<2x512xf32> to vector<2x384xf32>
    %cst_198 = arith.constant 5.000000e-01 : f32
    %624 = vector.broadcast %cst_198 : f32 to vector<2x384xf32>
    %625 = arith.mulf %624, %623 : vector<2x384xf32>
    %626 = math.tanh %625 : vector<2x384xf32>
    %cst_199 = arith.constant 5.000000e-01 : f32
    %627 = vector.broadcast %cst_199 : f32 to vector<2x384xf32>
    %628 = arith.mulf %627, %626 : vector<2x384xf32>
    %cst_200 = arith.constant 5.000000e-01 : f32
    %629 = vector.broadcast %cst_200 : f32 to vector<2x384xf32>
    %630 = arith.addf %628, %629 : vector<2x384xf32>
    %631 = vector.extract_strided_slice %630 {offsets = [0, 0], sizes = [2, 128], strides = [1, 1]} : vector<2x384xf32> to vector<2x128xf32>
    %632 = vector.extract_strided_slice %630 {offsets = [0, 128], sizes = [2, 128], strides = [1, 1]} : vector<2x384xf32> to vector<2x128xf32>
    %633 = vector.extract_strided_slice %630 {offsets = [0, 256], sizes = [2, 128], strides = [1, 1]} : vector<2x384xf32> to vector<2x128xf32>
    %634 = vector.extract_strided_slice %622 {offsets = [0, 384], sizes = [2, 128], strides = [1, 1]} : vector<2x512xf32> to vector<2x128xf32>
    %635 = math.tanh %634 : vector<2x128xf32>
    %636 = arith.mulf %632, %593 : vector<2x128xf32>
    %637 = arith.mulf %631, %635 : vector<2x128xf32>
    %638 = arith.addf %636, %637 : vector<2x128xf32>
    %639 = math.tanh %638 : vector<2x128xf32>
    %640 = arith.mulf %633, %639 : vector<2x128xf32>
    %641 = tpu.concatenate %620, %640 in 1 : vector<2x128xf32>, vector<2x128xf32> -> vector<2x256xf32>
    %642 = arith.truncf %641 : vector<2x256xf32> to vector<2x256xbf16>
    %c0_201 = arith.constant 0 : index
    %c0_202 = arith.constant 0 : index
    %643 = vector.load %arg11[%c0_201, %c0_202] : memref<256x1024xbf16, #tpu.memory_space<vmem>>, vector<256x1024xbf16>
    %cst_203 = arith.constant dense<0.000000e+00> : vector<2x1024xf32>
    %644 = tpu.matmul %642, %643, %cst_203 {dimension_numbers = #tpu.dot_dimension_numbers<[1], [0], [0], [1], [0, 0, 1, 1], [], []>} : vector<2x256xbf16>, vector<256x1024xbf16>, vector<2x1024xf32> -> vector<2x1024xf32>
    %645 = vector.extract_strided_slice %644 {offsets = [0, 0], sizes = [2, 512], strides = [1, 1]} : vector<2x1024xf32> to vector<2x512xf32>
    %c24 = arith.constant 24 : index
    %c0_204 = arith.constant 0 : index
    %646 = vector.load %arg16[%c24, %c0_204] : memref<32x512xf32, #tpu.memory_space<vmem>>, vector<2x512xf32>
    %647 = arith.addf %645, %646 : vector<2x512xf32>
    %648 = vector.extract_strided_slice %647 {offsets = [0, 0], sizes = [2, 384], strides = [1, 1]} : vector<2x512xf32> to vector<2x384xf32>
    %cst_205 = arith.constant 5.000000e-01 : f32
    %649 = vector.broadcast %cst_205 : f32 to vector<2x384xf32>
    %650 = arith.mulf %649, %648 : vector<2x384xf32>
    %651 = math.tanh %650 : vector<2x384xf32>
    %cst_206 = arith.constant 5.000000e-01 : f32
    %652 = vector.broadcast %cst_206 : f32 to vector<2x384xf32>
    %653 = arith.mulf %652, %651 : vector<2x384xf32>
    %cst_207 = arith.constant 5.000000e-01 : f32
    %654 = vector.broadcast %cst_207 : f32 to vector<2x384xf32>
    %655 = arith.addf %653, %654 : vector<2x384xf32>
    %656 = vector.extract_strided_slice %655 {offsets = [0, 0], sizes = [2, 128], strides = [1, 1]} : vector<2x384xf32> to vector<2x128xf32>
    %657 = vector.extract_strided_slice %655 {offsets = [0, 128], sizes = [2, 128], strides = [1, 1]} : vector<2x384xf32> to vector<2x128xf32>
    %658 = vector.extract_strided_slice %655 {offsets = [0, 256], sizes = [2, 128], strides = [1, 1]} : vector<2x384xf32> to vector<2x128xf32>
    %659 = vector.extract_strided_slice %647 {offsets = [0, 384], sizes = [2, 128], strides = [1, 1]} : vector<2x512xf32> to vector<2x128xf32>
    %660 = math.tanh %659 : vector<2x128xf32>
    %661 = arith.mulf %657, %618 : vector<2x128xf32>
    %662 = arith.mulf %656, %660 : vector<2x128xf32>
    %663 = arith.addf %661, %662 : vector<2x128xf32>
    %664 = math.tanh %663 : vector<2x128xf32>
    %665 = arith.mulf %658, %664 : vector<2x128xf32>
    %666 = vector.extract_strided_slice %644 {offsets = [0, 512], sizes = [2, 512], strides = [1, 1]} : vector<2x1024xf32> to vector<2x512xf32>
    %667 = arith.addf %666, %125 : vector<2x512xf32>
    %668 = vector.extract_strided_slice %667 {offsets = [0, 0], sizes = [2, 384], strides = [1, 1]} : vector<2x512xf32> to vector<2x384xf32>
    %cst_208 = arith.constant 5.000000e-01 : f32
    %669 = vector.broadcast %cst_208 : f32 to vector<2x384xf32>
    %670 = arith.mulf %669, %668 : vector<2x384xf32>
    %671 = math.tanh %670 : vector<2x384xf32>
    %cst_209 = arith.constant 5.000000e-01 : f32
    %672 = vector.broadcast %cst_209 : f32 to vector<2x384xf32>
    %673 = arith.mulf %672, %671 : vector<2x384xf32>
    %cst_210 = arith.constant 5.000000e-01 : f32
    %674 = vector.broadcast %cst_210 : f32 to vector<2x384xf32>
    %675 = arith.addf %673, %674 : vector<2x384xf32>
    %676 = vector.extract_strided_slice %675 {offsets = [0, 0], sizes = [2, 128], strides = [1, 1]} : vector<2x384xf32> to vector<2x128xf32>
    %677 = vector.extract_strided_slice %675 {offsets = [0, 128], sizes = [2, 128], strides = [1, 1]} : vector<2x384xf32> to vector<2x128xf32>
    %678 = vector.extract_strided_slice %675 {offsets = [0, 256], sizes = [2, 128], strides = [1, 1]} : vector<2x384xf32> to vector<2x128xf32>
    %679 = vector.extract_strided_slice %667 {offsets = [0, 384], sizes = [2, 128], strides = [1, 1]} : vector<2x512xf32> to vector<2x128xf32>
    %680 = math.tanh %679 : vector<2x128xf32>
    %681 = arith.mulf %677, %638 : vector<2x128xf32>
    %682 = arith.mulf %676, %680 : vector<2x128xf32>
    %683 = arith.addf %681, %682 : vector<2x128xf32>
    %684 = math.tanh %683 : vector<2x128xf32>
    %685 = arith.mulf %678, %684 : vector<2x128xf32>
    %686 = tpu.concatenate %665, %685 in 1 : vector<2x128xf32>, vector<2x128xf32> -> vector<2x256xf32>
    %687 = arith.truncf %686 : vector<2x256xf32> to vector<2x256xbf16>
    %c0_211 = arith.constant 0 : index
    %c0_212 = arith.constant 0 : index
    %688 = vector.load %arg11[%c0_211, %c0_212] : memref<256x1024xbf16, #tpu.memory_space<vmem>>, vector<256x1024xbf16>
    %cst_213 = arith.constant dense<0.000000e+00> : vector<2x1024xf32>
    %689 = tpu.matmul %687, %688, %cst_213 {dimension_numbers = #tpu.dot_dimension_numbers<[1], [0], [0], [1], [0, 0, 1, 1], [], []>} : vector<2x256xbf16>, vector<256x1024xbf16>, vector<2x1024xf32> -> vector<2x1024xf32>
    %690 = vector.extract_strided_slice %689 {offsets = [0, 0], sizes = [2, 512], strides = [1, 1]} : vector<2x1024xf32> to vector<2x512xf32>
    %c26 = arith.constant 26 : index
    %c0_214 = arith.constant 0 : index
    %691 = vector.load %arg16[%c26, %c0_214] : memref<32x512xf32, #tpu.memory_space<vmem>>, vector<2x512xf32>
    %692 = arith.addf %690, %691 : vector<2x512xf32>
    %693 = vector.extract_strided_slice %692 {offsets = [0, 0], sizes = [2, 384], strides = [1, 1]} : vector<2x512xf32> to vector<2x384xf32>
    %cst_215 = arith.constant 5.000000e-01 : f32
    %694 = vector.broadcast %cst_215 : f32 to vector<2x384xf32>
    %695 = arith.mulf %694, %693 : vector<2x384xf32>
    %696 = math.tanh %695 : vector<2x384xf32>
    %cst_216 = arith.constant 5.000000e-01 : f32
    %697 = vector.broadcast %cst_216 : f32 to vector<2x384xf32>
    %698 = arith.mulf %697, %696 : vector<2x384xf32>
    %cst_217 = arith.constant 5.000000e-01 : f32
    %699 = vector.broadcast %cst_217 : f32 to vector<2x384xf32>
    %700 = arith.addf %698, %699 : vector<2x384xf32>
    %701 = vector.extract_strided_slice %700 {offsets = [0, 0], sizes = [2, 128], strides = [1, 1]} : vector<2x384xf32> to vector<2x128xf32>
    %702 = vector.extract_strided_slice %700 {offsets = [0, 128], sizes = [2, 128], strides = [1, 1]} : vector<2x384xf32> to vector<2x128xf32>
    %703 = vector.extract_strided_slice %700 {offsets = [0, 256], sizes = [2, 128], strides = [1, 1]} : vector<2x384xf32> to vector<2x128xf32>
    %704 = vector.extract_strided_slice %692 {offsets = [0, 384], sizes = [2, 128], strides = [1, 1]} : vector<2x512xf32> to vector<2x128xf32>
    %705 = math.tanh %704 : vector<2x128xf32>
    %706 = arith.mulf %702, %663 : vector<2x128xf32>
    %707 = arith.mulf %701, %705 : vector<2x128xf32>
    %708 = arith.addf %706, %707 : vector<2x128xf32>
    %709 = math.tanh %708 : vector<2x128xf32>
    %710 = arith.mulf %703, %709 : vector<2x128xf32>
    %711 = vector.extract_strided_slice %689 {offsets = [0, 512], sizes = [2, 512], strides = [1, 1]} : vector<2x1024xf32> to vector<2x512xf32>
    %712 = arith.addf %711, %125 : vector<2x512xf32>
    %713 = vector.extract_strided_slice %712 {offsets = [0, 0], sizes = [2, 384], strides = [1, 1]} : vector<2x512xf32> to vector<2x384xf32>
    %cst_218 = arith.constant 5.000000e-01 : f32
    %714 = vector.broadcast %cst_218 : f32 to vector<2x384xf32>
    %715 = arith.mulf %714, %713 : vector<2x384xf32>
    %716 = math.tanh %715 : vector<2x384xf32>
    %cst_219 = arith.constant 5.000000e-01 : f32
    %717 = vector.broadcast %cst_219 : f32 to vector<2x384xf32>
    %718 = arith.mulf %717, %716 : vector<2x384xf32>
    %cst_220 = arith.constant 5.000000e-01 : f32
    %719 = vector.broadcast %cst_220 : f32 to vector<2x384xf32>
    %720 = arith.addf %718, %719 : vector<2x384xf32>
    %721 = vector.extract_strided_slice %720 {offsets = [0, 0], sizes = [2, 128], strides = [1, 1]} : vector<2x384xf32> to vector<2x128xf32>
    %722 = vector.extract_strided_slice %720 {offsets = [0, 128], sizes = [2, 128], strides = [1, 1]} : vector<2x384xf32> to vector<2x128xf32>
    %723 = vector.extract_strided_slice %720 {offsets = [0, 256], sizes = [2, 128], strides = [1, 1]} : vector<2x384xf32> to vector<2x128xf32>
    %724 = vector.extract_strided_slice %712 {offsets = [0, 384], sizes = [2, 128], strides = [1, 1]} : vector<2x512xf32> to vector<2x128xf32>
    %725 = math.tanh %724 : vector<2x128xf32>
    %726 = arith.mulf %722, %683 : vector<2x128xf32>
    %727 = arith.mulf %721, %725 : vector<2x128xf32>
    %728 = arith.addf %726, %727 : vector<2x128xf32>
    %729 = math.tanh %728 : vector<2x128xf32>
    %730 = arith.mulf %723, %729 : vector<2x128xf32>
    %731 = tpu.concatenate %710, %730 in 1 : vector<2x128xf32>, vector<2x128xf32> -> vector<2x256xf32>
    %732 = arith.truncf %731 : vector<2x256xf32> to vector<2x256xbf16>
    %c0_221 = arith.constant 0 : index
    %c0_222 = arith.constant 0 : index
    %733 = vector.load %arg11[%c0_221, %c0_222] : memref<256x1024xbf16, #tpu.memory_space<vmem>>, vector<256x1024xbf16>
    %cst_223 = arith.constant dense<0.000000e+00> : vector<2x1024xf32>
    %734 = tpu.matmul %732, %733, %cst_223 {dimension_numbers = #tpu.dot_dimension_numbers<[1], [0], [0], [1], [0, 0, 1, 1], [], []>} : vector<2x256xbf16>, vector<256x1024xbf16>, vector<2x1024xf32> -> vector<2x1024xf32>
    %735 = vector.extract_strided_slice %734 {offsets = [0, 0], sizes = [2, 512], strides = [1, 1]} : vector<2x1024xf32> to vector<2x512xf32>
    %c28 = arith.constant 28 : index
    %c0_224 = arith.constant 0 : index
    %736 = vector.load %arg16[%c28, %c0_224] : memref<32x512xf32, #tpu.memory_space<vmem>>, vector<2x512xf32>
    %737 = arith.addf %735, %736 : vector<2x512xf32>
    %738 = vector.extract_strided_slice %737 {offsets = [0, 0], sizes = [2, 384], strides = [1, 1]} : vector<2x512xf32> to vector<2x384xf32>
    %cst_225 = arith.constant 5.000000e-01 : f32
    %739 = vector.broadcast %cst_225 : f32 to vector<2x384xf32>
    %740 = arith.mulf %739, %738 : vector<2x384xf32>
    %741 = math.tanh %740 : vector<2x384xf32>
    %cst_226 = arith.constant 5.000000e-01 : f32
    %742 = vector.broadcast %cst_226 : f32 to vector<2x384xf32>
    %743 = arith.mulf %742, %741 : vector<2x384xf32>
    %cst_227 = arith.constant 5.000000e-01 : f32
    %744 = vector.broadcast %cst_227 : f32 to vector<2x384xf32>
    %745 = arith.addf %743, %744 : vector<2x384xf32>
    %746 = vector.extract_strided_slice %745 {offsets = [0, 0], sizes = [2, 128], strides = [1, 1]} : vector<2x384xf32> to vector<2x128xf32>
    %747 = vector.extract_strided_slice %745 {offsets = [0, 128], sizes = [2, 128], strides = [1, 1]} : vector<2x384xf32> to vector<2x128xf32>
    %748 = vector.extract_strided_slice %745 {offsets = [0, 256], sizes = [2, 128], strides = [1, 1]} : vector<2x384xf32> to vector<2x128xf32>
    %749 = vector.extract_strided_slice %737 {offsets = [0, 384], sizes = [2, 128], strides = [1, 1]} : vector<2x512xf32> to vector<2x128xf32>
    %750 = math.tanh %749 : vector<2x128xf32>
    %751 = arith.mulf %747, %708 : vector<2x128xf32>
    %752 = arith.mulf %746, %750 : vector<2x128xf32>
    %753 = arith.addf %751, %752 : vector<2x128xf32>
    %754 = math.tanh %753 : vector<2x128xf32>
    %755 = arith.mulf %748, %754 : vector<2x128xf32>
    %756 = vector.extract_strided_slice %734 {offsets = [0, 512], sizes = [2, 512], strides = [1, 1]} : vector<2x1024xf32> to vector<2x512xf32>
    %757 = arith.addf %756, %125 : vector<2x512xf32>
    %758 = vector.extract_strided_slice %757 {offsets = [0, 0], sizes = [2, 384], strides = [1, 1]} : vector<2x512xf32> to vector<2x384xf32>
    %cst_228 = arith.constant 5.000000e-01 : f32
    %759 = vector.broadcast %cst_228 : f32 to vector<2x384xf32>
    %760 = arith.mulf %759, %758 : vector<2x384xf32>
    %761 = math.tanh %760 : vector<2x384xf32>
    %cst_229 = arith.constant 5.000000e-01 : f32
    %762 = vector.broadcast %cst_229 : f32 to vector<2x384xf32>
    %763 = arith.mulf %762, %761 : vector<2x384xf32>
    %cst_230 = arith.constant 5.000000e-01 : f32
    %764 = vector.broadcast %cst_230 : f32 to vector<2x384xf32>
    %765 = arith.addf %763, %764 : vector<2x384xf32>
    %766 = vector.extract_strided_slice %765 {offsets = [0, 0], sizes = [2, 128], strides = [1, 1]} : vector<2x384xf32> to vector<2x128xf32>
    %767 = vector.extract_strided_slice %765 {offsets = [0, 128], sizes = [2, 128], strides = [1, 1]} : vector<2x384xf32> to vector<2x128xf32>
    %768 = vector.extract_strided_slice %765 {offsets = [0, 256], sizes = [2, 128], strides = [1, 1]} : vector<2x384xf32> to vector<2x128xf32>
    %769 = vector.extract_strided_slice %757 {offsets = [0, 384], sizes = [2, 128], strides = [1, 1]} : vector<2x512xf32> to vector<2x128xf32>
    %770 = math.tanh %769 : vector<2x128xf32>
    %771 = arith.mulf %767, %728 : vector<2x128xf32>
    %772 = arith.mulf %766, %770 : vector<2x128xf32>
    %773 = arith.addf %771, %772 : vector<2x128xf32>
    %774 = math.tanh %773 : vector<2x128xf32>
    %775 = arith.mulf %768, %774 : vector<2x128xf32>
    %776 = tpu.concatenate %755, %775 in 1 : vector<2x128xf32>, vector<2x128xf32> -> vector<2x256xf32>
    %777 = arith.truncf %776 : vector<2x256xf32> to vector<2x256xbf16>
    %c0_231 = arith.constant 0 : index
    %c0_232 = arith.constant 0 : index
    %778 = vector.load %arg11[%c0_231, %c0_232] : memref<256x1024xbf16, #tpu.memory_space<vmem>>, vector<256x1024xbf16>
    %cst_233 = arith.constant dense<0.000000e+00> : vector<2x1024xf32>
    %779 = tpu.matmul %777, %778, %cst_233 {dimension_numbers = #tpu.dot_dimension_numbers<[1], [0], [0], [1], [0, 0, 1, 1], [], []>} : vector<2x256xbf16>, vector<256x1024xbf16>, vector<2x1024xf32> -> vector<2x1024xf32>
    %780 = vector.extract_strided_slice %779 {offsets = [0, 0], sizes = [2, 512], strides = [1, 1]} : vector<2x1024xf32> to vector<2x512xf32>
    %c30 = arith.constant 30 : index
    %c0_234 = arith.constant 0 : index
    %781 = vector.load %arg16[%c30, %c0_234] : memref<32x512xf32, #tpu.memory_space<vmem>>, vector<2x512xf32>
    %782 = arith.addf %780, %781 : vector<2x512xf32>
    %783 = vector.extract_strided_slice %782 {offsets = [0, 0], sizes = [2, 384], strides = [1, 1]} : vector<2x512xf32> to vector<2x384xf32>
    %cst_235 = arith.constant 5.000000e-01 : f32
    %784 = vector.broadcast %cst_235 : f32 to vector<2x384xf32>
    %785 = arith.mulf %784, %783 : vector<2x384xf32>
    %786 = math.tanh %785 : vector<2x384xf32>
    %cst_236 = arith.constant 5.000000e-01 : f32
    %787 = vector.broadcast %cst_236 : f32 to vector<2x384xf32>
    %788 = arith.mulf %787, %786 : vector<2x384xf32>
    %cst_237 = arith.constant 5.000000e-01 : f32
    %789 = vector.broadcast %cst_237 : f32 to vector<2x384xf32>
    %790 = arith.addf %788, %789 : vector<2x384xf32>
    %791 = vector.extract_strided_slice %790 {offsets = [0, 0], sizes = [2, 128], strides = [1, 1]} : vector<2x384xf32> to vector<2x128xf32>
    %792 = vector.extract_strided_slice %790 {offsets = [0, 128], sizes = [2, 128], strides = [1, 1]} : vector<2x384xf32> to vector<2x128xf32>
    %793 = vector.extract_strided_slice %790 {offsets = [0, 256], sizes = [2, 128], strides = [1, 1]} : vector<2x384xf32> to vector<2x128xf32>
    %794 = vector.extract_strided_slice %782 {offsets = [0, 384], sizes = [2, 128], strides = [1, 1]} : vector<2x512xf32> to vector<2x128xf32>
    %795 = math.tanh %794 : vector<2x128xf32>
    %796 = arith.mulf %792, %753 : vector<2x128xf32>
    %797 = arith.mulf %791, %795 : vector<2x128xf32>
    %798 = arith.addf %796, %797 : vector<2x128xf32>
    %799 = math.tanh %798 : vector<2x128xf32>
    %800 = arith.mulf %793, %799 : vector<2x128xf32>
    %801 = vector.extract_strided_slice %779 {offsets = [0, 512], sizes = [2, 512], strides = [1, 1]} : vector<2x1024xf32> to vector<2x512xf32>
    %802 = arith.addf %801, %125 : vector<2x512xf32>
    %803 = vector.extract_strided_slice %802 {offsets = [0, 0], sizes = [2, 384], strides = [1, 1]} : vector<2x512xf32> to vector<2x384xf32>
    %cst_238 = arith.constant 5.000000e-01 : f32
    %804 = vector.broadcast %cst_238 : f32 to vector<2x384xf32>
    %805 = arith.mulf %804, %803 : vector<2x384xf32>
    %806 = math.tanh %805 : vector<2x384xf32>
    %cst_239 = arith.constant 5.000000e-01 : f32
    %807 = vector.broadcast %cst_239 : f32 to vector<2x384xf32>
    %808 = arith.mulf %807, %806 : vector<2x384xf32>
    %cst_240 = arith.constant 5.000000e-01 : f32
    %809 = vector.broadcast %cst_240 : f32 to vector<2x384xf32>
    %810 = arith.addf %808, %809 : vector<2x384xf32>
    %811 = vector.extract_strided_slice %810 {offsets = [0, 0], sizes = [2, 128], strides = [1, 1]} : vector<2x384xf32> to vector<2x128xf32>
    %812 = vector.extract_strided_slice %810 {offsets = [0, 128], sizes = [2, 128], strides = [1, 1]} : vector<2x384xf32> to vector<2x128xf32>
    %813 = vector.extract_strided_slice %810 {offsets = [0, 256], sizes = [2, 128], strides = [1, 1]} : vector<2x384xf32> to vector<2x128xf32>
    %814 = vector.extract_strided_slice %802 {offsets = [0, 384], sizes = [2, 128], strides = [1, 1]} : vector<2x512xf32> to vector<2x128xf32>
    %815 = math.tanh %814 : vector<2x128xf32>
    %816 = arith.mulf %812, %773 : vector<2x128xf32>
    %817 = arith.mulf %811, %815 : vector<2x128xf32>
    %818 = arith.addf %816, %817 : vector<2x128xf32>
    %819 = math.tanh %818 : vector<2x128xf32>
    %820 = arith.mulf %813, %819 : vector<2x128xf32>
    %821 = tpu.concatenate %800, %820 in 1 : vector<2x128xf32>, vector<2x128xf32> -> vector<2x256xf32>
    %822 = arith.truncf %821 : vector<2x256xf32> to vector<2x256xbf16>
    %c0_241 = arith.constant 0 : index
    %c512 = arith.constant 512 : index
    %823 = vector.load %arg11[%c0_241, %c512] : memref<256x1024xbf16, #tpu.memory_space<vmem>>, vector<256x512xbf16>
    %cst_242 = arith.constant dense<0.000000e+00> : vector<2x512xf32>
    %824 = tpu.matmul %822, %823, %cst_242 {dimension_numbers = #tpu.dot_dimension_numbers<[1], [0], [0], [1], [0, 0, 1, 1], [], []>} : vector<2x256xbf16>, vector<256x512xbf16>, vector<2x512xf32> -> vector<2x512xf32>
    %825 = arith.addf %824, %125 : vector<2x512xf32>
    %826 = vector.extract_strided_slice %825 {offsets = [0, 0], sizes = [2, 384], strides = [1, 1]} : vector<2x512xf32> to vector<2x384xf32>
    %cst_243 = arith.constant 5.000000e-01 : f32
    %827 = vector.broadcast %cst_243 : f32 to vector<2x384xf32>
    %828 = arith.mulf %827, %826 : vector<2x384xf32>
    %829 = math.tanh %828 : vector<2x384xf32>
    %cst_244 = arith.constant 5.000000e-01 : f32
    %830 = vector.broadcast %cst_244 : f32 to vector<2x384xf32>
    %831 = arith.mulf %830, %829 : vector<2x384xf32>
    %cst_245 = arith.constant 5.000000e-01 : f32
    %832 = vector.broadcast %cst_245 : f32 to vector<2x384xf32>
    %833 = arith.addf %831, %832 : vector<2x384xf32>
    %834 = vector.extract_strided_slice %833 {offsets = [0, 0], sizes = [2, 128], strides = [1, 1]} : vector<2x384xf32> to vector<2x128xf32>
    %835 = vector.extract_strided_slice %833 {offsets = [0, 128], sizes = [2, 128], strides = [1, 1]} : vector<2x384xf32> to vector<2x128xf32>
    %836 = vector.extract_strided_slice %833 {offsets = [0, 256], sizes = [2, 128], strides = [1, 1]} : vector<2x384xf32> to vector<2x128xf32>
    %837 = vector.extract_strided_slice %825 {offsets = [0, 384], sizes = [2, 128], strides = [1, 1]} : vector<2x512xf32> to vector<2x128xf32>
    %838 = math.tanh %837 : vector<2x128xf32>
    %839 = arith.mulf %835, %818 : vector<2x128xf32>
    %840 = arith.mulf %834, %838 : vector<2x128xf32>
    %841 = arith.addf %839, %840 : vector<2x128xf32>
    %842 = math.tanh %841 : vector<2x128xf32>
    %843 = arith.mulf %836, %842 : vector<2x128xf32>
    %844 = arith.truncf %843 : vector<2x128xf32> to vector<2x128xbf16>
    %c0_246 = arith.constant 0 : index
    %c0_247 = arith.constant 0 : index
    %845 = vector.load %arg13[%c0_246, %c0_247] : memref<128x128xbf16, #tpu.memory_space<vmem>>, vector<128x128xbf16>
    %cst_248 = arith.constant dense<0.000000e+00> : vector<2x128xf32>
    %846 = tpu.matmul %844, %845, %cst_248 {dimension_numbers = #tpu.dot_dimension_numbers<[1], [0], [0], [1], [0, 0, 1, 1], [], []>} : vector<2x128xbf16>, vector<128x128xbf16>, vector<2x128xf32> -> vector<2x128xf32>
    %c0_249 = arith.constant 0 : index
    %c0_250 = arith.constant 0 : index
    %847 = vector.load %arg14[%c0_249, %c0_250] : memref<1x128xf32, #tpu.memory_space<vmem>>, vector<1x128xf32>
    %848 = vector.broadcast %847 : vector<1x128xf32> to vector<2x128xf32>
    %849 = arith.addf %846, %848 : vector<2x128xf32>
    %c0_251 = arith.constant 0 : index
    %c0_252 = arith.constant 0 : index
    %850 = vector.load %arg15[%c0_251, %c0_252] : memref<2x128xf32, #tpu.memory_space<vmem>>, vector<2x128xf32>
    tpu.vector_store %arg15[%c0_251, %c0_252], %849 {strides = array<i32>} : memref<2x128xf32, #tpu.memory_space<vmem>>, vector<2x128xf32>,
    return
  }
}

</mosaic_0001>

<llo_original>
// kernel: tpu_custom_call.1
$region0: #{tpu_custom_call.1}
  #allocation0 [shape = 'u32[]', space=smem, size = 0x4, offset = 0x4, fixed_abs, tag = 'smem constant byte address 0x4 - core index']
  #allocation1 [shape = 'u32[144,128]{1,0:T(1,128)}', space=vmem, size = 0x12000, scoped, tag = 'internal scratch']
  #allocation2 [shape = 'f32[32,512]{1,0:T(8,128)}', space=vmem, size = 0x10000, scoped, tag = 'scratch operand']
  %s0 = inlined_call_operand.vmem [shape: bf16[56,20], index: 0, kind: input, shape index: {}]
  %s1 = inlined_call_operand.vmem [shape: bf16[20,64], index: 1, kind: input, shape index: {}]
  %s2 = inlined_call_operand.vmem [shape: f32[1,64], index: 2, kind: input, shape index: {}]
  %s3 = inlined_call_operand.hbm [shape: bf16[5,64,64], index: 3, kind: input, shape index: {}]
  %s4 = inlined_call_operand.vmem [shape: f32[1,64], index: 4, kind: input, shape index: {}]
  %s5 = inlined_call_operand.hbm [shape: bf16[5,64,64], index: 5, kind: input, shape index: {}]
  %s6 = inlined_call_operand.vmem [shape: f32[1,64], index: 6, kind: input, shape index: {}]
  %s7 = inlined_call_operand.hbm [shape: bf16[5,64,64], index: 7, kind: input, shape index: {}]
  %s8 = inlined_call_operand.vmem [shape: f32[1,64], index: 8, kind: input, shape index: {}]
  %s9 = inlined_call_operand.hbm [shape: bf16[64,512], index: 9, kind: input, shape index: {}]
  %s10 = inlined_call_operand.vmem [shape: f32[1,512], index: 10, kind: input, shape index: {}]
  %s11 = inlined_call_operand.hbm [shape: bf16[256,1024], index: 11, kind: input, shape index: {}]
  %s12 = inlined_call_operand.vmem [shape: f32[1,512], index: 12, kind: input, shape index: {}]
  %s13 = inlined_call_operand.vmem [shape: bf16[128,128], index: 13, kind: input, shape index: {}]
  %s14 = inlined_call_operand.vmem [shape: f32[1,128], index: 14, kind: input, shape index: {}]
  %s15 = inlined_call_operand.hbm [shape: f32[2,128], index: 15, kind: output, shape index: {}]
  %s16 = sld [smem:[#allocation0]]
  $region90: #{tpu_custom_call.1} parent=0
    _
  %s18 = ssub.s32 1, %s16
  %s19 = scalar_select 0, %s18, %s16
  $region1: #{tpu_custom_call.1} parent=0
    #allocation3 [shape = 'u8[81920]{0}', space=vmem, size = 0x14000, scoped, tag = 'input window, operand 3, single buffered']
    #allocation4 [shape = 's32[1]{0}', space=sflag, size = 0x4, scoped, tag = 'scoped memory for tpu_custom_call.1']
    #allocation5 [shape = 's32[1]{0}', space=sflag, size = 0x4, scoped, tag = 'scoped memory for tpu_custom_call.1']
    #allocation6 [shape = 'u8[81920]{0}', space=vmem, size = 0x14000, scoped, tag = 'input window, operand 5, single buffered']
    #allocation7 [shape = 's32[1]{0}', space=sflag, size = 0x4, scoped, tag = 'scoped memory for tpu_custom_call.1']
    #allocation8 [shape = 'u8[81920]{0}', space=vmem, size = 0x14000, scoped, tag = 'input window, operand 7, single buffered']
    #allocation9 [shape = 'u8[65536]{0}', space=vmem, size = 0x10000, scoped, tag = 'input window, operand 9, single buffered']
    #allocation10 [shape = 's32[1]{0}', space=sflag, size = 0x4, scoped, tag = 'scoped memory for tpu_custom_call.1']
    #allocation11 [shape = 'u8[524288]{0}', space=vmem, size = 0x80000, scoped, tag = 'input window, operand 11, single buffered']
    #allocation12 [shape = 'u8[1024]{0}', space=vmem, size = 0x400, scoped, tag = 'output window, operand 0, single buffered']
    %20 = vsyncpa [#allocation4], 0
    %21 = vsyncpa [#allocation7], 0
    %22 = vsyncpa [#allocation10], 0
    %23 = vsyncpa [#allocation5], 0
    // Predicated region
    $region2: #{tpu_custom_call.1} parent=1 // pred_check
      _
    $region3: #{tpu_custom_call.1} parent=1 // pred_check_branch
      %25 = sbr.rel (0) target = $region5
    $region4: #{tpu_custom_call.1} parent=1 // pred_region
      _
    $region5: #{tpu_custom_call.1} parent=1 // pred_fallthru
      _
    // Predicated region
    $region6: #{tpu_custom_call.1} parent=1 // pred_check
      _
    $region7: #{tpu_custom_call.1} parent=1 // pred_check_branch
      %27 = sbr.rel (0) target = $region9
    $region8: #{tpu_custom_call.1} parent=1 // pred_region
      _
    $region9: #{tpu_custom_call.1} parent=1 // pred_fallthru
      _
    // Predicated region
    $region10: #{tpu_custom_call.1} parent=1 // pred_check
      _
    $region11: #{tpu_custom_call.1} parent=1 // pred_check_branch
      %29 = sbr.rel (0) target = $region13
    $region12: #{tpu_custom_call.1} parent=1 // pred_region
      _
    $region13: #{tpu_custom_call.1} parent=1 // pred_fallthru
      _
    // Predicated region
    $region14: #{tpu_custom_call.1} parent=1 // pred_check
      _
    $region15: #{tpu_custom_call.1} parent=1 // pred_check_branch
      %31 = sbr.rel (0) target = $region17
    $region16: #{tpu_custom_call.1} parent=1 // pred_region
      %s33 = ssub.s32 2560, 2560
      %34 = vsyncadd [#allocation4], %s33
      %s35 = sshll.u32 [#allocation3], 4
      %s36 = int_to_ptr.vmem [resolvable:$true] %s35
      %41 = dma.hbm_to_vmem [thread:$0]  %s3, 2560, %s36, [#allocation4], 64, 64, 4
    $region17: #{tpu_custom_call.1} parent=1 // pred_fallthru
      _
    // Predicated region
    $region18: #{tpu_custom_call.1} parent=1 // pred_check
      _
    $region19: #{tpu_custom_call.1} parent=1 // pred_check_branch
      %43 = sbr.rel (0) target = $region21
    $region20: #{tpu_custom_call.1} parent=1 // pred_region
      _
    $region21: #{tpu_custom_call.1} parent=1 // pred_fallthru
      _
    // Predicated region
    $region22: #{tpu_custom_call.1} parent=1 // pred_check
      _
    $region23: #{tpu_custom_call.1} parent=1 // pred_check_branch
      %45 = sbr.rel (0) target = $region25
    $region24: #{tpu_custom_call.1} parent=1 // pred_region
      %s47 = ssub.s32 2560, 2560
      %48 = vsyncadd [#allocation7], %s47
      %s49 = sshll.u32 [#allocation6], 4
      %s50 = int_to_ptr.vmem [resolvable:$true] %s49
      %55 = dma.hbm_to_vmem [thread:$0]  %s5, 2560, %s50, [#allocation7], 64, 64, 4
    $region25: #{tpu_custom_call.1} parent=1 // pred_fallthru
      _
    // Predicated region
    $region26: #{tpu_custom_call.1} parent=1 // pred_check
      _
    $region27: #{tpu_custom_call.1} parent=1 // pred_check_branch
      %57 = sbr.rel (0) target = $region29
    $region28: #{tpu_custom_call.1} parent=1 // pred_region
      _
    $region29: #{tpu_custom_call.1} parent=1 // pred_fallthru
      _
    // Predicated region
    $region30: #{tpu_custom_call.1} parent=1 // pred_check
      _
    $region31: #{tpu_custom_call.1} parent=1 // pred_check_branch
      %59 = sbr.rel (0) target = $region33
    $region32: #{tpu_custom_call.1} parent=1 // pred_region
      %s61 = ssub.s32 2560, 2560
      %62 = vsyncadd [#allocation7], %s61
      %s63 = sshll.u32 [#allocation8], 4
      %s64 = int_to_ptr.vmem [resolvable:$true] %s63
      %69 = dma.hbm_to_vmem [thread:$0]  %s7, 2560, %s64, [#allocation7], 64, 64, 4
    $region33: #{tpu_custom_call.1} parent=1 // pred_fallthru
      _
    // Predicated region
    $region34: #{tpu_custom_call.1} parent=1 // pred_check
      _
    $region35: #{tpu_custom_call.1} parent=1 // pred_check_branch
      %71 = sbr.rel (0) target = $region37
    $region36: #{tpu_custom_call.1} parent=1 // pred_region
      _
    $region37: #{tpu_custom_call.1} parent=1 // pred_fallthru
      _
    // Predicated region
    $region38: #{tpu_custom_call.1} parent=1 // pred_check
      _
    $region39: #{tpu_custom_call.1} parent=1 // pred_check_branch
      %73 = sbr.rel (0) target = $region41
    $region40: #{tpu_custom_call.1} parent=1 // pred_region
      %s75 = ssub.s32 2048, 2048
      %76 = vsyncadd [#allocation10], %s75
      %s77 = sshll.u32 [#allocation9], 4
      %s78 = int_to_ptr.vmem [resolvable:$true] %s77
      %83 = dma.hbm_to_vmem [thread:$0]  %s9, 2048, %s78, [#allocation10], 256, 256, 16
    $region41: #{tpu_custom_call.1} parent=1 // pred_fallthru
      _
    // Predicated region
    $region42: #{tpu_custom_call.1} parent=1 // pred_check
      _
    $region43: #{tpu_custom_call.1} parent=1 // pred_check_branch
      %85 = sbr.rel (0) target = $region45
    $region44: #{tpu_custom_call.1} parent=1 // pred_region
      _
    $region45: #{tpu_custom_call.1} parent=1 // pred_fallthru
      _
    // Predicated region
    $region46: #{tpu_custom_call.1} parent=1 // pred_check
      _
    $region47: #{tpu_custom_call.1} parent=1 // pred_check_branch
      %87 = sbr.rel (0) target = $region49
    $region48: #{tpu_custom_call.1} parent=1 // pred_region
      %s89 = ssub.s32 16384, 16384
      %90 = vsyncadd [#allocation10], %s89
      %s91 = sshll.u32 [#allocation11], 4
      %s92 = int_to_ptr.vmem [resolvable:$true] %s91
      %97 = dma.hbm_to_vmem [thread:$0]  %s11, 16384, %s92, [#allocation10], 512, 512, 32
    $region49: #{tpu_custom_call.1} parent=1 // pred_fallthru
      _
    // Predicated region
    $region50: #{tpu_custom_call.1} parent=1 // pred_check
      _
    $region51: #{tpu_custom_call.1} parent=1 // pred_check_branch
      %99 = sbr.rel (0) target = $region53
    $region52: #{tpu_custom_call.1} parent=1 // pred_region
      _
    $region53: #{tpu_custom_call.1} parent=1 // pred_fallthru
      _
    // Predicated region
    $region54: #{tpu_custom_call.1} parent=1 // pred_check
      _
    $region55: #{tpu_custom_call.1} parent=1 // pred_check_branch
      %101 = sbr.rel (0) target = $region57
    $region56: #{tpu_custom_call.1} parent=1 // pred_region
      _
    $region57: #{tpu_custom_call.1} parent=1 // pred_fallthru
      _
    // Predicated region
    $region58: #{tpu_custom_call.1} parent=1 // pred_check
      _
    $region59: #{tpu_custom_call.1} parent=1 // pred_check_branch
      %103 = sbr.rel (0) target = $region61
    $region60: #{tpu_custom_call.1} parent=1 // pred_region
      _
    $region61: #{tpu_custom_call.1} parent=1 // pred_fallthru
      _
    // Predicated region
    $region62: #{tpu_custom_call.1} parent=1 // pred_check
      _
    $region63: #{tpu_custom_call.1} parent=1 // pred_check_branch
      %105 = sbr.rel (0) target = $region65
    $region64: #{tpu_custom_call.1} parent=1 // pred_region
      %106 = dma.done [#allocation4], 2560
    $region65: #{tpu_custom_call.1} parent=1 // pred_fallthru
      _
    // Predicated region
    $region66: #{tpu_custom_call.1} parent=1 // pred_check
      _
    $region67: #{tpu_custom_call.1} parent=1 // pred_check_branch
      %108 = sbr.rel (0) target = $region69
    $region68: #{tpu_custom_call.1} parent=1 // pred_region
      %109 = dma.done [#allocation7], 2560
    $region69: #{tpu_custom_call.1} parent=1 // pred_fallthru
      _
    // Predicated region
    $region70: #{tpu_custom_call.1} parent=1 // pred_check
      _
    $region71: #{tpu_custom_call.1} parent=1 // pred_check_branch
      %111 = sbr.rel (0) target = $region73
    $region72: #{tpu_custom_call.1} parent=1 // pred_region
      %112 = dma.done [#allocation7], 2560
    $region73: #{tpu_custom_call.1} parent=1 // pred_fallthru
      _
    // Predicated region
    $region74: #{tpu_custom_call.1} parent=1 // pred_check
      _
    $region75: #{tpu_custom_call.1} parent=1 // pred_check_branch
      %114 = sbr.rel (0) target = $region77
    $region76: #{tpu_custom_call.1} parent=1 // pred_region
      %115 = dma.done [#allocation10], 2048
    $region77: #{tpu_custom_call.1} parent=1 // pred_fallthru
      _
    // Predicated region
    $region78: #{tpu_custom_call.1} parent=1 // pred_check
      _
    $region79: #{tpu_custom_call.1} parent=1 // pred_check_branch
      %117 = sbr.rel (0) target = $region81
    $region80: #{tpu_custom_call.1} parent=1 // pred_region
      %118 = dma.done [#allocation10], 16384
    $region81: #{tpu_custom_call.1} parent=1 // pred_fallthru
      _
    %v120 = vld [vmem:[%s0] sm:$0xf]
    %v121 = vld [vmem:[%s0 + $0x4] sm:$0xf]
    %v122 = vld [vmem:[%s0 + $0x8] sm:$0xf]
    %v123 = vld [vmem:[%s0 + $0xc] sm:$0xf]
    %v124 = vld [vmem:[%s0 + $0x10] sm:$0xf]
    %v125 = vld [vmem:[%s0 + $0x14] sm:$0xf]
    %v126 = vld [vmem:[%s0 + $0x18] sm:$0xf]
    %v127 = vld [vmem:[%s1] sm:$0xf]
    %v128 = vld [vmem:[%s1 + $0x4] sm:$0xf]
    %v129 = vld [vmem:[%s1 + $0x8] sm:$0x3]
    %v130 = vld [vmem:[%s2] sm:$0x1]
    %v132 = vlaneseq
    %v133 = vshrl.u32 %v132, 7
    %v134 = vsub.s32 0, %v133
    %v135 = vrot.slane %v130, %v134
    %v144 = vunpack.c.l.b16 %v120
    %v145 = vunpack.c.l.b16 %v121
    %v146 = vunpack.c.l.b16 %v122
    %v147 = vunpack.c.l.b16 %v123
    %v148 = vunpack.c.l.b16 %v124
    %v149 = vunpack.c.l.b16 %v125
    %v150 = vunpack.c.l.b16 %v126
    %v151 = vpack.c.b16 %v145, %v144
    %v152 = vpack.c.b16 %v147, %v146
    %v153 = vpack.c.b16 %v149, %v148
    %v154 = vpack.c.b16 %v150, %v150
    %v158 = vunpack.c.l.b16 %v127
    %v159 = vunpack.c.l.b16 %v128
    %v160 = vunpack.c.l.b16 %v129
    %v161 = vpack.c.b16 %v159, %v158
    %v162 = vpack.c.b16 %v160, %v160
    %vm164 = vcmask 162816
    %v166 = vsel %vm164, %v151, 0
    %v169 = vsel %vm164, %v152, 0
    %v172 = vsel %vm164, %v153, 0
    %v175 = vsel %vm164, %v154, 0
    %vm177 = vcmask 1041408
    %v179 = vsel %vm177, %v162, 0
    %181 = vmatprep.subr.bf16.mxu0 0
    %182 = vmatpush1.bf16.msra.mxu0 %v161
    %183 = vmatprep.subr.bf16.mxu0 0
    %184 = vmatpush1.bf16.msra.mxu0 %v179
    %185 = vmatprep.subr.bf16.mxu0 0
    %186 = vmatpush1.bf16.msra.mxu0 0
    %187 = vmatprep.subr.bf16.mxu0 0
    %188 = vmatpush1.bf16.msra.mxu0 0
    %189 = vmatprep.subr.bf16.mxu0 0
    %190 = vmatpush1.bf16.msra.mxu0 0
    %191 = vmatprep.subr.bf16.mxu0 0
    %192 = vmatpush1.bf16.msra.mxu0 0
    %193 = vmatprep.subr.bf16.mxu0 0
    %194 = vmatpush1.bf16.msra.mxu0 0
    %195 = vmatprep.subr.bf16.mxu0 0
    %196 = vmatpush1.bf16.msra.mxu0 0
    %197 = vmatprep.subr.bf16.mxu0 0
    %198 = vmatpush1.bf16.msra.mxu0 0
    %199 = vmatprep.subr.bf16.mxu0 0
    %200 = vmatpush1.bf16.msra.mxu0 0
    %201 = vmatprep.subr.bf16.mxu0 0
    %202 = vmatpush1.bf16.msra.mxu0 0
    %203 = vmatprep.subr.bf16.mxu0 0
    %204 = vmatpush1.bf16.msra.mxu0 0
    %205 = vmatprep.subr.bf16.mxu0 0
    %206 = vmatpush1.bf16.msra.mxu0 0
    %207 = vmatprep.subr.bf16.mxu0 0
    %208 = vmatpush1.bf16.msra.mxu0 0
    %209 = vmatprep.subr.bf16.mxu0 0
    %210 = vmatpush1.bf16.msra.mxu0 0
    %211 = vmatprep.subr.bf16.mxu0 0
    %212 = vmatpush1.bf16.msra.mxu0 0
    %213 = vmatprep.mubr.bf16.mxu0 0
    %214 = vmatmul.mubr.bf16.gmra.mrb[0].mxu0 %v166
    %v215 = vpop.f32.mrb[0].mxu0
    %v216 = vadd.f32 %v135, %v215
    %v217 = vpop.f32.mrb[0].mxu0
    %v218 = vpop.f32.mrb[0].mxu0
    %v219 = vadd.f32 %v135, %v218
    %v220 = vpop.f32.mrb[0].mxu0
    %221 = vmatprep.mubr.bf16.mxu0 0
    %222 = vmatmul.mubr.bf16.gmra.mrb[0].mxu0 %v169
    %v223 = vpop.f32.mrb[0].mxu0
    %v224 = vadd.f32 %v135, %v223
    %v225 = vpop.f32.mrb[0].mxu0
    %v226 = vpop.f32.mrb[0].mxu0
    %v227 = vadd.f32 %v135, %v226
    %v228 = vpop.f32.mrb[0].mxu0
    %229 = vmatprep.mubr.bf16.mxu0 0
    %230 = vmatmul.mubr.bf16.gmra.mrb[0].mxu0 %v172
    %v231 = vpop.f32.mrb[0].mxu0
    %v232 = vadd.f32 %v135, %v231
    %v233 = vpop.f32.mrb[0].mxu0
    %v234 = vpop.f32.mrb[0].mxu0
    %v235 = vadd.f32 %v135, %v234
    %v236 = vpop.f32.mrb[0].mxu0
    %237 = vmatprep.mubr.bf16.mxu0 0
    %238 = vmatmul.mubr.bf16.gmra.mrb[0].mxu0 %v175
    %v239 = vpop.f32.mrb[0].mxu0
    %v240 = vadd.f32 %v135, %v239
    %v241 = vpop.f32.mrb[0].mxu0
    %v242 = vpop.f32.mrb[0].mxu0
    %v243 = vpop.f32.mrb[0].mxu0
    %244 = vdwg.mxu0
    %v245 = vmax.f32 %v216, 0.0
    %v246 = vmax.f32 %v219, 0.0
    %v247 = vmax.f32 %v224, 0.0
    %v248 = vmax.f32 %v227, 0.0
    %v249 = vmax.f32 %v232, 0.0
    %v250 = vmax.f32 %v235, 0.0
    %v251 = vmax.f32 %v240, 0.0
    %v252 = vpack.c.bf16 %v246, %v245
    %v253 = vpack.c.bf16 %v248, %v247
    %v254 = vpack.c.bf16 %v250, %v249
    %v255 = vld [vmem:[#allocation3] sm:$0xf]
    %v256 = vld [vmem:[#allocation3 + $0x4] sm:$0xf]
    %v257 = vld [vmem:[#allocation3 + $0x8] sm:$0xf]
    %v258 = vld [vmem:[#allocation3 + $0xc] sm:$0xf]
    %v259 = vld [vmem:[#allocation3 + $0x10] sm:$0xf]
    %v260 = vld [vmem:[#allocation3 + $0x14] sm:$0xf]
    %v261 = vld [vmem:[#allocation3 + $0x18] sm:$0xf]
    %v262 = vld [vmem:[#allocation3 + $0x1c] sm:$0xf]
    %v263 = vpack.c.bf16 %v251, %v251
    %s264 = scalar_lea.vmem [#allocation3], 32
    %v265 = vld [vmem:[%s264] sm:$0xf]
    %v266 = vld [vmem:[%s264 + $0x4] sm:$0xf]
    %v267 = vld [vmem:[%s264 + $0x8] sm:$0xf]
    %v268 = vld [vmem:[%s264 + $0xc] sm:$0xf]
    %v269 = vld [vmem:[%s264 + $0x10] sm:$0xf]
    %v270 = vld [vmem:[%s264 + $0x14] sm:$0xf]
    %v271 = vld [vmem:[%s264 + $0x18] sm:$0xf]
    %v272 = vld [vmem:[%s264 + $0x1c] sm:$0xf]
    %vm277 = vcmask 1046528
    %v278 = vrot.slane %v252, 1
    %v279 = vrot.slane %v253, 1
    %v280 = vsel %vm277, %v278, %v279
    %v281 = vrot.slane %v254, 1
    %v282 = vsel %vm277, %v279, %v281
    %v283 = vrot.slane %v263, 1
    %v284 = vsel %vm277, %v281, %v283
    %v293 = vunpack.c.l.b16 %v265
    %v294 = vunpack.c.l.b16 %v266
    %v295 = vunpack.c.l.b16 %v267
    %v296 = vunpack.c.l.b16 %v268
    %v297 = vunpack.c.l.b16 %v269
    %v298 = vunpack.c.l.b16 %v270
    %v299 = vunpack.c.l.b16 %v271
    %v300 = vunpack.c.l.b16 %v272
    %v301 = vpack.c.b16 %v294, %v293
    %v302 = vpack.c.b16 %v296, %v295
    %v303 = vpack.c.b16 %v298, %v297
    %v304 = vpack.c.b16 %v300, %v299
    %vm309 = vcmask 523264
    %v311 = vsel %vm309, %v280, 0
    %v314 = vsel %vm309, %v282, 0
    %v317 = vsel %vm309, %v284, 0
    %319 = vmatprep.subr.bf16.mxu0 0
    %320 = vmatpush1.bf16.msra.mxu0 %v301
    %321 = vmatprep.subr.bf16.mxu0 0
    %322 = vmatpush1.bf16.msra.mxu0 %v302
    %323 = vmatprep.subr.bf16.mxu0 0
    %324 = vmatpush1.bf16.msra.mxu0 %v303
    %325 = vmatprep.subr.bf16.mxu0 0
    %326 = vmatpush1.bf16.msra.mxu0 %v304
    %327 = vmatprep.subr.bf16.mxu0 0
    %328 = vmatpush1.bf16.msra.mxu0 0
    %329 = vmatprep.subr.bf16.mxu0 0
    %330 = vmatpush1.bf16.msra.mxu0 0
    %331 = vmatprep.subr.bf16.mxu0 0
    %332 = vmatpush1.bf16.msra.mxu0 0
    %333 = vmatprep.subr.bf16.mxu0 0
    %334 = vmatpush1.bf16.msra.mxu0 0
    %335 = vmatprep.subr.bf16.mxu0 0
    %336 = vmatpush1.bf16.msra.mxu0 0
    %337 = vmatprep.subr.bf16.mxu0 0
    %338 = vmatpush1.bf16.msra.mxu0 0
    %339 = vmatprep.subr.bf16.mxu0 0
    %340 = vmatpush1.bf16.msra.mxu0 0
    %341 = vmatprep.subr.bf16.mxu0 0
    %342 = vmatpush1.bf16.msra.mxu0 0
    %343 = vmatprep.subr.bf16.mxu0 0
    %344 = vmatpush1.bf16.msra.mxu0 0
    %345 = vmatprep.subr.bf16.mxu0 0
    %346 = vmatpush1.bf16.msra.mxu0 0
    %347 = vmatprep.subr.bf16.mxu0 0
    %348 = vmatpush1.bf16.msra.mxu0 0
    %349 = vmatprep.subr.bf16.mxu0 0
    %350 = vmatpush1.bf16.msra.mxu0 0
    %351 = vmatprep.mubr.bf16.mxu0 0
    %352 = vmatmul.mubr.bf16.gmra.mrb[0].mxu0 %v311
    %v353 = vpop.f32.mrb[0].mxu0
    %v354 = vadd.f32 0.0, %v353
    %v355 = vpop.f32.mrb[0].mxu0
    %v356 = vpop.f32.mrb[0].mxu0
    %v357 = vadd.f32 0.0, %v356
    %v358 = vpop.f32.mrb[0].mxu0
    %359 = vmatprep.mubr.bf16.mxu0 0
    %360 = vmatmul.mubr.bf16.gmra.mrb[0].mxu0 %v314
    %v361 = vpop.f32.mrb[0].mxu0
    %v362 = vadd.f32 0.0, %v361
    %v363 = vpop.f32.mrb[0].mxu0
    %v364 = vpop.f32.mrb[0].mxu0
    %v365 = vadd.f32 0.0, %v364
    %v366 = vpop.f32.mrb[0].mxu0
    %367 = vmatprep.mubr.bf16.mxu0 0
    %368 = vmatmul.mubr.bf16.gmra.mrb[0].mxu0 %v317
    %v369 = vpop.f32.mrb[0].mxu0
    %v370 = vadd.f32 0.0, %v369
    %v371 = vpop.f32.mrb[0].mxu0
    %v372 = vpop.f32.mrb[0].mxu0
    %v373 = vadd.f32 0.0, %v372
    %v374 = vpop.f32.mrb[0].mxu0
    %375 = vdwg.mxu0
    %v384 = vunpack.c.l.b16 %v255
    %v385 = vunpack.c.l.b16 %v256
    %v386 = vunpack.c.l.b16 %v257
    %v387 = vunpack.c.l.b16 %v258
    %v388 = vunpack.c.l.b16 %v259
    %v389 = vunpack.c.l.b16 %v260
    %v390 = vunpack.c.l.b16 %v261
    %v391 = vunpack.c.l.b16 %v262
    %v392 = vpack.c.b16 %v385, %v384
    %v393 = vpack.c.b16 %v387, %v386
    %v394 = vpack.c.b16 %v389, %v388
    %v395 = vpack.c.b16 %v391, %v390
    %v401 = vsel %vm309, %v252, 0
    %v404 = vsel %vm309, %v253, 0
    %v407 = vsel %vm309, %v254, 0
    %409 = vmatprep.subr.bf16.mxu0 0
    %410 = vmatpush1.bf16.msra.mxu0 %v392
    %411 = vmatprep.subr.bf16.mxu0 0
    %412 = vmatpush1.bf16.msra.mxu0 %v393
    %413 = vmatprep.subr.bf16.mxu0 0
    %414 = vmatpush1.bf16.msra.mxu0 %v394
    %415 = vmatprep.subr.bf16.mxu0 0
    %416 = vmatpush1.bf16.msra.mxu0 %v395
    %417 = vmatprep.subr.bf16.mxu0 0
    %418 = vmatpush1.bf16.msra.mxu0 0
    %419 = vmatprep.subr.bf16.mxu0 0
    %420 = vmatpush1.bf16.msra.mxu0 0
    %421 = vmatprep.subr.bf16.mxu0 0
    %422 = vmatpush1.bf16.msra.mxu0 0
    %423 = vmatprep.subr.bf16.mxu0 0
    %424 = vmatpush1.bf16.msra.mxu0 0
    %425 = vmatprep.subr.bf16.mxu0 0
    %426 = vmatpush1.bf16.msra.mxu0 0
    %427 = vmatprep.subr.bf16.mxu0 0
    %428 = vmatpush1.bf16.msra.mxu0 0
    %429 = vmatprep.subr.bf16.mxu0 0
    %430 = vmatpush1.bf16.msra.mxu0 0
    %431 = vmatprep.subr.bf16.mxu0 0
    %432 = vmatpush1.bf16.msra.mxu0 0
    %433 = vmatprep.subr.bf16.mxu0 0
    %434 = vmatpush1.bf16.msra.mxu0 0
    %435 = vmatprep.subr.bf16.mxu0 0
    %436 = vmatpush1.bf16.msra.mxu0 0
    %437 = vmatprep.subr.bf16.mxu0 0
    %438 = vmatpush1.bf16.msra.mxu0 0
    %439 = vmatprep.subr.bf16.mxu0 0
    %440 = vmatpush1.bf16.msra.mxu0 0
    %441 = vmatprep.mubr.bf16.mxu0 0
    %442 = vmatmul.mubr.bf16.gmra.mrb[0].mxu0 %v401
    %v443 = vpop.f32.mrb[0].mxu0
    %v444 = vadd.f32 %v354, %v443
    %v445 = vpop.f32.mrb[0].mxu0
    %v446 = vpop.f32.mrb[0].mxu0
    %v447 = vadd.f32 %v357, %v446
    %v448 = vpop.f32.mrb[0].mxu0
    %449 = vmatprep.mubr.bf16.mxu0 0
    %450 = vmatmul.mubr.bf16.gmra.mrb[0].mxu0 %v404
    %v451 = vpop.f32.mrb[0].mxu0
    %v452 = vadd.f32 %v362, %v451
    %v453 = vpop.f32.mrb[0].mxu0
    %v454 = vpop.f32.mrb[0].mxu0
    %v455 = vadd.f32 %v365, %v454
    %v456 = vpop.f32.mrb[0].mxu0
    %457 = vmatprep.mubr.bf16.mxu0 0
    %458 = vmatmul.mubr.bf16.gmra.mrb[0].mxu0 %v407
    %v459 = vpop.f32.mrb[0].mxu0
    %v460 = vadd.f32 %v370, %v459
    %v461 = vpop.f32.mrb[0].mxu0
    %v462 = vpop.f32.mrb[0].mxu0
    %v463 = vadd.f32 %v373, %v462
    %v464 = vpop.f32.mrb[0].mxu0
    %465 = vdwg.mxu0
    %s466 = scalar_lea.vmem [#allocation3], 64
    %v467 = vld [vmem:[%s466] sm:$0xf]
    %v468 = vld [vmem:[%s466 + $0x4] sm:$0xf]
    %v469 = vld [vmem:[%s466 + $0x8] sm:$0xf]
    %v470 = vld [vmem:[%s466 + $0xc] sm:$0xf]
    %v471 = vld [vmem:[%s466 + $0x10] sm:$0xf]
    %v472 = vld [vmem:[%s466 + $0x14] sm:$0xf]
    %v473 = vld [vmem:[%s466 + $0x18] sm:$0xf]
    %v474 = vld [vmem:[%s466 + $0x1c] sm:$0xf]
    %vm475 = vcmask 1045504
    %v476 = vrot.slane %v252, 2
    %v477 = vrot.slane %v253, 2
    %v478 = vsel %vm475, %v476, %v477
    %v479 = vrot.slane %v254, 2
    %v480 = vsel %vm475, %v477, %v479
    %v481 = vrot.slane %v263, 2
    %v482 = vsel %vm475, %v479, %v481
    %v491 = vunpack.c.l.b16 %v467
    %v492 = vunpack.c.l.b16 %v468
    %v493 = vunpack.c.l.b16 %v469
    %v494 = vunpack.c.l.b16 %v470
    %v495 = vunpack.c.l.b16 %v471
    %v496 = vunpack.c.l.b16 %v472
    %v497 = vunpack.c.l.b16 %v473
    %v498 = vunpack.c.l.b16 %v474
    %v499 = vpack.c.b16 %v492, %v491
    %v500 = vpack.c.b16 %v494, %v493
    %v501 = vpack.c.b16 %v496, %v495
    %v502 = vpack.c.b16 %v498, %v497
    %v508 = vsel %vm309, %v478, 0
    %v511 = vsel %vm309, %v480, 0
    %v514 = vsel %vm309, %v482, 0
    %516 = vmatprep.subr.bf16.mxu0 0
    %517 = vmatpush1.bf16.msra.mxu0 %v499
    %518 = vmatprep.subr.bf16.mxu0 0
    %519 = vmatpush1.bf16.msra.mxu0 %v500
    %520 = vmatprep.subr.bf16.mxu0 0
    %521 = vmatpush1.bf16.msra.mxu0 %v501
    %522 = vmatprep.subr.bf16.mxu0 0
    %523 = vmatpush1.bf16.msra.mxu0 %v502
    %524 = vmatprep.subr.bf16.mxu0 0
    %525 = vmatpush1.bf16.msra.mxu0 0
    %526 = vmatprep.subr.bf16.mxu0 0
    %527 = vmatpush1.bf16.msra.mxu0 0
    %528 = vmatprep.subr.bf16.mxu0 0
    %529 = vmatpush1.bf16.msra.mxu0 0
    %530 = vmatprep.subr.bf16.mxu0 0
    %531 = vmatpush1.bf16.msra.mxu0 0
    %532 = vmatprep.subr.bf16.mxu0 0
    %533 = vmatpush1.bf16.msra.mxu0 0
    %534 = vmatprep.subr.bf16.mxu0 0
    %535 = vmatpush1.bf16.msra.mxu0 0
    %536 = vmatprep.subr.bf16.mxu0 0
    %537 = vmatpush1.bf16.msra.mxu0 0
    %538 = vmatprep.subr.bf16.mxu0 0
    %539 = vmatpush1.bf16.msra.mxu0 0
    %540 = vmatprep.subr.bf16.mxu0 0
    %541 = vmatpush1.bf16.msra.mxu0 0
    %542 = vmatprep.subr.bf16.mxu0 0
    %543 = vmatpush1.bf16.msra.mxu0 0
    %544 = vmatprep.subr.bf16.mxu0 0
    %545 = vmatpush1.bf16.msra.mxu0 0
    %546 = vmatprep.subr.bf16.mxu0 0
    %547 = vmatpush1.bf16.msra.mxu0 0
    %548 = vmatprep.mubr.bf16.mxu0 0
    %549 = vmatmul.mubr.bf16.gmra.mrb[0].mxu0 %v508
    %v550 = vpop.f32.mrb[0].mxu0
    %v551 = vadd.f32 0.0, %v550
    %v552 = vpop.f32.mrb[0].mxu0
    %v553 = vpop.f32.mrb[0].mxu0
    %v554 = vadd.f32 0.0, %v553
    %v555 = vpop.f32.mrb[0].mxu0
    %556 = vmatprep.mubr.bf16.mxu0 0
    %557 = vmatmul.mubr.bf16.gmra.mrb[0].mxu0 %v511
    %v558 = vpop.f32.mrb[0].mxu0
    %v559 = vadd.f32 0.0, %v558
    %v560 = vpop.f32.mrb[0].mxu0
    %v561 = vpop.f32.mrb[0].mxu0
    %v562 = vadd.f32 0.0, %v561
    %v563 = vpop.f32.mrb[0].mxu0
    %564 = vmatprep.mubr.bf16.mxu0 0
    %565 = vmatmul.mubr.bf16.gmra.mrb[0].mxu0 %v514
    %v566 = vpop.f32.mrb[0].mxu0
    %v567 = vadd.f32 0.0, %v566
    %v568 = vpop.f32.mrb[0].mxu0
    %v569 = vpop.f32.mrb[0].mxu0
    %v570 = vadd.f32 0.0, %v569
    %v571 = vpop.f32.mrb[0].mxu0
    %572 = vdwg.mxu0
    %v573 = vadd.f32 %v444, %v551
    %v574 = vadd.f32 %v447, %v554
    %v575 = vadd.f32 %v452, %v559
    %v576 = vadd.f32 %v455, %v562
    %v577 = vadd.f32 %v460, %v567
    %v578 = vadd.f32 %v463, %v570
    %s579 = scalar_lea.vmem [#allocation3], 96
    %v580 = vld [vmem:[%s579] sm:$0xf]
    %v581 = vld [vmem:[%s579 + $0x4] sm:$0xf]
    %v582 = vld [vmem:[%s579 + $0x8] sm:$0xf]
    %v583 = vld [vmem:[%s579 + $0xc] sm:$0xf]
    %v584 = vld [vmem:[%s579 + $0x10] sm:$0xf]
    %v585 = vld [vmem:[%s579 + $0x14] sm:$0xf]
    %v586 = vld [vmem:[%s579 + $0x18] sm:$0xf]
    %v587 = vld [vmem:[%s579 + $0x1c] sm:$0xf]
    %vm588 = vcmask 1044480
    %v589 = vrot.slane %v252, 3
    %v590 = vrot.slane %v253, 3
    %v591 = vsel %vm588, %v589, %v590
    %v592 = vrot.slane %v254, 3
    %v593 = vsel %vm588, %v590, %v592
    %v594 = vrot.slane %v263, 3
    %v595 = vsel %vm588, %v592, %v594
    %v604 = vunpack.c.l.b16 %v580
    %v605 = vunpack.c.l.b16 %v581
    %v606 = vunpack.c.l.b16 %v582
    %v607 = vunpack.c.l.b16 %v583
    %v608 = vunpack.c.l.b16 %v584
    %v609 = vunpack.c.l.b16 %v585
    %v610 = vunpack.c.l.b16 %v586
    %v611 = vunpack.c.l.b16 %v587
    %v612 = vpack.c.b16 %v605, %v604
    %v613 = vpack.c.b16 %v607, %v606
    %v614 = vpack.c.b16 %v609, %v608
    %v615 = vpack.c.b16 %v611, %v610
    %v621 = vsel %vm309, %v591, 0
    %v624 = vsel %vm309, %v593, 0
    %v627 = vsel %vm309, %v595, 0
    %629 = vmatprep.subr.bf16.mxu0 0
    %630 = vmatpush1.bf16.msra.mxu0 %v612
    %631 = vmatprep.subr.bf16.mxu0 0
    %632 = vmatpush1.bf16.msra.mxu0 %v613
    %633 = vmatprep.subr.bf16.mxu0 0
    %634 = vmatpush1.bf16.msra.mxu0 %v614
    %635 = vmatprep.subr.bf16.mxu0 0
    %636 = vmatpush1.bf16.msra.mxu0 %v615
    %637 = vmatprep.subr.bf16.mxu0 0
    %638 = vmatpush1.bf16.msra.mxu0 0
    %639 = vmatprep.subr.bf16.mxu0 0
    %640 = vmatpush1.bf16.msra.mxu0 0
    %641 = vmatprep.subr.bf16.mxu0 0
    %642 = vmatpush1.bf16.msra.mxu0 0
    %643 = vmatprep.subr.bf16.mxu0 0
    %644 = vmatpush1.bf16.msra.mxu0 0
    %645 = vmatprep.subr.bf16.mxu0 0
    %646 = vmatpush1.bf16.msra.mxu0 0
    %647 = vmatprep.subr.bf16.mxu0 0
    %648 = vmatpush1.bf16.msra.mxu0 0
    %649 = vmatprep.subr.bf16.mxu0 0
    %650 = vmatpush1.bf16.msra.mxu0 0
    %651 = vmatprep.subr.bf16.mxu0 0
    %652 = vmatpush1.bf16.msra.mxu0 0
    %653 = vmatprep.subr.bf16.mxu0 0
    %654 = vmatpush1.bf16.msra.mxu0 0
    %655 = vmatprep.subr.bf16.mxu0 0
    %656 = vmatpush1.bf16.msra.mxu0 0
    %657 = vmatprep.subr.bf16.mxu0 0
    %658 = vmatpush1.bf16.msra.mxu0 0
    %659 = vmatprep.subr.bf16.mxu0 0
    %660 = vmatpush1.bf16.msra.mxu0 0
    %661 = vmatprep.mubr.bf16.mxu0 0
    %662 = vmatmul.mubr.bf16.gmra.mrb[0].mxu0 %v621
    %v663 = vpop.f32.mrb[0].mxu0
    %v664 = vadd.f32 0.0, %v663
    %v665 = vpop.f32.mrb[0].mxu0
    %v666 = vpop.f32.mrb[0].mxu0
    %v667 = vadd.f32 0.0, %v666
    %v668 = vpop.f32.mrb[0].mxu0
    %669 = vmatprep.mubr.bf16.mxu0 0
    %670 = vmatmul.mubr.bf16.gmra.mrb[0].mxu0 %v624
    %v671 = vpop.f32.mrb[0].mxu0
    %v672 = vadd.f32 0.0, %v671
    %v673 = vpop.f32.mrb[0].mxu0
    %v674 = vpop.f32.mrb[0].mxu0
    %v675 = vadd.f32 0.0, %v674
    %v676 = vpop.f32.mrb[0].mxu0
    %677 = vmatprep.mubr.bf16.mxu0 0
    %678 = vmatmul.mubr.bf16.gmra.mrb[0].mxu0 %v627
    %v679 = vpop.f32.mrb[0].mxu0
    %v680 = vadd.f32 0.0, %v679
    %v681 = vpop.f32.mrb[0].mxu0
    %v682 = vpop.f32.mrb[0].mxu0
    %v683 = vadd.f32 0.0, %v682
    %v684 = vpop.f32.mrb[0].mxu0
    %685 = vdwg.mxu0
    %v686 = vadd.f32 %v573, %v664
    %v687 = vadd.f32 %v574, %v667
    %v688 = vadd.f32 %v575, %v672
    %v689 = vadd.f32 %v576, %v675
    %v690 = vadd.f32 %v577, %v680
    %v691 = vadd.f32 %v578, %v683
    %v692 = vpack.c.bf16 %v247, %v246
    %v693 = vpack.c.bf16 %v249, %v248
    %v694 = vpack.c.bf16 %v251, %v250
    %s695 = scalar_lea.vmem [#allocation3], 128
    %v696 = vld [vmem:[%s695] sm:$0xf]
    %v697 = vld [vmem:[%s695 + $0x4] sm:$0xf]
    %v698 = vld [vmem:[%s695 + $0x8] sm:$0xf]
    %v699 = vld [vmem:[%s695 + $0xc] sm:$0xf]
    %v700 = vld [vmem:[%s695 + $0x10] sm:$0xf]
    %v701 = vld [vmem:[%s695 + $0x14] sm:$0xf]
    %v702 = vld [vmem:[%s695 + $0x18] sm:$0xf]
    %v703 = vld [vmem:[%s695 + $0x1c] sm:$0xf]
    %v712 = vunpack.c.l.b16 %v696
    %v713 = vunpack.c.l.b16 %v697
    %v714 = vunpack.c.l.b16 %v698
    %v715 = vunpack.c.l.b16 %v699
    %v716 = vunpack.c.l.b16 %v700
    %v717 = vunpack.c.l.b16 %v701
    %v718 = vunpack.c.l.b16 %v702
    %v719 = vunpack.c.l.b16 %v703
    %v720 = vpack.c.b16 %v713, %v712
    %v721 = vpack.c.b16 %v715, %v714
    %v722 = vpack.c.b16 %v717, %v716
    %v723 = vpack.c.b16 %v719, %v718
    %v729 = vsel %vm309, %v692, 0
    %v732 = vsel %vm309, %v693, 0
    %v735 = vsel %vm309, %v694, 0
    %737 = vmatprep.subr.bf16.mxu0 0
    %738 = vmatpush1.bf16.msra.mxu0 %v720
    %739 = vmatprep.subr.bf16.mxu0 0
    %740 = vmatpush1.bf16.msra.mxu0 %v721
    %741 = vmatprep.subr.bf16.mxu0 0
    %742 = vmatpush1.bf16.msra.mxu0 %v722
    %743 = vmatprep.subr.bf16.mxu0 0
    %744 = vmatpush1.bf16.msra.mxu0 %v723
    %745 = vmatprep.subr.bf16.mxu0 0
    %746 = vmatpush1.bf16.msra.mxu0 0
    %747 = vmatprep.subr.bf16.mxu0 0
    %748 = vmatpush1.bf16.msra.mxu0 0
    %749 = vmatprep.subr.bf16.mxu0 0
    %750 = vmatpush1.bf16.msra.mxu0 0
    %751 = vmatprep.subr.bf16.mxu0 0
    %752 = vmatpush1.bf16.msra.mxu0 0
    %753 = vmatprep.subr.bf16.mxu0 0
    %754 = vmatpush1.bf16.msra.mxu0 0
    %755 = vmatprep.subr.bf16.mxu0 0
    %756 = vmatpush1.bf16.msra.mxu0 0
    %757 = vmatprep.subr.bf16.mxu0 0
    %758 = vmatpush1.bf16.msra.mxu0 0
    %759 = vmatprep.subr.bf16.mxu0 0
    %760 = vmatpush1.bf16.msra.mxu0 0
    %761 = vmatprep.subr.bf16.mxu0 0
    %762 = vmatpush1.bf16.msra.mxu0 0
    %763 = vmatprep.subr.bf16.mxu0 0
    %764 = vmatpush1.bf16.msra.mxu0 0
    %765 = vmatprep.subr.bf16.mxu0 0
    %766 = vmatpush1.bf16.msra.mxu0 0
    %767 = vmatprep.subr.bf16.mxu0 0
    %768 = vmatpush1.bf16.msra.mxu0 0
    %769 = vmatprep.mubr.bf16.mxu0 0
    %770 = vmatmul.mubr.bf16.gmra.mrb[0].mxu0 %v729
    %v771 = vpop.f32.mrb[0].mxu0
    %v772 = vadd.f32 0.0, %v771
    %v773 = vpop.f32.mrb[0].mxu0
    %v774 = vpop.f32.mrb[0].mxu0
    %v775 = vadd.f32 0.0, %v774
    %v776 = vpop.f32.mrb[0].mxu0
    %777 = vmatprep.mubr.bf16.mxu0 0
    %778 = vmatmul.mubr.bf16.gmra.mrb[0].mxu0 %v732
    %v779 = vpop.f32.mrb[0].mxu0
    %v780 = vadd.f32 0.0, %v779
    %v781 = vpop.f32.mrb[0].mxu0
    %v782 = vpop.f32.mrb[0].mxu0
    %v783 = vadd.f32 0.0, %v782
    %v784 = vpop.f32.mrb[0].mxu0
    %785 = vmatprep.mubr.bf16.mxu0 0
    %786 = vmatmul.mubr.bf16.gmra.mrb[0].mxu0 %v735
    %v787 = vpop.f32.mrb[0].mxu0
    %v788 = vadd.f32 0.0, %v787
    %v789 = vpop.f32.mrb[0].mxu0
    %v790 = vpop.f32.mrb[0].mxu0
    %v791 = vadd.f32 0.0, %v790
    %v792 = vpop.f32.mrb[0].mxu0
    %793 = vdwg.mxu0
    %v794 = vadd.f32 %v686, %v772
    %v795 = vadd.f32 %v687, %v775
    %v796 = vadd.f32 %v688, %v780
    %v797 = vadd.f32 %v689, %v783
    %v798 = vadd.f32 %v690, %v788
    %v799 = vadd.f32 %v691, %v791
    %v800 = vld [vmem:[%s4] sm:$0x1]
    %v802 = vlaneseq
    %v803 = vshrl.u32 %v802, 7
    %v804 = vsub.s32 0, %v803
    %v805 = vrot.slane %v800, %v804
    %v807 = vadd.f32 %v794, %v805
    %v808 = vadd.f32 %v795, %v805
    %v809 = vadd.f32 %v796, %v805
    %v810 = vadd.f32 %v797, %v805
    %v811 = vadd.f32 %v798, %v805
    %v812 = vadd.f32 %v799, %v805
    %v813 = vmax.f32 %v807, 0.0
    %v814 = vmax.f32 %v808, 0.0
    %v815 = vmax.f32 %v809, 0.0
    %v816 = vmax.f32 %v810, 0.0
    %v817 = vmax.f32 %v811, 0.0
    %v818 = vmax.f32 %v812, 0.0
    %v819 = vpack.c.bf16 %v814, %v813
    %v820 = vpack.c.bf16 %v816, %v815
    %v821 = vpack.c.bf16 %v817, %v817
    %v822 = vld [vmem:[#allocation6] sm:$0xf]
    %v823 = vld [vmem:[#allocation6 + $0x4] sm:$0xf]
    %v824 = vld [vmem:[#allocation6 + $0x8] sm:$0xf]
    %v825 = vld [vmem:[#allocation6 + $0xc] sm:$0xf]
    %v826 = vld [vmem:[#allocation6 + $0x10] sm:$0xf]
    %v827 = vld [vmem:[#allocation6 + $0x14] sm:$0xf]
    %v828 = vld [vmem:[#allocation6 + $0x18] sm:$0xf]
    %v829 = vld [vmem:[#allocation6 + $0x1c] sm:$0xf]
    %v830 = vpack.c.bf16 %v818, %v817
    %s831 = scalar_lea.vmem [#allocation6], 32
    %v832 = vld [vmem:[%s831] sm:$0xf]
    %v833 = vld [vmem:[%s831 + $0x4] sm:$0xf]
    %v834 = vld [vmem:[%s831 + $0x8] sm:$0xf]
    %v835 = vld [vmem:[%s831 + $0xc] sm:$0xf]
    %v836 = vld [vmem:[%s831 + $0x10] sm:$0xf]
    %v837 = vld [vmem:[%s831 + $0x14] sm:$0xf]
    %v838 = vld [vmem:[%s831 + $0x18] sm:$0xf]
    %v839 = vld [vmem:[%s831 + $0x1c] sm:$0xf]
    %v843 = vrot.slane %v819, 1
    %v844 = vrot.slane %v820, 1
    %v845 = vsel %vm277, %v843, %v844
    %v846 = vrot.slane %v830, 1
    %v847 = vsel %vm277, %v844, %v846
    %v856 = vunpack.c.l.b16 %v832
    %v857 = vunpack.c.l.b16 %v833
    %v858 = vunpack.c.l.b16 %v834
    %v859 = vunpack.c.l.b16 %v835
    %v860 = vunpack.c.l.b16 %v836
    %v861 = vunpack.c.l.b16 %v837
    %v862 = vunpack.c.l.b16 %v838
    %v863 = vunpack.c.l.b16 %v839
    %v864 = vpack.c.b16 %v857, %v856
    %v865 = vpack.c.b16 %v859, %v858
    %v866 = vpack.c.b16 %v861, %v860
    %v867 = vpack.c.b16 %v863, %v862
    %v873 = vsel %vm309, %v845, 0
    %v876 = vsel %vm309, %v847, 0
    %v879 = vsel %vm309, %v846, 0
    %881 = vmatprep.subr.bf16.mxu0 0
    %882 = vmatpush1.bf16.msra.mxu0 %v864
    %883 = vmatprep.subr.bf16.mxu0 0
    %884 = vmatpush1.bf16.msra.mxu0 %v865
    %885 = vmatprep.subr.bf16.mxu0 0
    %886 = vmatpush1.bf16.msra.mxu0 %v866
    %887 = vmatprep.subr.bf16.mxu0 0
    %888 = vmatpush1.bf16.msra.mxu0 %v867
    %889 = vmatprep.subr.bf16.mxu0 0
    %890 = vmatpush1.bf16.msra.mxu0 0
    %891 = vmatprep.subr.bf16.mxu0 0
    %892 = vmatpush1.bf16.msra.mxu0 0
    %893 = vmatprep.subr.bf16.mxu0 0
    %894 = vmatpush1.bf16.msra.mxu0 0
    %895 = vmatprep.subr.bf16.mxu0 0
    %896 = vmatpush1.bf16.msra.mxu0 0
    %897 = vmatprep.subr.bf16.mxu0 0
    %898 = vmatpush1.bf16.msra.mxu0 0
    %899 = vmatprep.subr.bf16.mxu0 0
    %900 = vmatpush1.bf16.msra.mxu0 0
    %901 = vmatprep.subr.bf16.mxu0 0
    %902 = vmatpush1.bf16.msra.mxu0 0
    %903 = vmatprep.subr.bf16.mxu0 0
    %904 = vmatpush1.bf16.msra.mxu0 0
    %905 = vmatprep.subr.bf16.mxu0 0
    %906 = vmatpush1.bf16.msra.mxu0 0
    %907 = vmatprep.subr.bf16.mxu0 0
    %908 = vmatpush1.bf16.msra.mxu0 0
    %909 = vmatprep.subr.bf16.mxu0 0
    %910 = vmatpush1.bf16.msra.mxu0 0
    %911 = vmatprep.subr.bf16.mxu0 0
    %912 = vmatpush1.bf16.msra.mxu0 0
    %913 = vmatprep.mubr.bf16.mxu0 0
    %914 = vmatmul.mubr.bf16.gmra.mrb[0].mxu0 %v873
    %v915 = vpop.f32.mrb[0].mxu0
    %v916 = vadd.f32 0.0, %v915
    %v917 = vpop.f32.mrb[0].mxu0
    %v918 = vpop.f32.mrb[0].mxu0
    %v919 = vadd.f32 0.0, %v918
    %v920 = vpop.f32.mrb[0].mxu0
    %921 = vmatprep.mubr.bf16.mxu0 0
    %922 = vmatmul.mubr.bf16.gmra.mrb[0].mxu0 %v876
    %v923 = vpop.f32.mrb[0].mxu0
    %v924 = vadd.f32 0.0, %v923
    %v925 = vpop.f32.mrb[0].mxu0
    %v926 = vpop.f32.mrb[0].mxu0
    %v927 = vadd.f32 0.0, %v926
    %v928 = vpop.f32.mrb[0].mxu0
    %929 = vmatprep.mubr.bf16.mxu0 0
    %930 = vmatmul.mubr.bf16.gmra.mrb[0].mxu0 %v879
    %v931 = vpop.f32.mrb[0].mxu0
    %v932 = vadd.f32 0.0, %v931
    %v933 = vpop.f32.mrb[0].mxu0
    %v934 = vpop.f32.mrb[0].mxu0
    %v935 = vpop.f32.mrb[0].mxu0
    %936 = vdwg.mxu0
    %v945 = vunpack.c.l.b16 %v822
    %v946 = vunpack.c.l.b16 %v823
    %v947 = vunpack.c.l.b16 %v824
    %v948 = vunpack.c.l.b16 %v825
    %v949 = vunpack.c.l.b16 %v826
    %v950 = vunpack.c.l.b16 %v827
    %v951 = vunpack.c.l.b16 %v828
    %v952 = vunpack.c.l.b16 %v829
    %v953 = vpack.c.b16 %v946, %v945
    %v954 = vpack.c.b16 %v948, %v947
    %v955 = vpack.c.b16 %v950, %v949
    %v956 = vpack.c.b16 %v952, %v951
    %v962 = vsel %vm309, %v819, 0
    %v965 = vsel %vm309, %v820, 0
    %v968 = vsel %vm309, %v821, 0
    %970 = vmatprep.subr.bf16.mxu0 0
    %971 = vmatpush1.bf16.msra.mxu0 %v953
    %972 = vmatprep.subr.bf16.mxu0 0
    %973 = vmatpush1.bf16.msra.mxu0 %v954
    %974 = vmatprep.subr.bf16.mxu0 0
    %975 = vmatpush1.bf16.msra.mxu0 %v955
    %976 = vmatprep.subr.bf16.mxu0 0
    %977 = vmatpush1.bf16.msra.mxu0 %v956
    %978 = vmatprep.subr.bf16.mxu0 0
    %979 = vmatpush1.bf16.msra.mxu0 0
    %980 = vmatprep.subr.bf16.mxu0 0
    %981 = vmatpush1.bf16.msra.mxu0 0
    %982 = vmatprep.subr.bf16.mxu0 0
    %983 = vmatpush1.bf16.msra.mxu0 0
    %984 = vmatprep.subr.bf16.mxu0 0
    %985 = vmatpush1.bf16.msra.mxu0 0
    %986 = vmatprep.subr.bf16.mxu0 0
    %987 = vmatpush1.bf16.msra.mxu0 0
    %988 = vmatprep.subr.bf16.mxu0 0
    %989 = vmatpush1.bf16.msra.mxu0 0
    %990 = vmatprep.subr.bf16.mxu0 0
    %991 = vmatpush1.bf16.msra.mxu0 0
    %992 = vmatprep.subr.bf16.mxu0 0
    %993 = vmatpush1.bf16.msra.mxu0 0
    %994 = vmatprep.subr.bf16.mxu0 0
    %995 = vmatpush1.bf16.msra.mxu0 0
    %996 = vmatprep.subr.bf16.mxu0 0
    %997 = vmatpush1.bf16.msra.mxu0 0
    %998 = vmatprep.subr.bf16.mxu0 0
    %999 = vmatpush1.bf16.msra.mxu0 0
    %1000 = vmatprep.subr.bf16.mxu0 0
    %1001 = vmatpush1.bf16.msra.mxu0 0
    %1002 = vmatprep.mubr.bf16.mxu0 0
    %1003 = vmatmul.mubr.bf16.gmra.mrb[0].mxu0 %v962
    %v1004 = vpop.f32.mrb[0].mxu0
    %v1005 = vadd.f32 %v916, %v1004
    %v1006 = vpop.f32.mrb[0].mxu0
    %v1007 = vpop.f32.mrb[0].mxu0
    %v1008 = vadd.f32 %v919, %v1007
    %v1009 = vpop.f32.mrb[0].mxu0
    %1010 = vmatprep.mubr.bf16.mxu0 0
    %1011 = vmatmul.mubr.bf16.gmra.mrb[0].mxu0 %v965
    %v1012 = vpop.f32.mrb[0].mxu0
    %v1013 = vadd.f32 %v924, %v1012
    %v1014 = vpop.f32.mrb[0].mxu0
    %v1015 = vpop.f32.mrb[0].mxu0
    %v1016 = vadd.f32 %v927, %v1015
    %v1017 = vpop.f32.mrb[0].mxu0
    %1018 = vmatprep.mubr.bf16.mxu0 0
    %1019 = vmatmul.mubr.bf16.gmra.mrb[0].mxu0 %v968
    %v1020 = vpop.f32.mrb[0].mxu0
    %v1021 = vadd.f32 %v932, %v1020
    %v1022 = vpop.f32.mrb[0].mxu0
    %v1023 = vpop.f32.mrb[0].mxu0
    %v1024 = vpop.f32.mrb[0].mxu0
    %1025 = vdwg.mxu0
    %s1026 = scalar_lea.vmem [#allocation6], 64
    %v1027 = vld [vmem:[%s1026] sm:$0xf]
    %v1028 = vld [vmem:[%s1026 + $0x4] sm:$0xf]
    %v1029 = vld [vmem:[%s1026 + $0x8] sm:$0xf]
    %v1030 = vld [vmem:[%s1026 + $0xc] sm:$0xf]
    %v1031 = vld [vmem:[%s1026 + $0x10] sm:$0xf]
    %v1032 = vld [vmem:[%s1026 + $0x14] sm:$0xf]
    %v1033 = vld [vmem:[%s1026 + $0x18] sm:$0xf]
    %v1034 = vld [vmem:[%s1026 + $0x1c] sm:$0xf]
    %v1035 = vrot.slane %v819, 2
    %v1036 = vrot.slane %v820, 2
    %v1037 = vsel %vm475, %v1035, %v1036
    %v1038 = vrot.slane %v830, 2
    %v1039 = vsel %vm475, %v1036, %v1038
    %v1048 = vunpack.c.l.b16 %v1027
    %v1049 = vunpack.c.l.b16 %v1028
    %v1050 = vunpack.c.l.b16 %v1029
    %v1051 = vunpack.c.l.b16 %v1030
    %v1052 = vunpack.c.l.b16 %v1031
    %v1053 = vunpack.c.l.b16 %v1032
    %v1054 = vunpack.c.l.b16 %v1033
    %v1055 = vunpack.c.l.b16 %v1034
    %v1056 = vpack.c.b16 %v1049, %v1048
    %v1057 = vpack.c.b16 %v1051, %v1050
    %v1058 = vpack.c.b16 %v1053, %v1052
    %v1059 = vpack.c.b16 %v1055, %v1054
    %v1065 = vsel %vm309, %v1037, 0
    %v1068 = vsel %vm309, %v1039, 0
    %v1071 = vsel %vm309, %v1038, 0
    %1073 = vmatprep.subr.bf16.mxu0 0
    %1074 = vmatpush1.bf16.msra.mxu0 %v1056
    %1075 = vmatprep.subr.bf16.mxu0 0
    %1076 = vmatpush1.bf16.msra.mxu0 %v1057
    %1077 = vmatprep.subr.bf16.mxu0 0
    %1078 = vmatpush1.bf16.msra.mxu0 %v1058
    %1079 = vmatprep.subr.bf16.mxu0 0
    %1080 = vmatpush1.bf16.msra.mxu0 %v1059
    %1081 = vmatprep.subr.bf16.mxu0 0
    %1082 = vmatpush1.bf16.msra.mxu0 0
    %1083 = vmatprep.subr.bf16.mxu0 0
    %1084 = vmatpush1.bf16.msra.mxu0 0
    %1085 = vmatprep.subr.bf16.mxu0 0
    %1086 = vmatpush1.bf16.msra.mxu0 0
    %1087 = vmatprep.subr.bf16.mxu0 0
    %1088 = vmatpush1.bf16.msra.mxu0 0
    %1089 = vmatprep.subr.bf16.mxu0 0
    %1090 = vmatpush1.bf16.msra.mxu0 0
    %1091 = vmatprep.subr.bf16.mxu0 0
    %1092 = vmatpush1.bf16.msra.mxu0 0
    %1093 = vmatprep.subr.bf16.mxu0 0
    %1094 = vmatpush1.bf16.msra.mxu0 0
    %1095 = vmatprep.subr.bf16.mxu0 0
    %1096 = vmatpush1.bf16.msra.mxu0 0
    %1097 = vmatprep.subr.bf16.mxu0 0
    %1098 = vmatpush1.bf16.msra.mxu0 0
    %1099 = vmatprep.subr.bf16.mxu0 0
    %1100 = vmatpush1.bf16.msra.mxu0 0
    %1101 = vmatprep.subr.bf16.mxu0 0
    %1102 = vmatpush1.bf16.msra.mxu0 0
    %1103 = vmatprep.subr.bf16.mxu0 0
    %1104 = vmatpush1.bf16.msra.mxu0 0
    %1105 = vmatprep.mubr.bf16.mxu0 0
    %1106 = vmatmul.mubr.bf16.gmra.mrb[0].mxu0 %v1065
    %v1107 = vpop.f32.mrb[0].mxu0
    %v1108 = vadd.f32 0.0, %v1107
    %v1109 = vpop.f32.mrb[0].mxu0
    %v1110 = vpop.f32.mrb[0].mxu0
    %v1111 = vadd.f32 0.0, %v1110
    %v1112 = vpop.f32.mrb[0].mxu0
    %1113 = vmatprep.mubr.bf16.mxu0 0
    %1114 = vmatmul.mubr.bf16.gmra.mrb[0].mxu0 %v1068
    %v1115 = vpop.f32.mrb[0].mxu0
    %v1116 = vadd.f32 0.0, %v1115
    %v1117 = vpop.f32.mrb[0].mxu0
    %v1118 = vpop.f32.mrb[0].mxu0
    %v1119 = vadd.f32 0.0, %v1118
    %v1120 = vpop.f32.mrb[0].mxu0
    %1121 = vmatprep.mubr.bf16.mxu0 0
    %1122 = vmatmul.mubr.bf16.gmra.mrb[0].mxu0 %v1071
    %v1123 = vpop.f32.mrb[0].mxu0
    %v1124 = vadd.f32 0.0, %v1123
    %v1125 = vpop.f32.mrb[0].mxu0
    %v1126 = vpop.f32.mrb[0].mxu0
    %v1127 = vpop.f32.mrb[0].mxu0
    %1128 = vdwg.mxu0
    %v1129 = vadd.f32 %v1005, %v1108
    %v1130 = vadd.f32 %v1008, %v1111
    %v1131 = vadd.f32 %v1013, %v1116
    %v1132 = vadd.f32 %v1016, %v1119
    %v1133 = vadd.f32 %v1021, %v1124
    %s1134 = scalar_lea.vmem [#allocation6], 96
    %v1135 = vld [vmem:[%s1134] sm:$0xf]
    %v1136 = vld [vmem:[%s1134 + $0x4] sm:$0xf]
    %v1137 = vld [vmem:[%s1134 + $0x8] sm:$0xf]
    %v1138 = vld [vmem:[%s1134 + $0xc] sm:$0xf]
    %v1139 = vld [vmem:[%s1134 + $0x10] sm:$0xf]
    %v1140 = vld [vmem:[%s1134 + $0x14] sm:$0xf]
    %v1141 = vld [vmem:[%s1134 + $0x18] sm:$0xf]
    %v1142 = vld [vmem:[%s1134 + $0x1c] sm:$0xf]
    %v1143 = vrot.slane %v819, 3
    %v1144 = vrot.slane %v820, 3
    %v1145 = vsel %vm588, %v1143, %v1144
    %v1146 = vrot.slane %v830, 3
    %v1147 = vsel %vm588, %v1144, %v1146
    %v1156 = vunpack.c.l.b16 %v1135
    %v1157 = vunpack.c.l.b16 %v1136
    %v1158 = vunpack.c.l.b16 %v1137
    %v1159 = vunpack.c.l.b16 %v1138
    %v1160 = vunpack.c.l.b16 %v1139
    %v1161 = vunpack.c.l.b16 %v1140
    %v1162 = vunpack.c.l.b16 %v1141
    %v1163 = vunpack.c.l.b16 %v1142
    %v1164 = vpack.c.b16 %v1157, %v1156
    %v1165 = vpack.c.b16 %v1159, %v1158
    %v1166 = vpack.c.b16 %v1161, %v1160
    %v1167 = vpack.c.b16 %v1163, %v1162
    %v1173 = vsel %vm309, %v1145, 0
    %v1176 = vsel %vm309, %v1147, 0
    %v1179 = vsel %vm309, %v1146, 0
    %1181 = vmatprep.subr.bf16.mxu0 0
    %1182 = vmatpush1.bf16.msra.mxu0 %v1164
    %1183 = vmatprep.subr.bf16.mxu0 0
    %1184 = vmatpush1.bf16.msra.mxu0 %v1165
    %1185 = vmatprep.subr.bf16.mxu0 0
    %1186 = vmatpush1.bf16.msra.mxu0 %v1166
    %1187 = vmatprep.subr.bf16.mxu0 0
    %1188 = vmatpush1.bf16.msra.mxu0 %v1167
    %1189 = vmatprep.subr.bf16.mxu0 0
    %1190 = vmatpush1.bf16.msra.mxu0 0
    %1191 = vmatprep.subr.bf16.mxu0 0
    %1192 = vmatpush1.bf16.msra.mxu0 0
    %1193 = vmatprep.subr.bf16.mxu0 0
    %1194 = vmatpush1.bf16.msra.mxu0 0
    %1195 = vmatprep.subr.bf16.mxu0 0
    %1196 = vmatpush1.bf16.msra.mxu0 0
    %1197 = vmatprep.subr.bf16.mxu0 0
    %1198 = vmatpush1.bf16.msra.mxu0 0
    %1199 = vmatprep.subr.bf16.mxu0 0
    %1200 = vmatpush1.bf16.msra.mxu0 0
    %1201 = vmatprep.subr.bf16.mxu0 0
    %1202 = vmatpush1.bf16.msra.mxu0 0
    %1203 = vmatprep.subr.bf16.mxu0 0
    %1204 = vmatpush1.bf16.msra.mxu0 0
    %1205 = vmatprep.subr.bf16.mxu0 0
    %1206 = vmatpush1.bf16.msra.mxu0 0
    %1207 = vmatprep.subr.bf16.mxu0 0
    %1208 = vmatpush1.bf16.msra.mxu0 0
    %1209 = vmatprep.subr.bf16.mxu0 0
    %1210 = vmatpush1.bf16.msra.mxu0 0
    %1211 = vmatprep.subr.bf16.mxu0 0
    %1212 = vmatpush1.bf16.msra.mxu0 0
    %1213 = vmatprep.mubr.bf16.mxu0 0
    %1214 = vmatmul.mubr.bf16.gmra.mrb[0].mxu0 %v1173
    %v1215 = vpop.f32.mrb[0].mxu0
    %v1216 = vadd.f32 0.0, %v1215
    %v1217 = vpop.f32.mrb[0].mxu0
    %v1218 = vpop.f32.mrb[0].mxu0
    %v1219 = vadd.f32 0.0, %v1218
    %v1220 = vpop.f32.mrb[0].mxu0
    %1221 = vmatprep.mubr.bf16.mxu0 0
    %1222 = vmatmul.mubr.bf16.gmra.mrb[0].mxu0 %v1176
    %v1223 = vpop.f32.mrb[0].mxu0
    %v1224 = vadd.f32 0.0, %v1223
    %v1225 = vpop.f32.mrb[0].mxu0
    %v1226 = vpop.f32.mrb[0].mxu0
    %v1227 = vadd.f32 0.0, %v1226
    %v1228 = vpop.f32.mrb[0].mxu0
    %1229 = vmatprep.mubr.bf16.mxu0 0
    %1230 = vmatmul.mubr.bf16.gmra.mrb[0].mxu0 %v1179
    %v1231 = vpop.f32.mrb[0].mxu0
    %v1232 = vadd.f32 0.0, %v1231
    %v1233 = vpop.f32.mrb[0].mxu0
    %v1234 = vpop.f32.mrb[0].mxu0
    %v1235 = vpop.f32.mrb[0].mxu0
    %1236 = vdwg.mxu0
    %v1237 = vadd.f32 %v1129, %v1216
    %v1238 = vadd.f32 %v1130, %v1219
    %v1239 = vadd.f32 %v1131, %v1224
    %v1240 = vadd.f32 %v1132, %v1227
    %v1241 = vadd.f32 %v1133, %v1232
    %v1242 = vpack.c.bf16 %v815, %v814
    %v1243 = vpack.c.bf16 %v817, %v816
    %v1244 = vpack.c.bf16 %v818, %v818
    %s1245 = scalar_lea.vmem [#allocation6], 128
    %v1246 = vld [vmem:[%s1245] sm:$0xf]
    %v1247 = vld [vmem:[%s1245 + $0x4] sm:$0xf]
    %v1248 = vld [vmem:[%s1245 + $0x8] sm:$0xf]
    %v1249 = vld [vmem:[%s1245 + $0xc] sm:$0xf]
    %v1250 = vld [vmem:[%s1245 + $0x10] sm:$0xf]
    %v1251 = vld [vmem:[%s1245 + $0x14] sm:$0xf]
    %v1252 = vld [vmem:[%s1245 + $0x18] sm:$0xf]
    %v1253 = vld [vmem:[%s1245 + $0x1c] sm:$0xf]
    %v1262 = vunpack.c.l.b16 %v1246
    %v1263 = vunpack.c.l.b16 %v1247
    %v1264 = vunpack.c.l.b16 %v1248
    %v1265 = vunpack.c.l.b16 %v1249
    %v1266 = vunpack.c.l.b16 %v1250
    %v1267 = vunpack.c.l.b16 %v1251
    %v1268 = vunpack.c.l.b16 %v1252
    %v1269 = vunpack.c.l.b16 %v1253
    %v1270 = vpack.c.b16 %v1263, %v1262
    %v1271 = vpack.c.b16 %v1265, %v1264
    %v1272 = vpack.c.b16 %v1267, %v1266
    %v1273 = vpack.c.b16 %v1269, %v1268
    %v1279 = vsel %vm309, %v1242, 0
    %v1282 = vsel %vm309, %v1243, 0
    %v1285 = vsel %vm309, %v1244, 0
    %1287 = vmatprep.subr.bf16.mxu0 0
    %1288 = vmatpush1.bf16.msra.mxu0 %v1270
    %1289 = vmatprep.subr.bf16.mxu0 0
    %1290 = vmatpush1.bf16.msra.mxu0 %v1271
    %1291 = vmatprep.subr.bf16.mxu0 0
    %1292 = vmatpush1.bf16.msra.mxu0 %v1272
    %1293 = vmatprep.subr.bf16.mxu0 0
    %1294 = vmatpush1.bf16.msra.mxu0 %v1273
    %1295 = vmatprep.subr.bf16.mxu0 0
    %1296 = vmatpush1.bf16.msra.mxu0 0
    %1297 = vmatprep.subr.bf16.mxu0 0
    %1298 = vmatpush1.bf16.msra.mxu0 0
    %1299 = vmatprep.subr.bf16.mxu0 0
    %1300 = vmatpush1.bf16.msra.mxu0 0
    %1301 = vmatprep.subr.bf16.mxu0 0
    %1302 = vmatpush1.bf16.msra.mxu0 0
    %1303 = vmatprep.subr.bf16.mxu0 0
    %1304 = vmatpush1.bf16.msra.mxu0 0
    %1305 = vmatprep.subr.bf16.mxu0 0
    %1306 = vmatpush1.bf16.msra.mxu0 0
    %1307 = vmatprep.subr.bf16.mxu0 0
    %1308 = vmatpush1.bf16.msra.mxu0 0
    %1309 = vmatprep.subr.bf16.mxu0 0
    %1310 = vmatpush1.bf16.msra.mxu0 0
    %1311 = vmatprep.subr.bf16.mxu0 0
    %1312 = vmatpush1.bf16.msra.mxu0 0
    %1313 = vmatprep.subr.bf16.mxu0 0
    %1314 = vmatpush1.bf16.msra.mxu0 0
    %1315 = vmatprep.subr.bf16.mxu0 0
    %1316 = vmatpush1.bf16.msra.mxu0 0
    %1317 = vmatprep.subr.bf16.mxu0 0
    %1318 = vmatpush1.bf16.msra.mxu0 0
    %1319 = vmatprep.mubr.bf16.mxu0 0
    %1320 = vmatmul.mubr.bf16.gmra.mrb[0].mxu0 %v1279
    %v1321 = vpop.f32.mrb[0].mxu0
    %v1322 = vadd.f32 0.0, %v1321
    %v1323 = vpop.f32.mrb[0].mxu0
    %v1324 = vpop.f32.mrb[0].mxu0
    %v1325 = vadd.f32 0.0, %v1324
    %v1326 = vpop.f32.mrb[0].mxu0
    %1327 = vmatprep.mubr.bf16.mxu0 0
    %1328 = vmatmul.mubr.bf16.gmra.mrb[0].mxu0 %v1282
    %v1329 = vpop.f32.mrb[0].mxu0
    %v1330 = vadd.f32 0.0, %v1329
    %v1331 = vpop.f32.mrb[0].mxu0
    %v1332 = vpop.f32.mrb[0].mxu0
    %v1333 = vadd.f32 0.0, %v1332
    %v1334 = vpop.f32.mrb[0].mxu0
    %1335 = vmatprep.mubr.bf16.mxu0 0
    %1336 = vmatmul.mubr.bf16.gmra.mrb[0].mxu0 %v1285
    %v1337 = vpop.f32.mrb[0].mxu0
    %v1338 = vadd.f32 0.0, %v1337
    %v1339 = vpop.f32.mrb[0].mxu0
    %v1340 = vpop.f32.mrb[0].mxu0
    %v1341 = vpop.f32.mrb[0].mxu0
    %1342 = vdwg.mxu0
    %v1343 = vadd.f32 %v1237, %v1322
    %v1344 = vadd.f32 %v1238, %v1325
    %v1345 = vadd.f32 %v1239, %v1330
    %v1346 = vadd.f32 %v1240, %v1333
    %v1347 = vadd.f32 %v1241, %v1338
    %v1348 = vld [vmem:[%s6] sm:$0x1]
    %v1350 = vlaneseq
    %v1351 = vshrl.u32 %v1350, 7
    %v1352 = vsub.s32 0, %v1351
    %v1353 = vrot.slane %v1348, %v1352
    %v1355 = vadd.f32 %v1343, %v1353
    %v1356 = vadd.f32 %v1344, %v1353
    %v1357 = vadd.f32 %v1345, %v1353
    %v1358 = vadd.f32 %v1346, %v1353
    %v1359 = vadd.f32 %v1347, %v1353
    %v1360 = vmax.f32 %v1355, 0.0
    %v1361 = vmax.f32 %v1356, 0.0
    %v1362 = vmax.f32 %v1357, 0.0
    %v1363 = vmax.f32 %v1358, 0.0
    %v1364 = vmax.f32 %v1359, 0.0
    %v1365 = vpack.c.bf16 %v1361, %v1360
    %v1366 = vpack.c.bf16 %v1363, %v1362
    %v1367 = vld [vmem:[#allocation8] sm:$0xf]
    %v1368 = vld [vmem:[#allocation8 + $0x4] sm:$0xf]
    %v1369 = vld [vmem:[#allocation8 + $0x8] sm:$0xf]
    %v1370 = vld [vmem:[#allocation8 + $0xc] sm:$0xf]
    %v1371 = vld [vmem:[#allocation8 + $0x10] sm:$0xf]
    %v1372 = vld [vmem:[#allocation8 + $0x14] sm:$0xf]
    %v1373 = vld [vmem:[#allocation8 + $0x18] sm:$0xf]
    %v1374 = vld [vmem:[#allocation8 + $0x1c] sm:$0xf]
    %v1375 = vpack.c.bf16 %v1364, %v1364
    %s1376 = scalar_lea.vmem [#allocation8], 32
    %v1377 = vld [vmem:[%s1376] sm:$0xf]
    %v1378 = vld [vmem:[%s1376 + $0x4] sm:$0xf]
    %v1379 = vld [vmem:[%s1376 + $0x8] sm:$0xf]
    %v1380 = vld [vmem:[%s1376 + $0xc] sm:$0xf]
    %v1381 = vld [vmem:[%s1376 + $0x10] sm:$0xf]
    %v1382 = vld [vmem:[%s1376 + $0x14] sm:$0xf]
    %v1383 = vld [vmem:[%s1376 + $0x18] sm:$0xf]
    %v1384 = vld [vmem:[%s1376 + $0x1c] sm:$0xf]
    %v1388 = vrot.slane %v1365, 1
    %v1389 = vrot.slane %v1366, 1
    %v1390 = vsel %vm277, %v1388, %v1389
    %v1391 = vrot.slane %v1375, 1
    %v1392 = vsel %vm277, %v1389, %v1391
    %v1401 = vunpack.c.l.b16 %v1377
    %v1402 = vunpack.c.l.b16 %v1378
    %v1403 = vunpack.c.l.b16 %v1379
    %v1404 = vunpack.c.l.b16 %v1380
    %v1405 = vunpack.c.l.b16 %v1381
    %v1406 = vunpack.c.l.b16 %v1382
    %v1407 = vunpack.c.l.b16 %v1383
    %v1408 = vunpack.c.l.b16 %v1384
    %v1409 = vpack.c.b16 %v1402, %v1401
    %v1410 = vpack.c.b16 %v1404, %v1403
    %v1411 = vpack.c.b16 %v1406, %v1405
    %v1412 = vpack.c.b16 %v1408, %v1407
    %v1418 = vsel %vm309, %v1390, 0
    %v1421 = vsel %vm309, %v1392, 0
    %1423 = vmatprep.subr.bf16.mxu0 0
    %1424 = vmatpush1.bf16.msra.mxu0 %v1409
    %1425 = vmatprep.subr.bf16.mxu0 0
    %1426 = vmatpush1.bf16.msra.mxu0 %v1410
    %1427 = vmatprep.subr.bf16.mxu0 0
    %1428 = vmatpush1.bf16.msra.mxu0 %v1411
    %1429 = vmatprep.subr.bf16.mxu0 0
    %1430 = vmatpush1.bf16.msra.mxu0 %v1412
    %1431 = vmatprep.subr.bf16.mxu0 0
    %1432 = vmatpush1.bf16.msra.mxu0 0
    %1433 = vmatprep.subr.bf16.mxu0 0
    %1434 = vmatpush1.bf16.msra.mxu0 0
    %1435 = vmatprep.subr.bf16.mxu0 0
    %1436 = vmatpush1.bf16.msra.mxu0 0
    %1437 = vmatprep.subr.bf16.mxu0 0
    %1438 = vmatpush1.bf16.msra.mxu0 0
    %1439 = vmatprep.subr.bf16.mxu0 0
    %1440 = vmatpush1.bf16.msra.mxu0 0
    %1441 = vmatprep.subr.bf16.mxu0 0
    %1442 = vmatpush1.bf16.msra.mxu0 0
    %1443 = vmatprep.subr.bf16.mxu0 0
    %1444 = vmatpush1.bf16.msra.mxu0 0
    %1445 = vmatprep.subr.bf16.mxu0 0
    %1446 = vmatpush1.bf16.msra.mxu0 0
    %1447 = vmatprep.subr.bf16.mxu0 0
    %1448 = vmatpush1.bf16.msra.mxu0 0
    %1449 = vmatprep.subr.bf16.mxu0 0
    %1450 = vmatpush1.bf16.msra.mxu0 0
    %1451 = vmatprep.subr.bf16.mxu0 0
    %1452 = vmatpush1.bf16.msra.mxu0 0
    %1453 = vmatprep.subr.bf16.mxu0 0
    %1454 = vmatpush1.bf16.msra.mxu0 0
    %1455 = vmatprep.mubr.bf16.mxu0 0
    %1456 = vmatmul.mubr.bf16.gmra.mrb[0].mxu0 %v1418
    %v1457 = vpop.f32.mrb[0].mxu0
    %v1458 = vadd.f32 0.0, %v1457
    %v1459 = vpop.f32.mrb[0].mxu0
    %v1460 = vpop.f32.mrb[0].mxu0
    %v1461 = vadd.f32 0.0, %v1460
    %v1462 = vpop.f32.mrb[0].mxu0
    %1463 = vmatprep.mubr.bf16.mxu0 0
    %1464 = vmatmul.mubr.bf16.gmra.mrb[0].mxu0 %v1421
    %v1465 = vpop.f32.mrb[0].mxu0
    %v1466 = vadd.f32 0.0, %v1465
    %v1467 = vpop.f32.mrb[0].mxu0
    %v1468 = vpop.f32.mrb[0].mxu0
    %v1469 = vadd.f32 0.0, %v1468
    %v1470 = vpop.f32.mrb[0].mxu0
    %1471 = vdwg.mxu0
    %v1480 = vunpack.c.l.b16 %v1367
    %v1481 = vunpack.c.l.b16 %v1368
    %v1482 = vunpack.c.l.b16 %v1369
    %v1483 = vunpack.c.l.b16 %v1370
    %v1484 = vunpack.c.l.b16 %v1371
    %v1485 = vunpack.c.l.b16 %v1372
    %v1486 = vunpack.c.l.b16 %v1373
    %v1487 = vunpack.c.l.b16 %v1374
    %v1488 = vpack.c.b16 %v1481, %v1480
    %v1489 = vpack.c.b16 %v1483, %v1482
    %v1490 = vpack.c.b16 %v1485, %v1484
    %v1491 = vpack.c.b16 %v1487, %v1486
    %v1497 = vsel %vm309, %v1365, 0
    %v1500 = vsel %vm309, %v1366, 0
    %1502 = vmatprep.subr.bf16.mxu0 0
    %1503 = vmatpush1.bf16.msra.mxu0 %v1488
    %1504 = vmatprep.subr.bf16.mxu0 0
    %1505 = vmatpush1.bf16.msra.mxu0 %v1489
    %1506 = vmatprep.subr.bf16.mxu0 0
    %1507 = vmatpush1.bf16.msra.mxu0 %v1490
    %1508 = vmatprep.subr.bf16.mxu0 0
    %1509 = vmatpush1.bf16.msra.mxu0 %v1491
    %1510 = vmatprep.subr.bf16.mxu0 0
    %1511 = vmatpush1.bf16.msra.mxu0 0
    %1512 = vmatprep.subr.bf16.mxu0 0
    %1513 = vmatpush1.bf16.msra.mxu0 0
    %1514 = vmatprep.subr.bf16.mxu0 0
    %1515 = vmatpush1.bf16.msra.mxu0 0
    %1516 = vmatprep.subr.bf16.mxu0 0
    %1517 = vmatpush1.bf16.msra.mxu0 0
    %1518 = vmatprep.subr.bf16.mxu0 0
    %1519 = vmatpush1.bf16.msra.mxu0 0
    %1520 = vmatprep.subr.bf16.mxu0 0
    %1521 = vmatpush1.bf16.msra.mxu0 0
    %1522 = vmatprep.subr.bf16.mxu0 0
    %1523 = vmatpush1.bf16.msra.mxu0 0
    %1524 = vmatprep.subr.bf16.mxu0 0
    %1525 = vmatpush1.bf16.msra.mxu0 0
    %1526 = vmatprep.subr.bf16.mxu0 0
    %1527 = vmatpush1.bf16.msra.mxu0 0
    %1528 = vmatprep.subr.bf16.mxu0 0
    %1529 = vmatpush1.bf16.msra.mxu0 0
    %1530 = vmatprep.subr.bf16.mxu0 0
    %1531 = vmatpush1.bf16.msra.mxu0 0
    %1532 = vmatprep.subr.bf16.mxu0 0
    %1533 = vmatpush1.bf16.msra.mxu0 0
    %1534 = vmatprep.mubr.bf16.mxu0 0
    %1535 = vmatmul.mubr.bf16.gmra.mrb[0].mxu0 %v1497
    %v1536 = vpop.f32.mrb[0].mxu0
    %v1537 = vadd.f32 %v1458, %v1536
    %v1538 = vpop.f32.mrb[0].mxu0
    %v1539 = vpop.f32.mrb[0].mxu0
    %v1540 = vadd.f32 %v1461, %v1539
    %v1541 = vpop.f32.mrb[0].mxu0
    %1542 = vmatprep.mubr.bf16.mxu0 0
    %1543 = vmatmul.mubr.bf16.gmra.mrb[0].mxu0 %v1500
    %v1544 = vpop.f32.mrb[0].mxu0
    %v1545 = vadd.f32 %v1466, %v1544
    %v1546 = vpop.f32.mrb[0].mxu0
    %v1547 = vpop.f32.mrb[0].mxu0
    %v1548 = vadd.f32 %v1469, %v1547
    %v1549 = vpop.f32.mrb[0].mxu0
    %1550 = vdwg.mxu0
    %s1551 = scalar_lea.vmem [#allocation8], 64
    %v1552 = vld [vmem:[%s1551] sm:$0xf]
    %v1553 = vld [vmem:[%s1551 + $0x4] sm:$0xf]
    %v1554 = vld [vmem:[%s1551 + $0x8] sm:$0xf]
    %v1555 = vld [vmem:[%s1551 + $0xc] sm:$0xf]
    %v1556 = vld [vmem:[%s1551 + $0x10] sm:$0xf]
    %v1557 = vld [vmem:[%s1551 + $0x14] sm:$0xf]
    %v1558 = vld [vmem:[%s1551 + $0x18] sm:$0xf]
    %v1559 = vld [vmem:[%s1551 + $0x1c] sm:$0xf]
    %v1560 = vrot.slane %v1365, 2
    %v1561 = vrot.slane %v1366, 2
    %v1562 = vsel %vm475, %v1560, %v1561
    %v1563 = vrot.slane %v1375, 2
    %v1564 = vsel %vm475, %v1561, %v1563
    %v1573 = vunpack.c.l.b16 %v1552
    %v1574 = vunpack.c.l.b16 %v1553
    %v1575 = vunpack.c.l.b16 %v1554
    %v1576 = vunpack.c.l.b16 %v1555
    %v1577 = vunpack.c.l.b16 %v1556
    %v1578 = vunpack.c.l.b16 %v1557
    %v1579 = vunpack.c.l.b16 %v1558
    %v1580 = vunpack.c.l.b16 %v1559
    %v1581 = vpack.c.b16 %v1574, %v1573
    %v1582 = vpack.c.b16 %v1576, %v1575
    %v1583 = vpack.c.b16 %v1578, %v1577
    %v1584 = vpack.c.b16 %v1580, %v1579
    %v1590 = vsel %vm309, %v1562, 0
    %v1593 = vsel %vm309, %v1564, 0
    %1595 = vmatprep.subr.bf16.mxu0 0
    %1596 = vmatpush1.bf16.msra.mxu0 %v1581
    %1597 = vmatprep.subr.bf16.mxu0 0
    %1598 = vmatpush1.bf16.msra.mxu0 %v1582
    %1599 = vmatprep.subr.bf16.mxu0 0
    %1600 = vmatpush1.bf16.msra.mxu0 %v1583
    %1601 = vmatprep.subr.bf16.mxu0 0
    %1602 = vmatpush1.bf16.msra.mxu0 %v1584
    %1603 = vmatprep.subr.bf16.mxu0 0
    %1604 = vmatpush1.bf16.msra.mxu0 0
    %1605 = vmatprep.subr.bf16.mxu0 0
    %1606 = vmatpush1.bf16.msra.mxu0 0
    %1607 = vmatprep.subr.bf16.mxu0 0
    %1608 = vmatpush1.bf16.msra.mxu0 0
    %1609 = vmatprep.subr.bf16.mxu0 0
    %1610 = vmatpush1.bf16.msra.mxu0 0
    %1611 = vmatprep.subr.bf16.mxu0 0
    %1612 = vmatpush1.bf16.msra.mxu0 0
    %1613 = vmatprep.subr.bf16.mxu0 0
    %1614 = vmatpush1.bf16.msra.mxu0 0
    %1615 = vmatprep.subr.bf16.mxu0 0
    %1616 = vmatpush1.bf16.msra.mxu0 0
    %1617 = vmatprep.subr.bf16.mxu0 0
    %1618 = vmatpush1.bf16.msra.mxu0 0
    %1619 = vmatprep.subr.bf16.mxu0 0
    %1620 = vmatpush1.bf16.msra.mxu0 0
    %1621 = vmatprep.subr.bf16.mxu0 0
    %1622 = vmatpush1.bf16.msra.mxu0 0
    %1623 = vmatprep.subr.bf16.mxu0 0
    %1624 = vmatpush1.bf16.msra.mxu0 0
    %1625 = vmatprep.subr.bf16.mxu0 0
    %1626 = vmatpush1.bf16.msra.mxu0 0
    %1627 = vmatprep.mubr.bf16.mxu0 0
    %1628 = vmatmul.mubr.bf16.gmra.mrb[0].mxu0 %v1590
    %v1629 = vpop.f32.mrb[0].mxu0
    %v1630 = vadd.f32 0.0, %v1629
    %v1631 = vpop.f32.mrb[0].mxu0
    %v1632 = vpop.f32.mrb[0].mxu0
    %v1633 = vadd.f32 0.0, %v1632
    %v1634 = vpop.f32.mrb[0].mxu0
    %1635 = vmatprep.mubr.bf16.mxu0 0
    %1636 = vmatmul.mubr.bf16.gmra.mrb[0].mxu0 %v1593
    %v1637 = vpop.f32.mrb[0].mxu0
    %v1638 = vadd.f32 0.0, %v1637
    %v1639 = vpop.f32.mrb[0].mxu0
    %v1640 = vpop.f32.mrb[0].mxu0
    %v1641 = vadd.f32 0.0, %v1640
    %v1642 = vpop.f32.mrb[0].mxu0
    %1643 = vdwg.mxu0
    %v1644 = vadd.f32 %v1537, %v1630
    %v1645 = vadd.f32 %v1540, %v1633
    %v1646 = vadd.f32 %v1545, %v1638
    %v1647 = vadd.f32 %v1548, %v1641
    %s1648 = scalar_lea.vmem [#allocation8], 96
    %v1649 = vld [vmem:[%s1648] sm:$0xf]
    %v1650 = vld [vmem:[%s1648 + $0x4] sm:$0xf]
    %v1651 = vld [vmem:[%s1648 + $0x8] sm:$0xf]
    %v1652 = vld [vmem:[%s1648 + $0xc] sm:$0xf]
    %v1653 = vld [vmem:[%s1648 + $0x10] sm:$0xf]
    %v1654 = vld [vmem:[%s1648 + $0x14] sm:$0xf]
    %v1655 = vld [vmem:[%s1648 + $0x18] sm:$0xf]
    %v1656 = vld [vmem:[%s1648 + $0x1c] sm:$0xf]
    %v1657 = vrot.slane %v1365, 3
    %v1658 = vrot.slane %v1366, 3
    %v1659 = vsel %vm588, %v1657, %v1658
    %v1660 = vrot.slane %v1375, 3
    %v1661 = vsel %vm588, %v1658, %v1660
    %v1670 = vunpack.c.l.b16 %v1649
    %v1671 = vunpack.c.l.b16 %v1650
    %v1672 = vunpack.c.l.b16 %v1651
    %v1673 = vunpack.c.l.b16 %v1652
    %v1674 = vunpack.c.l.b16 %v1653
    %v1675 = vunpack.c.l.b16 %v1654
    %v1676 = vunpack.c.l.b16 %v1655
    %v1677 = vunpack.c.l.b16 %v1656
    %v1678 = vpack.c.b16 %v1671, %v1670
    %v1679 = vpack.c.b16 %v1673, %v1672
    %v1680 = vpack.c.b16 %v1675, %v1674
    %v1681 = vpack.c.b16 %v1677, %v1676
    %v1687 = vsel %vm309, %v1659, 0
    %v1690 = vsel %vm309, %v1661, 0
    %1692 = vmatprep.subr.bf16.mxu0 0
    %1693 = vmatpush1.bf16.msra.mxu0 %v1678
    %1694 = vmatprep.subr.bf16.mxu0 0
    %1695 = vmatpush1.bf16.msra.mxu0 %v1679
    %1696 = vmatprep.subr.bf16.mxu0 0
    %1697 = vmatpush1.bf16.msra.mxu0 %v1680
    %1698 = vmatprep.subr.bf16.mxu0 0
    %1699 = vmatpush1.bf16.msra.mxu0 %v1681
    %1700 = vmatprep.subr.bf16.mxu0 0
    %1701 = vmatpush1.bf16.msra.mxu0 0
    %1702 = vmatprep.subr.bf16.mxu0 0
    %1703 = vmatpush1.bf16.msra.mxu0 0
    %1704 = vmatprep.subr.bf16.mxu0 0
    %1705 = vmatpush1.bf16.msra.mxu0 0
    %1706 = vmatprep.subr.bf16.mxu0 0
    %1707 = vmatpush1.bf16.msra.mxu0 0
    %1708 = vmatprep.subr.bf16.mxu0 0
    %1709 = vmatpush1.bf16.msra.mxu0 0
    %1710 = vmatprep.subr.bf16.mxu0 0
    %1711 = vmatpush1.bf16.msra.mxu0 0
    %1712 = vmatprep.subr.bf16.mxu0 0
    %1713 = vmatpush1.bf16.msra.mxu0 0
    %1714 = vmatprep.subr.bf16.mxu0 0
    %1715 = vmatpush1.bf16.msra.mxu0 0
    %1716 = vmatprep.subr.bf16.mxu0 0
    %1717 = vmatpush1.bf16.msra.mxu0 0
    %1718 = vmatprep.subr.bf16.mxu0 0
    %1719 = vmatpush1.bf16.msra.mxu0 0
    %1720 = vmatprep.subr.bf16.mxu0 0
    %1721 = vmatpush1.bf16.msra.mxu0 0
    %1722 = vmatprep.subr.bf16.mxu0 0
    %1723 = vmatpush1.bf16.msra.mxu0 0
    %1724 = vmatprep.mubr.bf16.mxu0 0
    %1725 = vmatmul.mubr.bf16.gmra.mrb[0].mxu0 %v1687
    %v1726 = vpop.f32.mrb[0].mxu0
    %v1727 = vadd.f32 0.0, %v1726
    %v1728 = vpop.f32.mrb[0].mxu0
    %v1729 = vpop.f32.mrb[0].mxu0
    %v1730 = vadd.f32 0.0, %v1729
    %v1731 = vpop.f32.mrb[0].mxu0
    %1732 = vmatprep.mubr.bf16.mxu0 0
    %1733 = vmatmul.mubr.bf16.gmra.mrb[0].mxu0 %v1690
    %v1734 = vpop.f32.mrb[0].mxu0
    %v1735 = vadd.f32 0.0, %v1734
    %v1736 = vpop.f32.mrb[0].mxu0
    %v1737 = vpop.f32.mrb[0].mxu0
    %v1738 = vadd.f32 0.0, %v1737
    %v1739 = vpop.f32.mrb[0].mxu0
    %1740 = vdwg.mxu0
    %v1741 = vadd.f32 %v1644, %v1727
    %v1742 = vadd.f32 %v1645, %v1730
    %v1743 = vadd.f32 %v1646, %v1735
    %v1744 = vadd.f32 %v1647, %v1738
    %v1745 = vpack.c.bf16 %v1362, %v1361
    %v1746 = vpack.c.bf16 %v1364, %v1363
    %s1747 = scalar_lea.vmem [#allocation8], 128
    %v1748 = vld [vmem:[%s1747] sm:$0xf]
    %v1749 = vld [vmem:[%s1747 + $0x4] sm:$0xf]
    %v1750 = vld [vmem:[%s1747 + $0x8] sm:$0xf]
    %v1751 = vld [vmem:[%s1747 + $0xc] sm:$0xf]
    %v1752 = vld [vmem:[%s1747 + $0x10] sm:$0xf]
    %v1753 = vld [vmem:[%s1747 + $0x14] sm:$0xf]
    %v1754 = vld [vmem:[%s1747 + $0x18] sm:$0xf]
    %v1755 = vld [vmem:[%s1747 + $0x1c] sm:$0xf]
    %v1764 = vunpack.c.l.b16 %v1748
    %v1765 = vunpack.c.l.b16 %v1749
    %v1766 = vunpack.c.l.b16 %v1750
    %v1767 = vunpack.c.l.b16 %v1751
    %v1768 = vunpack.c.l.b16 %v1752
    %v1769 = vunpack.c.l.b16 %v1753
    %v1770 = vunpack.c.l.b16 %v1754
    %v1771 = vunpack.c.l.b16 %v1755
    %v1772 = vpack.c.b16 %v1765, %v1764
    %v1773 = vpack.c.b16 %v1767, %v1766
    %v1774 = vpack.c.b16 %v1769, %v1768
    %v1775 = vpack.c.b16 %v1771, %v1770
    %v1781 = vsel %vm309, %v1745, 0
    %v1784 = vsel %vm309, %v1746, 0
    %1786 = vmatprep.subr.bf16.mxu0 0
    %1787 = vmatpush1.bf16.msra.mxu0 %v1772
    %1788 = vmatprep.subr.bf16.mxu0 0
    %1789 = vmatpush1.bf16.msra.mxu0 %v1773
    %1790 = vmatprep.subr.bf16.mxu0 0
    %1791 = vmatpush1.bf16.msra.mxu0 %v1774
    %1792 = vmatprep.subr.bf16.mxu0 0
    %1793 = vmatpush1.bf16.msra.mxu0 %v1775
    %1794 = vmatprep.subr.bf16.mxu0 0
    %1795 = vmatpush1.bf16.msra.mxu0 0
    %1796 = vmatprep.subr.bf16.mxu0 0
    %1797 = vmatpush1.bf16.msra.mxu0 0
    %1798 = vmatprep.subr.bf16.mxu0 0
    %1799 = vmatpush1.bf16.msra.mxu0 0
    %1800 = vmatprep.subr.bf16.mxu0 0
    %1801 = vmatpush1.bf16.msra.mxu0 0
    %1802 = vmatprep.subr.bf16.mxu0 0
    %1803 = vmatpush1.bf16.msra.mxu0 0
    %1804 = vmatprep.subr.bf16.mxu0 0
    %1805 = vmatpush1.bf16.msra.mxu0 0
    %1806 = vmatprep.subr.bf16.mxu0 0
    %1807 = vmatpush1.bf16.msra.mxu0 0
    %1808 = vmatprep.subr.bf16.mxu0 0
    %1809 = vmatpush1.bf16.msra.mxu0 0
    %1810 = vmatprep.subr.bf16.mxu0 0
    %1811 = vmatpush1.bf16.msra.mxu0 0
    %1812 = vmatprep.subr.bf16.mxu0 0
    %1813 = vmatpush1.bf16.msra.mxu0 0
    %1814 = vmatprep.subr.bf16.mxu0 0
    %1815 = vmatpush1.bf16.msra.mxu0 0
    %1816 = vmatprep.subr.bf16.mxu0 0
    %1817 = vmatpush1.bf16.msra.mxu0 0
    %1818 = vmatprep.mubr.bf16.mxu0 0
    %1819 = vmatmul.mubr.bf16.gmra.mrb[0].mxu0 %v1781
    %v1820 = vpop.f32.mrb[0].mxu0
    %v1821 = vadd.f32 0.0, %v1820
    %v1822 = vpop.f32.mrb[0].mxu0
    %v1823 = vpop.f32.mrb[0].mxu0
    %v1824 = vadd.f32 0.0, %v1823
    %v1825 = vpop.f32.mrb[0].mxu0
    %1826 = vmatprep.mubr.bf16.mxu0 0
    %1827 = vmatmul.mubr.bf16.gmra.mrb[0].mxu0 %v1784
    %v1828 = vpop.f32.mrb[0].mxu0
    %v1829 = vadd.f32 0.0, %v1828
    %v1830 = vpop.f32.mrb[0].mxu0
    %v1831 = vpop.f32.mrb[0].mxu0
    %v1832 = vadd.f32 0.0, %v1831
    %v1833 = vpop.f32.mrb[0].mxu0
    %1834 = vdwg.mxu0
    %v1835 = vadd.f32 %v1741, %v1821
    %v1836 = vadd.f32 %v1742, %v1824
    %v1837 = vadd.f32 %v1743, %v1829
    %v1838 = vadd.f32 %v1744, %v1832
    %v1839 = vld [vmem:[%s8] sm:$0x1]
    %v1841 = vlaneseq
    %v1842 = vshrl.u32 %v1841, 7
    %v1843 = vsub.s32 0, %v1842
    %v1844 = vrot.slane %v1839, %v1843
    %v1846 = vadd.f32 %v1835, %v1844
    %v1847 = vadd.f32 %v1836, %v1844
    %v1848 = vadd.f32 %v1837, %v1844
    %v1849 = vadd.f32 %v1838, %v1844
    %v1850 = vmax.f32 %v1846, 0.0
    %v1851 = vmax.f32 %v1847, 0.0
    %v1852 = vmax.f32 %v1848, 0.0
    %v1853 = vmax.f32 %v1849, 0.0
    %v1854 = vpack.c.bf16 %v1851, %v1850
    %v1855 = vpack.c.bf16 %v1853, %v1852
    %v1856 = vld [vmem:[#allocation9] sm:$0xff]
    %v1857 = vld [vmem:[#allocation9 + $0x8] sm:$0xff]
    %v1858 = vld [vmem:[#allocation9 + $0x10] sm:$0xff]
    %v1859 = vld [vmem:[#allocation9 + $0x18] sm:$0xff]
    %v1860 = vld [vmem:[#allocation9 + $0x20] sm:$0xff]
    %v1861 = vld [vmem:[#allocation9 + $0x28] sm:$0xff]
    %v1862 = vld [vmem:[#allocation9 + $0x30] sm:$0xff]
    %v1863 = vld [vmem:[#allocation9 + $0x38] sm:$0xff]
    %v1864 = vld [vmem:[#allocation9 + $0x40] sm:$0xff]
    %v1865 = vld [vmem:[#allocation9 + $0x48] sm:$0xff]
    %v1866 = vld [vmem:[#allocation9 + $0x50] sm:$0xff]
    %v1867 = vld [vmem:[#allocation9 + $0x58] sm:$0xff]
    %v1868 = vld [vmem:[#allocation9 + $0x60] sm:$0xff]
    %v1869 = vld [vmem:[#allocation9 + $0x68] sm:$0xff]
    %v1870 = vld [vmem:[#allocation9 + $0x70] sm:$0xff]
    %v1871 = vld [vmem:[#allocation9 + $0x78] sm:$0xff]
    %v1872 = vld [vmem:[%s10] sm:$0xf]
    %v1874 = vlaneseq
    %v1875 = vshrl.u32 %v1874, 7
    %v1876 = vsub.s32 0, %v1875
    %v1877 = vrot.slane %v1872, %v1876
    %v1878 = vlaneseq
    %v1879 = vshrl.u32 %v1878, 7
    %v1880 = vsub.s32 1, %v1879
    %v1881 = vrot.slane %v1872, %v1880
    %v1882 = vlaneseq
    %v1883 = vshrl.u32 %v1882, 7
    %v1884 = vsub.s32 2, %v1883
    %v1885 = vrot.slane %v1872, %v1884
    %v1886 = vlaneseq
    %v1887 = vshrl.u32 %v1886, 7
    %v1888 = vsub.s32 3, %v1887
    %v1889 = vrot.slane %v1872, %v1888
    %v1910 = vunpack.c.l.b16 %v1856
    %v1911 = vunpack.c.h.b16 %v1856
    %v1912 = vunpack.c.l.b16 %v1857
    %v1913 = vunpack.c.h.b16 %v1857
    %v1914 = vunpack.c.l.b16 %v1858
    %v1915 = vunpack.c.h.b16 %v1858
    %v1916 = vunpack.c.l.b16 %v1859
    %v1917 = vunpack.c.h.b16 %v1859
    %v1918 = vunpack.c.l.b16 %v1860
    %v1919 = vunpack.c.h.b16 %v1860
    %v1920 = vunpack.c.l.b16 %v1861
    %v1921 = vunpack.c.h.b16 %v1861
    %v1922 = vunpack.c.l.b16 %v1862
    %v1923 = vunpack.c.h.b16 %v1862
    %v1924 = vunpack.c.l.b16 %v1863
    %v1925 = vunpack.c.h.b16 %v1863
    %v1926 = vunpack.c.l.b16 %v1864
    %v1927 = vunpack.c.h.b16 %v1864
    %v1928 = vunpack.c.l.b16 %v1865
    %v1929 = vunpack.c.h.b16 %v1865
    %v1930 = vunpack.c.l.b16 %v1866
    %v1931 = vunpack.c.h.b16 %v1866
    %v1932 = vunpack.c.l.b16 %v1867
    %v1933 = vunpack.c.h.b16 %v1867
    %v1934 = vunpack.c.l.b16 %v1868
    %v1935 = vunpack.c.h.b16 %v1868
    %v1936 = vunpack.c.l.b16 %v1869
    %v1937 = vunpack.c.h.b16 %v1869
    %v1938 = vunpack.c.l.b16 %v1870
    %v1939 = vunpack.c.h.b16 %v1870
    %v1940 = vunpack.c.l.b16 %v1871
    %v1941 = vunpack.c.h.b16 %v1871
    %v1942 = vpack.c.b16 %v1914, %v1910
    %v1943 = vpack.c.b16 %v1915, %v1911
    %v1944 = vpack.c.b16 %v1916, %v1912
    %v1945 = vpack.c.b16 %v1917, %v1913
    %v1946 = vpack.c.b16 %v1922, %v1918
    %v1947 = vpack.c.b16 %v1923, %v1919
    %v1948 = vpack.c.b16 %v1924, %v1920
    %v1949 = vpack.c.b16 %v1925, %v1921
    %v1950 = vpack.c.b16 %v1930, %v1926
    %v1951 = vpack.c.b16 %v1931, %v1927
    %v1952 = vpack.c.b16 %v1932, %v1928
    %v1953 = vpack.c.b16 %v1933, %v1929
    %v1954 = vpack.c.b16 %v1938, %v1934
    %v1955 = vpack.c.b16 %v1939, %v1935
    %v1956 = vpack.c.b16 %v1940, %v1936
    %v1957 = vpack.c.b16 %v1941, %v1937
    %v1975 = vsel %vm309, %v1854, 0
    %v1978 = vsel %vm309, %v1855, 0
    %1980 = vmatprep.subr.bf16.mxu0 %v1943
    %1981 = vmatpush1.bf16.msra.mxu0 %v1942
    %1982 = vmatprep.subr.bf16.mxu0 %v1947
    %1983 = vmatpush1.bf16.msra.mxu0 %v1946
    %1984 = vmatprep.subr.bf16.mxu0 %v1951
    %1985 = vmatpush1.bf16.msra.mxu0 %v1950
    %1986 = vmatprep.subr.bf16.mxu0 %v1955
    %1987 = vmatpush1.bf16.msra.mxu0 %v1954
    %1988 = vmatprep.subr.bf16.mxu0 0
    %1989 = vmatpush1.bf16.msra.mxu0 0
    %1990 = vmatprep.subr.bf16.mxu0 0
    %1991 = vmatpush1.bf16.msra.mxu0 0
    %1992 = vmatprep.subr.bf16.mxu0 0
    %1993 = vmatpush1.bf16.msra.mxu0 0
    %1994 = vmatprep.subr.bf16.mxu0 0
    %1995 = vmatpush1.bf16.msra.mxu0 0
    %1996 = vmatprep.subr.bf16.mxu0 0
    %1997 = vmatpush1.bf16.msra.mxu0 0
    %1998 = vmatprep.subr.bf16.mxu0 0
    %1999 = vmatpush1.bf16.msra.mxu0 0
    %2000 = vmatprep.subr.bf16.mxu0 0
    %2001 = vmatpush1.bf16.msra.mxu0 0
    %2002 = vmatprep.subr.bf16.mxu0 0
    %2003 = vmatpush1.bf16.msra.mxu0 0
    %2004 = vmatprep.subr.bf16.mxu0 0
    %2005 = vmatpush1.bf16.msra.mxu0 0
    %2006 = vmatprep.subr.bf16.mxu0 0
    %2007 = vmatpush1.bf16.msra.mxu0 0
    %2008 = vmatprep.subr.bf16.mxu0 0
    %2009 = vmatpush1.bf16.msra.mxu0 0
    %2010 = vmatprep.subr.bf16.mxu0 0
    %2011 = vmatpush1.bf16.msra.mxu0 0
    %2012 = vmatprep.mubr.bf16.mxu0 0
    %2013 = vmatmul.mubr.bf16.gmra.mrb[0].mxu0 %v1975
    %v2014 = vpop.f32.mrb[0].mxu0
    %v2015 = vadd.f32 %v1877, %v2014
    %v2016 = vpop.f32.mrb[0].mxu0
    %v2017 = vadd.f32 %v1881, %v2016
    %v2018 = vpop.f32.mrb[0].mxu0
    %v2019 = vadd.f32 %v1877, %v2018
    %v2020 = vpop.f32.mrb[0].mxu0
    %v2021 = vadd.f32 %v1881, %v2020
    %2022 = vmatprep.mubr.bf16.mxu0 0
    %2023 = vmatmul.mubr.bf16.gmra.mrb[0].mxu0 %v1978
    %v2024 = vpop.f32.mrb[0].mxu0
    %v2025 = vadd.f32 %v1877, %v2024
    %v2026 = vpop.f32.mrb[0].mxu0
    %v2027 = vadd.f32 %v1881, %v2026
    %v2028 = vpop.f32.mrb[0].mxu0
    %v2029 = vadd.f32 %v1877, %v2028
    %v2030 = vpop.f32.mrb[0].mxu0
    %v2031 = vadd.f32 %v1881, %v2030
    %2032 = vdwg.mxu0
    %2033 = vmatprep.subr.bf16.mxu0 %v1945
    %2034 = vmatpush1.bf16.msra.mxu0 %v1944
    %2035 = vmatprep.subr.bf16.mxu0 %v1949
    %2036 = vmatpush1.bf16.msra.mxu0 %v1948
    %2037 = vmatprep.subr.bf16.mxu0 %v1953
    %2038 = vmatpush1.bf16.msra.mxu0 %v1952
    %2039 = vmatprep.subr.bf16.mxu0 %v1957
    %2040 = vmatpush1.bf16.msra.mxu0 %v1956
    %2041 = vmatprep.subr.bf16.mxu0 0
    %2042 = vmatpush1.bf16.msra.mxu0 0
    %2043 = vmatprep.subr.bf16.mxu0 0
    %2044 = vmatpush1.bf16.msra.mxu0 0
    %2045 = vmatprep.subr.bf16.mxu0 0
    %2046 = vmatpush1.bf16.msra.mxu0 0
    %2047 = vmatprep.subr.bf16.mxu0 0
    %2048 = vmatpush1.bf16.msra.mxu0 0
    %2049 = vmatprep.subr.bf16.mxu0 0
    %2050 = vmatpush1.bf16.msra.mxu0 0
    %2051 = vmatprep.subr.bf16.mxu0 0
    %2052 = vmatpush1.bf16.msra.mxu0 0
    %2053 = vmatprep.subr.bf16.mxu0 0
    %2054 = vmatpush1.bf16.msra.mxu0 0
    %2055 = vmatprep.subr.bf16.mxu0 0
    %2056 = vmatpush1.bf16.msra.mxu0 0
    %2057 = vmatprep.subr.bf16.mxu0 0
    %2058 = vmatpush1.bf16.msra.mxu0 0
    %2059 = vmatprep.subr.bf16.mxu0 0
    %2060 = vmatpush1.bf16.msra.mxu0 0
    %2061 = vmatprep.subr.bf16.mxu0 0
    %2062 = vmatpush1.bf16.msra.mxu0 0
    %2063 = vmatprep.subr.bf16.mxu0 0
    %2064 = vmatpush1.bf16.msra.mxu0 0
    %2065 = vmatprep.mubr.bf16.mxu0 0
    %2066 = vmatmul.mubr.bf16.gmra.mrb[0].mxu0 %v1975
    %v2067 = vpop.f32.mrb[0].mxu0
    %v2068 = vadd.f32 %v1885, %v2067
    %v2069 = vpop.f32.mrb[0].mxu0
    %v2070 = vadd.f32 %v1889, %v2069
    %v2071 = vpop.f32.mrb[0].mxu0
    %v2072 = vadd.f32 %v1885, %v2071
    %v2073 = vpop.f32.mrb[0].mxu0
    %v2074 = vadd.f32 %v1889, %v2073
    %2075 = vmatprep.mubr.bf16.mxu0 0
    %2076 = vmatmul.mubr.bf16.gmra.mrb[0].mxu0 %v1978
    %v2077 = vpop.f32.mrb[0].mxu0
    %v2078 = vadd.f32 %v1885, %v2077
    %v2079 = vpop.f32.mrb[0].mxu0
    %v2080 = vadd.f32 %v1889, %v2079
    %v2081 = vpop.f32.mrb[0].mxu0
    %v2082 = vadd.f32 %v1885, %v2081
    %v2083 = vpop.f32.mrb[0].mxu0
    %v2084 = vadd.f32 %v1889, %v2083
    %2085 = vdwg.mxu0
    %2086 = vst [vmem:[#allocation2] sm:$0xff] %v2015
    %2087 = vst [vmem:[#allocation2 + $0x8] sm:$0xff] %v2017
    %2088 = vst [vmem:[#allocation2 + $0x10] sm:$0xff] %v2068
    %2089 = vst [vmem:[#allocation2 + $0x18] sm:$0xff] %v2070
    %2090 = vst [vmem:[#allocation2 + $0x20] sm:$0xff] %v2019
    %2091 = vst [vmem:[#allocation2 + $0x28] sm:$0xff] %v2021
    %2092 = vst [vmem:[#allocation2 + $0x30] sm:$0xff] %v2072
    %2093 = vst [vmem:[#allocation2 + $0x38] sm:$0xff] %v2074
    %2094 = vst [vmem:[#allocation2 + $0x40] sm:$0xff] %v2025
    %2095 = vst [vmem:[#allocation2 + $0x48] sm:$0xff] %v2027
    %2096 = vst [vmem:[#allocation2 + $0x50] sm:$0xff] %v2078
    %2097 = vst [vmem:[#allocation2 + $0x58] sm:$0xff] %v2080
    %2098 = vst [vmem:[#allocation2 + $0x60] sm:$0xff] %v2029
    %2099 = vst [vmem:[#allocation2 + $0x68] sm:$0xff] %v2031
    %2100 = vst [vmem:[#allocation2 + $0x70] sm:$0xff] %v2082
    %2101 = vst [vmem:[#allocation2 + $0x78] sm:$0xff] %v2084
    %v2102 = vld [vmem:[%s12] sm:$0xf]
    %v2104 = vlaneseq
    %v2105 = vshrl.u32 %v2104, 7
    %v2106 = vsub.s32 0, %v2105
    %v2107 = vrot.slane %v2102, %v2106
    %v2108 = vlaneseq
    %v2109 = vshrl.u32 %v2108, 7
    %v2110 = vsub.s32 1, %v2109
    %v2111 = vrot.slane %v2102, %v2110
    %v2112 = vlaneseq
    %v2113 = vshrl.u32 %v2112, 7
    %v2114 = vsub.s32 2, %v2113
    %v2115 = vrot.slane %v2102, %v2114
    %v2116 = vlaneseq
    %v2117 = vshrl.u32 %v2116, 7
    %v2118 = vsub.s32 3, %v2117
    %v2119 = vrot.slane %v2102, %v2118
    %v2124 = vld [vmem:[#allocation2] sm:$0x3]
    %v2125 = vld [vmem:[#allocation2 + $0x8] sm:$0x3]
    %v2126 = vld [vmem:[#allocation2 + $0x10] sm:$0x3]
    %v2127 = vld [vmem:[#allocation2 + $0x18] sm:$0x3]
    %v2128 = vmul.f32 %v2124, 0.5
    %v2129 = vmul.f32 %v2125, 0.5
    %v2130 = vmul.f32 %v2126, 0.5
    %v2131 = vtanh.pop %v2128
    %v2132 = vtanh.pop %v2129
    %v2133 = vtanh.pop %v2130
    %v2134 = vmul.f32 %v2131, 0.5
    %v2135 = vmul.f32 %v2132, 0.5
    %v2136 = vmul.f32 %v2133, 0.5
    %v2137 = vadd.f32 %v2134, 0.5
    %v2138 = vadd.f32 %v2135, 0.5
    %v2139 = vadd.f32 %v2136, 0.5
    %v2140 = vtanh.pop %v2127
    %v2141 = vmul.f32 %v2138, 0.0
    %v2142 = vmul.f32 %v2137, %v2140
    %v2143 = vadd.f32 %v2141, %v2142
    %v2144 = vtanh.pop %v2143
    %v2145 = vmul.f32 %v2139, %v2144
    %v2146 = vpack.c.bf16 %v2145, %v2145
    %v2147 = vpack.c.bf16 0.0, 0.0
    %v2148 = vld [vmem:[#allocation11] sm:$0xff]
    %v2149 = vld [vmem:[#allocation11 + $0x8] sm:$0xff]
    %v2150 = vld [vmem:[#allocation11 + $0x10] sm:$0xff]
    %v2151 = vld [vmem:[#allocation11 + $0x18] sm:$0xff]
    %v2152 = vld [vmem:[#allocation11 + $0x20] sm:$0xff]
    %v2153 = vld [vmem:[#allocation11 + $0x28] sm:$0xff]
    %v2154 = vld [vmem:[#allocation11 + $0x30] sm:$0xff]
    %v2155 = vld [vmem:[#allocation11 + $0x38] sm:$0xff]
    %v2156 = vld [vmem:[#allocation11 + $0x40] sm:$0xff]
    %v2157 = vld [vmem:[#allocation11 + $0x48] sm:$0xff]
    %v2158 = vld [vmem:[#allocation11 + $0x50] sm:$0xff]
    %v2159 = vld [vmem:[#allocation11 + $0x58] sm:$0xff]
    %v2160 = vld [vmem:[#allocation11 + $0x60] sm:$0xff]
    %v2161 = vld [vmem:[#allocation11 + $0x68] sm:$0xff]
    %v2162 = vld [vmem:[#allocation11 + $0x70] sm:$0xff]
    %v2163 = vld [vmem:[#allocation11 + $0x78] sm:$0xff]
    %v2164 = vld [vmem:[#allocation11 + $0x80] sm:$0xff]
    %v2165 = vld [vmem:[#allocation11 + $0x88] sm:$0xff]
    %v2166 = vld [vmem:[#allocation11 + $0x90] sm:$0xff]
    %v2167 = vld [vmem:[#allocation11 + $0x98] sm:$0xff]
    %v2168 = vld [vmem:[#allocation11 + $0xa0] sm:$0xff]
    %v2169 = vld [vmem:[#allocation11 + $0xa8] sm:$0xff]
    %v2170 = vld [vmem:[#allocation11 + $0xb0] sm:$0xff]
    %v2171 = vld [vmem:[#allocation11 + $0xb8] sm:$0xff]
    %v2172 = vld [vmem:[#allocation11 + $0xc0] sm:$0xff]
    %v2173 = vld [vmem:[#allocation11 + $0xc8] sm:$0xff]
    %v2174 = vld [vmem:[#allocation11 + $0xd0] sm:$0xff]
    %v2175 = vld [vmem:[#allocation11 + $0xd8] sm:$0xff]
    %v2176 = vld [vmem:[#allocation11 + $0xe0] sm:$0xff]
    %v2177 = vld [vmem:[#allocation11 + $0xe8] sm:$0xff]
    %v2178 = vld [vmem:[#allocation11 + $0xf0] sm:$0xff]
    %v2179 = vld [vmem:[#allocation11 + $0xf8] sm:$0xff]
    %v2180 = vld [vmem:[#allocation11 + $0x100] sm:$0xff]
    %v2181 = vld [vmem:[#allocation11 + $0x108] sm:$0xff]
    %v2182 = vld [vmem:[#allocation11 + $0x110] sm:$0xff]
    %v2183 = vld [vmem:[#allocation11 + $0x118] sm:$0xff]
    %v2184 = vld [vmem:[#allocation11 + $0x120] sm:$0xff]
    %v2185 = vld [vmem:[#allocation11 + $0x128] sm:$0xff]
    %v2186 = vld [vmem:[#allocation11 + $0x130] sm:$0xff]
    %v2187 = vld [vmem:[#allocation11 + $0x138] sm:$0xff]
    %v2188 = vld [vmem:[#allocation11 + $0x140] sm:$0xff]
    %v2189 = vld [vmem:[#allocation11 + $0x148] sm:$0xff]
    %v2190 = vld [vmem:[#allocation11 + $0x150] sm:$0xff]
    %v2191 = vld [vmem:[#allocation11 + $0x158] sm:$0xff]
    %v2192 = vld [vmem:[#allocation11 + $0x160] sm:$0xff]
    %v2193 = vld [vmem:[#allocation11 + $0x168] sm:$0xff]
    %v2194 = vld [vmem:[#allocation11 + $0x170] sm:$0xff]
    %v2195 = vld [vmem:[#allocation11 + $0x178] sm:$0xff]
    %v2196 = vld [vmem:[#allocation11 + $0x180] sm:$0xff]
    %v2197 = vld [vmem:[#allocation11 + $0x188] sm:$0xff]
    %v2198 = vld [vmem:[#allocation11 + $0x190] sm:$0xff]
    %v2199 = vld [vmem:[#allocation11 + $0x198] sm:$0xff]
    %v2200 = vld [vmem:[#allocation11 + $0x1a0] sm:$0xff]
    %v2201 = vld [vmem:[#allocation11 + $0x1a8] sm:$0xff]
    %v2202 = vld [vmem:[#allocation11 + $0x1b0] sm:$0xff]
    %v2203 = vld [vmem:[#allocation11 + $0x1b8] sm:$0xff]
    %v2204 = vld [vmem:[#allocation11 + $0x1c0] sm:$0xff]
    %v2205 = vld [vmem:[#allocation11 + $0x1c8] sm:$0xff]
    %v2206 = vld [vmem:[#allocation11 + $0x1d0] sm:$0xff]
    %v2207 = vld [vmem:[#allocation11 + $0x1d8] sm:$0xff]
    %v2208 = vld [vmem:[#allocation11 + $0x1e0] sm:$0xff]
    %v2209 = vld [vmem:[#allocation11 + $0x1e8] sm:$0xff]
    %v2210 = vld [vmem:[#allocation11 + $0x1f0] sm:$0xff]
    %v2211 = vld [vmem:[#allocation11 + $0x1f8] sm:$0xff]
    %v2212 = vld [vmem:[#allocation11 + $0x200] sm:$0xff]
    %v2213 = vld [vmem:[#allocation11 + $0x208] sm:$0xff]
    %v2214 = vld [vmem:[#allocation11 + $0x210] sm:$0xff]
    %v2215 = vld [vmem:[#allocation11 + $0x218] sm:$0xff]
    %v2216 = vld [vmem:[#allocation11 + $0x220] sm:$0xff]
    %v2217 = vld [vmem:[#allocation11 + $0x228] sm:$0xff]
    %v2218 = vld [vmem:[#allocation11 + $0x230] sm:$0xff]
    %v2219 = vld [vmem:[#allocation11 + $0x238] sm:$0xff]
    %v2220 = vld [vmem:[#allocation11 + $0x240] sm:$0xff]
    %v2221 = vld [vmem:[#allocation11 + $0x248] sm:$0xff]
    %v2222 = vld [vmem:[#allocation11 + $0x250] sm:$0xff]
    %v2223 = vld [vmem:[#allocation11 + $0x258] sm:$0xff]
    %v2224 = vld [vmem:[#allocation11 + $0x260] sm:$0xff]
    %v2225 = vld [vmem:[#allocation11 + $0x268] sm:$0xff]
    %v2226 = vld [vmem:[#allocation11 + $0x270] sm:$0xff]
    %v2227 = vld [vmem:[#allocation11 + $0x278] sm:$0xff]
    %v2228 = vld [vmem:[#allocation11 + $0x280] sm:$0xff]
    %v2229 = vld [vmem:[#allocation11 + $0x288] sm:$0xff]
    %v2230 = vld [vmem:[#allocation11 + $0x290] sm:$0xff]
    %v2231 = vld [vmem:[#allocation11 + $0x298] sm:$0xff]
    %v2232 = vld [vmem:[#allocation11 + $0x2a0] sm:$0xff]
    %v2233 = vld [vmem:[#allocation11 + $0x2a8] sm:$0xff]
    %v2234 = vld [vmem:[#allocation11 + $0x2b0] sm:$0xff]
    %v2235 = vld [vmem:[#allocation11 + $0x2b8] sm:$0xff]
    %v2236 = vld [vmem:[#allocation11 + $0x2c0] sm:$0xff]
    %v2237 = vld [vmem:[#allocation11 + $0x2c8] sm:$0xff]
    %v2238 = vld [vmem:[#allocation11 + $0x2d0] sm:$0xff]
    %v2239 = vld [vmem:[#allocation11 + $0x2d8] sm:$0xff]
    %v2240 = vld [vmem:[#allocation11 + $0x2e0] sm:$0xff]
    %v2241 = vld [vmem:[#allocation11 + $0x2e8] sm:$0xff]
    %v2242 = vld [vmem:[#allocation11 + $0x2f0] sm:$0xff]
    %v2243 = vld [vmem:[#allocation11 + $0x2f8] sm:$0xff]
    %v2244 = vld [vmem:[#allocation11 + $0x300] sm:$0xff]
    %v2245 = vld [vmem:[#allocation11 + $0x308] sm:$0xff]
    %v2246 = vld [vmem:[#allocation11 + $0x310] sm:$0xff]
    %v2247 = vld [vmem:[#allocation11 + $0x318] sm:$0xff]
    %v2248 = vld [vmem:[#allocation11 + $0x320] sm:$0xff]
    %v2249 = vld [vmem:[#allocation11 + $0x328] sm:$0xff]
    %v2250 = vld [vmem:[#allocation11 + $0x330] sm:$0xff]
    %v2251 = vld [vmem:[#allocation11 + $0x338] sm:$0xff]
    %v2252 = vld [vmem:[#allocation11 + $0x340] sm:$0xff]
    %v2253 = vld [vmem:[#allocation11 + $0x348] sm:$0xff]
    %v2254 = vld [vmem:[#allocation11 + $0x350] sm:$0xff]
    %v2255 = vld [vmem:[#allocation11 + $0x358] sm:$0xff]
    %v2256 = vld [vmem:[#allocation11 + $0x360] sm:$0xff]
    %v2257 = vld [vmem:[#allocation11 + $0x368] sm:$0xff]
    %v2258 = vld [vmem:[#allocation11 + $0x370] sm:$0xff]
    %v2259 = vld [vmem:[#allocation11 + $0x378] sm:$0xff]
    %v2260 = vld [vmem:[#allocation11 + $0x380] sm:$0xff]
    %v2261 = vld [vmem:[#allocation11 + $0x388] sm:$0xff]
    %v2262 = vld [vmem:[#allocation11 + $0x390] sm:$0xff]
    %v2263 = vld [vmem:[#allocation11 + $0x398] sm:$0xff]
    %v2264 = vld [vmem:[#allocation11 + $0x3a0] sm:$0xff]
    %v2265 = vld [vmem:[#allocation11 + $0x3a8] sm:$0xff]
    %v2266 = vld [vmem:[#allocation11 + $0x3b0] sm:$0xff]
    %v2267 = vld [vmem:[#allocation11 + $0x3b8] sm:$0xff]
    %v2268 = vld [vmem:[#allocation11 + $0x3c0] sm:$0xff]
    %v2269 = vld [vmem:[#allocation11 + $0x3c8] sm:$0xff]
    %v2270 = vld [vmem:[#allocation11 + $0x3d0] sm:$0xff]
    %v2271 = vld [vmem:[#allocation11 + $0x3d8] sm:$0xff]
    %v2272 = vld [vmem:[#allocation11 + $0x3e0] sm:$0xff]
    %v2273 = vld [vmem:[#allocation11 + $0x3e8] sm:$0xff]
    %v2274 = vld [vmem:[#allocation11 + $0x3f0] sm:$0xff]
    %v2275 = vld [vmem:[#allocation11 + $0x3f8] sm:$0xff]
    %v2404 = vunpack.c.l.b16 %v2148
    %v2405 = vunpack.c.h.b16 %v2148
    %v2406 = vunpack.c.l.b16 %v2149
    %v2407 = vunpack.c.h.b16 %v2149
    %v2408 = vunpack.c.l.b16 %v2150
    %v2409 = vunpack.c.h.b16 %v2150
    %v2410 = vunpack.c.l.b16 %v2151
    %v2411 = vunpack.c.h.b16 %v2151
    %v2412 = vunpack.c.l.b16 %v2152
    %v2413 = vunpack.c.h.b16 %v2152
    %v2414 = vunpack.c.l.b16 %v2153
    %v2415 = vunpack.c.h.b16 %v2153
    %v2416 = vunpack.c.l.b16 %v2154
    %v2417 = vunpack.c.h.b16 %v2154
    %v2418 = vunpack.c.l.b16 %v2155
    %v2419 = vunpack.c.h.b16 %v2155
    %v2420 = vunpack.c.l.b16 %v2156
    %v2421 = vunpack.c.h.b16 %v2156
    %v2422 = vunpack.c.l.b16 %v2157
    %v2423 = vunpack.c.h.b16 %v2157
    %v2424 = vunpack.c.l.b16 %v2158
    %v2425 = vunpack.c.h.b16 %v2158
    %v2426 = vunpack.c.l.b16 %v2159
    %v2427 = vunpack.c.h.b16 %v2159
    %v2428 = vunpack.c.l.b16 %v2160
    %v2429 = vunpack.c.h.b16 %v2160
    %v2430 = vunpack.c.l.b16 %v2161
    %v2431 = vunpack.c.h.b16 %v2161
    %v2432 = vunpack.c.l.b16 %v2162
    %v2433 = vunpack.c.h.b16 %v2162
    %v2434 = vunpack.c.l.b16 %v2163
    %v2435 = vunpack.c.h.b16 %v2163
    %v2436 = vunpack.c.l.b16 %v2164
    %v2437 = vunpack.c.h.b16 %v2164
    %v2438 = vunpack.c.l.b16 %v2165
    %v2439 = vunpack.c.h.b16 %v2165
    %v2440 = vunpack.c.l.b16 %v2166
    %v2441 = vunpack.c.h.b16 %v2166
    %v2442 = vunpack.c.l.b16 %v2167
    %v2443 = vunpack.c.h.b16 %v2167
    %v2444 = vunpack.c.l.b16 %v2168
    %v2445 = vunpack.c.h.b16 %v2168
    %v2446 = vunpack.c.l.b16 %v2169
    %v2447 = vunpack.c.h.b16 %v2169
    %v2448 = vunpack.c.l.b16 %v2170
    %v2449 = vunpack.c.h.b16 %v2170
    %v2450 = vunpack.c.l.b16 %v2171
    %v2451 = vunpack.c.h.b16 %v2171
    %v2452 = vunpack.c.l.b16 %v2172
    %v2453 = vunpack.c.h.b16 %v2172
    %v2454 = vunpack.c.l.b16 %v2173
    %v2455 = vunpack.c.h.b16 %v2173
    %v2456 = vunpack.c.l.b16 %v2174
    %v2457 = vunpack.c.h.b16 %v2174
    %v2458 = vunpack.c.l.b16 %v2175
    %v2459 = vunpack.c.h.b16 %v2175
    %v2460 = vunpack.c.l.b16 %v2176
    %v2461 = vunpack.c.h.b16 %v2176
    %v2462 = vunpack.c.l.b16 %v2177
    %v2463 = vunpack.c.h.b16 %v2177
    %v2464 = vunpack.c.l.b16 %v2178
    %v2465 = vunpack.c.h.b16 %v2178
    %v2466 = vunpack.c.l.b16 %v2179
    %v2467 = vunpack.c.h.b16 %v2179
    %v2468 = vunpack.c.l.b16 %v2180
    %v2469 = vunpack.c.h.b16 %v2180
    %v2470 = vunpack.c.l.b16 %v2181
    %v2471 = vunpack.c.h.b16 %v2181
    %v2472 = vunpack.c.l.b16 %v2182
    %v2473 = vunpack.c.h.b16 %v2182
    %v2474 = vunpack.c.l.b16 %v2183
    %v2475 = vunpack.c.h.b16 %v2183
    %v2476 = vunpack.c.l.b16 %v2184
    %v2477 = vunpack.c.h.b16 %v2184
    %v2478 = vunpack.c.l.b16 %v2185
    %v2479 = vunpack.c.h.b16 %v2185
    %v2480 = vunpack.c.l.b16 %v2186
    %v2481 = vunpack.c.h.b16 %v2186
    %v2482 = vunpack.c.l.b16 %v2187
    %v2483 = vunpack.c.h.b16 %v2187
    %v2484 = vunpack.c.l.b16 %v2188
    %v2485 = vunpack.c.h.b16 %v2188
    %v2486 = vunpack.c.l.b16 %v2189
    %v2487 = vunpack.c.h.b16 %v2189
    %v2488 = vunpack.c.l.b16 %v2190
    %v2489 = vunpack.c.h.b16 %v2190
    %v2490 = vunpack.c.l.b16 %v2191
    %v2491 = vunpack.c.h.b16 %v2191
    %v2492 = vunpack.c.l.b16 %v2192
    %v2493 = vunpack.c.h.b16 %v2192
    %v2494 = vunpack.c.l.b16 %v2193
    %v2495 = vunpack.c.h.b16 %v2193
    %v2496 = vunpack.c.l.b16 %v2194
    %v2497 = vunpack.c.h.b16 %v2194
    %v2498 = vunpack.c.l.b16 %v2195
    %v2499 = vunpack.c.h.b16 %v2195
    %v2500 = vunpack.c.l.b16 %v2196
    %v2501 = vunpack.c.h.b16 %v2196
    %v2502 = vunpack.c.l.b16 %v2197
    %v2503 = vunpack.c.h.b16 %v2197
    %v2504 = vunpack.c.l.b16 %v2198
    %v2505 = vunpack.c.h.b16 %v2198
    %v2506 = vunpack.c.l.b16 %v2199
    %v2507 = vunpack.c.h.b16 %v2199
    %v2508 = vunpack.c.l.b16 %v2200
    %v2509 = vunpack.c.h.b16 %v2200
    %v2510 = vunpack.c.l.b16 %v2201
    %v2511 = vunpack.c.h.b16 %v2201
    %v2512 = vunpack.c.l.b16 %v2202
    %v2513 = vunpack.c.h.b16 %v2202
    %v2514 = vunpack.c.l.b16 %v2203
    %v2515 = vunpack.c.h.b16 %v2203
    %v2516 = vunpack.c.l.b16 %v2204
    %v2517 = vunpack.c.h.b16 %v2204
    %v2518 = vunpack.c.l.b16 %v2205
    %v2519 = vunpack.c.h.b16 %v2205
    %v2520 = vunpack.c.l.b16 %v2206
    %v2521 = vunpack.c.h.b16 %v2206
    %v2522 = vunpack.c.l.b16 %v2207
    %v2523 = vunpack.c.h.b16 %v2207
    %v2524 = vunpack.c.l.b16 %v2208
    %v2525 = vunpack.c.h.b16 %v2208
    %v2526 = vunpack.c.l.b16 %v2209
    %v2527 = vunpack.c.h.b16 %v2209
    %v2528 = vunpack.c.l.b16 %v2210
    %v2529 = vunpack.c.h.b16 %v2210
    %v2530 = vunpack.c.l.b16 %v2211
    %v2531 = vunpack.c.h.b16 %v2211
    %v2532 = vunpack.c.l.b16 %v2212
    %v2533 = vunpack.c.h.b16 %v2212
    %v2534 = vunpack.c.l.b16 %v2213
    %v2535 = vunpack.c.h.b16 %v2213
    %v2536 = vunpack.c.l.b16 %v2214
    %v2537 = vunpack.c.h.b16 %v2214
    %v2538 = vunpack.c.l.b16 %v2215
    %v2539 = vunpack.c.h.b16 %v2215
    %v2540 = vunpack.c.l.b16 %v2216
    %v2541 = vunpack.c.h.b16 %v2216
    %v2542 = vunpack.c.l.b16 %v2217
    %v2543 = vunpack.c.h.b16 %v2217
    %v2544 = vunpack.c.l.b16 %v2218
    %v2545 = vunpack.c.h.b16 %v2218
    %v2546 = vunpack.c.l.b16 %v2219
    %v2547 = vunpack.c.h.b16 %v2219
    %v2548 = vunpack.c.l.b16 %v2220
    %v2549 = vunpack.c.h.b16 %v2220
    %v2550 = vunpack.c.l.b16 %v2221
    %v2551 = vunpack.c.h.b16 %v2221
    %v2552 = vunpack.c.l.b16 %v2222
    %v2553 = vunpack.c.h.b16 %v2222
    %v2554 = vunpack.c.l.b16 %v2223
    %v2555 = vunpack.c.h.b16 %v2223
    %v2556 = vunpack.c.l.b16 %v2224
    %v2557 = vunpack.c.h.b16 %v2224
    %v2558 = vunpack.c.l.b16 %v2225
    %v2559 = vunpack.c.h.b16 %v2225
    %v2560 = vunpack.c.l.b16 %v2226
    %v2561 = vunpack.c.h.b16 %v2226
    %v2562 = vunpack.c.l.b16 %v2227
    %v2563 = vunpack.c.h.b16 %v2227
    %v2564 = vunpack.c.l.b16 %v2228
    %v2565 = vunpack.c.h.b16 %v2228
    %v2566 = vunpack.c.l.b16 %v2229
    %v2567 = vunpack.c.h.b16 %v2229
    %v2568 = vunpack.c.l.b16 %v2230
    %v2569 = vunpack.c.h.b16 %v2230
    %v2570 = vunpack.c.l.b16 %v2231
    %v2571 = vunpack.c.h.b16 %v2231
    %v2572 = vunpack.c.l.b16 %v2232
    %v2573 = vunpack.c.h.b16 %v2232
    %v2574 = vunpack.c.l.b16 %v2233
    %v2575 = vunpack.c.h.b16 %v2233
    %v2576 = vunpack.c.l.b16 %v2234
    %v2577 = vunpack.c.h.b16 %v2234
    %v2578 = vunpack.c.l.b16 %v2235
    %v2579 = vunpack.c.h.b16 %v2235
    %v2580 = vunpack.c.l.b16 %v2236
    %v2581 = vunpack.c.h.b16 %v2236
    %v2582 = vunpack.c.l.b16 %v2237
    %v2583 = vunpack.c.h.b16 %v2237
    %v2584 = vunpack.c.l.b16 %v2238
    %v2585 = vunpack.c.h.b16 %v2238
    %v2586 = vunpack.c.l.b16 %v2239
    %v2587 = vunpack.c.h.b16 %v2239
    %v2588 = vunpack.c.l.b16 %v2240
    %v2589 = vunpack.c.h.b16 %v2240
    %v2590 = vunpack.c.l.b16 %v2241
    %v2591 = vunpack.c.h.b16 %v2241
    %v2592 = vunpack.c.l.b16 %v2242
    %v2593 = vunpack.c.h.b16 %v2242
    %v2594 = vunpack.c.l.b16 %v2243
    %v2595 = vunpack.c.h.b16 %v2243
    %v2596 = vunpack.c.l.b16 %v2244
    %v2597 = vunpack.c.h.b16 %v2244
    %v2598 = vunpack.c.l.b16 %v2245
    %v2599 = vunpack.c.h.b16 %v2245
    %v2600 = vunpack.c.l.b16 %v2246
    %v2601 = vunpack.c.h.b16 %v2246
    %v2602 = vunpack.c.l.b16 %v2247
    %v2603 = vunpack.c.h.b16 %v2247
    %v2604 = vunpack.c.l.b16 %v2248
    %v2605 = vunpack.c.h.b16 %v2248
    %v2606 = vunpack.c.l.b16 %v2249
    %v2607 = vunpack.c.h.b16 %v2249
    %v2608 = vunpack.c.l.b16 %v2250
    %v2609 = vunpack.c.h.b16 %v2250
    %v2610 = vunpack.c.l.b16 %v2251
    %v2611 = vunpack.c.h.b16 %v2251
    %v2612 = vunpack.c.l.b16 %v2252
    %v2613 = vunpack.c.h.b16 %v2252
    %v2614 = vunpack.c.l.b16 %v2253
    %v2615 = vunpack.c.h.b16 %v2253
    %v2616 = vunpack.c.l.b16 %v2254
    %v2617 = vunpack.c.h.b16 %v2254
    %v2618 = vunpack.c.l.b16 %v2255
    %v2619 = vunpack.c.h.b16 %v2255
    %v2620 = vunpack.c.l.b16 %v2256
    %v2621 = vunpack.c.h.b16 %v2256
    %v2622 = vunpack.c.l.b16 %v2257
    %v2623 = vunpack.c.h.b16 %v2257
    %v2624 = vunpack.c.l.b16 %v2258
    %v2625 = vunpack.c.h.b16 %v2258
    %v2626 = vunpack.c.l.b16 %v2259
    %v2627 = vunpack.c.h.b16 %v2259
    %v2628 = vunpack.c.l.b16 %v2260
    %v2629 = vunpack.c.h.b16 %v2260
    %v2630 = vunpack.c.l.b16 %v2261
    %v2631 = vunpack.c.h.b16 %v2261
    %v2632 = vunpack.c.l.b16 %v2262
    %v2633 = vunpack.c.h.b16 %v2262
    %v2634 = vunpack.c.l.b16 %v2263
    %v2635 = vunpack.c.h.b16 %v2263
    %v2636 = vunpack.c.l.b16 %v2264
    %v2637 = vunpack.c.h.b16 %v2264
    %v2638 = vunpack.c.l.b16 %v2265
    %v2639 = vunpack.c.h.b16 %v2265
    %v2640 = vunpack.c.l.b16 %v2266
    %v2641 = vunpack.c.h.b16 %v2266
    %v2642 = vunpack.c.l.b16 %v2267
    %v2643 = vunpack.c.h.b16 %v2267
    %v2644 = vunpack.c.l.b16 %v2268
    %v2645 = vunpack.c.h.b16 %v2268
    %v2646 = vunpack.c.l.b16 %v2269
    %v2647 = vunpack.c.h.b16 %v2269
    %v2648 = vunpack.c.l.b16 %v2270
    %v2649 = vunpack.c.h.b16 %v2270
    %v2650 = vunpack.c.l.b16 %v2271
    %v2651 = vunpack.c.h.b16 %v2271
    %v2652 = vunpack.c.l.b16 %v2272
    %v2653 = vunpack.c.h.b16 %v2272
    %v2654 = vunpack.c.l.b16 %v2273
    %v2655 = vunpack.c.h.b16 %v2273
    %v2656 = vunpack.c.l.b16 %v2274
    %v2657 = vunpack.c.h.b16 %v2274
    %v2658 = vunpack.c.l.b16 %v2275
    %v2659 = vunpack.c.h.b16 %v2275
    %v2660 = vpack.c.b16 %v2412, %v2404
    %v2661 = vpack.c.b16 %v2413, %v2405
    %v2662 = vpack.c.b16 %v2414, %v2406
    %v2663 = vpack.c.b16 %v2415, %v2407
    %v2664 = vpack.c.b16 %v2416, %v2408
    %v2665 = vpack.c.b16 %v2417, %v2409
    %v2666 = vpack.c.b16 %v2418, %v2410
    %v2667 = vpack.c.b16 %v2419, %v2411
    %v2668 = vpack.c.b16 %v2428, %v2420
    %v2669 = vpack.c.b16 %v2429, %v2421
    %v2670 = vpack.c.b16 %v2430, %v2422
    %v2671 = vpack.c.b16 %v2431, %v2423
    %v2672 = vpack.c.b16 %v2432, %v2424
    %v2673 = vpack.c.b16 %v2433, %v2425
    %v2674 = vpack.c.b16 %v2434, %v2426
    %v2675 = vpack.c.b16 %v2435, %v2427
    %v2676 = vpack.c.b16 %v2444, %v2436
    %v2677 = vpack.c.b16 %v2445, %v2437
    %v2678 = vpack.c.b16 %v2446, %v2438
    %v2679 = vpack.c.b16 %v2447, %v2439
    %v2680 = vpack.c.b16 %v2448, %v2440
    %v2681 = vpack.c.b16 %v2449, %v2441
    %v2682 = vpack.c.b16 %v2450, %v2442
    %v2683 = vpack.c.b16 %v2451, %v2443
    %v2684 = vpack.c.b16 %v2460, %v2452
    %v2685 = vpack.c.b16 %v2461, %v2453
    %v2686 = vpack.c.b16 %v2462, %v2454
    %v2687 = vpack.c.b16 %v2463, %v2455
    %v2688 = vpack.c.b16 %v2464, %v2456
    %v2689 = vpack.c.b16 %v2465, %v2457
    %v2690 = vpack.c.b16 %v2466, %v2458
    %v2691 = vpack.c.b16 %v2467, %v2459
    %v2692 = vpack.c.b16 %v2476, %v2468
    %v2693 = vpack.c.b16 %v2477, %v2469
    %v2694 = vpack.c.b16 %v2478, %v2470
    %v2695 = vpack.c.b16 %v2479, %v2471
    %v2696 = vpack.c.b16 %v2480, %v2472
    %v2697 = vpack.c.b16 %v2481, %v2473
    %v2698 = vpack.c.b16 %v2482, %v2474
    %v2699 = vpack.c.b16 %v2483, %v2475
    %v2700 = vpack.c.b16 %v2492, %v2484
    %v2701 = vpack.c.b16 %v2493, %v2485
    %v2702 = vpack.c.b16 %v2494, %v2486
    %v2703 = vpack.c.b16 %v2495, %v2487
    %v2704 = vpack.c.b16 %v2496, %v2488
    %v2705 = vpack.c.b16 %v2497, %v2489
    %v2706 = vpack.c.b16 %v2498, %v2490
    %v2707 = vpack.c.b16 %v2499, %v2491
    %v2708 = vpack.c.b16 %v2508, %v2500
    %v2709 = vpack.c.b16 %v2509, %v2501
    %v2710 = vpack.c.b16 %v2510, %v2502
    %v2711 = vpack.c.b16 %v2511, %v2503
    %v2712 = vpack.c.b16 %v2512, %v2504
    %v2713 = vpack.c.b16 %v2513, %v2505
    %v2714 = vpack.c.b16 %v2514, %v2506
    %v2715 = vpack.c.b16 %v2515, %v2507
    %v2716 = vpack.c.b16 %v2524, %v2516
    %v2717 = vpack.c.b16 %v2525, %v2517
    %v2718 = vpack.c.b16 %v2526, %v2518
    %v2719 = vpack.c.b16 %v2527, %v2519
    %v2720 = vpack.c.b16 %v2528, %v2520
    %v2721 = vpack.c.b16 %v2529, %v2521
    %v2722 = vpack.c.b16 %v2530, %v2522
    %v2723 = vpack.c.b16 %v2531, %v2523
    %v2724 = vpack.c.b16 %v2540, %v2532
    %v2725 = vpack.c.b16 %v2541, %v2533
    %v2726 = vpack.c.b16 %v2542, %v2534
    %v2727 = vpack.c.b16 %v2543, %v2535
    %v2728 = vpack.c.b16 %v2544, %v2536
    %v2729 = vpack.c.b16 %v2545, %v2537
    %v2730 = vpack.c.b16 %v2546, %v2538
    %v2731 = vpack.c.b16 %v2547, %v2539
    %v2732 = vpack.c.b16 %v2556, %v2548
    %v2733 = vpack.c.b16 %v2557, %v2549
    %v2734 = vpack.c.b16 %v2558, %v2550
    %v2735 = vpack.c.b16 %v2559, %v2551
    %v2736 = vpack.c.b16 %v2560, %v2552
    %v2737 = vpack.c.b16 %v2561, %v2553
    %v2738 = vpack.c.b16 %v2562, %v2554
    %v2739 = vpack.c.b16 %v2563, %v2555
    %v2740 = vpack.c.b16 %v2572, %v2564
    %v2741 = vpack.c.b16 %v2573, %v2565
    %v2742 = vpack.c.b16 %v2574, %v2566
    %v2743 = vpack.c.b16 %v2575, %v2567
    %v2744 = vpack.c.b16 %v2576, %v2568
    %v2745 = vpack.c.b16 %v2577, %v2569
    %v2746 = vpack.c.b16 %v2578, %v2570
    %v2747 = vpack.c.b16 %v2579, %v2571
    %v2748 = vpack.c.b16 %v2588, %v2580
    %v2749 = vpack.c.b16 %v2589, %v2581
    %v2750 = vpack.c.b16 %v2590, %v2582
    %v2751 = vpack.c.b16 %v2591, %v2583
    %v2752 = vpack.c.b16 %v2592, %v2584
    %v2753 = vpack.c.b16 %v2593, %v2585
    %v2754 = vpack.c.b16 %v2594, %v2586
    %v2755 = vpack.c.b16 %v2595, %v2587
    %v2756 = vpack.c.b16 %v2604, %v2596
    %v2757 = vpack.c.b16 %v2605, %v2597
    %v2758 = vpack.c.b16 %v2606, %v2598
    %v2759 = vpack.c.b16 %v2607, %v2599
    %v2760 = vpack.c.b16 %v2608, %v2600
    %v2761 = vpack.c.b16 %v2609, %v2601
    %v2762 = vpack.c.b16 %v2610, %v2602
    %v2763 = vpack.c.b16 %v2611, %v2603
    %v2764 = vpack.c.b16 %v2620, %v2612
    %v2765 = vpack.c.b16 %v2621, %v2613
    %v2766 = vpack.c.b16 %v2622, %v2614
    %v2767 = vpack.c.b16 %v2623, %v2615
    %v2768 = vpack.c.b16 %v2624, %v2616
    %v2769 = vpack.c.b16 %v2625, %v2617
    %v2770 = vpack.c.b16 %v2626, %v2618
    %v2771 = vpack.c.b16 %v2627, %v2619
    %v2772 = vpack.c.b16 %v2636, %v2628
    %v2773 = vpack.c.b16 %v2637, %v2629
    %v2774 = vpack.c.b16 %v2638, %v2630
    %v2775 = vpack.c.b16 %v2639, %v2631
    %v2776 = vpack.c.b16 %v2640, %v2632
    %v2777 = vpack.c.b16 %v2641, %v2633
    %v2778 = vpack.c.b16 %v2642, %v2634
    %v2779 = vpack.c.b16 %v2643, %v2635
    %v2780 = vpack.c.b16 %v2652, %v2644
    %v2781 = vpack.c.b16 %v2653, %v2645
    %v2782 = vpack.c.b16 %v2654, %v2646
    %v2783 = vpack.c.b16 %v2655, %v2647
    %v2784 = vpack.c.b16 %v2656, %v2648
    %v2785 = vpack.c.b16 %v2657, %v2649
    %v2786 = vpack.c.b16 %v2658, %v2650
    %v2787 = vpack.c.b16 %v2659, %v2651
    %2916 = vmatprep.subr.bf16.mxu0 %v2661
    %2917 = vmatpush1.bf16.msra.mxu0 %v2660
    %2918 = vmatprep.subr.bf16.mxu0 %v2669
    %2919 = vmatpush1.bf16.msra.mxu0 %v2668
    %2920 = vmatprep.subr.bf16.mxu0 %v2677
    %2921 = vmatpush1.bf16.msra.mxu0 %v2676
    %2922 = vmatprep.subr.bf16.mxu0 %v2685
    %2923 = vmatpush1.bf16.msra.mxu0 %v2684
    %2924 = vmatprep.subr.bf16.mxu0 %v2693
    %2925 = vmatpush1.bf16.msra.mxu0 %v2692
    %2926 = vmatprep.subr.bf16.mxu0 %v2701
    %2927 = vmatpush1.bf16.msra.mxu0 %v2700
    %2928 = vmatprep.subr.bf16.mxu0 %v2709
    %2929 = vmatpush1.bf16.msra.mxu0 %v2708
    %2930 = vmatprep.subr.bf16.mxu0 %v2717
    %2931 = vmatpush1.bf16.msra.mxu0 %v2716
    %2932 = vmatprep.subr.bf16.mxu0 %v2725
    %2933 = vmatpush1.bf16.msra.mxu0 %v2724
    %2934 = vmatprep.subr.bf16.mxu0 %v2733
    %2935 = vmatpush1.bf16.msra.mxu0 %v2732
    %2936 = vmatprep.subr.bf16.mxu0 %v2741
    %2937 = vmatpush1.bf16.msra.mxu0 %v2740
    %2938 = vmatprep.subr.bf16.mxu0 %v2749
    %2939 = vmatpush1.bf16.msra.mxu0 %v2748
    %2940 = vmatprep.subr.bf16.mxu0 %v2757
    %2941 = vmatpush1.bf16.msra.mxu0 %v2756
    %2942 = vmatprep.subr.bf16.mxu0 %v2765
    %2943 = vmatpush1.bf16.msra.mxu0 %v2764
    %2944 = vmatprep.subr.bf16.mxu0 %v2773
    %2945 = vmatpush1.bf16.msra.mxu0 %v2772
    %2946 = vmatprep.subr.bf16.mxu0 %v2781
    %2947 = vmatpush1.bf16.msra.mxu0 %v2780
    %2948 = vmatprep.mubr.bf16.mxu0 %v2147
    %2949 = vmatmul.mubr.bf16.gmra.mrb[0].mxu0 %v2146
    %v2950 = vpop.f32.mrb[0].mxu0
    %v2951 = vadd.f32 0.0, %v2950
    %v2952 = vpop.f32.mrb[0].mxu0
    %v2953 = vadd.f32 0.0, %v2952
    %v2954 = vpop.f32.mrb[0].mxu0
    %v2955 = vpop.f32.mrb[0].mxu0
    %2956 = vdwg.mxu0
    %2957 = vmatprep.subr.bf16.mxu0 %v2663
    %2958 = vmatpush1.bf16.msra.mxu0 %v2662
    %2959 = vmatprep.subr.bf16.mxu0 %v2671
    %2960 = vmatpush1.bf16.msra.mxu0 %v2670
    %2961 = vmatprep.subr.bf16.mxu0 %v2679
    %2962 = vmatpush1.bf16.msra.mxu0 %v2678
    %2963 = vmatprep.subr.bf16.mxu0 %v2687
    %2964 = vmatpush1.bf16.msra.mxu0 %v2686
    %2965 = vmatprep.subr.bf16.mxu0 %v2695
    %2966 = vmatpush1.bf16.msra.mxu0 %v2694
    %2967 = vmatprep.subr.bf16.mxu0 %v2703
    %2968 = vmatpush1.bf16.msra.mxu0 %v2702
    %2969 = vmatprep.subr.bf16.mxu0 %v2711
    %2970 = vmatpush1.bf16.msra.mxu0 %v2710
    %2971 = vmatprep.subr.bf16.mxu0 %v2719
    %2972 = vmatpush1.bf16.msra.mxu0 %v2718
    %2973 = vmatprep.subr.bf16.mxu0 %v2727
    %2974 = vmatpush1.bf16.msra.mxu0 %v2726
    %2975 = vmatprep.subr.bf16.mxu0 %v2735
    %2976 = vmatpush1.bf16.msra.mxu0 %v2734
    %2977 = vmatprep.subr.bf16.mxu0 %v2743
    %2978 = vmatpush1.bf16.msra.mxu0 %v2742
    %2979 = vmatprep.subr.bf16.mxu0 %v2751
    %2980 = vmatpush1.bf16.msra.mxu0 %v2750
    %2981 = vmatprep.subr.bf16.mxu0 %v2759
    %2982 = vmatpush1.bf16.msra.mxu0 %v2758
    %2983 = vmatprep.subr.bf16.mxu0 %v2767
    %2984 = vmatpush1.bf16.msra.mxu0 %v2766
    %2985 = vmatprep.subr.bf16.mxu0 %v2775
    %2986 = vmatpush1.bf16.msra.mxu0 %v2774
    %2987 = vmatprep.subr.bf16.mxu0 %v2783
    %2988 = vmatpush1.bf16.msra.mxu0 %v2782
    %2989 = vmatprep.mubr.bf16.mxu0 %v2147
    %2990 = vmatmul.mubr.bf16.gmra.mrb[0].mxu0 %v2146
    %v2991 = vpop.f32.mrb[0].mxu0
    %v2992 = vadd.f32 0.0, %v2991
    %v2993 = vpop.f32.mrb[0].mxu0
    %v2994 = vadd.f32 0.0, %v2993
    %v2995 = vpop.f32.mrb[0].mxu0
    %v2996 = vpop.f32.mrb[0].mxu0
    %2997 = vdwg.mxu0
    %2998 = vmatprep.subr.bf16.mxu0 %v2665
    %2999 = vmatpush1.bf16.msra.mxu0 %v2664
    %3000 = vmatprep.subr.bf16.mxu0 %v2673
    %3001 = vmatpush1.bf16.msra.mxu0 %v2672
    %3002 = vmatprep.subr.bf16.mxu0 %v2681
    %3003 = vmatpush1.bf16.msra.mxu0 %v2680
    %3004 = vmatprep.subr.bf16.mxu0 %v2689
    %3005 = vmatpush1.bf16.msra.mxu0 %v2688
    %3006 = vmatprep.subr.bf16.mxu0 %v2697
    %3007 = vmatpush1.bf16.msra.mxu0 %v2696
    %3008 = vmatprep.subr.bf16.mxu0 %v2705
    %3009 = vmatpush1.bf16.msra.mxu0 %v2704
    %3010 = vmatprep.subr.bf16.mxu0 %v2713
    %3011 = vmatpush1.bf16.msra.mxu0 %v2712
    %3012 = vmatprep.subr.bf16.mxu0 %v2721
    %3013 = vmatpush1.bf16.msra.mxu0 %v2720
    %3014 = vmatprep.subr.bf16.mxu0 %v2729
    %3015 = vmatpush1.bf16.msra.mxu0 %v2728
    %3016 = vmatprep.subr.bf16.mxu0 %v2737
    %3017 = vmatpush1.bf16.msra.mxu0 %v2736
    %3018 = vmatprep.subr.bf16.mxu0 %v2745
    %3019 = vmatpush1.bf16.msra.mxu0 %v2744
    %3020 = vmatprep.subr.bf16.mxu0 %v2753
    %3021 = vmatpush1.bf16.msra.mxu0 %v2752
    %3022 = vmatprep.subr.bf16.mxu0 %v2761
    %3023 = vmatpush1.bf16.msra.mxu0 %v2760
    %3024 = vmatprep.subr.bf16.mxu0 %v2769
    %3025 = vmatpush1.bf16.msra.mxu0 %v2768
    %3026 = vmatprep.subr.bf16.mxu0 %v2777
    %3027 = vmatpush1.bf16.msra.mxu0 %v2776
    %3028 = vmatprep.subr.bf16.mxu0 %v2785
    %3029 = vmatpush1.bf16.msra.mxu0 %v2784
    %3030 = vmatprep.mubr.bf16.mxu0 %v2147
    %3031 = vmatmul.mubr.bf16.gmra.mrb[0].mxu0 %v2146
    %v3032 = vpop.f32.mrb[0].mxu0
    %v3033 = vadd.f32 0.0, %v3032
    %v3034 = vpop.f32.mrb[0].mxu0
    %v3035 = vadd.f32 0.0, %v3034
    %v3036 = vpop.f32.mrb[0].mxu0
    %v3037 = vpop.f32.mrb[0].mxu0
    %3038 = vdwg.mxu0
    %3039 = vmatprep.subr.bf16.mxu0 %v2667
    %3040 = vmatpush1.bf16.msra.mxu0 %v2666
    %3041 = vmatprep.subr.bf16.mxu0 %v2675
    %3042 = vmatpush1.bf16.msra.mxu0 %v2674
    %3043 = vmatprep.subr.bf16.mxu0 %v2683
    %3044 = vmatpush1.bf16.msra.mxu0 %v2682
    %3045 = vmatprep.subr.bf16.mxu0 %v2691
    %3046 = vmatpush1.bf16.msra.mxu0 %v2690
    %3047 = vmatprep.subr.bf16.mxu0 %v2699
    %3048 = vmatpush1.bf16.msra.mxu0 %v2698
    %3049 = vmatprep.subr.bf16.mxu0 %v2707
    %3050 = vmatpush1.bf16.msra.mxu0 %v2706
    %3051 = vmatprep.subr.bf16.mxu0 %v2715
    %3052 = vmatpush1.bf16.msra.mxu0 %v2714
    %3053 = vmatprep.subr.bf16.mxu0 %v2723
    %3054 = vmatpush1.bf16.msra.mxu0 %v2722
    %3055 = vmatprep.subr.bf16.mxu0 %v2731
    %3056 = vmatpush1.bf16.msra.mxu0 %v2730
    %3057 = vmatprep.subr.bf16.mxu0 %v2739
    %3058 = vmatpush1.bf16.msra.mxu0 %v2738
    %3059 = vmatprep.subr.bf16.mxu0 %v2747
    %3060 = vmatpush1.bf16.msra.mxu0 %v2746
    %3061 = vmatprep.subr.bf16.mxu0 %v2755
    %3062 = vmatpush1.bf16.msra.mxu0 %v2754
    %3063 = vmatprep.subr.bf16.mxu0 %v2763
    %3064 = vmatpush1.bf16.msra.mxu0 %v2762
    %3065 = vmatprep.subr.bf16.mxu0 %v2771
    %3066 = vmatpush1.bf16.msra.mxu0 %v2770
    %3067 = vmatprep.subr.bf16.mxu0 %v2779
    %3068 = vmatpush1.bf16.msra.mxu0 %v2778
    %3069 = vmatprep.subr.bf16.mxu0 %v2787
    %3070 = vmatpush1.bf16.msra.mxu0 %v2786
    %3071 = vmatprep.mubr.bf16.mxu0 %v2147
    %3072 = vmatmul.mubr.bf16.gmra.mrb[0].mxu0 %v2146
    %v3073 = vpop.f32.mrb[0].mxu0
    %v3074 = vadd.f32 0.0, %v3073
    %v3075 = vpop.f32.mrb[0].mxu0
    %v3076 = vadd.f32 0.0, %v3075
    %v3077 = vpop.f32.mrb[0].mxu0
    %v3078 = vpop.f32.mrb[0].mxu0
    %3079 = vdwg.mxu0
    %v3080 = vld [vmem:[#allocation2] sm:$0xc]
    %v3081 = vld [vmem:[#allocation2 + $0x8] sm:$0xc]
    %v3082 = vld [vmem:[#allocation2 + $0x10] sm:$0xc]
    %v3083 = vld [vmem:[#allocation2 + $0x18] sm:$0xc]
    %v3088 = vrot.slane %v3080, 2
    %v3089 = vrot.slane %v3081, 2
    %v3090 = vrot.slane %v3082, 2
    %v3091 = vrot.slane %v3083, 2
    %v3096 = vadd.f32 %v2951, %v3088
    %v3097 = vadd.f32 %v2953, %v3089
    %v3098 = vadd.f32 %v2992, %v3090
    %v3099 = vadd.f32 %v2994, %v3091
    %v3100 = vmul.f32 %v3096, 0.5
    %v3101 = vmul.f32 %v3097, 0.5
    %v3102 = vmul.f32 %v3098, 0.5
    %v3103 = vtanh.pop %v3100
    %v3104 = vtanh.pop %v3101
    %v3105 = vtanh.pop %v3102
    %v3106 = vmul.f32 %v3103, 0.5
    %v3107 = vmul.f32 %v3104, 0.5
    %v3108 = vmul.f32 %v3105, 0.5
    %v3109 = vadd.f32 %v3106, 0.5
    %v3110 = vadd.f32 %v3107, 0.5
    %v3111 = vadd.f32 %v3108, 0.5
    %v3112 = vtanh.pop %v3099
    %v3113 = vmul.f32 %v3110, %v2143
    %v3114 = vmul.f32 %v3109, %v3112
    %v3115 = vadd.f32 %v3113, %v3114
    %v3116 = vtanh.pop %v3115
    %v3117 = vmul.f32 %v3111, %v3116
    %v3118 = vadd.f32 %v3033, %v2107
    %v3119 = vadd.f32 %v3035, %v2111
    %v3120 = vadd.f32 %v3074, %v2115
    %v3121 = vadd.f32 %v3076, %v2119
    %v3122 = vmul.f32 %v3118, 0.5
    %v3123 = vmul.f32 %v3119, 0.5
    %v3124 = vmul.f32 %v3120, 0.5
    %v3125 = vtanh.pop %v3122
    %v3126 = vtanh.pop %v3123
    %v3127 = vtanh.pop %v3124
    %v3128 = vmul.f32 %v3125, 0.5
    %v3129 = vmul.f32 %v3126, 0.5
    %v3130 = vmul.f32 %v3127, 0.5
    %v3131 = vadd.f32 %v3128, 0.5
    %v3132 = vadd.f32 %v3129, 0.5
    %v3133 = vadd.f32 %v3130, 0.5
    %v3134 = vtanh.pop %v3121
    %v3135 = vmul.f32 %v3132, 0.0
    %v3136 = vmul.f32 %v3131, %v3134
    %v3137 = vadd.f32 %v3135, %v3136
    %v3138 = vtanh.pop %v3137
    %v3139 = vmul.f32 %v3133, %v3138
    %v3140 = vpack.c.bf16 %v3117, %v3117
    %v3141 = vpack.c.bf16 %v3139, %v3139
    %3142 = vmatprep.subr.bf16.mxu0 %v2661
    %3143 = vmatpush1.bf16.msra.mxu0 %v2660
    %3144 = vmatprep.subr.bf16.mxu0 %v2669
    %3145 = vmatpush1.bf16.msra.mxu0 %v2668
    %3146 = vmatprep.subr.bf16.mxu0 %v2677
    %3147 = vmatpush1.bf16.msra.mxu0 %v2676
    %3148 = vmatprep.subr.bf16.mxu0 %v2685
    %3149 = vmatpush1.bf16.msra.mxu0 %v2684
    %3150 = vmatprep.subr.bf16.mxu0 %v2693
    %3151 = vmatpush1.bf16.msra.mxu0 %v2692
    %3152 = vmatprep.subr.bf16.mxu0 %v2701
    %3153 = vmatpush1.bf16.msra.mxu0 %v2700
    %3154 = vmatprep.subr.bf16.mxu0 %v2709
    %3155 = vmatpush1.bf16.msra.mxu0 %v2708
    %3156 = vmatprep.subr.bf16.mxu0 %v2717
    %3157 = vmatpush1.bf16.msra.mxu0 %v2716
    %3158 = vmatprep.subr.bf16.mxu0 %v2725
    %3159 = vmatpush1.bf16.msra.mxu0 %v2724
    %3160 = vmatprep.subr.bf16.mxu0 %v2733
    %3161 = vmatpush1.bf16.msra.mxu0 %v2732
    %3162 = vmatprep.subr.bf16.mxu0 %v2741
    %3163 = vmatpush1.bf16.msra.mxu0 %v2740
    %3164 = vmatprep.subr.bf16.mxu0 %v2749
    %3165 = vmatpush1.bf16.msra.mxu0 %v2748
    %3166 = vmatprep.subr.bf16.mxu0 %v2757
    %3167 = vmatpush1.bf16.msra.mxu0 %v2756
    %3168 = vmatprep.subr.bf16.mxu0 %v2765
    %3169 = vmatpush1.bf16.msra.mxu0 %v2764
    %3170 = vmatprep.subr.bf16.mxu0 %v2773
    %3171 = vmatpush1.bf16.msra.mxu0 %v2772
    %3172 = vmatprep.subr.bf16.mxu0 %v2781
    %3173 = vmatpush1.bf16.msra.mxu0 %v2780
    %3174 = vmatprep.mubr.bf16.mxu0 %v3141
    %3175 = vmatmul.mubr.bf16.gmra.mrb[0].mxu0 %v3140
    %v3176 = vpop.f32.mrb[0].mxu0
    %v3177 = vadd.f32 0.0, %v3176
    %v3178 = vpop.f32.mrb[0].mxu0
    %v3179 = vadd.f32 0.0, %v3178
    %v3180 = vpop.f32.mrb[0].mxu0
    %v3181 = vpop.f32.mrb[0].mxu0
    %3182 = vdwg.mxu0
    %3183 = vmatprep.subr.bf16.mxu0 %v2663
    %3184 = vmatpush1.bf16.msra.mxu0 %v2662
    %3185 = vmatprep.subr.bf16.mxu0 %v2671
    %3186 = vmatpush1.bf16.msra.mxu0 %v2670
    %3187 = vmatprep.subr.bf16.mxu0 %v2679
    %3188 = vmatpush1.bf16.msra.mxu0 %v2678
    %3189 = vmatprep.subr.bf16.mxu0 %v2687
    %3190 = vmatpush1.bf16.msra.mxu0 %v2686
    %3191 = vmatprep.subr.bf16.mxu0 %v2695
    %3192 = vmatpush1.bf16.msra.mxu0 %v2694
    %3193 = vmatprep.subr.bf16.mxu0 %v2703
    %3194 = vmatpush1.bf16.msra.mxu0 %v2702
    %3195 = vmatprep.subr.bf16.mxu0 %v2711
    %3196 = vmatpush1.bf16.msra.mxu0 %v2710
    %3197 = vmatprep.subr.bf16.mxu0 %v2719
    %3198 = vmatpush1.bf16.msra.mxu0 %v2718
    %3199 = vmatprep.subr.bf16.mxu0 %v2727
    %3200 = vmatpush1.bf16.msra.mxu0 %v2726
    %3201 = vmatprep.subr.bf16.mxu0 %v2735
    %3202 = vmatpush1.bf16.msra.mxu0 %v2734
    %3203 = vmatprep.subr.bf16.mxu0 %v2743
    %3204 = vmatpush1.bf16.msra.mxu0 %v2742
    %3205 = vmatprep.subr.bf16.mxu0 %v2751
    %3206 = vmatpush1.bf16.msra.mxu0 %v2750
    %3207 = vmatprep.subr.bf16.mxu0 %v2759
    %3208 = vmatpush1.bf16.msra.mxu0 %v2758
    %3209 = vmatprep.subr.bf16.mxu0 %v2767
    %3210 = vmatpush1.bf16.msra.mxu0 %v2766
    %3211 = vmatprep.subr.bf16.mxu0 %v2775
    %3212 = vmatpush1.bf16.msra.mxu0 %v2774
    %3213 = vmatprep.subr.bf16.mxu0 %v2783
    %3214 = vmatpush1.bf16.msra.mxu0 %v2782
    %3215 = vmatprep.mubr.bf16.mxu0 %v3141
    %3216 = vmatmul.mubr.bf16.gmra.mrb[0].mxu0 %v3140
    %v3217 = vpop.f32.mrb[0].mxu0
    %v3218 = vadd.f32 0.0, %v3217
    %v3219 = vpop.f32.mrb[0].mxu0
    %v3220 = vadd.f32 0.0, %v3219
    %v3221 = vpop.f32.mrb[0].mxu0
    %v3222 = vpop.f32.mrb[0].mxu0
    %3223 = vdwg.mxu0
    %3224 = vmatprep.subr.bf16.mxu0 %v2665
    %3225 = vmatpush1.bf16.msra.mxu0 %v2664
    %3226 = vmatprep.subr.bf16.mxu0 %v2673
    %3227 = vmatpush1.bf16.msra.mxu0 %v2672
    %3228 = vmatprep.subr.bf16.mxu0 %v2681
    %3229 = vmatpush1.bf16.msra.mxu0 %v2680
    %3230 = vmatprep.subr.bf16.mxu0 %v2689
    %3231 = vmatpush1.bf16.msra.mxu0 %v2688
    %3232 = vmatprep.subr.bf16.mxu0 %v2697
    %3233 = vmatpush1.bf16.msra.mxu0 %v2696
    %3234 = vmatprep.subr.bf16.mxu0 %v2705
    %3235 = vmatpush1.bf16.msra.mxu0 %v2704
    %3236 = vmatprep.subr.bf16.mxu0 %v2713
    %3237 = vmatpush1.bf16.msra.mxu0 %v2712
    %3238 = vmatprep.subr.bf16.mxu0 %v2721
    %3239 = vmatpush1.bf16.msra.mxu0 %v2720
    %3240 = vmatprep.subr.bf16.mxu0 %v2729
    %3241 = vmatpush1.bf16.msra.mxu0 %v2728
    %3242 = vmatprep.subr.bf16.mxu0 %v2737
    %3243 = vmatpush1.bf16.msra.mxu0 %v2736
    %3244 = vmatprep.subr.bf16.mxu0 %v2745
    %3245 = vmatpush1.bf16.msra.mxu0 %v2744
    %3246 = vmatprep.subr.bf16.mxu0 %v2753
    %3247 = vmatpush1.bf16.msra.mxu0 %v2752
    %3248 = vmatprep.subr.bf16.mxu0 %v2761
    %3249 = vmatpush1.bf16.msra.mxu0 %v2760
    %3250 = vmatprep.subr.bf16.mxu0 %v2769
    %3251 = vmatpush1.bf16.msra.mxu0 %v2768
    %3252 = vmatprep.subr.bf16.mxu0 %v2777
    %3253 = vmatpush1.bf16.msra.mxu0 %v2776
    %3254 = vmatprep.subr.bf16.mxu0 %v2785
    %3255 = vmatpush1.bf16.msra.mxu0 %v2784
    %3256 = vmatprep.mubr.bf16.mxu0 %v3141
    %3257 = vmatmul.mubr.bf16.gmra.mrb[0].mxu0 %v3140
    %v3258 = vpop.f32.mrb[0].mxu0
    %v3259 = vadd.f32 0.0, %v3258
    %v3260 = vpop.f32.mrb[0].mxu0
    %v3261 = vadd.f32 0.0, %v3260
    %v3262 = vpop.f32.mrb[0].mxu0
    %v3263 = vpop.f32.mrb[0].mxu0
    %3264 = vdwg.mxu0
    %3265 = vmatprep.subr.bf16.mxu0 %v2667
    %3266 = vmatpush1.bf16.msra.mxu0 %v2666
    %3267 = vmatprep.subr.bf16.mxu0 %v2675
    %3268 = vmatpush1.bf16.msra.mxu0 %v2674
    %3269 = vmatprep.subr.bf16.mxu0 %v2683
    %3270 = vmatpush1.bf16.msra.mxu0 %v2682
    %3271 = vmatprep.subr.bf16.mxu0 %v2691
    %3272 = vmatpush1.bf16.msra.mxu0 %v2690
    %3273 = vmatprep.subr.bf16.mxu0 %v2699
    %3274 = vmatpush1.bf16.msra.mxu0 %v2698
    %3275 = vmatprep.subr.bf16.mxu0 %v2707
    %3276 = vmatpush1.bf16.msra.mxu0 %v2706
    %3277 = vmatprep.subr.bf16.mxu0 %v2715
    %3278 = vmatpush1.bf16.msra.mxu0 %v2714
    %3279 = vmatprep.subr.bf16.mxu0 %v2723
    %3280 = vmatpush1.bf16.msra.mxu0 %v2722
    %3281 = vmatprep.subr.bf16.mxu0 %v2731
    %3282 = vmatpush1.bf16.msra.mxu0 %v2730
    %3283 = vmatprep.subr.bf16.mxu0 %v2739
    %3284 = vmatpush1.bf16.msra.mxu0 %v2738
    %3285 = vmatprep.subr.bf16.mxu0 %v2747
    %3286 = vmatpush1.bf16.msra.mxu0 %v2746
    %3287 = vmatprep.subr.bf16.mxu0 %v2755
    %3288 = vmatpush1.bf16.msra.mxu0 %v2754
    %3289 = vmatprep.subr.bf16.mxu0 %v2763
    %3290 = vmatpush1.bf16.msra.mxu0 %v2762
    %3291 = vmatprep.subr.bf16.mxu0 %v2771
    %3292 = vmatpush1.bf16.msra.mxu0 %v2770
    %3293 = vmatprep.subr.bf16.mxu0 %v2779
    %3294 = vmatpush1.bf16.msra.mxu0 %v2778
    %3295 = vmatprep.subr.bf16.mxu0 %v2787
    %3296 = vmatpush1.bf16.msra.mxu0 %v2786
    %3297 = vmatprep.mubr.bf16.mxu0 %v3141
    %3298 = vmatmul.mubr.bf16.gmra.mrb[0].mxu0 %v3140
    %v3299 = vpop.f32.mrb[0].mxu0
    %v3300 = vadd.f32 0.0, %v3299
    %v3301 = vpop.f32.mrb[0].mxu0
    %v3302 = vadd.f32 0.0, %v3301
    %v3303 = vpop.f32.mrb[0].mxu0
    %v3304 = vpop.f32.mrb[0].mxu0
    %3305 = vdwg.mxu0
    %v3306 = vld [vmem:[#allocation2] sm:$0x30]
    %v3307 = vld [vmem:[#allocation2 + $0x8] sm:$0x30]
    %v3308 = vld [vmem:[#allocation2 + $0x10] sm:$0x30]
    %v3309 = vld [vmem:[#allocation2 + $0x18] sm:$0x30]
    %v3314 = vrot.slane %v3306, 4
    %v3315 = vrot.slane %v3307, 4
    %v3316 = vrot.slane %v3308, 4
    %v3317 = vrot.slane %v3309, 4
    %v3322 = vadd.f32 %v3177, %v3314
    %v3323 = vadd.f32 %v3179, %v3315
    %v3324 = vadd.f32 %v3218, %v3316
    %v3325 = vadd.f32 %v3220, %v3317
    %v3326 = vmul.f32 %v3322, 0.5
    %v3327 = vmul.f32 %v3323, 0.5
    %v3328 = vmul.f32 %v3324, 0.5
    %v3329 = vtanh.pop %v3326
    %v3330 = vtanh.pop %v3327
    %v3331 = vtanh.pop %v3328
    %v3332 = vmul.f32 %v3329, 0.5
    %v3333 = vmul.f32 %v3330, 0.5
    %v3334 = vmul.f32 %v3331, 0.5
    %v3335 = vadd.f32 %v3332, 0.5
    %v3336 = vadd.f32 %v3333, 0.5
    %v3337 = vadd.f32 %v3334, 0.5
    %v3338 = vtanh.pop %v3325
    %v3339 = vmul.f32 %v3336, %v3115
    %v3340 = vmul.f32 %v3335, %v3338
    %v3341 = vadd.f32 %v3339, %v3340
    %v3342 = vtanh.pop %v3341
    %v3343 = vmul.f32 %v3337, %v3342
    %v3344 = vadd.f32 %v3259, %v2107
    %v3345 = vadd.f32 %v3261, %v2111
    %v3346 = vadd.f32 %v3300, %v2115
    %v3347 = vadd.f32 %v3302, %v2119
    %v3348 = vmul.f32 %v3344, 0.5
    %v3349 = vmul.f32 %v3345, 0.5
    %v3350 = vmul.f32 %v3346, 0.5
    %v3351 = vtanh.pop %v3348
    %v3352 = vtanh.pop %v3349
    %v3353 = vtanh.pop %v3350
    %v3354 = vmul.f32 %v3351, 0.5
    %v3355 = vmul.f32 %v3352, 0.5
    %v3356 = vmul.f32 %v3353, 0.5
    %v3357 = vadd.f32 %v3354, 0.5
    %v3358 = vadd.f32 %v3355, 0.5
    %v3359 = vadd.f32 %v3356, 0.5
    %v3360 = vtanh.pop %v3347
    %v3361 = vmul.f32 %v3358, %v3137
    %v3362 = vmul.f32 %v3357, %v3360
    %v3363 = vadd.f32 %v3361, %v3362
    %v3364 = vtanh.pop %v3363
    %v3365 = vmul.f32 %v3359, %v3364
    %v3366 = vpack.c.bf16 %v3343, %v3343
    %v3367 = vpack.c.bf16 %v3365, %v3365
    %3368 = vmatprep.subr.bf16.mxu0 %v2661
    %3369 = vmatpush1.bf16.msra.mxu0 %v2660
    %3370 = vmatprep.subr.bf16.mxu0 %v2669
    %3371 = vmatpush1.bf16.msra.mxu0 %v2668
    %3372 = vmatprep.subr.bf16.mxu0 %v2677
    %3373 = vmatpush1.bf16.msra.mxu0 %v2676
    %3374 = vmatprep.subr.bf16.mxu0 %v2685
    %3375 = vmatpush1.bf16.msra.mxu0 %v2684
    %3376 = vmatprep.subr.bf16.mxu0 %v2693
    %3377 = vmatpush1.bf16.msra.mxu0 %v2692
    %3378 = vmatprep.subr.bf16.mxu0 %v2701
    %3379 = vmatpush1.bf16.msra.mxu0 %v2700
    %3380 = vmatprep.subr.bf16.mxu0 %v2709
    %3381 = vmatpush1.bf16.msra.mxu0 %v2708
    %3382 = vmatprep.subr.bf16.mxu0 %v2717
    %3383 = vmatpush1.bf16.msra.mxu0 %v2716
    %3384 = vmatprep.subr.bf16.mxu0 %v2725
    %3385 = vmatpush1.bf16.msra.mxu0 %v2724
    %3386 = vmatprep.subr.bf16.mxu0 %v2733
    %3387 = vmatpush1.bf16.msra.mxu0 %v2732
    %3388 = vmatprep.subr.bf16.mxu0 %v2741
    %3389 = vmatpush1.bf16.msra.mxu0 %v2740
    %3390 = vmatprep.subr.bf16.mxu0 %v2749
    %3391 = vmatpush1.bf16.msra.mxu0 %v2748
    %3392 = vmatprep.subr.bf16.mxu0 %v2757
    %3393 = vmatpush1.bf16.msra.mxu0 %v2756
    %3394 = vmatprep.subr.bf16.mxu0 %v2765
    %3395 = vmatpush1.bf16.msra.mxu0 %v2764
    %3396 = vmatprep.subr.bf16.mxu0 %v2773
    %3397 = vmatpush1.bf16.msra.mxu0 %v2772
    %3398 = vmatprep.subr.bf16.mxu0 %v2781
    %3399 = vmatpush1.bf16.msra.mxu0 %v2780
    %3400 = vmatprep.mubr.bf16.mxu0 %v3367
    %3401 = vmatmul.mubr.bf16.gmra.mrb[0].mxu0 %v3366
    %v3402 = vpop.f32.mrb[0].mxu0
    %v3403 = vadd.f32 0.0, %v3402
    %v3404 = vpop.f32.mrb[0].mxu0
    %v3405 = vadd.f32 0.0, %v3404
    %v3406 = vpop.f32.mrb[0].mxu0
    %v3407 = vpop.f32.mrb[0].mxu0
    %3408 = vdwg.mxu0
    %3409 = vmatprep.subr.bf16.mxu0 %v2663
    %3410 = vmatpush1.bf16.msra.mxu0 %v2662
    %3411 = vmatprep.subr.bf16.mxu0 %v2671
    %3412 = vmatpush1.bf16.msra.mxu0 %v2670
    %3413 = vmatprep.subr.bf16.mxu0 %v2679
    %3414 = vmatpush1.bf16.msra.mxu0 %v2678
    %3415 = vmatprep.subr.bf16.mxu0 %v2687
    %3416 = vmatpush1.bf16.msra.mxu0 %v2686
    %3417 = vmatprep.subr.bf16.mxu0 %v2695
    %3418 = vmatpush1.bf16.msra.mxu0 %v2694
    %3419 = vmatprep.subr.bf16.mxu0 %v2703
    %3420 = vmatpush1.bf16.msra.mxu0 %v2702
    %3421 = vmatprep.subr.bf16.mxu0 %v2711
    %3422 = vmatpush1.bf16.msra.mxu0 %v2710
    %3423 = vmatprep.subr.bf16.mxu0 %v2719
    %3424 = vmatpush1.bf16.msra.mxu0 %v2718
    %3425 = vmatprep.subr.bf16.mxu0 %v2727
    %3426 = vmatpush1.bf16.msra.mxu0 %v2726
    %3427 = vmatprep.subr.bf16.mxu0 %v2735
    %3428 = vmatpush1.bf16.msra.mxu0 %v2734
    %3429 = vmatprep.subr.bf16.mxu0 %v2743
    %3430 = vmatpush1.bf16.msra.mxu0 %v2742
    %3431 = vmatprep.subr.bf16.mxu0 %v2751
    %3432 = vmatpush1.bf16.msra.mxu0 %v2750
    %3433 = vmatprep.subr.bf16.mxu0 %v2759
    %3434 = vmatpush1.bf16.msra.mxu0 %v2758
    %3435 = vmatprep.subr.bf16.mxu0 %v2767
    %3436 = vmatpush1.bf16.msra.mxu0 %v2766
    %3437 = vmatprep.subr.bf16.mxu0 %v2775
    %3438 = vmatpush1.bf16.msra.mxu0 %v2774
    %3439 = vmatprep.subr.bf16.mxu0 %v2783
    %3440 = vmatpush1.bf16.msra.mxu0 %v2782
    %3441 = vmatprep.mubr.bf16.mxu0 %v3367
    %3442 = vmatmul.mubr.bf16.gmra.mrb[0].mxu0 %v3366
    %v3443 = vpop.f32.mrb[0].mxu0
    %v3444 = vadd.f32 0.0, %v3443
    %v3445 = vpop.f32.mrb[0].mxu0
    %v3446 = vadd.f32 0.0, %v3445
    %v3447 = vpop.f32.mrb[0].mxu0
    %v3448 = vpop.f32.mrb[0].mxu0
    %3449 = vdwg.mxu0
    %3450 = vmatprep.subr.bf16.mxu0 %v2665
    %3451 = vmatpush1.bf16.msra.mxu0 %v2664
    %3452 = vmatprep.subr.bf16.mxu0 %v2673
    %3453 = vmatpush1.bf16.msra.mxu0 %v2672
    %3454 = vmatprep.subr.bf16.mxu0 %v2681
    %3455 = vmatpush1.bf16.msra.mxu0 %v2680
    %3456 = vmatprep.subr.bf16.mxu0 %v2689
    %3457 = vmatpush1.bf16.msra.mxu0 %v2688
    %3458 = vmatprep.subr.bf16.mxu0 %v2697
    %3459 = vmatpush1.bf16.msra.mxu0 %v2696
    %3460 = vmatprep.subr.bf16.mxu0 %v2705
    %3461 = vmatpush1.bf16.msra.mxu0 %v2704
    %3462 = vmatprep.subr.bf16.mxu0 %v2713
    %3463 = vmatpush1.bf16.msra.mxu0 %v2712
    %3464 = vmatprep.subr.bf16.mxu0 %v2721
    %3465 = vmatpush1.bf16.msra.mxu0 %v2720
    %3466 = vmatprep.subr.bf16.mxu0 %v2729
    %3467 = vmatpush1.bf16.msra.mxu0 %v2728
    %3468 = vmatprep.subr.bf16.mxu0 %v2737
    %3469 = vmatpush1.bf16.msra.mxu0 %v2736
    %3470 = vmatprep.subr.bf16.mxu0 %v2745
    %3471 = vmatpush1.bf16.msra.mxu0 %v2744
    %3472 = vmatprep.subr.bf16.mxu0 %v2753
    %3473 = vmatpush1.bf16.msra.mxu0 %v2752
    %3474 = vmatprep.subr.bf16.mxu0 %v2761
    %3475 = vmatpush1.bf16.msra.mxu0 %v2760
    %3476 = vmatprep.subr.bf16.mxu0 %v2769
    %3477 = vmatpush1.bf16.msra.mxu0 %v2768
    %3478 = vmatprep.subr.bf16.mxu0 %v2777
    %3479 = vmatpush1.bf16.msra.mxu0 %v2776
    %3480 = vmatprep.subr.bf16.mxu0 %v2785
    %3481 = vmatpush1.bf16.msra.mxu0 %v2784
    %3482 = vmatprep.mubr.bf16.mxu0 %v3367
    %3483 = vmatmul.mubr.bf16.gmra.mrb[0].mxu0 %v3366
    %v3484 = vpop.f32.mrb[0].mxu0
    %v3485 = vadd.f32 0.0, %v3484
    %v3486 = vpop.f32.mrb[0].mxu0
    %v3487 = vadd.f32 0.0, %v3486
    %v3488 = vpop.f32.mrb[0].mxu0
    %v3489 = vpop.f32.mrb[0].mxu0
    %3490 = vdwg.mxu0
    %3491 = vmatprep.subr.bf16.mxu0 %v2667
    %3492 = vmatpush1.bf16.msra.mxu0 %v2666
    %3493 = vmatprep.subr.bf16.mxu0 %v2675
    %3494 = vmatpush1.bf16.msra.mxu0 %v2674
    %3495 = vmatprep.subr.bf16.mxu0 %v2683
    %3496 = vmatpush1.bf16.msra.mxu0 %v2682
    %3497 = vmatprep.subr.bf16.mxu0 %v2691
    %3498 = vmatpush1.bf16.msra.mxu0 %v2690
    %3499 = vmatprep.subr.bf16.mxu0 %v2699
    %3500 = vmatpush1.bf16.msra.mxu0 %v2698
    %3501 = vmatprep.subr.bf16.mxu0 %v2707
    %3502 = vmatpush1.bf16.msra.mxu0 %v2706
    %3503 = vmatprep.subr.bf16.mxu0 %v2715
    %3504 = vmatpush1.bf16.msra.mxu0 %v2714
    %3505 = vmatprep.subr.bf16.mxu0 %v2723
    %3506 = vmatpush1.bf16.msra.mxu0 %v2722
    %3507 = vmatprep.subr.bf16.mxu0 %v2731
    %3508 = vmatpush1.bf16.msra.mxu0 %v2730
    %3509 = vmatprep.subr.bf16.mxu0 %v2739
    %3510 = vmatpush1.bf16.msra.mxu0 %v2738
    %3511 = vmatprep.subr.bf16.mxu0 %v2747
    %3512 = vmatpush1.bf16.msra.mxu0 %v2746
    %3513 = vmatprep.subr.bf16.mxu0 %v2755
    %3514 = vmatpush1.bf16.msra.mxu0 %v2754
    %3515 = vmatprep.subr.bf16.mxu0 %v2763
    %3516 = vmatpush1.bf16.msra.mxu0 %v2762
    %3517 = vmatprep.subr.bf16.mxu0 %v2771
    %3518 = vmatpush1.bf16.msra.mxu0 %v2770
    %3519 = vmatprep.subr.bf16.mxu0 %v2779
    %3520 = vmatpush1.bf16.msra.mxu0 %v2778
    %3521 = vmatprep.subr.bf16.mxu0 %v2787
    %3522 = vmatpush1.bf16.msra.mxu0 %v2786
    %3523 = vmatprep.mubr.bf16.mxu0 %v3367
    %3524 = vmatmul.mubr.bf16.gmra.mrb[0].mxu0 %v3366
    %v3525 = vpop.f32.mrb[0].mxu0
    %v3526 = vadd.f32 0.0, %v3525
    %v3527 = vpop.f32.mrb[0].mxu0
    %v3528 = vadd.f32 0.0, %v3527
    %v3529 = vpop.f32.mrb[0].mxu0
    %v3530 = vpop.f32.mrb[0].mxu0
    %3531 = vdwg.mxu0
    %v3532 = vld [vmem:[#allocation2] sm:$0xc0]
    %v3533 = vld [vmem:[#allocation2 + $0x8] sm:$0xc0]
    %v3534 = vld [vmem:[#allocation2 + $0x10] sm:$0xc0]
    %v3535 = vld [vmem:[#allocation2 + $0x18] sm:$0xc0]
    %v3540 = vrot.slane %v3532, 6
    %v3541 = vrot.slane %v3533, 6
    %v3542 = vrot.slane %v3534, 6
    %v3543 = vrot.slane %v3535, 6
    %v3548 = vadd.f32 %v3403, %v3540
    %v3549 = vadd.f32 %v3405, %v3541
    %v3550 = vadd.f32 %v3444, %v3542
    %v3551 = vadd.f32 %v3446, %v3543
    %v3552 = vmul.f32 %v3548, 0.5
    %v3553 = vmul.f32 %v3549, 0.5
    %v3554 = vmul.f32 %v3550, 0.5
    %v3555 = vtanh.pop %v3552
    %v3556 = vtanh.pop %v3553
    %v3557 = vtanh.pop %v3554
    %v3558 = vmul.f32 %v3555, 0.5
    %v3559 = vmul.f32 %v3556, 0.5
    %v3560 = vmul.f32 %v3557, 0.5
    %v3561 = vadd.f32 %v3558, 0.5
    %v3562 = vadd.f32 %v3559, 0.5
    %v3563 = vadd.f32 %v3560, 0.5
    %v3564 = vtanh.pop %v3551
    %v3565 = vmul.f32 %v3562, %v3341
    %v3566 = vmul.f32 %v3561, %v3564
    %v3567 = vadd.f32 %v3565, %v3566
    %v3568 = vtanh.pop %v3567
    %v3569 = vmul.f32 %v3563, %v3568
    %v3570 = vadd.f32 %v3485, %v2107
    %v3571 = vadd.f32 %v3487, %v2111
    %v3572 = vadd.f32 %v3526, %v2115
    %v3573 = vadd.f32 %v3528, %v2119
    %v3574 = vmul.f32 %v3570, 0.5
    %v3575 = vmul.f32 %v3571, 0.5
    %v3576 = vmul.f32 %v3572, 0.5
    %v3577 = vtanh.pop %v3574
    %v3578 = vtanh.pop %v3575
    %v3579 = vtanh.pop %v3576
    %v3580 = vmul.f32 %v3577, 0.5
    %v3581 = vmul.f32 %v3578, 0.5
    %v3582 = vmul.f32 %v3579, 0.5
    %v3583 = vadd.f32 %v3580, 0.5
    %v3584 = vadd.f32 %v3581, 0.5
    %v3585 = vadd.f32 %v3582, 0.5
    %v3586 = vtanh.pop %v3573
    %v3587 = vmul.f32 %v3584, %v3363
    %v3588 = vmul.f32 %v3583, %v3586
    %v3589 = vadd.f32 %v3587, %v3588
    %v3590 = vtanh.pop %v3589
    %v3591 = vmul.f32 %v3585, %v3590
    %v3592 = vpack.c.bf16 %v3569, %v3569
    %v3593 = vpack.c.bf16 %v3591, %v3591
    %3594 = vmatprep.subr.bf16.mxu0 %v2661
    %3595 = vmatpush1.bf16.msra.mxu0 %v2660
    %3596 = vmatprep.subr.bf16.mxu0 %v2669
    %3597 = vmatpush1.bf16.msra.mxu0 %v2668
    %3598 = vmatprep.subr.bf16.mxu0 %v2677
    %3599 = vmatpush1.bf16.msra.mxu0 %v2676
    %3600 = vmatprep.subr.bf16.mxu0 %v2685
    %3601 = vmatpush1.bf16.msra.mxu0 %v2684
    %3602 = vmatprep.subr.bf16.mxu0 %v2693
    %3603 = vmatpush1.bf16.msra.mxu0 %v2692
    %3604 = vmatprep.subr.bf16.mxu0 %v2701
    %3605 = vmatpush1.bf16.msra.mxu0 %v2700
    %3606 = vmatprep.subr.bf16.mxu0 %v2709
    %3607 = vmatpush1.bf16.msra.mxu0 %v2708
    %3608 = vmatprep.subr.bf16.mxu0 %v2717
    %3609 = vmatpush1.bf16.msra.mxu0 %v2716
    %3610 = vmatprep.subr.bf16.mxu0 %v2725
    %3611 = vmatpush1.bf16.msra.mxu0 %v2724
    %3612 = vmatprep.subr.bf16.mxu0 %v2733
    %3613 = vmatpush1.bf16.msra.mxu0 %v2732
    %3614 = vmatprep.subr.bf16.mxu0 %v2741
    %3615 = vmatpush1.bf16.msra.mxu0 %v2740
    %3616 = vmatprep.subr.bf16.mxu0 %v2749
    %3617 = vmatpush1.bf16.msra.mxu0 %v2748
    %3618 = vmatprep.subr.bf16.mxu0 %v2757
    %3619 = vmatpush1.bf16.msra.mxu0 %v2756
    %3620 = vmatprep.subr.bf16.mxu0 %v2765
    %3621 = vmatpush1.bf16.msra.mxu0 %v2764
    %3622 = vmatprep.subr.bf16.mxu0 %v2773
    %3623 = vmatpush1.bf16.msra.mxu0 %v2772
    %3624 = vmatprep.subr.bf16.mxu0 %v2781
    %3625 = vmatpush1.bf16.msra.mxu0 %v2780
    %3626 = vmatprep.mubr.bf16.mxu0 %v3593
    %3627 = vmatmul.mubr.bf16.gmra.mrb[0].mxu0 %v3592
    %v3628 = vpop.f32.mrb[0].mxu0
    %v3629 = vadd.f32 0.0, %v3628
    %v3630 = vpop.f32.mrb[0].mxu0
    %v3631 = vadd.f32 0.0, %v3630
    %v3632 = vpop.f32.mrb[0].mxu0
    %v3633 = vpop.f32.mrb[0].mxu0
    %3634 = vdwg.mxu0
    %3635 = vmatprep.subr.bf16.mxu0 %v2663
    %3636 = vmatpush1.bf16.msra.mxu0 %v2662
    %3637 = vmatprep.subr.bf16.mxu0 %v2671
    %3638 = vmatpush1.bf16.msra.mxu0 %v2670
    %3639 = vmatprep.subr.bf16.mxu0 %v2679
    %3640 = vmatpush1.bf16.msra.mxu0 %v2678
    %3641 = vmatprep.subr.bf16.mxu0 %v2687
    %3642 = vmatpush1.bf16.msra.mxu0 %v2686
    %3643 = vmatprep.subr.bf16.mxu0 %v2695
    %3644 = vmatpush1.bf16.msra.mxu0 %v2694
    %3645 = vmatprep.subr.bf16.mxu0 %v2703
    %3646 = vmatpush1.bf16.msra.mxu0 %v2702
    %3647 = vmatprep.subr.bf16.mxu0 %v2711
    %3648 = vmatpush1.bf16.msra.mxu0 %v2710
    %3649 = vmatprep.subr.bf16.mxu0 %v2719
    %3650 = vmatpush1.bf16.msra.mxu0 %v2718
    %3651 = vmatprep.subr.bf16.mxu0 %v2727
    %3652 = vmatpush1.bf16.msra.mxu0 %v2726
    %3653 = vmatprep.subr.bf16.mxu0 %v2735
    %3654 = vmatpush1.bf16.msra.mxu0 %v2734
    %3655 = vmatprep.subr.bf16.mxu0 %v2743
    %3656 = vmatpush1.bf16.msra.mxu0 %v2742
    %3657 = vmatprep.subr.bf16.mxu0 %v2751
    %3658 = vmatpush1.bf16.msra.mxu0 %v2750
    %3659 = vmatprep.subr.bf16.mxu0 %v2759
    %3660 = vmatpush1.bf16.msra.mxu0 %v2758
    %3661 = vmatprep.subr.bf16.mxu0 %v2767
    %3662 = vmatpush1.bf16.msra.mxu0 %v2766
    %3663 = vmatprep.subr.bf16.mxu0 %v2775
    %3664 = vmatpush1.bf16.msra.mxu0 %v2774
    %3665 = vmatprep.subr.bf16.mxu0 %v2783
    %3666 = vmatpush1.bf16.msra.mxu0 %v2782
    %3667 = vmatprep.mubr.bf16.mxu0 %v3593
    %3668 = vmatmul.mubr.bf16.gmra.mrb[0].mxu0 %v3592
    %v3669 = vpop.f32.mrb[0].mxu0
    %v3670 = vadd.f32 0.0, %v3669
    %v3671 = vpop.f32.mrb[0].mxu0
    %v3672 = vadd.f32 0.0, %v3671
    %v3673 = vpop.f32.mrb[0].mxu0
    %v3674 = vpop.f32.mrb[0].mxu0
    %3675 = vdwg.mxu0
    %3676 = vmatprep.subr.bf16.mxu0 %v2665
    %3677 = vmatpush1.bf16.msra.mxu0 %v2664
    %3678 = vmatprep.subr.bf16.mxu0 %v2673
    %3679 = vmatpush1.bf16.msra.mxu0 %v2672
    %3680 = vmatprep.subr.bf16.mxu0 %v2681
    %3681 = vmatpush1.bf16.msra.mxu0 %v2680
    %3682 = vmatprep.subr.bf16.mxu0 %v2689
    %3683 = vmatpush1.bf16.msra.mxu0 %v2688
    %3684 = vmatprep.subr.bf16.mxu0 %v2697
    %3685 = vmatpush1.bf16.msra.mxu0 %v2696
    %3686 = vmatprep.subr.bf16.mxu0 %v2705
    %3687 = vmatpush1.bf16.msra.mxu0 %v2704
    %3688 = vmatprep.subr.bf16.mxu0 %v2713
    %3689 = vmatpush1.bf16.msra.mxu0 %v2712
    %3690 = vmatprep.subr.bf16.mxu0 %v2721
    %3691 = vmatpush1.bf16.msra.mxu0 %v2720
    %3692 = vmatprep.subr.bf16.mxu0 %v2729
    %3693 = vmatpush1.bf16.msra.mxu0 %v2728
    %3694 = vmatprep.subr.bf16.mxu0 %v2737
    %3695 = vmatpush1.bf16.msra.mxu0 %v2736
    %3696 = vmatprep.subr.bf16.mxu0 %v2745
    %3697 = vmatpush1.bf16.msra.mxu0 %v2744
    %3698 = vmatprep.subr.bf16.mxu0 %v2753
    %3699 = vmatpush1.bf16.msra.mxu0 %v2752
    %3700 = vmatprep.subr.bf16.mxu0 %v2761
    %3701 = vmatpush1.bf16.msra.mxu0 %v2760
    %3702 = vmatprep.subr.bf16.mxu0 %v2769
    %3703 = vmatpush1.bf16.msra.mxu0 %v2768
    %3704 = vmatprep.subr.bf16.mxu0 %v2777
    %3705 = vmatpush1.bf16.msra.mxu0 %v2776
    %3706 = vmatprep.subr.bf16.mxu0 %v2785
    %3707 = vmatpush1.bf16.msra.mxu0 %v2784
    %3708 = vmatprep.mubr.bf16.mxu0 %v3593
    %3709 = vmatmul.mubr.bf16.gmra.mrb[0].mxu0 %v3592
    %v3710 = vpop.f32.mrb[0].mxu0
    %v3711 = vadd.f32 0.0, %v3710
    %v3712 = vpop.f32.mrb[0].mxu0
    %v3713 = vadd.f32 0.0, %v3712
    %v3714 = vpop.f32.mrb[0].mxu0
    %v3715 = vpop.f32.mrb[0].mxu0
    %3716 = vdwg.mxu0
    %3717 = vmatprep.subr.bf16.mxu0 %v2667
    %3718 = vmatpush1.bf16.msra.mxu0 %v2666
    %3719 = vmatprep.subr.bf16.mxu0 %v2675
    %3720 = vmatpush1.bf16.msra.mxu0 %v2674
    %3721 = vmatprep.subr.bf16.mxu0 %v2683
    %3722 = vmatpush1.bf16.msra.mxu0 %v2682
    %3723 = vmatprep.subr.bf16.mxu0 %v2691
    %3724 = vmatpush1.bf16.msra.mxu0 %v2690
    %3725 = vmatprep.subr.bf16.mxu0 %v2699
    %3726 = vmatpush1.bf16.msra.mxu0 %v2698
    %3727 = vmatprep.subr.bf16.mxu0 %v2707
    %3728 = vmatpush1.bf16.msra.mxu0 %v2706
    %3729 = vmatprep.subr.bf16.mxu0 %v2715
    %3730 = vmatpush1.bf16.msra.mxu0 %v2714
    %3731 = vmatprep.subr.bf16.mxu0 %v2723
    %3732 = vmatpush1.bf16.msra.mxu0 %v2722
    %3733 = vmatprep.subr.bf16.mxu0 %v2731
    %3734 = vmatpush1.bf16.msra.mxu0 %v2730
    %3735 = vmatprep.subr.bf16.mxu0 %v2739
    %3736 = vmatpush1.bf16.msra.mxu0 %v2738
    %3737 = vmatprep.subr.bf16.mxu0 %v2747
    %3738 = vmatpush1.bf16.msra.mxu0 %v2746
    %3739 = vmatprep.subr.bf16.mxu0 %v2755
    %3740 = vmatpush1.bf16.msra.mxu0 %v2754
    %3741 = vmatprep.subr.bf16.mxu0 %v2763
    %3742 = vmatpush1.bf16.msra.mxu0 %v2762
    %3743 = vmatprep.subr.bf16.mxu0 %v2771
    %3744 = vmatpush1.bf16.msra.mxu0 %v2770
    %3745 = vmatprep.subr.bf16.mxu0 %v2779
    %3746 = vmatpush1.bf16.msra.mxu0 %v2778
    %3747 = vmatprep.subr.bf16.mxu0 %v2787
    %3748 = vmatpush1.bf16.msra.mxu0 %v2786
    %3749 = vmatprep.mubr.bf16.mxu0 %v3593
    %3750 = vmatmul.mubr.bf16.gmra.mrb[0].mxu0 %v3592
    %v3751 = vpop.f32.mrb[0].mxu0
    %v3752 = vadd.f32 0.0, %v3751
    %v3753 = vpop.f32.mrb[0].mxu0
    %v3754 = vadd.f32 0.0, %v3753
    %v3755 = vpop.f32.mrb[0].mxu0
    %v3756 = vpop.f32.mrb[0].mxu0
    %3757 = vdwg.mxu0
    %v3758 = vld [vmem:[#allocation2 + $0x20] sm:$0x3]
    %v3759 = vld [vmem:[#allocation2 + $0x28] sm:$0x3]
    %v3760 = vld [vmem:[#allocation2 + $0x30] sm:$0x3]
    %v3761 = vld [vmem:[#allocation2 + $0x38] sm:$0x3]
    %v3762 = vadd.f32 %v3629, %v3758
    %v3763 = vadd.f32 %v3631, %v3759
    %v3764 = vadd.f32 %v3670, %v3760
    %v3765 = vadd.f32 %v3672, %v3761
    %v3766 = vmul.f32 %v3762, 0.5
    %v3767 = vmul.f32 %v3763, 0.5
    %v3768 = vmul.f32 %v3764, 0.5
    %v3769 = vtanh.pop %v3766
    %v3770 = vtanh.pop %v3767
    %v3771 = vtanh.pop %v3768
    %v3772 = vmul.f32 %v3769, 0.5
    %v3773 = vmul.f32 %v3770, 0.5
    %v3774 = vmul.f32 %v3771, 0.5
    %v3775 = vadd.f32 %v3772, 0.5
    %v3776 = vadd.f32 %v3773, 0.5
    %v3777 = vadd.f32 %v3774, 0.5
    %v3778 = vtanh.pop %v3765
    %v3779 = vmul.f32 %v3776, %v3567
    %v3780 = vmul.f32 %v3775, %v3778
    %v3781 = vadd.f32 %v3779, %v3780
    %v3782 = vtanh.pop %v3781
    %v3783 = vmul.f32 %v3777, %v3782
    %v3784 = vadd.f32 %v3711, %v2107
    %v3785 = vadd.f32 %v3713, %v2111
    %v3786 = vadd.f32 %v3752, %v2115
    %v3787 = vadd.f32 %v3754, %v2119
    %v3788 = vmul.f32 %v3784, 0.5
    %v3789 = vmul.f32 %v3785, 0.5
    %v3790 = vmul.f32 %v3786, 0.5
    %v3791 = vtanh.pop %v3788
    %v3792 = vtanh.pop %v3789
    %v3793 = vtanh.pop %v3790
    %v3794 = vmul.f32 %v3791, 0.5
    %v3795 = vmul.f32 %v3792, 0.5
    %v3796 = vmul.f32 %v3793, 0.5
    %v3797 = vadd.f32 %v3794, 0.5
    %v3798 = vadd.f32 %v3795, 0.5
    %v3799 = vadd.f32 %v3796, 0.5
    %v3800 = vtanh.pop %v3787
    %v3801 = vmul.f32 %v3798, %v3589
    %v3802 = vmul.f32 %v3797, %v3800
    %v3803 = vadd.f32 %v3801, %v3802
    %v3804 = vtanh.pop %v3803
    %v3805 = vmul.f32 %v3799, %v3804
    %v3806 = vpack.c.bf16 %v3783, %v3783
    %v3807 = vpack.c.bf16 %v3805, %v3805
    %3808 = vmatprep.subr.bf16.mxu0 %v2661
    %3809 = vmatpush1.bf16.msra.mxu0 %v2660
    %3810 = vmatprep.subr.bf16.mxu0 %v2669
    %3811 = vmatpush1.bf16.msra.mxu0 %v2668
    %3812 = vmatprep.subr.bf16.mxu0 %v2677
    %3813 = vmatpush1.bf16.msra.mxu0 %v2676
    %3814 = vmatprep.subr.bf16.mxu0 %v2685
    %3815 = vmatpush1.bf16.msra.mxu0 %v2684
    %3816 = vmatprep.subr.bf16.mxu0 %v2693
    %3817 = vmatpush1.bf16.msra.mxu0 %v2692
    %3818 = vmatprep.subr.bf16.mxu0 %v2701
    %3819 = vmatpush1.bf16.msra.mxu0 %v2700
    %3820 = vmatprep.subr.bf16.mxu0 %v2709
    %3821 = vmatpush1.bf16.msra.mxu0 %v2708
    %3822 = vmatprep.subr.bf16.mxu0 %v2717
    %3823 = vmatpush1.bf16.msra.mxu0 %v2716
    %3824 = vmatprep.subr.bf16.mxu0 %v2725
    %3825 = vmatpush1.bf16.msra.mxu0 %v2724
    %3826 = vmatprep.subr.bf16.mxu0 %v2733
    %3827 = vmatpush1.bf16.msra.mxu0 %v2732
    %3828 = vmatprep.subr.bf16.mxu0 %v2741
    %3829 = vmatpush1.bf16.msra.mxu0 %v2740
    %3830 = vmatprep.subr.bf16.mxu0 %v2749
    %3831 = vmatpush1.bf16.msra.mxu0 %v2748
    %3832 = vmatprep.subr.bf16.mxu0 %v2757
    %3833 = vmatpush1.bf16.msra.mxu0 %v2756
    %3834 = vmatprep.subr.bf16.mxu0 %v2765
    %3835 = vmatpush1.bf16.msra.mxu0 %v2764
    %3836 = vmatprep.subr.bf16.mxu0 %v2773
    %3837 = vmatpush1.bf16.msra.mxu0 %v2772
    %3838 = vmatprep.subr.bf16.mxu0 %v2781
    %3839 = vmatpush1.bf16.msra.mxu0 %v2780
    %3840 = vmatprep.mubr.bf16.mxu0 %v3807
    %3841 = vmatmul.mubr.bf16.gmra.mrb[0].mxu0 %v3806
    %v3842 = vpop.f32.mrb[0].mxu0
    %v3843 = vadd.f32 0.0, %v3842
    %v3844 = vpop.f32.mrb[0].mxu0
    %v3845 = vadd.f32 0.0, %v3844
    %v3846 = vpop.f32.mrb[0].mxu0
    %v3847 = vpop.f32.mrb[0].mxu0
    %3848 = vdwg.mxu0
    %3849 = vmatprep.subr.bf16.mxu0 %v2663
    %3850 = vmatpush1.bf16.msra.mxu0 %v2662
    %3851 = vmatprep.subr.bf16.mxu0 %v2671
    %3852 = vmatpush1.bf16.msra.mxu0 %v2670
    %3853 = vmatprep.subr.bf16.mxu0 %v2679
    %3854 = vmatpush1.bf16.msra.mxu0 %v2678
    %3855 = vmatprep.subr.bf16.mxu0 %v2687
    %3856 = vmatpush1.bf16.msra.mxu0 %v2686
    %3857 = vmatprep.subr.bf16.mxu0 %v2695
    %3858 = vmatpush1.bf16.msra.mxu0 %v2694
    %3859 = vmatprep.subr.bf16.mxu0 %v2703
    %3860 = vmatpush1.bf16.msra.mxu0 %v2702
    %3861 = vmatprep.subr.bf16.mxu0 %v2711
    %3862 = vmatpush1.bf16.msra.mxu0 %v2710
    %3863 = vmatprep.subr.bf16.mxu0 %v2719
    %3864 = vmatpush1.bf16.msra.mxu0 %v2718
    %3865 = vmatprep.subr.bf16.mxu0 %v2727
    %3866 = vmatpush1.bf16.msra.mxu0 %v2726
    %3867 = vmatprep.subr.bf16.mxu0 %v2735
    %3868 = vmatpush1.bf16.msra.mxu0 %v2734
    %3869 = vmatprep.subr.bf16.mxu0 %v2743
    %3870 = vmatpush1.bf16.msra.mxu0 %v2742
    %3871 = vmatprep.subr.bf16.mxu0 %v2751
    %3872 = vmatpush1.bf16.msra.mxu0 %v2750
    %3873 = vmatprep.subr.bf16.mxu0 %v2759
    %3874 = vmatpush1.bf16.msra.mxu0 %v2758
    %3875 = vmatprep.subr.bf16.mxu0 %v2767
    %3876 = vmatpush1.bf16.msra.mxu0 %v2766
    %3877 = vmatprep.subr.bf16.mxu0 %v2775
    %3878 = vmatpush1.bf16.msra.mxu0 %v2774
    %3879 = vmatprep.subr.bf16.mxu0 %v2783
    %3880 = vmatpush1.bf16.msra.mxu0 %v2782
    %3881 = vmatprep.mubr.bf16.mxu0 %v3807
    %3882 = vmatmul.mubr.bf16.gmra.mrb[0].mxu0 %v3806
    %v3883 = vpop.f32.mrb[0].mxu0
    %v3884 = vadd.f32 0.0, %v3883
    %v3885 = vpop.f32.mrb[0].mxu0
    %v3886 = vadd.f32 0.0, %v3885
    %v3887 = vpop.f32.mrb[0].mxu0
    %v3888 = vpop.f32.mrb[0].mxu0
    %3889 = vdwg.mxu0
    %3890 = vmatprep.subr.bf16.mxu0 %v2665
    %3891 = vmatpush1.bf16.msra.mxu0 %v2664
    %3892 = vmatprep.subr.bf16.mxu0 %v2673
    %3893 = vmatpush1.bf16.msra.mxu0 %v2672
    %3894 = vmatprep.subr.bf16.mxu0 %v2681
    %3895 = vmatpush1.bf16.msra.mxu0 %v2680
    %3896 = vmatprep.subr.bf16.mxu0 %v2689
    %3897 = vmatpush1.bf16.msra.mxu0 %v2688
    %3898 = vmatprep.subr.bf16.mxu0 %v2697
    %3899 = vmatpush1.bf16.msra.mxu0 %v2696
    %3900 = vmatprep.subr.bf16.mxu0 %v2705
    %3901 = vmatpush1.bf16.msra.mxu0 %v2704
    %3902 = vmatprep.subr.bf16.mxu0 %v2713
    %3903 = vmatpush1.bf16.msra.mxu0 %v2712
    %3904 = vmatprep.subr.bf16.mxu0 %v2721
    %3905 = vmatpush1.bf16.msra.mxu0 %v2720
    %3906 = vmatprep.subr.bf16.mxu0 %v2729
    %3907 = vmatpush1.bf16.msra.mxu0 %v2728
    %3908 = vmatprep.subr.bf16.mxu0 %v2737
    %3909 = vmatpush1.bf16.msra.mxu0 %v2736
    %3910 = vmatprep.subr.bf16.mxu0 %v2745
    %3911 = vmatpush1.bf16.msra.mxu0 %v2744
    %3912 = vmatprep.subr.bf16.mxu0 %v2753
    %3913 = vmatpush1.bf16.msra.mxu0 %v2752
    %3914 = vmatprep.subr.bf16.mxu0 %v2761
    %3915 = vmatpush1.bf16.msra.mxu0 %v2760
    %3916 = vmatprep.subr.bf16.mxu0 %v2769
    %3917 = vmatpush1.bf16.msra.mxu0 %v2768
    %3918 = vmatprep.subr.bf16.mxu0 %v2777
    %3919 = vmatpush1.bf16.msra.mxu0 %v2776
    %3920 = vmatprep.subr.bf16.mxu0 %v2785
    %3921 = vmatpush1.bf16.msra.mxu0 %v2784
    %3922 = vmatprep.mubr.bf16.mxu0 %v3807
    %3923 = vmatmul.mubr.bf16.gmra.mrb[0].mxu0 %v3806
    %v3924 = vpop.f32.mrb[0].mxu0
    %v3925 = vadd.f32 0.0, %v3924
    %v3926 = vpop.f32.mrb[0].mxu0
    %v3927 = vadd.f32 0.0, %v3926
    %v3928 = vpop.f32.mrb[0].mxu0
    %v3929 = vpop.f32.mrb[0].mxu0
    %3930 = vdwg.mxu0
    %3931 = vmatprep.subr.bf16.mxu0 %v2667
    %3932 = vmatpush1.bf16.msra.mxu0 %v2666
    %3933 = vmatprep.subr.bf16.mxu0 %v2675
    %3934 = vmatpush1.bf16.msra.mxu0 %v2674
    %3935 = vmatprep.subr.bf16.mxu0 %v2683
    %3936 = vmatpush1.bf16.msra.mxu0 %v2682
    %3937 = vmatprep.subr.bf16.mxu0 %v2691
    %3938 = vmatpush1.bf16.msra.mxu0 %v2690
    %3939 = vmatprep.subr.bf16.mxu0 %v2699
    %3940 = vmatpush1.bf16.msra.mxu0 %v2698
    %3941 = vmatprep.subr.bf16.mxu0 %v2707
    %3942 = vmatpush1.bf16.msra.mxu0 %v2706
    %3943 = vmatprep.subr.bf16.mxu0 %v2715
    %3944 = vmatpush1.bf16.msra.mxu0 %v2714
    %3945 = vmatprep.subr.bf16.mxu0 %v2723
    %3946 = vmatpush1.bf16.msra.mxu0 %v2722
    %3947 = vmatprep.subr.bf16.mxu0 %v2731
    %3948 = vmatpush1.bf16.msra.mxu0 %v2730
    %3949 = vmatprep.subr.bf16.mxu0 %v2739
    %3950 = vmatpush1.bf16.msra.mxu0 %v2738
    %3951 = vmatprep.subr.bf16.mxu0 %v2747
    %3952 = vmatpush1.bf16.msra.mxu0 %v2746
    %3953 = vmatprep.subr.bf16.mxu0 %v2755
    %3954 = vmatpush1.bf16.msra.mxu0 %v2754
    %3955 = vmatprep.subr.bf16.mxu0 %v2763
    %3956 = vmatpush1.bf16.msra.mxu0 %v2762
    %3957 = vmatprep.subr.bf16.mxu0 %v2771
    %3958 = vmatpush1.bf16.msra.mxu0 %v2770
    %3959 = vmatprep.subr.bf16.mxu0 %v2779
    %3960 = vmatpush1.bf16.msra.mxu0 %v2778
    %3961 = vmatprep.subr.bf16.mxu0 %v2787
    %3962 = vmatpush1.bf16.msra.mxu0 %v2786
    %3963 = vmatprep.mubr.bf16.mxu0 %v3807
    %3964 = vmatmul.mubr.bf16.gmra.mrb[0].mxu0 %v3806
    %v3965 = vpop.f32.mrb[0].mxu0
    %v3966 = vadd.f32 0.0, %v3965
    %v3967 = vpop.f32.mrb[0].mxu0
    %v3968 = vadd.f32 0.0, %v3967
    %v3969 = vpop.f32.mrb[0].mxu0
    %v3970 = vpop.f32.mrb[0].mxu0
    %3971 = vdwg.mxu0
    %v3972 = vld [vmem:[#allocation2 + $0x20] sm:$0xc]
    %v3973 = vld [vmem:[#allocation2 + $0x28] sm:$0xc]
    %v3974 = vld [vmem:[#allocation2 + $0x30] sm:$0xc]
    %v3975 = vld [vmem:[#allocation2 + $0x38] sm:$0xc]
    %v3980 = vrot.slane %v3972, 2
    %v3981 = vrot.slane %v3973, 2
    %v3982 = vrot.slane %v3974, 2
    %v3983 = vrot.slane %v3975, 2
    %v3988 = vadd.f32 %v3843, %v3980
    %v3989 = vadd.f32 %v3845, %v3981
    %v3990 = vadd.f32 %v3884, %v3982
    %v3991 = vadd.f32 %v3886, %v3983
    %v3992 = vmul.f32 %v3988, 0.5
    %v3993 = vmul.f32 %v3989, 0.5
    %v3994 = vmul.f32 %v3990, 0.5
    %v3995 = vtanh.pop %v3992
    %v3996 = vtanh.pop %v3993
    %v3997 = vtanh.pop %v3994
    %v3998 = vmul.f32 %v3995, 0.5
    %v3999 = vmul.f32 %v3996, 0.5
    %v4000 = vmul.f32 %v3997, 0.5
    %v4001 = vadd.f32 %v3998, 0.5
    %v4002 = vadd.f32 %v3999, 0.5
    %v4003 = vadd.f32 %v4000, 0.5
    %v4004 = vtanh.pop %v3991
    %v4005 = vmul.f32 %v4002, %v3781
    %v4006 = vmul.f32 %v4001, %v4004
    %v4007 = vadd.f32 %v4005, %v4006
    %v4008 = vtanh.pop %v4007
    %v4009 = vmul.f32 %v4003, %v4008
    %v4010 = vadd.f32 %v3925, %v2107
    %v4011 = vadd.f32 %v3927, %v2111
    %v4012 = vadd.f32 %v3966, %v2115
    %v4013 = vadd.f32 %v3968, %v2119
    %v4014 = vmul.f32 %v4010, 0.5
    %v4015 = vmul.f32 %v4011, 0.5
    %v4016 = vmul.f32 %v4012, 0.5
    %v4017 = vtanh.pop %v4014
    %v4018 = vtanh.pop %v4015
    %v4019 = vtanh.pop %v4016
    %v4020 = vmul.f32 %v4017, 0.5
    %v4021 = vmul.f32 %v4018, 0.5
    %v4022 = vmul.f32 %v4019, 0.5
    %v4023 = vadd.f32 %v4020, 0.5
    %v4024 = vadd.f32 %v4021, 0.5
    %v4025 = vadd.f32 %v4022, 0.5
    %v4026 = vtanh.pop %v4013
    %v4027 = vmul.f32 %v4024, %v3803
    %v4028 = vmul.f32 %v4023, %v4026
    %v4029 = vadd.f32 %v4027, %v4028
    %v4030 = vtanh.pop %v4029
    %v4031 = vmul.f32 %v4025, %v4030
    %v4032 = vpack.c.bf16 %v4009, %v4009
    %v4033 = vpack.c.bf16 %v4031, %v4031
    %4034 = vmatprep.subr.bf16.mxu0 %v2661
    %4035 = vmatpush1.bf16.msra.mxu0 %v2660
    %4036 = vmatprep.subr.bf16.mxu0 %v2669
    %4037 = vmatpush1.bf16.msra.mxu0 %v2668
    %4038 = vmatprep.subr.bf16.mxu0 %v2677
    %4039 = vmatpush1.bf16.msra.mxu0 %v2676
    %4040 = vmatprep.subr.bf16.mxu0 %v2685
    %4041 = vmatpush1.bf16.msra.mxu0 %v2684
    %4042 = vmatprep.subr.bf16.mxu0 %v2693
    %4043 = vmatpush1.bf16.msra.mxu0 %v2692
    %4044 = vmatprep.subr.bf16.mxu0 %v2701
    %4045 = vmatpush1.bf16.msra.mxu0 %v2700
    %4046 = vmatprep.subr.bf16.mxu0 %v2709
    %4047 = vmatpush1.bf16.msra.mxu0 %v2708
    %4048 = vmatprep.subr.bf16.mxu0 %v2717
    %4049 = vmatpush1.bf16.msra.mxu0 %v2716
    %4050 = vmatprep.subr.bf16.mxu0 %v2725
    %4051 = vmatpush1.bf16.msra.mxu0 %v2724
    %4052 = vmatprep.subr.bf16.mxu0 %v2733
    %4053 = vmatpush1.bf16.msra.mxu0 %v2732
    %4054 = vmatprep.subr.bf16.mxu0 %v2741
    %4055 = vmatpush1.bf16.msra.mxu0 %v2740
    %4056 = vmatprep.subr.bf16.mxu0 %v2749
    %4057 = vmatpush1.bf16.msra.mxu0 %v2748
    %4058 = vmatprep.subr.bf16.mxu0 %v2757
    %4059 = vmatpush1.bf16.msra.mxu0 %v2756
    %4060 = vmatprep.subr.bf16.mxu0 %v2765
    %4061 = vmatpush1.bf16.msra.mxu0 %v2764
    %4062 = vmatprep.subr.bf16.mxu0 %v2773
    %4063 = vmatpush1.bf16.msra.mxu0 %v2772
    %4064 = vmatprep.subr.bf16.mxu0 %v2781
    %4065 = vmatpush1.bf16.msra.mxu0 %v2780
    %4066 = vmatprep.mubr.bf16.mxu0 %v4033
    %4067 = vmatmul.mubr.bf16.gmra.mrb[0].mxu0 %v4032
    %v4068 = vpop.f32.mrb[0].mxu0
    %v4069 = vadd.f32 0.0, %v4068
    %v4070 = vpop.f32.mrb[0].mxu0
    %v4071 = vadd.f32 0.0, %v4070
    %v4072 = vpop.f32.mrb[0].mxu0
    %v4073 = vpop.f32.mrb[0].mxu0
    %4074 = vdwg.mxu0
    %4075 = vmatprep.subr.bf16.mxu0 %v2663
    %4076 = vmatpush1.bf16.msra.mxu0 %v2662
    %4077 = vmatprep.subr.bf16.mxu0 %v2671
    %4078 = vmatpush1.bf16.msra.mxu0 %v2670
    %4079 = vmatprep.subr.bf16.mxu0 %v2679
    %4080 = vmatpush1.bf16.msra.mxu0 %v2678
    %4081 = vmatprep.subr.bf16.mxu0 %v2687
    %4082 = vmatpush1.bf16.msra.mxu0 %v2686
    %4083 = vmatprep.subr.bf16.mxu0 %v2695
    %4084 = vmatpush1.bf16.msra.mxu0 %v2694
    %4085 = vmatprep.subr.bf16.mxu0 %v2703
    %4086 = vmatpush1.bf16.msra.mxu0 %v2702
    %4087 = vmatprep.subr.bf16.mxu0 %v2711
    %4088 = vmatpush1.bf16.msra.mxu0 %v2710
    %4089 = vmatprep.subr.bf16.mxu0 %v2719
    %4090 = vmatpush1.bf16.msra.mxu0 %v2718
    %4091 = vmatprep.subr.bf16.mxu0 %v2727
    %4092 = vmatpush1.bf16.msra.mxu0 %v2726
    %4093 = vmatprep.subr.bf16.mxu0 %v2735
    %4094 = vmatpush1.bf16.msra.mxu0 %v2734
    %4095 = vmatprep.subr.bf16.mxu0 %v2743
    %4096 = vmatpush1.bf16.msra.mxu0 %v2742
    %4097 = vmatprep.subr.bf16.mxu0 %v2751
    %4098 = vmatpush1.bf16.msra.mxu0 %v2750
    %4099 = vmatprep.subr.bf16.mxu0 %v2759
    %4100 = vmatpush1.bf16.msra.mxu0 %v2758
    %4101 = vmatprep.subr.bf16.mxu0 %v2767
    %4102 = vmatpush1.bf16.msra.mxu0 %v2766
    %4103 = vmatprep.subr.bf16.mxu0 %v2775
    %4104 = vmatpush1.bf16.msra.mxu0 %v2774
    %4105 = vmatprep.subr.bf16.mxu0 %v2783
    %4106 = vmatpush1.bf16.msra.mxu0 %v2782
    %4107 = vmatprep.mubr.bf16.mxu0 %v4033
    %4108 = vmatmul.mubr.bf16.gmra.mrb[0].mxu0 %v4032
    %v4109 = vpop.f32.mrb[0].mxu0
    %v4110 = vadd.f32 0.0, %v4109
    %v4111 = vpop.f32.mrb[0].mxu0
    %v4112 = vadd.f32 0.0, %v4111
    %v4113 = vpop.f32.mrb[0].mxu0
    %v4114 = vpop.f32.mrb[0].mxu0
    %4115 = vdwg.mxu0
    %4116 = vmatprep.subr.bf16.mxu0 %v2665
    %4117 = vmatpush1.bf16.msra.mxu0 %v2664
    %4118 = vmatprep.subr.bf16.mxu0 %v2673
    %4119 = vmatpush1.bf16.msra.mxu0 %v2672
    %4120 = vmatprep.subr.bf16.mxu0 %v2681
    %4121 = vmatpush1.bf16.msra.mxu0 %v2680
    %4122 = vmatprep.subr.bf16.mxu0 %v2689
    %4123 = vmatpush1.bf16.msra.mxu0 %v2688
    %4124 = vmatprep.subr.bf16.mxu0 %v2697
    %4125 = vmatpush1.bf16.msra.mxu0 %v2696
    %4126 = vmatprep.subr.bf16.mxu0 %v2705
    %4127 = vmatpush1.bf16.msra.mxu0 %v2704
    %4128 = vmatprep.subr.bf16.mxu0 %v2713
    %4129 = vmatpush1.bf16.msra.mxu0 %v2712
    %4130 = vmatprep.subr.bf16.mxu0 %v2721
    %4131 = vmatpush1.bf16.msra.mxu0 %v2720
    %4132 = vmatprep.subr.bf16.mxu0 %v2729
    %4133 = vmatpush1.bf16.msra.mxu0 %v2728
    %4134 = vmatprep.subr.bf16.mxu0 %v2737
    %4135 = vmatpush1.bf16.msra.mxu0 %v2736
    %4136 = vmatprep.subr.bf16.mxu0 %v2745
    %4137 = vmatpush1.bf16.msra.mxu0 %v2744
    %4138 = vmatprep.subr.bf16.mxu0 %v2753
    %4139 = vmatpush1.bf16.msra.mxu0 %v2752
    %4140 = vmatprep.subr.bf16.mxu0 %v2761
    %4141 = vmatpush1.bf16.msra.mxu0 %v2760
    %4142 = vmatprep.subr.bf16.mxu0 %v2769
    %4143 = vmatpush1.bf16.msra.mxu0 %v2768
    %4144 = vmatprep.subr.bf16.mxu0 %v2777
    %4145 = vmatpush1.bf16.msra.mxu0 %v2776
    %4146 = vmatprep.subr.bf16.mxu0 %v2785
    %4147 = vmatpush1.bf16.msra.mxu0 %v2784
    %4148 = vmatprep.mubr.bf16.mxu0 %v4033
    %4149 = vmatmul.mubr.bf16.gmra.mrb[0].mxu0 %v4032
    %v4150 = vpop.f32.mrb[0].mxu0
    %v4151 = vadd.f32 0.0, %v4150
    %v4152 = vpop.f32.mrb[0].mxu0
    %v4153 = vadd.f32 0.0, %v4152
    %v4154 = vpop.f32.mrb[0].mxu0
    %v4155 = vpop.f32.mrb[0].mxu0
    %4156 = vdwg.mxu0
    %4157 = vmatprep.subr.bf16.mxu0 %v2667
    %4158 = vmatpush1.bf16.msra.mxu0 %v2666
    %4159 = vmatprep.subr.bf16.mxu0 %v2675
    %4160 = vmatpush1.bf16.msra.mxu0 %v2674
    %4161 = vmatprep.subr.bf16.mxu0 %v2683
    %4162 = vmatpush1.bf16.msra.mxu0 %v2682
    %4163 = vmatprep.subr.bf16.mxu0 %v2691
    %4164 = vmatpush1.bf16.msra.mxu0 %v2690
    %4165 = vmatprep.subr.bf16.mxu0 %v2699
    %4166 = vmatpush1.bf16.msra.mxu0 %v2698
    %4167 = vmatprep.subr.bf16.mxu0 %v2707
    %4168 = vmatpush1.bf16.msra.mxu0 %v2706
    %4169 = vmatprep.subr.bf16.mxu0 %v2715
    %4170 = vmatpush1.bf16.msra.mxu0 %v2714
    %4171 = vmatprep.subr.bf16.mxu0 %v2723
    %4172 = vmatpush1.bf16.msra.mxu0 %v2722
    %4173 = vmatprep.subr.bf16.mxu0 %v2731
    %4174 = vmatpush1.bf16.msra.mxu0 %v2730
    %4175 = vmatprep.subr.bf16.mxu0 %v2739
    %4176 = vmatpush1.bf16.msra.mxu0 %v2738
    %4177 = vmatprep.subr.bf16.mxu0 %v2747
    %4178 = vmatpush1.bf16.msra.mxu0 %v2746
    %4179 = vmatprep.subr.bf16.mxu0 %v2755
    %4180 = vmatpush1.bf16.msra.mxu0 %v2754
    %4181 = vmatprep.subr.bf16.mxu0 %v2763
    %4182 = vmatpush1.bf16.msra.mxu0 %v2762
    %4183 = vmatprep.subr.bf16.mxu0 %v2771
    %4184 = vmatpush1.bf16.msra.mxu0 %v2770
    %4185 = vmatprep.subr.bf16.mxu0 %v2779
    %4186 = vmatpush1.bf16.msra.mxu0 %v2778
    %4187 = vmatprep.subr.bf16.mxu0 %v2787
    %4188 = vmatpush1.bf16.msra.mxu0 %v2786
    %4189 = vmatprep.mubr.bf16.mxu0 %v4033
    %4190 = vmatmul.mubr.bf16.gmra.mrb[0].mxu0 %v4032
    %v4191 = vpop.f32.mrb[0].mxu0
    %v4192 = vadd.f32 0.0, %v4191
    %v4193 = vpop.f32.mrb[0].mxu0
    %v4194 = vadd.f32 0.0, %v4193
    %v4195 = vpop.f32.mrb[0].mxu0
    %v4196 = vpop.f32.mrb[0].mxu0
    %4197 = vdwg.mxu0
    %v4198 = vld [vmem:[#allocation2 + $0x20] sm:$0x30]
    %v4199 = vld [vmem:[#allocation2 + $0x28] sm:$0x30]
    %v4200 = vld [vmem:[#allocation2 + $0x30] sm:$0x30]
    %v4201 = vld [vmem:[#allocation2 + $0x38] sm:$0x30]
    %v4206 = vrot.slane %v4198, 4
    %v4207 = vrot.slane %v4199, 4
    %v4208 = vrot.slane %v4200, 4
    %v4209 = vrot.slane %v4201, 4
    %v4214 = vadd.f32 %v4069, %v4206
    %v4215 = vadd.f32 %v4071, %v4207
    %v4216 = vadd.f32 %v4110, %v4208
    %v4217 = vadd.f32 %v4112, %v4209
    %v4218 = vmul.f32 %v4214, 0.5
    %v4219 = vmul.f32 %v4215, 0.5
    %v4220 = vmul.f32 %v4216, 0.5
    %v4221 = vtanh.pop %v4218
    %v4222 = vtanh.pop %v4219
    %v4223 = vtanh.pop %v4220
    %v4224 = vmul.f32 %v4221, 0.5
    %v4225 = vmul.f32 %v4222, 0.5
    %v4226 = vmul.f32 %v4223, 0.5
    %v4227 = vadd.f32 %v4224, 0.5
    %v4228 = vadd.f32 %v4225, 0.5
    %v4229 = vadd.f32 %v4226, 0.5
    %v4230 = vtanh.pop %v4217
    %v4231 = vmul.f32 %v4228, %v4007
    %v4232 = vmul.f32 %v4227, %v4230
    %v4233 = vadd.f32 %v4231, %v4232
    %v4234 = vtanh.pop %v4233
    %v4235 = vmul.f32 %v4229, %v4234
    %v4236 = vadd.f32 %v4151, %v2107
    %v4237 = vadd.f32 %v4153, %v2111
    %v4238 = vadd.f32 %v4192, %v2115
    %v4239 = vadd.f32 %v4194, %v2119
    %v4240 = vmul.f32 %v4236, 0.5
    %v4241 = vmul.f32 %v4237, 0.5
    %v4242 = vmul.f32 %v4238, 0.5
    %v4243 = vtanh.pop %v4240
    %v4244 = vtanh.pop %v4241
    %v4245 = vtanh.pop %v4242
    %v4246 = vmul.f32 %v4243, 0.5
    %v4247 = vmul.f32 %v4244, 0.5
    %v4248 = vmul.f32 %v4245, 0.5
    %v4249 = vadd.f32 %v4246, 0.5
    %v4250 = vadd.f32 %v4247, 0.5
    %v4251 = vadd.f32 %v4248, 0.5
    %v4252 = vtanh.pop %v4239
    %v4253 = vmul.f32 %v4250, %v4029
    %v4254 = vmul.f32 %v4249, %v4252
    %v4255 = vadd.f32 %v4253, %v4254
    %v4256 = vtanh.pop %v4255
    %v4257 = vmul.f32 %v4251, %v4256
    %v4258 = vpack.c.bf16 %v4235, %v4235
    %v4259 = vpack.c.bf16 %v4257, %v4257
    %4260 = vmatprep.subr.bf16.mxu0 %v2661
    %4261 = vmatpush1.bf16.msra.mxu0 %v2660
    %4262 = vmatprep.subr.bf16.mxu0 %v2669
    %4263 = vmatpush1.bf16.msra.mxu0 %v2668
    %4264 = vmatprep.subr.bf16.mxu0 %v2677
    %4265 = vmatpush1.bf16.msra.mxu0 %v2676
    %4266 = vmatprep.subr.bf16.mxu0 %v2685
    %4267 = vmatpush1.bf16.msra.mxu0 %v2684
    %4268 = vmatprep.subr.bf16.mxu0 %v2693
    %4269 = vmatpush1.bf16.msra.mxu0 %v2692
    %4270 = vmatprep.subr.bf16.mxu0 %v2701
    %4271 = vmatpush1.bf16.msra.mxu0 %v2700
    %4272 = vmatprep.subr.bf16.mxu0 %v2709
    %4273 = vmatpush1.bf16.msra.mxu0 %v2708
    %4274 = vmatprep.subr.bf16.mxu0 %v2717
    %4275 = vmatpush1.bf16.msra.mxu0 %v2716
    %4276 = vmatprep.subr.bf16.mxu0 %v2725
    %4277 = vmatpush1.bf16.msra.mxu0 %v2724
    %4278 = vmatprep.subr.bf16.mxu0 %v2733
    %4279 = vmatpush1.bf16.msra.mxu0 %v2732
    %4280 = vmatprep.subr.bf16.mxu0 %v2741
    %4281 = vmatpush1.bf16.msra.mxu0 %v2740
    %4282 = vmatprep.subr.bf16.mxu0 %v2749
    %4283 = vmatpush1.bf16.msra.mxu0 %v2748
    %4284 = vmatprep.subr.bf16.mxu0 %v2757
    %4285 = vmatpush1.bf16.msra.mxu0 %v2756
    %4286 = vmatprep.subr.bf16.mxu0 %v2765
    %4287 = vmatpush1.bf16.msra.mxu0 %v2764
    %4288 = vmatprep.subr.bf16.mxu0 %v2773
    %4289 = vmatpush1.bf16.msra.mxu0 %v2772
    %4290 = vmatprep.subr.bf16.mxu0 %v2781
    %4291 = vmatpush1.bf16.msra.mxu0 %v2780
    %4292 = vmatprep.mubr.bf16.mxu0 %v4259
    %4293 = vmatmul.mubr.bf16.gmra.mrb[0].mxu0 %v4258
    %v4294 = vpop.f32.mrb[0].mxu0
    %v4295 = vadd.f32 0.0, %v4294
    %v4296 = vpop.f32.mrb[0].mxu0
    %v4297 = vadd.f32 0.0, %v4296
    %v4298 = vpop.f32.mrb[0].mxu0
    %v4299 = vpop.f32.mrb[0].mxu0
    %4300 = vdwg.mxu0
    %4301 = vmatprep.subr.bf16.mxu0 %v2663
    %4302 = vmatpush1.bf16.msra.mxu0 %v2662
    %4303 = vmatprep.subr.bf16.mxu0 %v2671
    %4304 = vmatpush1.bf16.msra.mxu0 %v2670
    %4305 = vmatprep.subr.bf16.mxu0 %v2679
    %4306 = vmatpush1.bf16.msra.mxu0 %v2678
    %4307 = vmatprep.subr.bf16.mxu0 %v2687
    %4308 = vmatpush1.bf16.msra.mxu0 %v2686
    %4309 = vmatprep.subr.bf16.mxu0 %v2695
    %4310 = vmatpush1.bf16.msra.mxu0 %v2694
    %4311 = vmatprep.subr.bf16.mxu0 %v2703
    %4312 = vmatpush1.bf16.msra.mxu0 %v2702
    %4313 = vmatprep.subr.bf16.mxu0 %v2711
    %4314 = vmatpush1.bf16.msra.mxu0 %v2710
    %4315 = vmatprep.subr.bf16.mxu0 %v2719
    %4316 = vmatpush1.bf16.msra.mxu0 %v2718
    %4317 = vmatprep.subr.bf16.mxu0 %v2727
    %4318 = vmatpush1.bf16.msra.mxu0 %v2726
    %4319 = vmatprep.subr.bf16.mxu0 %v2735
    %4320 = vmatpush1.bf16.msra.mxu0 %v2734
    %4321 = vmatprep.subr.bf16.mxu0 %v2743
    %4322 = vmatpush1.bf16.msra.mxu0 %v2742
    %4323 = vmatprep.subr.bf16.mxu0 %v2751
    %4324 = vmatpush1.bf16.msra.mxu0 %v2750
    %4325 = vmatprep.subr.bf16.mxu0 %v2759
    %4326 = vmatpush1.bf16.msra.mxu0 %v2758
    %4327 = vmatprep.subr.bf16.mxu0 %v2767
    %4328 = vmatpush1.bf16.msra.mxu0 %v2766
    %4329 = vmatprep.subr.bf16.mxu0 %v2775
    %4330 = vmatpush1.bf16.msra.mxu0 %v2774
    %4331 = vmatprep.subr.bf16.mxu0 %v2783
    %4332 = vmatpush1.bf16.msra.mxu0 %v2782
    %4333 = vmatprep.mubr.bf16.mxu0 %v4259
    %4334 = vmatmul.mubr.bf16.gmra.mrb[0].mxu0 %v4258
    %v4335 = vpop.f32.mrb[0].mxu0
    %v4336 = vadd.f32 0.0, %v4335
    %v4337 = vpop.f32.mrb[0].mxu0
    %v4338 = vadd.f32 0.0, %v4337
    %v4339 = vpop.f32.mrb[0].mxu0
    %v4340 = vpop.f32.mrb[0].mxu0
    %4341 = vdwg.mxu0
    %4342 = vmatprep.subr.bf16.mxu0 %v2665
    %4343 = vmatpush1.bf16.msra.mxu0 %v2664
    %4344 = vmatprep.subr.bf16.mxu0 %v2673
    %4345 = vmatpush1.bf16.msra.mxu0 %v2672
    %4346 = vmatprep.subr.bf16.mxu0 %v2681
    %4347 = vmatpush1.bf16.msra.mxu0 %v2680
    %4348 = vmatprep.subr.bf16.mxu0 %v2689
    %4349 = vmatpush1.bf16.msra.mxu0 %v2688
    %4350 = vmatprep.subr.bf16.mxu0 %v2697
    %4351 = vmatpush1.bf16.msra.mxu0 %v2696
    %4352 = vmatprep.subr.bf16.mxu0 %v2705
    %4353 = vmatpush1.bf16.msra.mxu0 %v2704
    %4354 = vmatprep.subr.bf16.mxu0 %v2713
    %4355 = vmatpush1.bf16.msra.mxu0 %v2712
    %4356 = vmatprep.subr.bf16.mxu0 %v2721
    %4357 = vmatpush1.bf16.msra.mxu0 %v2720
    %4358 = vmatprep.subr.bf16.mxu0 %v2729
    %4359 = vmatpush1.bf16.msra.mxu0 %v2728
    %4360 = vmatprep.subr.bf16.mxu0 %v2737
    %4361 = vmatpush1.bf16.msra.mxu0 %v2736
    %4362 = vmatprep.subr.bf16.mxu0 %v2745
    %4363 = vmatpush1.bf16.msra.mxu0 %v2744
    %4364 = vmatprep.subr.bf16.mxu0 %v2753
    %4365 = vmatpush1.bf16.msra.mxu0 %v2752
    %4366 = vmatprep.subr.bf16.mxu0 %v2761
    %4367 = vmatpush1.bf16.msra.mxu0 %v2760
    %4368 = vmatprep.subr.bf16.mxu0 %v2769
    %4369 = vmatpush1.bf16.msra.mxu0 %v2768
    %4370 = vmatprep.subr.bf16.mxu0 %v2777
    %4371 = vmatpush1.bf16.msra.mxu0 %v2776
    %4372 = vmatprep.subr.bf16.mxu0 %v2785
    %4373 = vmatpush1.bf16.msra.mxu0 %v2784
    %4374 = vmatprep.mubr.bf16.mxu0 %v4259
    %4375 = vmatmul.mubr.bf16.gmra.mrb[0].mxu0 %v4258
    %v4376 = vpop.f32.mrb[0].mxu0
    %v4377 = vadd.f32 0.0, %v4376
    %v4378 = vpop.f32.mrb[0].mxu0
    %v4379 = vadd.f32 0.0, %v4378
    %v4380 = vpop.f32.mrb[0].mxu0
    %v4381 = vpop.f32.mrb[0].mxu0
    %4382 = vdwg.mxu0
    %4383 = vmatprep.subr.bf16.mxu0 %v2667
    %4384 = vmatpush1.bf16.msra.mxu0 %v2666
    %4385 = vmatprep.subr.bf16.mxu0 %v2675
    %4386 = vmatpush1.bf16.msra.mxu0 %v2674
    %4387 = vmatprep.subr.bf16.mxu0 %v2683
    %4388 = vmatpush1.bf16.msra.mxu0 %v2682
    %4389 = vmatprep.subr.bf16.mxu0 %v2691
    %4390 = vmatpush1.bf16.msra.mxu0 %v2690
    %4391 = vmatprep.subr.bf16.mxu0 %v2699
    %4392 = vmatpush1.bf16.msra.mxu0 %v2698
    %4393 = vmatprep.subr.bf16.mxu0 %v2707
    %4394 = vmatpush1.bf16.msra.mxu0 %v2706
    %4395 = vmatprep.subr.bf16.mxu0 %v2715
    %4396 = vmatpush1.bf16.msra.mxu0 %v2714
    %4397 = vmatprep.subr.bf16.mxu0 %v2723
    %4398 = vmatpush1.bf16.msra.mxu0 %v2722
    %4399 = vmatprep.subr.bf16.mxu0 %v2731
    %4400 = vmatpush1.bf16.msra.mxu0 %v2730
    %4401 = vmatprep.subr.bf16.mxu0 %v2739
    %4402 = vmatpush1.bf16.msra.mxu0 %v2738
    %4403 = vmatprep.subr.bf16.mxu0 %v2747
    %4404 = vmatpush1.bf16.msra.mxu0 %v2746
    %4405 = vmatprep.subr.bf16.mxu0 %v2755
    %4406 = vmatpush1.bf16.msra.mxu0 %v2754
    %4407 = vmatprep.subr.bf16.mxu0 %v2763
    %4408 = vmatpush1.bf16.msra.mxu0 %v2762
    %4409 = vmatprep.subr.bf16.mxu0 %v2771
    %4410 = vmatpush1.bf16.msra.mxu0 %v2770
    %4411 = vmatprep.subr.bf16.mxu0 %v2779
    %4412 = vmatpush1.bf16.msra.mxu0 %v2778
    %4413 = vmatprep.subr.bf16.mxu0 %v2787
    %4414 = vmatpush1.bf16.msra.mxu0 %v2786
    %4415 = vmatprep.mubr.bf16.mxu0 %v4259
    %4416 = vmatmul.mubr.bf16.gmra.mrb[0].mxu0 %v4258
    %v4417 = vpop.f32.mrb[0].mxu0
    %v4418 = vadd.f32 0.0, %v4417
    %v4419 = vpop.f32.mrb[0].mxu0
    %v4420 = vadd.f32 0.0, %v4419
    %v4421 = vpop.f32.mrb[0].mxu0
    %v4422 = vpop.f32.mrb[0].mxu0
    %4423 = vdwg.mxu0
    %v4424 = vld [vmem:[#allocation2 + $0x20] sm:$0xc0]
    %v4425 = vld [vmem:[#allocation2 + $0x28] sm:$0xc0]
    %v4426 = vld [vmem:[#allocation2 + $0x30] sm:$0xc0]
    %v4427 = vld [vmem:[#allocation2 + $0x38] sm:$0xc0]
    %v4432 = vrot.slane %v4424, 6
    %v4433 = vrot.slane %v4425, 6
    %v4434 = vrot.slane %v4426, 6
    %v4435 = vrot.slane %v4427, 6
    %v4440 = vadd.f32 %v4295, %v4432
    %v4441 = vadd.f32 %v4297, %v4433
    %v4442 = vadd.f32 %v4336, %v4434
    %v4443 = vadd.f32 %v4338, %v4435
    %v4444 = vmul.f32 %v4440, 0.5
    %v4445 = vmul.f32 %v4441, 0.5
    %v4446 = vmul.f32 %v4442, 0.5
    %v4447 = vtanh.pop %v4444
    %v4448 = vtanh.pop %v4445
    %v4449 = vtanh.pop %v4446
    %v4450 = vmul.f32 %v4447, 0.5
    %v4451 = vmul.f32 %v4448, 0.5
    %v4452 = vmul.f32 %v4449, 0.5
    %v4453 = vadd.f32 %v4450, 0.5
    %v4454 = vadd.f32 %v4451, 0.5
    %v4455 = vadd.f32 %v4452, 0.5
    %v4456 = vtanh.pop %v4443
    %v4457 = vmul.f32 %v4454, %v4233
    %v4458 = vmul.f32 %v4453, %v4456
    %v4459 = vadd.f32 %v4457, %v4458
    %v4460 = vtanh.pop %v4459
    %v4461 = vmul.f32 %v4455, %v4460
    %v4462 = vadd.f32 %v4377, %v2107
    %v4463 = vadd.f32 %v4379, %v2111
    %v4464 = vadd.f32 %v4418, %v2115
    %v4465 = vadd.f32 %v4420, %v2119
    %v4466 = vmul.f32 %v4462, 0.5
    %v4467 = vmul.f32 %v4463, 0.5
    %v4468 = vmul.f32 %v4464, 0.5
    %v4469 = vtanh.pop %v4466
    %v4470 = vtanh.pop %v4467
    %v4471 = vtanh.pop %v4468
    %v4472 = vmul.f32 %v4469, 0.5
    %v4473 = vmul.f32 %v4470, 0.5
    %v4474 = vmul.f32 %v4471, 0.5
    %v4475 = vadd.f32 %v4472, 0.5
    %v4476 = vadd.f32 %v4473, 0.5
    %v4477 = vadd.f32 %v4474, 0.5
    %v4478 = vtanh.pop %v4465
    %v4479 = vmul.f32 %v4476, %v4255
    %v4480 = vmul.f32 %v4475, %v4478
    %v4481 = vadd.f32 %v4479, %v4480
    %v4482 = vtanh.pop %v4481
    %v4483 = vmul.f32 %v4477, %v4482
    %v4484 = vpack.c.bf16 %v4461, %v4461
    %v4485 = vpack.c.bf16 %v4483, %v4483
    %4486 = vmatprep.subr.bf16.mxu0 %v2661
    %4487 = vmatpush1.bf16.msra.mxu0 %v2660
    %4488 = vmatprep.subr.bf16.mxu0 %v2669
    %4489 = vmatpush1.bf16.msra.mxu0 %v2668
    %4490 = vmatprep.subr.bf16.mxu0 %v2677
    %4491 = vmatpush1.bf16.msra.mxu0 %v2676
    %4492 = vmatprep.subr.bf16.mxu0 %v2685
    %4493 = vmatpush1.bf16.msra.mxu0 %v2684
    %4494 = vmatprep.subr.bf16.mxu0 %v2693
    %4495 = vmatpush1.bf16.msra.mxu0 %v2692
    %4496 = vmatprep.subr.bf16.mxu0 %v2701
    %4497 = vmatpush1.bf16.msra.mxu0 %v2700
    %4498 = vmatprep.subr.bf16.mxu0 %v2709
    %4499 = vmatpush1.bf16.msra.mxu0 %v2708
    %4500 = vmatprep.subr.bf16.mxu0 %v2717
    %4501 = vmatpush1.bf16.msra.mxu0 %v2716
    %4502 = vmatprep.subr.bf16.mxu0 %v2725
    %4503 = vmatpush1.bf16.msra.mxu0 %v2724
    %4504 = vmatprep.subr.bf16.mxu0 %v2733
    %4505 = vmatpush1.bf16.msra.mxu0 %v2732
    %4506 = vmatprep.subr.bf16.mxu0 %v2741
    %4507 = vmatpush1.bf16.msra.mxu0 %v2740
    %4508 = vmatprep.subr.bf16.mxu0 %v2749
    %4509 = vmatpush1.bf16.msra.mxu0 %v2748
    %4510 = vmatprep.subr.bf16.mxu0 %v2757
    %4511 = vmatpush1.bf16.msra.mxu0 %v2756
    %4512 = vmatprep.subr.bf16.mxu0 %v2765
    %4513 = vmatpush1.bf16.msra.mxu0 %v2764
    %4514 = vmatprep.subr.bf16.mxu0 %v2773
    %4515 = vmatpush1.bf16.msra.mxu0 %v2772
    %4516 = vmatprep.subr.bf16.mxu0 %v2781
    %4517 = vmatpush1.bf16.msra.mxu0 %v2780
    %4518 = vmatprep.mubr.bf16.mxu0 %v4485
    %4519 = vmatmul.mubr.bf16.gmra.mrb[0].mxu0 %v4484
    %v4520 = vpop.f32.mrb[0].mxu0
    %v4521 = vadd.f32 0.0, %v4520
    %v4522 = vpop.f32.mrb[0].mxu0
    %v4523 = vadd.f32 0.0, %v4522
    %v4524 = vpop.f32.mrb[0].mxu0
    %v4525 = vpop.f32.mrb[0].mxu0
    %4526 = vdwg.mxu0
    %4527 = vmatprep.subr.bf16.mxu0 %v2663
    %4528 = vmatpush1.bf16.msra.mxu0 %v2662
    %4529 = vmatprep.subr.bf16.mxu0 %v2671
    %4530 = vmatpush1.bf16.msra.mxu0 %v2670
    %4531 = vmatprep.subr.bf16.mxu0 %v2679
    %4532 = vmatpush1.bf16.msra.mxu0 %v2678
    %4533 = vmatprep.subr.bf16.mxu0 %v2687
    %4534 = vmatpush1.bf16.msra.mxu0 %v2686
    %4535 = vmatprep.subr.bf16.mxu0 %v2695
    %4536 = vmatpush1.bf16.msra.mxu0 %v2694
    %4537 = vmatprep.subr.bf16.mxu0 %v2703
    %4538 = vmatpush1.bf16.msra.mxu0 %v2702
    %4539 = vmatprep.subr.bf16.mxu0 %v2711
    %4540 = vmatpush1.bf16.msra.mxu0 %v2710
    %4541 = vmatprep.subr.bf16.mxu0 %v2719
    %4542 = vmatpush1.bf16.msra.mxu0 %v2718
    %4543 = vmatprep.subr.bf16.mxu0 %v2727
    %4544 = vmatpush1.bf16.msra.mxu0 %v2726
    %4545 = vmatprep.subr.bf16.mxu0 %v2735
    %4546 = vmatpush1.bf16.msra.mxu0 %v2734
    %4547 = vmatprep.subr.bf16.mxu0 %v2743
    %4548 = vmatpush1.bf16.msra.mxu0 %v2742
    %4549 = vmatprep.subr.bf16.mxu0 %v2751
    %4550 = vmatpush1.bf16.msra.mxu0 %v2750
    %4551 = vmatprep.subr.bf16.mxu0 %v2759
    %4552 = vmatpush1.bf16.msra.mxu0 %v2758
    %4553 = vmatprep.subr.bf16.mxu0 %v2767
    %4554 = vmatpush1.bf16.msra.mxu0 %v2766
    %4555 = vmatprep.subr.bf16.mxu0 %v2775
    %4556 = vmatpush1.bf16.msra.mxu0 %v2774
    %4557 = vmatprep.subr.bf16.mxu0 %v2783
    %4558 = vmatpush1.bf16.msra.mxu0 %v2782
    %4559 = vmatprep.mubr.bf16.mxu0 %v4485
    %4560 = vmatmul.mubr.bf16.gmra.mrb[0].mxu0 %v4484
    %v4561 = vpop.f32.mrb[0].mxu0
    %v4562 = vadd.f32 0.0, %v4561
    %v4563 = vpop.f32.mrb[0].mxu0
    %v4564 = vadd.f32 0.0, %v4563
    %v4565 = vpop.f32.mrb[0].mxu0
    %v4566 = vpop.f32.mrb[0].mxu0
    %4567 = vdwg.mxu0
    %4568 = vmatprep.subr.bf16.mxu0 %v2665
    %4569 = vmatpush1.bf16.msra.mxu0 %v2664
    %4570 = vmatprep.subr.bf16.mxu0 %v2673
    %4571 = vmatpush1.bf16.msra.mxu0 %v2672
    %4572 = vmatprep.subr.bf16.mxu0 %v2681
    %4573 = vmatpush1.bf16.msra.mxu0 %v2680
    %4574 = vmatprep.subr.bf16.mxu0 %v2689
    %4575 = vmatpush1.bf16.msra.mxu0 %v2688
    %4576 = vmatprep.subr.bf16.mxu0 %v2697
    %4577 = vmatpush1.bf16.msra.mxu0 %v2696
    %4578 = vmatprep.subr.bf16.mxu0 %v2705
    %4579 = vmatpush1.bf16.msra.mxu0 %v2704
    %4580 = vmatprep.subr.bf16.mxu0 %v2713
    %4581 = vmatpush1.bf16.msra.mxu0 %v2712
    %4582 = vmatprep.subr.bf16.mxu0 %v2721
    %4583 = vmatpush1.bf16.msra.mxu0 %v2720
    %4584 = vmatprep.subr.bf16.mxu0 %v2729
    %4585 = vmatpush1.bf16.msra.mxu0 %v2728
    %4586 = vmatprep.subr.bf16.mxu0 %v2737
    %4587 = vmatpush1.bf16.msra.mxu0 %v2736
    %4588 = vmatprep.subr.bf16.mxu0 %v2745
    %4589 = vmatpush1.bf16.msra.mxu0 %v2744
    %4590 = vmatprep.subr.bf16.mxu0 %v2753
    %4591 = vmatpush1.bf16.msra.mxu0 %v2752
    %4592 = vmatprep.subr.bf16.mxu0 %v2761
    %4593 = vmatpush1.bf16.msra.mxu0 %v2760
    %4594 = vmatprep.subr.bf16.mxu0 %v2769
    %4595 = vmatpush1.bf16.msra.mxu0 %v2768
    %4596 = vmatprep.subr.bf16.mxu0 %v2777
    %4597 = vmatpush1.bf16.msra.mxu0 %v2776
    %4598 = vmatprep.subr.bf16.mxu0 %v2785
    %4599 = vmatpush1.bf16.msra.mxu0 %v2784
    %4600 = vmatprep.mubr.bf16.mxu0 %v4485
    %4601 = vmatmul.mubr.bf16.gmra.mrb[0].mxu0 %v4484
    %v4602 = vpop.f32.mrb[0].mxu0
    %v4603 = vadd.f32 0.0, %v4602
    %v4604 = vpop.f32.mrb[0].mxu0
    %v4605 = vadd.f32 0.0, %v4604
    %v4606 = vpop.f32.mrb[0].mxu0
    %v4607 = vpop.f32.mrb[0].mxu0
    %4608 = vdwg.mxu0
    %4609 = vmatprep.subr.bf16.mxu0 %v2667
    %4610 = vmatpush1.bf16.msra.mxu0 %v2666
    %4611 = vmatprep.subr.bf16.mxu0 %v2675
    %4612 = vmatpush1.bf16.msra.mxu0 %v2674
    %4613 = vmatprep.subr.bf16.mxu0 %v2683
    %4614 = vmatpush1.bf16.msra.mxu0 %v2682
    %4615 = vmatprep.subr.bf16.mxu0 %v2691
    %4616 = vmatpush1.bf16.msra.mxu0 %v2690
    %4617 = vmatprep.subr.bf16.mxu0 %v2699
    %4618 = vmatpush1.bf16.msra.mxu0 %v2698
    %4619 = vmatprep.subr.bf16.mxu0 %v2707
    %4620 = vmatpush1.bf16.msra.mxu0 %v2706
    %4621 = vmatprep.subr.bf16.mxu0 %v2715
    %4622 = vmatpush1.bf16.msra.mxu0 %v2714
    %4623 = vmatprep.subr.bf16.mxu0 %v2723
    %4624 = vmatpush1.bf16.msra.mxu0 %v2722
    %4625 = vmatprep.subr.bf16.mxu0 %v2731
    %4626 = vmatpush1.bf16.msra.mxu0 %v2730
    %4627 = vmatprep.subr.bf16.mxu0 %v2739
    %4628 = vmatpush1.bf16.msra.mxu0 %v2738
    %4629 = vmatprep.subr.bf16.mxu0 %v2747
    %4630 = vmatpush1.bf16.msra.mxu0 %v2746
    %4631 = vmatprep.subr.bf16.mxu0 %v2755
    %4632 = vmatpush1.bf16.msra.mxu0 %v2754
    %4633 = vmatprep.subr.bf16.mxu0 %v2763
    %4634 = vmatpush1.bf16.msra.mxu0 %v2762
    %4635 = vmatprep.subr.bf16.mxu0 %v2771
    %4636 = vmatpush1.bf16.msra.mxu0 %v2770
    %4637 = vmatprep.subr.bf16.mxu0 %v2779
    %4638 = vmatpush1.bf16.msra.mxu0 %v2778
    %4639 = vmatprep.subr.bf16.mxu0 %v2787
    %4640 = vmatpush1.bf16.msra.mxu0 %v2786
    %4641 = vmatprep.mubr.bf16.mxu0 %v4485
    %4642 = vmatmul.mubr.bf16.gmra.mrb[0].mxu0 %v4484
    %v4643 = vpop.f32.mrb[0].mxu0
    %v4644 = vadd.f32 0.0, %v4643
    %v4645 = vpop.f32.mrb[0].mxu0
    %v4646 = vadd.f32 0.0, %v4645
    %v4647 = vpop.f32.mrb[0].mxu0
    %v4648 = vpop.f32.mrb[0].mxu0
    %4649 = vdwg.mxu0
    %v4650 = vld [vmem:[#allocation2 + $0x40] sm:$0x3]
    %v4651 = vld [vmem:[#allocation2 + $0x48] sm:$0x3]
    %v4652 = vld [vmem:[#allocation2 + $0x50] sm:$0x3]
    %v4653 = vld [vmem:[#allocation2 + $0x58] sm:$0x3]
    %v4654 = vadd.f32 %v4521, %v4650
    %v4655 = vadd.f32 %v4523, %v4651
    %v4656 = vadd.f32 %v4562, %v4652
    %v4657 = vadd.f32 %v4564, %v4653
    %v4658 = vmul.f32 %v4654, 0.5
    %v4659 = vmul.f32 %v4655, 0.5
    %v4660 = vmul.f32 %v4656, 0.5
    %v4661 = vtanh.pop %v4658
    %v4662 = vtanh.pop %v4659
    %v4663 = vtanh.pop %v4660
    %v4664 = vmul.f32 %v4661, 0.5
    %v4665 = vmul.f32 %v4662, 0.5
    %v4666 = vmul.f32 %v4663, 0.5
    %v4667 = vadd.f32 %v4664, 0.5
    %v4668 = vadd.f32 %v4665, 0.5
    %v4669 = vadd.f32 %v4666, 0.5
    %v4670 = vtanh.pop %v4657
    %v4671 = vmul.f32 %v4668, %v4459
    %v4672 = vmul.f32 %v4667, %v4670
    %v4673 = vadd.f32 %v4671, %v4672
    %v4674 = vtanh.pop %v4673
    %v4675 = vmul.f32 %v4669, %v4674
    %v4676 = vadd.f32 %v4603, %v2107
    %v4677 = vadd.f32 %v4605, %v2111
    %v4678 = vadd.f32 %v4644, %v2115
    %v4679 = vadd.f32 %v4646, %v2119
    %v4680 = vmul.f32 %v4676, 0.5
    %v4681 = vmul.f32 %v4677, 0.5
    %v4682 = vmul.f32 %v4678, 0.5
    %v4683 = vtanh.pop %v4680
    %v4684 = vtanh.pop %v4681
    %v4685 = vtanh.pop %v4682
    %v4686 = vmul.f32 %v4683, 0.5
    %v4687 = vmul.f32 %v4684, 0.5
    %v4688 = vmul.f32 %v4685, 0.5
    %v4689 = vadd.f32 %v4686, 0.5
    %v4690 = vadd.f32 %v4687, 0.5
    %v4691 = vadd.f32 %v4688, 0.5
    %v4692 = vtanh.pop %v4679
    %v4693 = vmul.f32 %v4690, %v4481
    %v4694 = vmul.f32 %v4689, %v4692
    %v4695 = vadd.f32 %v4693, %v4694
    %v4696 = vtanh.pop %v4695
    %v4697 = vmul.f32 %v4691, %v4696
    %v4698 = vpack.c.bf16 %v4675, %v4675
    %v4699 = vpack.c.bf16 %v4697, %v4697
    %4700 = vmatprep.subr.bf16.mxu0 %v2661
    %4701 = vmatpush1.bf16.msra.mxu0 %v2660
    %4702 = vmatprep.subr.bf16.mxu0 %v2669
    %4703 = vmatpush1.bf16.msra.mxu0 %v2668
    %4704 = vmatprep.subr.bf16.mxu0 %v2677
    %4705 = vmatpush1.bf16.msra.mxu0 %v2676
    %4706 = vmatprep.subr.bf16.mxu0 %v2685
    %4707 = vmatpush1.bf16.msra.mxu0 %v2684
    %4708 = vmatprep.subr.bf16.mxu0 %v2693
    %4709 = vmatpush1.bf16.msra.mxu0 %v2692
    %4710 = vmatprep.subr.bf16.mxu0 %v2701
    %4711 = vmatpush1.bf16.msra.mxu0 %v2700
    %4712 = vmatprep.subr.bf16.mxu0 %v2709
    %4713 = vmatpush1.bf16.msra.mxu0 %v2708
    %4714 = vmatprep.subr.bf16.mxu0 %v2717
    %4715 = vmatpush1.bf16.msra.mxu0 %v2716
    %4716 = vmatprep.subr.bf16.mxu0 %v2725
    %4717 = vmatpush1.bf16.msra.mxu0 %v2724
    %4718 = vmatprep.subr.bf16.mxu0 %v2733
    %4719 = vmatpush1.bf16.msra.mxu0 %v2732
    %4720 = vmatprep.subr.bf16.mxu0 %v2741
    %4721 = vmatpush1.bf16.msra.mxu0 %v2740
    %4722 = vmatprep.subr.bf16.mxu0 %v2749
    %4723 = vmatpush1.bf16.msra.mxu0 %v2748
    %4724 = vmatprep.subr.bf16.mxu0 %v2757
    %4725 = vmatpush1.bf16.msra.mxu0 %v2756
    %4726 = vmatprep.subr.bf16.mxu0 %v2765
    %4727 = vmatpush1.bf16.msra.mxu0 %v2764
    %4728 = vmatprep.subr.bf16.mxu0 %v2773
    %4729 = vmatpush1.bf16.msra.mxu0 %v2772
    %4730 = vmatprep.subr.bf16.mxu0 %v2781
    %4731 = vmatpush1.bf16.msra.mxu0 %v2780
    %4732 = vmatprep.mubr.bf16.mxu0 %v4699
    %4733 = vmatmul.mubr.bf16.gmra.mrb[0].mxu0 %v4698
    %v4734 = vpop.f32.mrb[0].mxu0
    %v4735 = vadd.f32 0.0, %v4734
    %v4736 = vpop.f32.mrb[0].mxu0
    %v4737 = vadd.f32 0.0, %v4736
    %v4738 = vpop.f32.mrb[0].mxu0
    %v4739 = vpop.f32.mrb[0].mxu0
    %4740 = vdwg.mxu0
    %4741 = vmatprep.subr.bf16.mxu0 %v2663
    %4742 = vmatpush1.bf16.msra.mxu0 %v2662
    %4743 = vmatprep.subr.bf16.mxu0 %v2671
    %4744 = vmatpush1.bf16.msra.mxu0 %v2670
    %4745 = vmatprep.subr.bf16.mxu0 %v2679
    %4746 = vmatpush1.bf16.msra.mxu0 %v2678
    %4747 = vmatprep.subr.bf16.mxu0 %v2687
    %4748 = vmatpush1.bf16.msra.mxu0 %v2686
    %4749 = vmatprep.subr.bf16.mxu0 %v2695
    %4750 = vmatpush1.bf16.msra.mxu0 %v2694
    %4751 = vmatprep.subr.bf16.mxu0 %v2703
    %4752 = vmatpush1.bf16.msra.mxu0 %v2702
    %4753 = vmatprep.subr.bf16.mxu0 %v2711
    %4754 = vmatpush1.bf16.msra.mxu0 %v2710
    %4755 = vmatprep.subr.bf16.mxu0 %v2719
    %4756 = vmatpush1.bf16.msra.mxu0 %v2718
    %4757 = vmatprep.subr.bf16.mxu0 %v2727
    %4758 = vmatpush1.bf16.msra.mxu0 %v2726
    %4759 = vmatprep.subr.bf16.mxu0 %v2735
    %4760 = vmatpush1.bf16.msra.mxu0 %v2734
    %4761 = vmatprep.subr.bf16.mxu0 %v2743
    %4762 = vmatpush1.bf16.msra.mxu0 %v2742
    %4763 = vmatprep.subr.bf16.mxu0 %v2751
    %4764 = vmatpush1.bf16.msra.mxu0 %v2750
    %4765 = vmatprep.subr.bf16.mxu0 %v2759
    %4766 = vmatpush1.bf16.msra.mxu0 %v2758
    %4767 = vmatprep.subr.bf16.mxu0 %v2767
    %4768 = vmatpush1.bf16.msra.mxu0 %v2766
    %4769 = vmatprep.subr.bf16.mxu0 %v2775
    %4770 = vmatpush1.bf16.msra.mxu0 %v2774
    %4771 = vmatprep.subr.bf16.mxu0 %v2783
    %4772 = vmatpush1.bf16.msra.mxu0 %v2782
    %4773 = vmatprep.mubr.bf16.mxu0 %v4699
    %4774 = vmatmul.mubr.bf16.gmra.mrb[0].mxu0 %v4698
    %v4775 = vpop.f32.mrb[0].mxu0
    %v4776 = vadd.f32 0.0, %v4775
    %v4777 = vpop.f32.mrb[0].mxu0
    %v4778 = vadd.f32 0.0, %v4777
    %v4779 = vpop.f32.mrb[0].mxu0
    %v4780 = vpop.f32.mrb[0].mxu0
    %4781 = vdwg.mxu0
    %4782 = vmatprep.subr.bf16.mxu0 %v2665
    %4783 = vmatpush1.bf16.msra.mxu0 %v2664
    %4784 = vmatprep.subr.bf16.mxu0 %v2673
    %4785 = vmatpush1.bf16.msra.mxu0 %v2672
    %4786 = vmatprep.subr.bf16.mxu0 %v2681
    %4787 = vmatpush1.bf16.msra.mxu0 %v2680
    %4788 = vmatprep.subr.bf16.mxu0 %v2689
    %4789 = vmatpush1.bf16.msra.mxu0 %v2688
    %4790 = vmatprep.subr.bf16.mxu0 %v2697
    %4791 = vmatpush1.bf16.msra.mxu0 %v2696
    %4792 = vmatprep.subr.bf16.mxu0 %v2705
    %4793 = vmatpush1.bf16.msra.mxu0 %v2704
    %4794 = vmatprep.subr.bf16.mxu0 %v2713
    %4795 = vmatpush1.bf16.msra.mxu0 %v2712
    %4796 = vmatprep.subr.bf16.mxu0 %v2721
    %4797 = vmatpush1.bf16.msra.mxu0 %v2720
    %4798 = vmatprep.subr.bf16.mxu0 %v2729
    %4799 = vmatpush1.bf16.msra.mxu0 %v2728
    %4800 = vmatprep.subr.bf16.mxu0 %v2737
    %4801 = vmatpush1.bf16.msra.mxu0 %v2736
    %4802 = vmatprep.subr.bf16.mxu0 %v2745
    %4803 = vmatpush1.bf16.msra.mxu0 %v2744
    %4804 = vmatprep.subr.bf16.mxu0 %v2753
    %4805 = vmatpush1.bf16.msra.mxu0 %v2752
    %4806 = vmatprep.subr.bf16.mxu0 %v2761
    %4807 = vmatpush1.bf16.msra.mxu0 %v2760
    %4808 = vmatprep.subr.bf16.mxu0 %v2769
    %4809 = vmatpush1.bf16.msra.mxu0 %v2768
    %4810 = vmatprep.subr.bf16.mxu0 %v2777
    %4811 = vmatpush1.bf16.msra.mxu0 %v2776
    %4812 = vmatprep.subr.bf16.mxu0 %v2785
    %4813 = vmatpush1.bf16.msra.mxu0 %v2784
    %4814 = vmatprep.mubr.bf16.mxu0 %v4699
    %4815 = vmatmul.mubr.bf16.gmra.mrb[0].mxu0 %v4698
    %v4816 = vpop.f32.mrb[0].mxu0
    %v4817 = vadd.f32 0.0, %v4816
    %v4818 = vpop.f32.mrb[0].mxu0
    %v4819 = vadd.f32 0.0, %v4818
    %v4820 = vpop.f32.mrb[0].mxu0
    %v4821 = vpop.f32.mrb[0].mxu0
    %4822 = vdwg.mxu0
    %4823 = vmatprep.subr.bf16.mxu0 %v2667
    %4824 = vmatpush1.bf16.msra.mxu0 %v2666
    %4825 = vmatprep.subr.bf16.mxu0 %v2675
    %4826 = vmatpush1.bf16.msra.mxu0 %v2674
    %4827 = vmatprep.subr.bf16.mxu0 %v2683
    %4828 = vmatpush1.bf16.msra.mxu0 %v2682
    %4829 = vmatprep.subr.bf16.mxu0 %v2691
    %4830 = vmatpush1.bf16.msra.mxu0 %v2690
    %4831 = vmatprep.subr.bf16.mxu0 %v2699
    %4832 = vmatpush1.bf16.msra.mxu0 %v2698
    %4833 = vmatprep.subr.bf16.mxu0 %v2707
    %4834 = vmatpush1.bf16.msra.mxu0 %v2706
    %4835 = vmatprep.subr.bf16.mxu0 %v2715
    %4836 = vmatpush1.bf16.msra.mxu0 %v2714
    %4837 = vmatprep.subr.bf16.mxu0 %v2723
    %4838 = vmatpush1.bf16.msra.mxu0 %v2722
    %4839 = vmatprep.subr.bf16.mxu0 %v2731
    %4840 = vmatpush1.bf16.msra.mxu0 %v2730
    %4841 = vmatprep.subr.bf16.mxu0 %v2739
    %4842 = vmatpush1.bf16.msra.mxu0 %v2738
    %4843 = vmatprep.subr.bf16.mxu0 %v2747
    %4844 = vmatpush1.bf16.msra.mxu0 %v2746
    %4845 = vmatprep.subr.bf16.mxu0 %v2755
    %4846 = vmatpush1.bf16.msra.mxu0 %v2754
    %4847 = vmatprep.subr.bf16.mxu0 %v2763
    %4848 = vmatpush1.bf16.msra.mxu0 %v2762
    %4849 = vmatprep.subr.bf16.mxu0 %v2771
    %4850 = vmatpush1.bf16.msra.mxu0 %v2770
    %4851 = vmatprep.subr.bf16.mxu0 %v2779
    %4852 = vmatpush1.bf16.msra.mxu0 %v2778
    %4853 = vmatprep.subr.bf16.mxu0 %v2787
    %4854 = vmatpush1.bf16.msra.mxu0 %v2786
    %4855 = vmatprep.mubr.bf16.mxu0 %v4699
    %4856 = vmatmul.mubr.bf16.gmra.mrb[0].mxu0 %v4698
    %v4857 = vpop.f32.mrb[0].mxu0
    %v4858 = vadd.f32 0.0, %v4857
    %v4859 = vpop.f32.mrb[0].mxu0
    %v4860 = vadd.f32 0.0, %v4859
    %v4861 = vpop.f32.mrb[0].mxu0
    %v4862 = vpop.f32.mrb[0].mxu0
    %4863 = vdwg.mxu0
    %v4864 = vld [vmem:[#allocation2 + $0x40] sm:$0xc]
    %v4865 = vld [vmem:[#allocation2 + $0x48] sm:$0xc]
    %v4866 = vld [vmem:[#allocation2 + $0x50] sm:$0xc]
    %v4867 = vld [vmem:[#allocation2 + $0x58] sm:$0xc]
    %v4872 = vrot.slane %v4864, 2
    %v4873 = vrot.slane %v4865, 2
    %v4874 = vrot.slane %v4866, 2
    %v4875 = vrot.slane %v4867, 2
    %v4880 = vadd.f32 %v4735, %v4872
    %v4881 = vadd.f32 %v4737, %v4873
    %v4882 = vadd.f32 %v4776, %v4874
    %v4883 = vadd.f32 %v4778, %v4875
    %v4884 = vmul.f32 %v4880, 0.5
    %v4885 = vmul.f32 %v4881, 0.5
    %v4886 = vmul.f32 %v4882, 0.5
    %v4887 = vtanh.pop %v4884
    %v4888 = vtanh.pop %v4885
    %v4889 = vtanh.pop %v4886
    %v4890 = vmul.f32 %v4887, 0.5
    %v4891 = vmul.f32 %v4888, 0.5
    %v4892 = vmul.f32 %v4889, 0.5
    %v4893 = vadd.f32 %v4890, 0.5
    %v4894 = vadd.f32 %v4891, 0.5
    %v4895 = vadd.f32 %v4892, 0.5
    %v4896 = vtanh.pop %v4883
    %v4897 = vmul.f32 %v4894, %v4673
    %v4898 = vmul.f32 %v4893, %v4896
    %v4899 = vadd.f32 %v4897, %v4898
    %v4900 = vtanh.pop %v4899
    %v4901 = vmul.f32 %v4895, %v4900
    %v4902 = vadd.f32 %v4817, %v2107
    %v4903 = vadd.f32 %v4819, %v2111
    %v4904 = vadd.f32 %v4858, %v2115
    %v4905 = vadd.f32 %v4860, %v2119
    %v4906 = vmul.f32 %v4902, 0.5
    %v4907 = vmul.f32 %v4903, 0.5
    %v4908 = vmul.f32 %v4904, 0.5
    %v4909 = vtanh.pop %v4906
    %v4910 = vtanh.pop %v4907
    %v4911 = vtanh.pop %v4908
    %v4912 = vmul.f32 %v4909, 0.5
    %v4913 = vmul.f32 %v4910, 0.5
    %v4914 = vmul.f32 %v4911, 0.5
    %v4915 = vadd.f32 %v4912, 0.5
    %v4916 = vadd.f32 %v4913, 0.5
    %v4917 = vadd.f32 %v4914, 0.5
    %v4918 = vtanh.pop %v4905
    %v4919 = vmul.f32 %v4916, %v4695
    %v4920 = vmul.f32 %v4915, %v4918
    %v4921 = vadd.f32 %v4919, %v4920
    %v4922 = vtanh.pop %v4921
    %v4923 = vmul.f32 %v4917, %v4922
    %v4924 = vpack.c.bf16 %v4901, %v4901
    %v4925 = vpack.c.bf16 %v4923, %v4923
    %4926 = vmatprep.subr.bf16.mxu0 %v2661
    %4927 = vmatpush1.bf16.msra.mxu0 %v2660
    %4928 = vmatprep.subr.bf16.mxu0 %v2669
    %4929 = vmatpush1.bf16.msra.mxu0 %v2668
    %4930 = vmatprep.subr.bf16.mxu0 %v2677
    %4931 = vmatpush1.bf16.msra.mxu0 %v2676
    %4932 = vmatprep.subr.bf16.mxu0 %v2685
    %4933 = vmatpush1.bf16.msra.mxu0 %v2684
    %4934 = vmatprep.subr.bf16.mxu0 %v2693
    %4935 = vmatpush1.bf16.msra.mxu0 %v2692
    %4936 = vmatprep.subr.bf16.mxu0 %v2701
    %4937 = vmatpush1.bf16.msra.mxu0 %v2700
    %4938 = vmatprep.subr.bf16.mxu0 %v2709
    %4939 = vmatpush1.bf16.msra.mxu0 %v2708
    %4940 = vmatprep.subr.bf16.mxu0 %v2717
    %4941 = vmatpush1.bf16.msra.mxu0 %v2716
    %4942 = vmatprep.subr.bf16.mxu0 %v2725
    %4943 = vmatpush1.bf16.msra.mxu0 %v2724
    %4944 = vmatprep.subr.bf16.mxu0 %v2733
    %4945 = vmatpush1.bf16.msra.mxu0 %v2732
    %4946 = vmatprep.subr.bf16.mxu0 %v2741
    %4947 = vmatpush1.bf16.msra.mxu0 %v2740
    %4948 = vmatprep.subr.bf16.mxu0 %v2749
    %4949 = vmatpush1.bf16.msra.mxu0 %v2748
    %4950 = vmatprep.subr.bf16.mxu0 %v2757
    %4951 = vmatpush1.bf16.msra.mxu0 %v2756
    %4952 = vmatprep.subr.bf16.mxu0 %v2765
    %4953 = vmatpush1.bf16.msra.mxu0 %v2764
    %4954 = vmatprep.subr.bf16.mxu0 %v2773
    %4955 = vmatpush1.bf16.msra.mxu0 %v2772
    %4956 = vmatprep.subr.bf16.mxu0 %v2781
    %4957 = vmatpush1.bf16.msra.mxu0 %v2780
    %4958 = vmatprep.mubr.bf16.mxu0 %v4925
    %4959 = vmatmul.mubr.bf16.gmra.mrb[0].mxu0 %v4924
    %v4960 = vpop.f32.mrb[0].mxu0
    %v4961 = vadd.f32 0.0, %v4960
    %v4962 = vpop.f32.mrb[0].mxu0
    %v4963 = vadd.f32 0.0, %v4962
    %v4964 = vpop.f32.mrb[0].mxu0
    %v4965 = vpop.f32.mrb[0].mxu0
    %4966 = vdwg.mxu0
    %4967 = vmatprep.subr.bf16.mxu0 %v2663
    %4968 = vmatpush1.bf16.msra.mxu0 %v2662
    %4969 = vmatprep.subr.bf16.mxu0 %v2671
    %4970 = vmatpush1.bf16.msra.mxu0 %v2670
    %4971 = vmatprep.subr.bf16.mxu0 %v2679
    %4972 = vmatpush1.bf16.msra.mxu0 %v2678
    %4973 = vmatprep.subr.bf16.mxu0 %v2687
    %4974 = vmatpush1.bf16.msra.mxu0 %v2686
    %4975 = vmatprep.subr.bf16.mxu0 %v2695
    %4976 = vmatpush1.bf16.msra.mxu0 %v2694
    %4977 = vmatprep.subr.bf16.mxu0 %v2703
    %4978 = vmatpush1.bf16.msra.mxu0 %v2702
    %4979 = vmatprep.subr.bf16.mxu0 %v2711
    %4980 = vmatpush1.bf16.msra.mxu0 %v2710
    %4981 = vmatprep.subr.bf16.mxu0 %v2719
    %4982 = vmatpush1.bf16.msra.mxu0 %v2718
    %4983 = vmatprep.subr.bf16.mxu0 %v2727
    %4984 = vmatpush1.bf16.msra.mxu0 %v2726
    %4985 = vmatprep.subr.bf16.mxu0 %v2735
    %4986 = vmatpush1.bf16.msra.mxu0 %v2734
    %4987 = vmatprep.subr.bf16.mxu0 %v2743
    %4988 = vmatpush1.bf16.msra.mxu0 %v2742
    %4989 = vmatprep.subr.bf16.mxu0 %v2751
    %4990 = vmatpush1.bf16.msra.mxu0 %v2750
    %4991 = vmatprep.subr.bf16.mxu0 %v2759
    %4992 = vmatpush1.bf16.msra.mxu0 %v2758
    %4993 = vmatprep.subr.bf16.mxu0 %v2767
    %4994 = vmatpush1.bf16.msra.mxu0 %v2766
    %4995 = vmatprep.subr.bf16.mxu0 %v2775
    %4996 = vmatpush1.bf16.msra.mxu0 %v2774
    %4997 = vmatprep.subr.bf16.mxu0 %v2783
    %4998 = vmatpush1.bf16.msra.mxu0 %v2782
    %4999 = vmatprep.mubr.bf16.mxu0 %v4925
    %5000 = vmatmul.mubr.bf16.gmra.mrb[0].mxu0 %v4924
    %v5001 = vpop.f32.mrb[0].mxu0
    %v5002 = vadd.f32 0.0, %v5001
    %v5003 = vpop.f32.mrb[0].mxu0
    %v5004 = vadd.f32 0.0, %v5003
    %v5005 = vpop.f32.mrb[0].mxu0
    %v5006 = vpop.f32.mrb[0].mxu0
    %5007 = vdwg.mxu0
    %5008 = vmatprep.subr.bf16.mxu0 %v2665
    %5009 = vmatpush1.bf16.msra.mxu0 %v2664
    %5010 = vmatprep.subr.bf16.mxu0 %v2673
    %5011 = vmatpush1.bf16.msra.mxu0 %v2672
    %5012 = vmatprep.subr.bf16.mxu0 %v2681
    %5013 = vmatpush1.bf16.msra.mxu0 %v2680
    %5014 = vmatprep.subr.bf16.mxu0 %v2689
    %5015 = vmatpush1.bf16.msra.mxu0 %v2688
    %5016 = vmatprep.subr.bf16.mxu0 %v2697
    %5017 = vmatpush1.bf16.msra.mxu0 %v2696
    %5018 = vmatprep.subr.bf16.mxu0 %v2705
    %5019 = vmatpush1.bf16.msra.mxu0 %v2704
    %5020 = vmatprep.subr.bf16.mxu0 %v2713
    %5021 = vmatpush1.bf16.msra.mxu0 %v2712
    %5022 = vmatprep.subr.bf16.mxu0 %v2721
    %5023 = vmatpush1.bf16.msra.mxu0 %v2720
    %5024 = vmatprep.subr.bf16.mxu0 %v2729
    %5025 = vmatpush1.bf16.msra.mxu0 %v2728
    %5026 = vmatprep.subr.bf16.mxu0 %v2737
    %5027 = vmatpush1.bf16.msra.mxu0 %v2736
    %5028 = vmatprep.subr.bf16.mxu0 %v2745
    %5029 = vmatpush1.bf16.msra.mxu0 %v2744
    %5030 = vmatprep.subr.bf16.mxu0 %v2753
    %5031 = vmatpush1.bf16.msra.mxu0 %v2752
    %5032 = vmatprep.subr.bf16.mxu0 %v2761
    %5033 = vmatpush1.bf16.msra.mxu0 %v2760
    %5034 = vmatprep.subr.bf16.mxu0 %v2769
    %5035 = vmatpush1.bf16.msra.mxu0 %v2768
    %5036 = vmatprep.subr.bf16.mxu0 %v2777
    %5037 = vmatpush1.bf16.msra.mxu0 %v2776
    %5038 = vmatprep.subr.bf16.mxu0 %v2785
    %5039 = vmatpush1.bf16.msra.mxu0 %v2784
    %5040 = vmatprep.mubr.bf16.mxu0 %v4925
    %5041 = vmatmul.mubr.bf16.gmra.mrb[0].mxu0 %v4924
    %v5042 = vpop.f32.mrb[0].mxu0
    %v5043 = vadd.f32 0.0, %v5042
    %v5044 = vpop.f32.mrb[0].mxu0
    %v5045 = vadd.f32 0.0, %v5044
    %v5046 = vpop.f32.mrb[0].mxu0
    %v5047 = vpop.f32.mrb[0].mxu0
    %5048 = vdwg.mxu0
    %5049 = vmatprep.subr.bf16.mxu0 %v2667
    %5050 = vmatpush1.bf16.msra.mxu0 %v2666
    %5051 = vmatprep.subr.bf16.mxu0 %v2675
    %5052 = vmatpush1.bf16.msra.mxu0 %v2674
    %5053 = vmatprep.subr.bf16.mxu0 %v2683
    %5054 = vmatpush1.bf16.msra.mxu0 %v2682
    %5055 = vmatprep.subr.bf16.mxu0 %v2691
    %5056 = vmatpush1.bf16.msra.mxu0 %v2690
    %5057 = vmatprep.subr.bf16.mxu0 %v2699
    %5058 = vmatpush1.bf16.msra.mxu0 %v2698
    %5059 = vmatprep.subr.bf16.mxu0 %v2707
    %5060 = vmatpush1.bf16.msra.mxu0 %v2706
    %5061 = vmatprep.subr.bf16.mxu0 %v2715
    %5062 = vmatpush1.bf16.msra.mxu0 %v2714
    %5063 = vmatprep.subr.bf16.mxu0 %v2723
    %5064 = vmatpush1.bf16.msra.mxu0 %v2722
    %5065 = vmatprep.subr.bf16.mxu0 %v2731
    %5066 = vmatpush1.bf16.msra.mxu0 %v2730
    %5067 = vmatprep.subr.bf16.mxu0 %v2739
    %5068 = vmatpush1.bf16.msra.mxu0 %v2738
    %5069 = vmatprep.subr.bf16.mxu0 %v2747
    %5070 = vmatpush1.bf16.msra.mxu0 %v2746
    %5071 = vmatprep.subr.bf16.mxu0 %v2755
    %5072 = vmatpush1.bf16.msra.mxu0 %v2754
    %5073 = vmatprep.subr.bf16.mxu0 %v2763
    %5074 = vmatpush1.bf16.msra.mxu0 %v2762
    %5075 = vmatprep.subr.bf16.mxu0 %v2771
    %5076 = vmatpush1.bf16.msra.mxu0 %v2770
    %5077 = vmatprep.subr.bf16.mxu0 %v2779
    %5078 = vmatpush1.bf16.msra.mxu0 %v2778
    %5079 = vmatprep.subr.bf16.mxu0 %v2787
    %5080 = vmatpush1.bf16.msra.mxu0 %v2786
    %5081 = vmatprep.mubr.bf16.mxu0 %v4925
    %5082 = vmatmul.mubr.bf16.gmra.mrb[0].mxu0 %v4924
    %v5083 = vpop.f32.mrb[0].mxu0
    %v5084 = vadd.f32 0.0, %v5083
    %v5085 = vpop.f32.mrb[0].mxu0
    %v5086 = vadd.f32 0.0, %v5085
    %v5087 = vpop.f32.mrb[0].mxu0
    %v5088 = vpop.f32.mrb[0].mxu0
    %5089 = vdwg.mxu0
    %v5090 = vld [vmem:[#allocation2 + $0x40] sm:$0x30]
    %v5091 = vld [vmem:[#allocation2 + $0x48] sm:$0x30]
    %v5092 = vld [vmem:[#allocation2 + $0x50] sm:$0x30]
    %v5093 = vld [vmem:[#allocation2 + $0x58] sm:$0x30]
    %v5098 = vrot.slane %v5090, 4
    %v5099 = vrot.slane %v5091, 4
    %v5100 = vrot.slane %v5092, 4
    %v5101 = vrot.slane %v5093, 4
    %v5106 = vadd.f32 %v4961, %v5098
    %v5107 = vadd.f32 %v4963, %v5099
    %v5108 = vadd.f32 %v5002, %v5100
    %v5109 = vadd.f32 %v5004, %v5101
    %v5110 = vmul.f32 %v5106, 0.5
    %v5111 = vmul.f32 %v5107, 0.5
    %v5112 = vmul.f32 %v5108, 0.5
    %v5113 = vtanh.pop %v5110
    %v5114 = vtanh.pop %v5111
    %v5115 = vtanh.pop %v5112
    %v5116 = vmul.f32 %v5113, 0.5
    %v5117 = vmul.f32 %v5114, 0.5
    %v5118 = vmul.f32 %v5115, 0.5
    %v5119 = vadd.f32 %v5116, 0.5
    %v5120 = vadd.f32 %v5117, 0.5
    %v5121 = vadd.f32 %v5118, 0.5
    %v5122 = vtanh.pop %v5109
    %v5123 = vmul.f32 %v5120, %v4899
    %v5124 = vmul.f32 %v5119, %v5122
    %v5125 = vadd.f32 %v5123, %v5124
    %v5126 = vtanh.pop %v5125
    %v5127 = vmul.f32 %v5121, %v5126
    %v5128 = vadd.f32 %v5043, %v2107
    %v5129 = vadd.f32 %v5045, %v2111
    %v5130 = vadd.f32 %v5084, %v2115
    %v5131 = vadd.f32 %v5086, %v2119
    %v5132 = vmul.f32 %v5128, 0.5
    %v5133 = vmul.f32 %v5129, 0.5
    %v5134 = vmul.f32 %v5130, 0.5
    %v5135 = vtanh.pop %v5132
    %v5136 = vtanh.pop %v5133
    %v5137 = vtanh.pop %v5134
    %v5138 = vmul.f32 %v5135, 0.5
    %v5139 = vmul.f32 %v5136, 0.5
    %v5140 = vmul.f32 %v5137, 0.5
    %v5141 = vadd.f32 %v5138, 0.5
    %v5142 = vadd.f32 %v5139, 0.5
    %v5143 = vadd.f32 %v5140, 0.5
    %v5144 = vtanh.pop %v5131
    %v5145 = vmul.f32 %v5142, %v4921
    %v5146 = vmul.f32 %v5141, %v5144
    %v5147 = vadd.f32 %v5145, %v5146
    %v5148 = vtanh.pop %v5147
    %v5149 = vmul.f32 %v5143, %v5148
    %v5150 = vpack.c.bf16 %v5127, %v5127
    %v5151 = vpack.c.bf16 %v5149, %v5149
    %5152 = vmatprep.subr.bf16.mxu0 %v2661
    %5153 = vmatpush1.bf16.msra.mxu0 %v2660
    %5154 = vmatprep.subr.bf16.mxu0 %v2669
    %5155 = vmatpush1.bf16.msra.mxu0 %v2668
    %5156 = vmatprep.subr.bf16.mxu0 %v2677
    %5157 = vmatpush1.bf16.msra.mxu0 %v2676
    %5158 = vmatprep.subr.bf16.mxu0 %v2685
    %5159 = vmatpush1.bf16.msra.mxu0 %v2684
    %5160 = vmatprep.subr.bf16.mxu0 %v2693
    %5161 = vmatpush1.bf16.msra.mxu0 %v2692
    %5162 = vmatprep.subr.bf16.mxu0 %v2701
    %5163 = vmatpush1.bf16.msra.mxu0 %v2700
    %5164 = vmatprep.subr.bf16.mxu0 %v2709
    %5165 = vmatpush1.bf16.msra.mxu0 %v2708
    %5166 = vmatprep.subr.bf16.mxu0 %v2717
    %5167 = vmatpush1.bf16.msra.mxu0 %v2716
    %5168 = vmatprep.subr.bf16.mxu0 %v2725
    %5169 = vmatpush1.bf16.msra.mxu0 %v2724
    %5170 = vmatprep.subr.bf16.mxu0 %v2733
    %5171 = vmatpush1.bf16.msra.mxu0 %v2732
    %5172 = vmatprep.subr.bf16.mxu0 %v2741
    %5173 = vmatpush1.bf16.msra.mxu0 %v2740
    %5174 = vmatprep.subr.bf16.mxu0 %v2749
    %5175 = vmatpush1.bf16.msra.mxu0 %v2748
    %5176 = vmatprep.subr.bf16.mxu0 %v2757
    %5177 = vmatpush1.bf16.msra.mxu0 %v2756
    %5178 = vmatprep.subr.bf16.mxu0 %v2765
    %5179 = vmatpush1.bf16.msra.mxu0 %v2764
    %5180 = vmatprep.subr.bf16.mxu0 %v2773
    %5181 = vmatpush1.bf16.msra.mxu0 %v2772
    %5182 = vmatprep.subr.bf16.mxu0 %v2781
    %5183 = vmatpush1.bf16.msra.mxu0 %v2780
    %5184 = vmatprep.mubr.bf16.mxu0 %v5151
    %5185 = vmatmul.mubr.bf16.gmra.mrb[0].mxu0 %v5150
    %v5186 = vpop.f32.mrb[0].mxu0
    %v5187 = vadd.f32 0.0, %v5186
    %v5188 = vpop.f32.mrb[0].mxu0
    %v5189 = vadd.f32 0.0, %v5188
    %v5190 = vpop.f32.mrb[0].mxu0
    %v5191 = vpop.f32.mrb[0].mxu0
    %5192 = vdwg.mxu0
    %5193 = vmatprep.subr.bf16.mxu0 %v2663
    %5194 = vmatpush1.bf16.msra.mxu0 %v2662
    %5195 = vmatprep.subr.bf16.mxu0 %v2671
    %5196 = vmatpush1.bf16.msra.mxu0 %v2670
    %5197 = vmatprep.subr.bf16.mxu0 %v2679
    %5198 = vmatpush1.bf16.msra.mxu0 %v2678
    %5199 = vmatprep.subr.bf16.mxu0 %v2687
    %5200 = vmatpush1.bf16.msra.mxu0 %v2686
    %5201 = vmatprep.subr.bf16.mxu0 %v2695
    %5202 = vmatpush1.bf16.msra.mxu0 %v2694
    %5203 = vmatprep.subr.bf16.mxu0 %v2703
    %5204 = vmatpush1.bf16.msra.mxu0 %v2702
    %5205 = vmatprep.subr.bf16.mxu0 %v2711
    %5206 = vmatpush1.bf16.msra.mxu0 %v2710
    %5207 = vmatprep.subr.bf16.mxu0 %v2719
    %5208 = vmatpush1.bf16.msra.mxu0 %v2718
    %5209 = vmatprep.subr.bf16.mxu0 %v2727
    %5210 = vmatpush1.bf16.msra.mxu0 %v2726
    %5211 = vmatprep.subr.bf16.mxu0 %v2735
    %5212 = vmatpush1.bf16.msra.mxu0 %v2734
    %5213 = vmatprep.subr.bf16.mxu0 %v2743
    %5214 = vmatpush1.bf16.msra.mxu0 %v2742
    %5215 = vmatprep.subr.bf16.mxu0 %v2751
    %5216 = vmatpush1.bf16.msra.mxu0 %v2750
    %5217 = vmatprep.subr.bf16.mxu0 %v2759
    %5218 = vmatpush1.bf16.msra.mxu0 %v2758
    %5219 = vmatprep.subr.bf16.mxu0 %v2767
    %5220 = vmatpush1.bf16.msra.mxu0 %v2766
    %5221 = vmatprep.subr.bf16.mxu0 %v2775
    %5222 = vmatpush1.bf16.msra.mxu0 %v2774
    %5223 = vmatprep.subr.bf16.mxu0 %v2783
    %5224 = vmatpush1.bf16.msra.mxu0 %v2782
    %5225 = vmatprep.mubr.bf16.mxu0 %v5151
    %5226 = vmatmul.mubr.bf16.gmra.mrb[0].mxu0 %v5150
    %v5227 = vpop.f32.mrb[0].mxu0
    %v5228 = vadd.f32 0.0, %v5227
    %v5229 = vpop.f32.mrb[0].mxu0
    %v5230 = vadd.f32 0.0, %v5229
    %v5231 = vpop.f32.mrb[0].mxu0
    %v5232 = vpop.f32.mrb[0].mxu0
    %5233 = vdwg.mxu0
    %5234 = vmatprep.subr.bf16.mxu0 %v2665
    %5235 = vmatpush1.bf16.msra.mxu0 %v2664
    %5236 = vmatprep.subr.bf16.mxu0 %v2673
    %5237 = vmatpush1.bf16.msra.mxu0 %v2672
    %5238 = vmatprep.subr.bf16.mxu0 %v2681
    %5239 = vmatpush1.bf16.msra.mxu0 %v2680
    %5240 = vmatprep.subr.bf16.mxu0 %v2689
    %5241 = vmatpush1.bf16.msra.mxu0 %v2688
    %5242 = vmatprep.subr.bf16.mxu0 %v2697
    %5243 = vmatpush1.bf16.msra.mxu0 %v2696
    %5244 = vmatprep.subr.bf16.mxu0 %v2705
    %5245 = vmatpush1.bf16.msra.mxu0 %v2704
    %5246 = vmatprep.subr.bf16.mxu0 %v2713
    %5247 = vmatpush1.bf16.msra.mxu0 %v2712
    %5248 = vmatprep.subr.bf16.mxu0 %v2721
    %5249 = vmatpush1.bf16.msra.mxu0 %v2720
    %5250 = vmatprep.subr.bf16.mxu0 %v2729
    %5251 = vmatpush1.bf16.msra.mxu0 %v2728
    %5252 = vmatprep.subr.bf16.mxu0 %v2737
    %5253 = vmatpush1.bf16.msra.mxu0 %v2736
    %5254 = vmatprep.subr.bf16.mxu0 %v2745
    %5255 = vmatpush1.bf16.msra.mxu0 %v2744
    %5256 = vmatprep.subr.bf16.mxu0 %v2753
    %5257 = vmatpush1.bf16.msra.mxu0 %v2752
    %5258 = vmatprep.subr.bf16.mxu0 %v2761
    %5259 = vmatpush1.bf16.msra.mxu0 %v2760
    %5260 = vmatprep.subr.bf16.mxu0 %v2769
    %5261 = vmatpush1.bf16.msra.mxu0 %v2768
    %5262 = vmatprep.subr.bf16.mxu0 %v2777
    %5263 = vmatpush1.bf16.msra.mxu0 %v2776
    %5264 = vmatprep.subr.bf16.mxu0 %v2785
    %5265 = vmatpush1.bf16.msra.mxu0 %v2784
    %5266 = vmatprep.mubr.bf16.mxu0 %v5151
    %5267 = vmatmul.mubr.bf16.gmra.mrb[0].mxu0 %v5150
    %v5268 = vpop.f32.mrb[0].mxu0
    %v5269 = vadd.f32 0.0, %v5268
    %v5270 = vpop.f32.mrb[0].mxu0
    %v5271 = vadd.f32 0.0, %v5270
    %v5272 = vpop.f32.mrb[0].mxu0
    %v5273 = vpop.f32.mrb[0].mxu0
    %5274 = vdwg.mxu0
    %5275 = vmatprep.subr.bf16.mxu0 %v2667
    %5276 = vmatpush1.bf16.msra.mxu0 %v2666
    %5277 = vmatprep.subr.bf16.mxu0 %v2675
    %5278 = vmatpush1.bf16.msra.mxu0 %v2674
    %5279 = vmatprep.subr.bf16.mxu0 %v2683
    %5280 = vmatpush1.bf16.msra.mxu0 %v2682
    %5281 = vmatprep.subr.bf16.mxu0 %v2691
    %5282 = vmatpush1.bf16.msra.mxu0 %v2690
    %5283 = vmatprep.subr.bf16.mxu0 %v2699
    %5284 = vmatpush1.bf16.msra.mxu0 %v2698
    %5285 = vmatprep.subr.bf16.mxu0 %v2707
    %5286 = vmatpush1.bf16.msra.mxu0 %v2706
    %5287 = vmatprep.subr.bf16.mxu0 %v2715
    %5288 = vmatpush1.bf16.msra.mxu0 %v2714
    %5289 = vmatprep.subr.bf16.mxu0 %v2723
    %5290 = vmatpush1.bf16.msra.mxu0 %v2722
    %5291 = vmatprep.subr.bf16.mxu0 %v2731
    %5292 = vmatpush1.bf16.msra.mxu0 %v2730
    %5293 = vmatprep.subr.bf16.mxu0 %v2739
    %5294 = vmatpush1.bf16.msra.mxu0 %v2738
    %5295 = vmatprep.subr.bf16.mxu0 %v2747
    %5296 = vmatpush1.bf16.msra.mxu0 %v2746
    %5297 = vmatprep.subr.bf16.mxu0 %v2755
    %5298 = vmatpush1.bf16.msra.mxu0 %v2754
    %5299 = vmatprep.subr.bf16.mxu0 %v2763
    %5300 = vmatpush1.bf16.msra.mxu0 %v2762
    %5301 = vmatprep.subr.bf16.mxu0 %v2771
    %5302 = vmatpush1.bf16.msra.mxu0 %v2770
    %5303 = vmatprep.subr.bf16.mxu0 %v2779
    %5304 = vmatpush1.bf16.msra.mxu0 %v2778
    %5305 = vmatprep.subr.bf16.mxu0 %v2787
    %5306 = vmatpush1.bf16.msra.mxu0 %v2786
    %5307 = vmatprep.mubr.bf16.mxu0 %v5151
    %5308 = vmatmul.mubr.bf16.gmra.mrb[0].mxu0 %v5150
    %v5309 = vpop.f32.mrb[0].mxu0
    %v5310 = vadd.f32 0.0, %v5309
    %v5311 = vpop.f32.mrb[0].mxu0
    %v5312 = vadd.f32 0.0, %v5311
    %v5313 = vpop.f32.mrb[0].mxu0
    %v5314 = vpop.f32.mrb[0].mxu0
    %5315 = vdwg.mxu0
    %v5316 = vld [vmem:[#allocation2 + $0x40] sm:$0xc0]
    %v5317 = vld [vmem:[#allocation2 + $0x48] sm:$0xc0]
    %v5318 = vld [vmem:[#allocation2 + $0x50] sm:$0xc0]
    %v5319 = vld [vmem:[#allocation2 + $0x58] sm:$0xc0]
    %v5324 = vrot.slane %v5316, 6
    %v5325 = vrot.slane %v5317, 6
    %v5326 = vrot.slane %v5318, 6
    %v5327 = vrot.slane %v5319, 6
    %v5332 = vadd.f32 %v5187, %v5324
    %v5333 = vadd.f32 %v5189, %v5325
    %v5334 = vadd.f32 %v5228, %v5326
    %v5335 = vadd.f32 %v5230, %v5327
    %v5336 = vmul.f32 %v5332, 0.5
    %v5337 = vmul.f32 %v5333, 0.5
    %v5338 = vmul.f32 %v5334, 0.5
    %v5339 = vtanh.pop %v5336
    %v5340 = vtanh.pop %v5337
    %v5341 = vtanh.pop %v5338
    %v5342 = vmul.f32 %v5339, 0.5
    %v5343 = vmul.f32 %v5340, 0.5
    %v5344 = vmul.f32 %v5341, 0.5
    %v5345 = vadd.f32 %v5342, 0.5
    %v5346 = vadd.f32 %v5343, 0.5
    %v5347 = vadd.f32 %v5344, 0.5
    %v5348 = vtanh.pop %v5335
    %v5349 = vmul.f32 %v5346, %v5125
    %v5350 = vmul.f32 %v5345, %v5348
    %v5351 = vadd.f32 %v5349, %v5350
    %v5352 = vtanh.pop %v5351
    %v5353 = vmul.f32 %v5347, %v5352
    %v5354 = vadd.f32 %v5269, %v2107
    %v5355 = vadd.f32 %v5271, %v2111
    %v5356 = vadd.f32 %v5310, %v2115
    %v5357 = vadd.f32 %v5312, %v2119
    %v5358 = vmul.f32 %v5354, 0.5
    %v5359 = vmul.f32 %v5355, 0.5
    %v5360 = vmul.f32 %v5356, 0.5
    %v5361 = vtanh.pop %v5358
    %v5362 = vtanh.pop %v5359
    %v5363 = vtanh.pop %v5360
    %v5364 = vmul.f32 %v5361, 0.5
    %v5365 = vmul.f32 %v5362, 0.5
    %v5366 = vmul.f32 %v5363, 0.5
    %v5367 = vadd.f32 %v5364, 0.5
    %v5368 = vadd.f32 %v5365, 0.5
    %v5369 = vadd.f32 %v5366, 0.5
    %v5370 = vtanh.pop %v5357
    %v5371 = vmul.f32 %v5368, %v5147
    %v5372 = vmul.f32 %v5367, %v5370
    %v5373 = vadd.f32 %v5371, %v5372
    %v5374 = vtanh.pop %v5373
    %v5375 = vmul.f32 %v5369, %v5374
    %v5376 = vpack.c.bf16 %v5353, %v5353
    %v5377 = vpack.c.bf16 %v5375, %v5375
    %5378 = vmatprep.subr.bf16.mxu0 %v2661
    %5379 = vmatpush1.bf16.msra.mxu0 %v2660
    %5380 = vmatprep.subr.bf16.mxu0 %v2669
    %5381 = vmatpush1.bf16.msra.mxu0 %v2668
    %5382 = vmatprep.subr.bf16.mxu0 %v2677
    %5383 = vmatpush1.bf16.msra.mxu0 %v2676
    %5384 = vmatprep.subr.bf16.mxu0 %v2685
    %5385 = vmatpush1.bf16.msra.mxu0 %v2684
    %5386 = vmatprep.subr.bf16.mxu0 %v2693
    %5387 = vmatpush1.bf16.msra.mxu0 %v2692
    %5388 = vmatprep.subr.bf16.mxu0 %v2701
    %5389 = vmatpush1.bf16.msra.mxu0 %v2700
    %5390 = vmatprep.subr.bf16.mxu0 %v2709
    %5391 = vmatpush1.bf16.msra.mxu0 %v2708
    %5392 = vmatprep.subr.bf16.mxu0 %v2717
    %5393 = vmatpush1.bf16.msra.mxu0 %v2716
    %5394 = vmatprep.subr.bf16.mxu0 %v2725
    %5395 = vmatpush1.bf16.msra.mxu0 %v2724
    %5396 = vmatprep.subr.bf16.mxu0 %v2733
    %5397 = vmatpush1.bf16.msra.mxu0 %v2732
    %5398 = vmatprep.subr.bf16.mxu0 %v2741
    %5399 = vmatpush1.bf16.msra.mxu0 %v2740
    %5400 = vmatprep.subr.bf16.mxu0 %v2749
    %5401 = vmatpush1.bf16.msra.mxu0 %v2748
    %5402 = vmatprep.subr.bf16.mxu0 %v2757
    %5403 = vmatpush1.bf16.msra.mxu0 %v2756
    %5404 = vmatprep.subr.bf16.mxu0 %v2765
    %5405 = vmatpush1.bf16.msra.mxu0 %v2764
    %5406 = vmatprep.subr.bf16.mxu0 %v2773
    %5407 = vmatpush1.bf16.msra.mxu0 %v2772
    %5408 = vmatprep.subr.bf16.mxu0 %v2781
    %5409 = vmatpush1.bf16.msra.mxu0 %v2780
    %5410 = vmatprep.mubr.bf16.mxu0 %v5377
    %5411 = vmatmul.mubr.bf16.gmra.mrb[0].mxu0 %v5376
    %v5412 = vpop.f32.mrb[0].mxu0
    %v5413 = vadd.f32 0.0, %v5412
    %v5414 = vpop.f32.mrb[0].mxu0
    %v5415 = vadd.f32 0.0, %v5414
    %v5416 = vpop.f32.mrb[0].mxu0
    %v5417 = vpop.f32.mrb[0].mxu0
    %5418 = vdwg.mxu0
    %5419 = vmatprep.subr.bf16.mxu0 %v2663
    %5420 = vmatpush1.bf16.msra.mxu0 %v2662
    %5421 = vmatprep.subr.bf16.mxu0 %v2671
    %5422 = vmatpush1.bf16.msra.mxu0 %v2670
    %5423 = vmatprep.subr.bf16.mxu0 %v2679
    %5424 = vmatpush1.bf16.msra.mxu0 %v2678
    %5425 = vmatprep.subr.bf16.mxu0 %v2687
    %5426 = vmatpush1.bf16.msra.mxu0 %v2686
    %5427 = vmatprep.subr.bf16.mxu0 %v2695
    %5428 = vmatpush1.bf16.msra.mxu0 %v2694
    %5429 = vmatprep.subr.bf16.mxu0 %v2703
    %5430 = vmatpush1.bf16.msra.mxu0 %v2702
    %5431 = vmatprep.subr.bf16.mxu0 %v2711
    %5432 = vmatpush1.bf16.msra.mxu0 %v2710
    %5433 = vmatprep.subr.bf16.mxu0 %v2719
    %5434 = vmatpush1.bf16.msra.mxu0 %v2718
    %5435 = vmatprep.subr.bf16.mxu0 %v2727
    %5436 = vmatpush1.bf16.msra.mxu0 %v2726
    %5437 = vmatprep.subr.bf16.mxu0 %v2735
    %5438 = vmatpush1.bf16.msra.mxu0 %v2734
    %5439 = vmatprep.subr.bf16.mxu0 %v2743
    %5440 = vmatpush1.bf16.msra.mxu0 %v2742
    %5441 = vmatprep.subr.bf16.mxu0 %v2751
    %5442 = vmatpush1.bf16.msra.mxu0 %v2750
    %5443 = vmatprep.subr.bf16.mxu0 %v2759
    %5444 = vmatpush1.bf16.msra.mxu0 %v2758
    %5445 = vmatprep.subr.bf16.mxu0 %v2767
    %5446 = vmatpush1.bf16.msra.mxu0 %v2766
    %5447 = vmatprep.subr.bf16.mxu0 %v2775
    %5448 = vmatpush1.bf16.msra.mxu0 %v2774
    %5449 = vmatprep.subr.bf16.mxu0 %v2783
    %5450 = vmatpush1.bf16.msra.mxu0 %v2782
    %5451 = vmatprep.mubr.bf16.mxu0 %v5377
    %5452 = vmatmul.mubr.bf16.gmra.mrb[0].mxu0 %v5376
    %v5453 = vpop.f32.mrb[0].mxu0
    %v5454 = vadd.f32 0.0, %v5453
    %v5455 = vpop.f32.mrb[0].mxu0
    %v5456 = vadd.f32 0.0, %v5455
    %v5457 = vpop.f32.mrb[0].mxu0
    %v5458 = vpop.f32.mrb[0].mxu0
    %5459 = vdwg.mxu0
    %5460 = vmatprep.subr.bf16.mxu0 %v2665
    %5461 = vmatpush1.bf16.msra.mxu0 %v2664
    %5462 = vmatprep.subr.bf16.mxu0 %v2673
    %5463 = vmatpush1.bf16.msra.mxu0 %v2672
    %5464 = vmatprep.subr.bf16.mxu0 %v2681
    %5465 = vmatpush1.bf16.msra.mxu0 %v2680
    %5466 = vmatprep.subr.bf16.mxu0 %v2689
    %5467 = vmatpush1.bf16.msra.mxu0 %v2688
    %5468 = vmatprep.subr.bf16.mxu0 %v2697
    %5469 = vmatpush1.bf16.msra.mxu0 %v2696
    %5470 = vmatprep.subr.bf16.mxu0 %v2705
    %5471 = vmatpush1.bf16.msra.mxu0 %v2704
    %5472 = vmatprep.subr.bf16.mxu0 %v2713
    %5473 = vmatpush1.bf16.msra.mxu0 %v2712
    %5474 = vmatprep.subr.bf16.mxu0 %v2721
    %5475 = vmatpush1.bf16.msra.mxu0 %v2720
    %5476 = vmatprep.subr.bf16.mxu0 %v2729
    %5477 = vmatpush1.bf16.msra.mxu0 %v2728
    %5478 = vmatprep.subr.bf16.mxu0 %v2737
    %5479 = vmatpush1.bf16.msra.mxu0 %v2736
    %5480 = vmatprep.subr.bf16.mxu0 %v2745
    %5481 = vmatpush1.bf16.msra.mxu0 %v2744
    %5482 = vmatprep.subr.bf16.mxu0 %v2753
    %5483 = vmatpush1.bf16.msra.mxu0 %v2752
    %5484 = vmatprep.subr.bf16.mxu0 %v2761
    %5485 = vmatpush1.bf16.msra.mxu0 %v2760
    %5486 = vmatprep.subr.bf16.mxu0 %v2769
    %5487 = vmatpush1.bf16.msra.mxu0 %v2768
    %5488 = vmatprep.subr.bf16.mxu0 %v2777
    %5489 = vmatpush1.bf16.msra.mxu0 %v2776
    %5490 = vmatprep.subr.bf16.mxu0 %v2785
    %5491 = vmatpush1.bf16.msra.mxu0 %v2784
    %5492 = vmatprep.mubr.bf16.mxu0 %v5377
    %5493 = vmatmul.mubr.bf16.gmra.mrb[0].mxu0 %v5376
    %v5494 = vpop.f32.mrb[0].mxu0
    %v5495 = vadd.f32 0.0, %v5494
    %v5496 = vpop.f32.mrb[0].mxu0
    %v5497 = vadd.f32 0.0, %v5496
    %v5498 = vpop.f32.mrb[0].mxu0
    %v5499 = vpop.f32.mrb[0].mxu0
    %5500 = vdwg.mxu0
    %5501 = vmatprep.subr.bf16.mxu0 %v2667
    %5502 = vmatpush1.bf16.msra.mxu0 %v2666
    %5503 = vmatprep.subr.bf16.mxu0 %v2675
    %5504 = vmatpush1.bf16.msra.mxu0 %v2674
    %5505 = vmatprep.subr.bf16.mxu0 %v2683
    %5506 = vmatpush1.bf16.msra.mxu0 %v2682
    %5507 = vmatprep.subr.bf16.mxu0 %v2691
    %5508 = vmatpush1.bf16.msra.mxu0 %v2690
    %5509 = vmatprep.subr.bf16.mxu0 %v2699
    %5510 = vmatpush1.bf16.msra.mxu0 %v2698
    %5511 = vmatprep.subr.bf16.mxu0 %v2707
    %5512 = vmatpush1.bf16.msra.mxu0 %v2706
    %5513 = vmatprep.subr.bf16.mxu0 %v2715
    %5514 = vmatpush1.bf16.msra.mxu0 %v2714
    %5515 = vmatprep.subr.bf16.mxu0 %v2723
    %5516 = vmatpush1.bf16.msra.mxu0 %v2722
    %5517 = vmatprep.subr.bf16.mxu0 %v2731
    %5518 = vmatpush1.bf16.msra.mxu0 %v2730
    %5519 = vmatprep.subr.bf16.mxu0 %v2739
    %5520 = vmatpush1.bf16.msra.mxu0 %v2738
    %5521 = vmatprep.subr.bf16.mxu0 %v2747
    %5522 = vmatpush1.bf16.msra.mxu0 %v2746
    %5523 = vmatprep.subr.bf16.mxu0 %v2755
    %5524 = vmatpush1.bf16.msra.mxu0 %v2754
    %5525 = vmatprep.subr.bf16.mxu0 %v2763
    %5526 = vmatpush1.bf16.msra.mxu0 %v2762
    %5527 = vmatprep.subr.bf16.mxu0 %v2771
    %5528 = vmatpush1.bf16.msra.mxu0 %v2770
    %5529 = vmatprep.subr.bf16.mxu0 %v2779
    %5530 = vmatpush1.bf16.msra.mxu0 %v2778
    %5531 = vmatprep.subr.bf16.mxu0 %v2787
    %5532 = vmatpush1.bf16.msra.mxu0 %v2786
    %5533 = vmatprep.mubr.bf16.mxu0 %v5377
    %5534 = vmatmul.mubr.bf16.gmra.mrb[0].mxu0 %v5376
    %v5535 = vpop.f32.mrb[0].mxu0
    %v5536 = vadd.f32 0.0, %v5535
    %v5537 = vpop.f32.mrb[0].mxu0
    %v5538 = vadd.f32 0.0, %v5537
    %v5539 = vpop.f32.mrb[0].mxu0
    %v5540 = vpop.f32.mrb[0].mxu0
    %5541 = vdwg.mxu0
    %v5542 = vld [vmem:[#allocation2 + $0x60] sm:$0x3]
    %v5543 = vld [vmem:[#allocation2 + $0x68] sm:$0x3]
    %v5544 = vld [vmem:[#allocation2 + $0x70] sm:$0x3]
    %v5545 = vld [vmem:[#allocation2 + $0x78] sm:$0x3]
    %v5546 = vadd.f32 %v5413, %v5542
    %v5547 = vadd.f32 %v5415, %v5543
    %v5548 = vadd.f32 %v5454, %v5544
    %v5549 = vadd.f32 %v5456, %v5545
    %v5550 = vmul.f32 %v5546, 0.5
    %v5551 = vmul.f32 %v5547, 0.5
    %v5552 = vmul.f32 %v5548, 0.5
    %v5553 = vtanh.pop %v5550
    %v5554 = vtanh.pop %v5551
    %v5555 = vtanh.pop %v5552
    %v5556 = vmul.f32 %v5553, 0.5
    %v5557 = vmul.f32 %v5554, 0.5
    %v5558 = vmul.f32 %v5555, 0.5
    %v5559 = vadd.f32 %v5556, 0.5
    %v5560 = vadd.f32 %v5557, 0.5
    %v5561 = vadd.f32 %v5558, 0.5
    %v5562 = vtanh.pop %v5549
    %v5563 = vmul.f32 %v5560, %v5351
    %v5564 = vmul.f32 %v5559, %v5562
    %v5565 = vadd.f32 %v5563, %v5564
    %v5566 = vtanh.pop %v5565
    %v5567 = vmul.f32 %v5561, %v5566
    %v5568 = vadd.f32 %v5495, %v2107
    %v5569 = vadd.f32 %v5497, %v2111
    %v5570 = vadd.f32 %v5536, %v2115
    %v5571 = vadd.f32 %v5538, %v2119
    %v5572 = vmul.f32 %v5568, 0.5
    %v5573 = vmul.f32 %v5569, 0.5
    %v5574 = vmul.f32 %v5570, 0.5
    %v5575 = vtanh.pop %v5572
    %v5576 = vtanh.pop %v5573
    %v5577 = vtanh.pop %v5574
    %v5578 = vmul.f32 %v5575, 0.5
    %v5579 = vmul.f32 %v5576, 0.5
    %v5580 = vmul.f32 %v5577, 0.5
    %v5581 = vadd.f32 %v5578, 0.5
    %v5582 = vadd.f32 %v5579, 0.5
    %v5583 = vadd.f32 %v5580, 0.5
    %v5584 = vtanh.pop %v5571
    %v5585 = vmul.f32 %v5582, %v5373
    %v5586 = vmul.f32 %v5581, %v5584
    %v5587 = vadd.f32 %v5585, %v5586
    %v5588 = vtanh.pop %v5587
    %v5589 = vmul.f32 %v5583, %v5588
    %v5590 = vpack.c.bf16 %v5567, %v5567
    %v5591 = vpack.c.bf16 %v5589, %v5589
    %5592 = vmatprep.subr.bf16.mxu0 %v2661
    %5593 = vmatpush1.bf16.msra.mxu0 %v2660
    %5594 = vmatprep.subr.bf16.mxu0 %v2669
    %5595 = vmatpush1.bf16.msra.mxu0 %v2668
    %5596 = vmatprep.subr.bf16.mxu0 %v2677
    %5597 = vmatpush1.bf16.msra.mxu0 %v2676
    %5598 = vmatprep.subr.bf16.mxu0 %v2685
    %5599 = vmatpush1.bf16.msra.mxu0 %v2684
    %5600 = vmatprep.subr.bf16.mxu0 %v2693
    %5601 = vmatpush1.bf16.msra.mxu0 %v2692
    %5602 = vmatprep.subr.bf16.mxu0 %v2701
    %5603 = vmatpush1.bf16.msra.mxu0 %v2700
    %5604 = vmatprep.subr.bf16.mxu0 %v2709
    %5605 = vmatpush1.bf16.msra.mxu0 %v2708
    %5606 = vmatprep.subr.bf16.mxu0 %v2717
    %5607 = vmatpush1.bf16.msra.mxu0 %v2716
    %5608 = vmatprep.subr.bf16.mxu0 %v2725
    %5609 = vmatpush1.bf16.msra.mxu0 %v2724
    %5610 = vmatprep.subr.bf16.mxu0 %v2733
    %5611 = vmatpush1.bf16.msra.mxu0 %v2732
    %5612 = vmatprep.subr.bf16.mxu0 %v2741
    %5613 = vmatpush1.bf16.msra.mxu0 %v2740
    %5614 = vmatprep.subr.bf16.mxu0 %v2749
    %5615 = vmatpush1.bf16.msra.mxu0 %v2748
    %5616 = vmatprep.subr.bf16.mxu0 %v2757
    %5617 = vmatpush1.bf16.msra.mxu0 %v2756
    %5618 = vmatprep.subr.bf16.mxu0 %v2765
    %5619 = vmatpush1.bf16.msra.mxu0 %v2764
    %5620 = vmatprep.subr.bf16.mxu0 %v2773
    %5621 = vmatpush1.bf16.msra.mxu0 %v2772
    %5622 = vmatprep.subr.bf16.mxu0 %v2781
    %5623 = vmatpush1.bf16.msra.mxu0 %v2780
    %5624 = vmatprep.mubr.bf16.mxu0 %v5591
    %5625 = vmatmul.mubr.bf16.gmra.mrb[0].mxu0 %v5590
    %v5626 = vpop.f32.mrb[0].mxu0
    %v5627 = vadd.f32 0.0, %v5626
    %v5628 = vpop.f32.mrb[0].mxu0
    %v5629 = vadd.f32 0.0, %v5628
    %v5630 = vpop.f32.mrb[0].mxu0
    %v5631 = vpop.f32.mrb[0].mxu0
    %5632 = vdwg.mxu0
    %5633 = vmatprep.subr.bf16.mxu0 %v2663
    %5634 = vmatpush1.bf16.msra.mxu0 %v2662
    %5635 = vmatprep.subr.bf16.mxu0 %v2671
    %5636 = vmatpush1.bf16.msra.mxu0 %v2670
    %5637 = vmatprep.subr.bf16.mxu0 %v2679
    %5638 = vmatpush1.bf16.msra.mxu0 %v2678
    %5639 = vmatprep.subr.bf16.mxu0 %v2687
    %5640 = vmatpush1.bf16.msra.mxu0 %v2686
    %5641 = vmatprep.subr.bf16.mxu0 %v2695
    %5642 = vmatpush1.bf16.msra.mxu0 %v2694
    %5643 = vmatprep.subr.bf16.mxu0 %v2703
    %5644 = vmatpush1.bf16.msra.mxu0 %v2702
    %5645 = vmatprep.subr.bf16.mxu0 %v2711
    %5646 = vmatpush1.bf16.msra.mxu0 %v2710
    %5647 = vmatprep.subr.bf16.mxu0 %v2719
    %5648 = vmatpush1.bf16.msra.mxu0 %v2718
    %5649 = vmatprep.subr.bf16.mxu0 %v2727
    %5650 = vmatpush1.bf16.msra.mxu0 %v2726
    %5651 = vmatprep.subr.bf16.mxu0 %v2735
    %5652 = vmatpush1.bf16.msra.mxu0 %v2734
    %5653 = vmatprep.subr.bf16.mxu0 %v2743
    %5654 = vmatpush1.bf16.msra.mxu0 %v2742
    %5655 = vmatprep.subr.bf16.mxu0 %v2751
    %5656 = vmatpush1.bf16.msra.mxu0 %v2750
    %5657 = vmatprep.subr.bf16.mxu0 %v2759
    %5658 = vmatpush1.bf16.msra.mxu0 %v2758
    %5659 = vmatprep.subr.bf16.mxu0 %v2767
    %5660 = vmatpush1.bf16.msra.mxu0 %v2766
    %5661 = vmatprep.subr.bf16.mxu0 %v2775
    %5662 = vmatpush1.bf16.msra.mxu0 %v2774
    %5663 = vmatprep.subr.bf16.mxu0 %v2783
    %5664 = vmatpush1.bf16.msra.mxu0 %v2782
    %5665 = vmatprep.mubr.bf16.mxu0 %v5591
    %5666 = vmatmul.mubr.bf16.gmra.mrb[0].mxu0 %v5590
    %v5667 = vpop.f32.mrb[0].mxu0
    %v5668 = vadd.f32 0.0, %v5667
    %v5669 = vpop.f32.mrb[0].mxu0
    %v5670 = vadd.f32 0.0, %v5669
    %v5671 = vpop.f32.mrb[0].mxu0
    %v5672 = vpop.f32.mrb[0].mxu0
    %5673 = vdwg.mxu0
    %5674 = vmatprep.subr.bf16.mxu0 %v2665
    %5675 = vmatpush1.bf16.msra.mxu0 %v2664
    %5676 = vmatprep.subr.bf16.mxu0 %v2673
    %5677 = vmatpush1.bf16.msra.mxu0 %v2672
    %5678 = vmatprep.subr.bf16.mxu0 %v2681
    %5679 = vmatpush1.bf16.msra.mxu0 %v2680
    %5680 = vmatprep.subr.bf16.mxu0 %v2689
    %5681 = vmatpush1.bf16.msra.mxu0 %v2688
    %5682 = vmatprep.subr.bf16.mxu0 %v2697
    %5683 = vmatpush1.bf16.msra.mxu0 %v2696
    %5684 = vmatprep.subr.bf16.mxu0 %v2705
    %5685 = vmatpush1.bf16.msra.mxu0 %v2704
    %5686 = vmatprep.subr.bf16.mxu0 %v2713
    %5687 = vmatpush1.bf16.msra.mxu0 %v2712
    %5688 = vmatprep.subr.bf16.mxu0 %v2721
    %5689 = vmatpush1.bf16.msra.mxu0 %v2720
    %5690 = vmatprep.subr.bf16.mxu0 %v2729
    %5691 = vmatpush1.bf16.msra.mxu0 %v2728
    %5692 = vmatprep.subr.bf16.mxu0 %v2737
    %5693 = vmatpush1.bf16.msra.mxu0 %v2736
    %5694 = vmatprep.subr.bf16.mxu0 %v2745
    %5695 = vmatpush1.bf16.msra.mxu0 %v2744
    %5696 = vmatprep.subr.bf16.mxu0 %v2753
    %5697 = vmatpush1.bf16.msra.mxu0 %v2752
    %5698 = vmatprep.subr.bf16.mxu0 %v2761
    %5699 = vmatpush1.bf16.msra.mxu0 %v2760
    %5700 = vmatprep.subr.bf16.mxu0 %v2769
    %5701 = vmatpush1.bf16.msra.mxu0 %v2768
    %5702 = vmatprep.subr.bf16.mxu0 %v2777
    %5703 = vmatpush1.bf16.msra.mxu0 %v2776
    %5704 = vmatprep.subr.bf16.mxu0 %v2785
    %5705 = vmatpush1.bf16.msra.mxu0 %v2784
    %5706 = vmatprep.mubr.bf16.mxu0 %v5591
    %5707 = vmatmul.mubr.bf16.gmra.mrb[0].mxu0 %v5590
    %v5708 = vpop.f32.mrb[0].mxu0
    %v5709 = vadd.f32 0.0, %v5708
    %v5710 = vpop.f32.mrb[0].mxu0
    %v5711 = vadd.f32 0.0, %v5710
    %v5712 = vpop.f32.mrb[0].mxu0
    %v5713 = vpop.f32.mrb[0].mxu0
    %5714 = vdwg.mxu0
    %5715 = vmatprep.subr.bf16.mxu0 %v2667
    %5716 = vmatpush1.bf16.msra.mxu0 %v2666
    %5717 = vmatprep.subr.bf16.mxu0 %v2675
    %5718 = vmatpush1.bf16.msra.mxu0 %v2674
    %5719 = vmatprep.subr.bf16.mxu0 %v2683
    %5720 = vmatpush1.bf16.msra.mxu0 %v2682
    %5721 = vmatprep.subr.bf16.mxu0 %v2691
    %5722 = vmatpush1.bf16.msra.mxu0 %v2690
    %5723 = vmatprep.subr.bf16.mxu0 %v2699
    %5724 = vmatpush1.bf16.msra.mxu0 %v2698
    %5725 = vmatprep.subr.bf16.mxu0 %v2707
    %5726 = vmatpush1.bf16.msra.mxu0 %v2706
    %5727 = vmatprep.subr.bf16.mxu0 %v2715
    %5728 = vmatpush1.bf16.msra.mxu0 %v2714
    %5729 = vmatprep.subr.bf16.mxu0 %v2723
    %5730 = vmatpush1.bf16.msra.mxu0 %v2722
    %5731 = vmatprep.subr.bf16.mxu0 %v2731
    %5732 = vmatpush1.bf16.msra.mxu0 %v2730
    %5733 = vmatprep.subr.bf16.mxu0 %v2739
    %5734 = vmatpush1.bf16.msra.mxu0 %v2738
    %5735 = vmatprep.subr.bf16.mxu0 %v2747
    %5736 = vmatpush1.bf16.msra.mxu0 %v2746
    %5737 = vmatprep.subr.bf16.mxu0 %v2755
    %5738 = vmatpush1.bf16.msra.mxu0 %v2754
    %5739 = vmatprep.subr.bf16.mxu0 %v2763
    %5740 = vmatpush1.bf16.msra.mxu0 %v2762
    %5741 = vmatprep.subr.bf16.mxu0 %v2771
    %5742 = vmatpush1.bf16.msra.mxu0 %v2770
    %5743 = vmatprep.subr.bf16.mxu0 %v2779
    %5744 = vmatpush1.bf16.msra.mxu0 %v2778
    %5745 = vmatprep.subr.bf16.mxu0 %v2787
    %5746 = vmatpush1.bf16.msra.mxu0 %v2786
    %5747 = vmatprep.mubr.bf16.mxu0 %v5591
    %5748 = vmatmul.mubr.bf16.gmra.mrb[0].mxu0 %v5590
    %v5749 = vpop.f32.mrb[0].mxu0
    %v5750 = vadd.f32 0.0, %v5749
    %v5751 = vpop.f32.mrb[0].mxu0
    %v5752 = vadd.f32 0.0, %v5751
    %v5753 = vpop.f32.mrb[0].mxu0
    %v5754 = vpop.f32.mrb[0].mxu0
    %5755 = vdwg.mxu0
    %v5756 = vld [vmem:[#allocation2 + $0x60] sm:$0xc]
    %v5757 = vld [vmem:[#allocation2 + $0x68] sm:$0xc]
    %v5758 = vld [vmem:[#allocation2 + $0x70] sm:$0xc]
    %v5759 = vld [vmem:[#allocation2 + $0x78] sm:$0xc]
    %v5764 = vrot.slane %v5756, 2
    %v5765 = vrot.slane %v5757, 2
    %v5766 = vrot.slane %v5758, 2
    %v5767 = vrot.slane %v5759, 2
    %v5772 = vadd.f32 %v5627, %v5764
    %v5773 = vadd.f32 %v5629, %v5765
    %v5774 = vadd.f32 %v5668, %v5766
    %v5775 = vadd.f32 %v5670, %v5767
    %v5776 = vmul.f32 %v5772, 0.5
    %v5777 = vmul.f32 %v5773, 0.5
    %v5778 = vmul.f32 %v5774, 0.5
    %v5779 = vtanh.pop %v5776
    %v5780 = vtanh.pop %v5777
    %v5781 = vtanh.pop %v5778
    %v5782 = vmul.f32 %v5779, 0.5
    %v5783 = vmul.f32 %v5780, 0.5
    %v5784 = vmul.f32 %v5781, 0.5
    %v5785 = vadd.f32 %v5782, 0.5
    %v5786 = vadd.f32 %v5783, 0.5
    %v5787 = vadd.f32 %v5784, 0.5
    %v5788 = vtanh.pop %v5775
    %v5789 = vmul.f32 %v5786, %v5565
    %v5790 = vmul.f32 %v5785, %v5788
    %v5791 = vadd.f32 %v5789, %v5790
    %v5792 = vtanh.pop %v5791
    %v5793 = vmul.f32 %v5787, %v5792
    %v5794 = vadd.f32 %v5709, %v2107
    %v5795 = vadd.f32 %v5711, %v2111
    %v5796 = vadd.f32 %v5750, %v2115
    %v5797 = vadd.f32 %v5752, %v2119
    %v5798 = vmul.f32 %v5794, 0.5
    %v5799 = vmul.f32 %v5795, 0.5
    %v5800 = vmul.f32 %v5796, 0.5
    %v5801 = vtanh.pop %v5798
    %v5802 = vtanh.pop %v5799
    %v5803 = vtanh.pop %v5800
    %v5804 = vmul.f32 %v5801, 0.5
    %v5805 = vmul.f32 %v5802, 0.5
    %v5806 = vmul.f32 %v5803, 0.5
    %v5807 = vadd.f32 %v5804, 0.5
    %v5808 = vadd.f32 %v5805, 0.5
    %v5809 = vadd.f32 %v5806, 0.5
    %v5810 = vtanh.pop %v5797
    %v5811 = vmul.f32 %v5808, %v5587
    %v5812 = vmul.f32 %v5807, %v5810
    %v5813 = vadd.f32 %v5811, %v5812
    %v5814 = vtanh.pop %v5813
    %v5815 = vmul.f32 %v5809, %v5814
    %v5816 = vpack.c.bf16 %v5793, %v5793
    %v5817 = vpack.c.bf16 %v5815, %v5815
    %5818 = vmatprep.subr.bf16.mxu0 %v2661
    %5819 = vmatpush1.bf16.msra.mxu0 %v2660
    %5820 = vmatprep.subr.bf16.mxu0 %v2669
    %5821 = vmatpush1.bf16.msra.mxu0 %v2668
    %5822 = vmatprep.subr.bf16.mxu0 %v2677
    %5823 = vmatpush1.bf16.msra.mxu0 %v2676
    %5824 = vmatprep.subr.bf16.mxu0 %v2685
    %5825 = vmatpush1.bf16.msra.mxu0 %v2684
    %5826 = vmatprep.subr.bf16.mxu0 %v2693
    %5827 = vmatpush1.bf16.msra.mxu0 %v2692
    %5828 = vmatprep.subr.bf16.mxu0 %v2701
    %5829 = vmatpush1.bf16.msra.mxu0 %v2700
    %5830 = vmatprep.subr.bf16.mxu0 %v2709
    %5831 = vmatpush1.bf16.msra.mxu0 %v2708
    %5832 = vmatprep.subr.bf16.mxu0 %v2717
    %5833 = vmatpush1.bf16.msra.mxu0 %v2716
    %5834 = vmatprep.subr.bf16.mxu0 %v2725
    %5835 = vmatpush1.bf16.msra.mxu0 %v2724
    %5836 = vmatprep.subr.bf16.mxu0 %v2733
    %5837 = vmatpush1.bf16.msra.mxu0 %v2732
    %5838 = vmatprep.subr.bf16.mxu0 %v2741
    %5839 = vmatpush1.bf16.msra.mxu0 %v2740
    %5840 = vmatprep.subr.bf16.mxu0 %v2749
    %5841 = vmatpush1.bf16.msra.mxu0 %v2748
    %5842 = vmatprep.subr.bf16.mxu0 %v2757
    %5843 = vmatpush1.bf16.msra.mxu0 %v2756
    %5844 = vmatprep.subr.bf16.mxu0 %v2765
    %5845 = vmatpush1.bf16.msra.mxu0 %v2764
    %5846 = vmatprep.subr.bf16.mxu0 %v2773
    %5847 = vmatpush1.bf16.msra.mxu0 %v2772
    %5848 = vmatprep.subr.bf16.mxu0 %v2781
    %5849 = vmatpush1.bf16.msra.mxu0 %v2780
    %5850 = vmatprep.mubr.bf16.mxu0 %v5817
    %5851 = vmatmul.mubr.bf16.gmra.mrb[0].mxu0 %v5816
    %v5852 = vpop.f32.mrb[0].mxu0
    %v5853 = vadd.f32 0.0, %v5852
    %v5854 = vpop.f32.mrb[0].mxu0
    %v5855 = vadd.f32 0.0, %v5854
    %v5856 = vpop.f32.mrb[0].mxu0
    %v5857 = vpop.f32.mrb[0].mxu0
    %5858 = vdwg.mxu0
    %5859 = vmatprep.subr.bf16.mxu0 %v2663
    %5860 = vmatpush1.bf16.msra.mxu0 %v2662
    %5861 = vmatprep.subr.bf16.mxu0 %v2671
    %5862 = vmatpush1.bf16.msra.mxu0 %v2670
    %5863 = vmatprep.subr.bf16.mxu0 %v2679
    %5864 = vmatpush1.bf16.msra.mxu0 %v2678
    %5865 = vmatprep.subr.bf16.mxu0 %v2687
    %5866 = vmatpush1.bf16.msra.mxu0 %v2686
    %5867 = vmatprep.subr.bf16.mxu0 %v2695
    %5868 = vmatpush1.bf16.msra.mxu0 %v2694
    %5869 = vmatprep.subr.bf16.mxu0 %v2703
    %5870 = vmatpush1.bf16.msra.mxu0 %v2702
    %5871 = vmatprep.subr.bf16.mxu0 %v2711
    %5872 = vmatpush1.bf16.msra.mxu0 %v2710
    %5873 = vmatprep.subr.bf16.mxu0 %v2719
    %5874 = vmatpush1.bf16.msra.mxu0 %v2718
    %5875 = vmatprep.subr.bf16.mxu0 %v2727
    %5876 = vmatpush1.bf16.msra.mxu0 %v2726
    %5877 = vmatprep.subr.bf16.mxu0 %v2735
    %5878 = vmatpush1.bf16.msra.mxu0 %v2734
    %5879 = vmatprep.subr.bf16.mxu0 %v2743
    %5880 = vmatpush1.bf16.msra.mxu0 %v2742
    %5881 = vmatprep.subr.bf16.mxu0 %v2751
    %5882 = vmatpush1.bf16.msra.mxu0 %v2750
    %5883 = vmatprep.subr.bf16.mxu0 %v2759
    %5884 = vmatpush1.bf16.msra.mxu0 %v2758
    %5885 = vmatprep.subr.bf16.mxu0 %v2767
    %5886 = vmatpush1.bf16.msra.mxu0 %v2766
    %5887 = vmatprep.subr.bf16.mxu0 %v2775
    %5888 = vmatpush1.bf16.msra.mxu0 %v2774
    %5889 = vmatprep.subr.bf16.mxu0 %v2783
    %5890 = vmatpush1.bf16.msra.mxu0 %v2782
    %5891 = vmatprep.mubr.bf16.mxu0 %v5817
    %5892 = vmatmul.mubr.bf16.gmra.mrb[0].mxu0 %v5816
    %v5893 = vpop.f32.mrb[0].mxu0
    %v5894 = vadd.f32 0.0, %v5893
    %v5895 = vpop.f32.mrb[0].mxu0
    %v5896 = vadd.f32 0.0, %v5895
    %v5897 = vpop.f32.mrb[0].mxu0
    %v5898 = vpop.f32.mrb[0].mxu0
    %5899 = vdwg.mxu0
    %5900 = vmatprep.subr.bf16.mxu0 %v2665
    %5901 = vmatpush1.bf16.msra.mxu0 %v2664
    %5902 = vmatprep.subr.bf16.mxu0 %v2673
    %5903 = vmatpush1.bf16.msra.mxu0 %v2672
    %5904 = vmatprep.subr.bf16.mxu0 %v2681
    %5905 = vmatpush1.bf16.msra.mxu0 %v2680
    %5906 = vmatprep.subr.bf16.mxu0 %v2689
    %5907 = vmatpush1.bf16.msra.mxu0 %v2688
    %5908 = vmatprep.subr.bf16.mxu0 %v2697
    %5909 = vmatpush1.bf16.msra.mxu0 %v2696
    %5910 = vmatprep.subr.bf16.mxu0 %v2705
    %5911 = vmatpush1.bf16.msra.mxu0 %v2704
    %5912 = vmatprep.subr.bf16.mxu0 %v2713
    %5913 = vmatpush1.bf16.msra.mxu0 %v2712
    %5914 = vmatprep.subr.bf16.mxu0 %v2721
    %5915 = vmatpush1.bf16.msra.mxu0 %v2720
    %5916 = vmatprep.subr.bf16.mxu0 %v2729
    %5917 = vmatpush1.bf16.msra.mxu0 %v2728
    %5918 = vmatprep.subr.bf16.mxu0 %v2737
    %5919 = vmatpush1.bf16.msra.mxu0 %v2736
    %5920 = vmatprep.subr.bf16.mxu0 %v2745
    %5921 = vmatpush1.bf16.msra.mxu0 %v2744
    %5922 = vmatprep.subr.bf16.mxu0 %v2753
    %5923 = vmatpush1.bf16.msra.mxu0 %v2752
    %5924 = vmatprep.subr.bf16.mxu0 %v2761
    %5925 = vmatpush1.bf16.msra.mxu0 %v2760
    %5926 = vmatprep.subr.bf16.mxu0 %v2769
    %5927 = vmatpush1.bf16.msra.mxu0 %v2768
    %5928 = vmatprep.subr.bf16.mxu0 %v2777
    %5929 = vmatpush1.bf16.msra.mxu0 %v2776
    %5930 = vmatprep.subr.bf16.mxu0 %v2785
    %5931 = vmatpush1.bf16.msra.mxu0 %v2784
    %5932 = vmatprep.mubr.bf16.mxu0 %v5817
    %5933 = vmatmul.mubr.bf16.gmra.mrb[0].mxu0 %v5816
    %v5934 = vpop.f32.mrb[0].mxu0
    %v5935 = vadd.f32 0.0, %v5934
    %v5936 = vpop.f32.mrb[0].mxu0
    %v5937 = vadd.f32 0.0, %v5936
    %v5938 = vpop.f32.mrb[0].mxu0
    %v5939 = vpop.f32.mrb[0].mxu0
    %5940 = vdwg.mxu0
    %5941 = vmatprep.subr.bf16.mxu0 %v2667
    %5942 = vmatpush1.bf16.msra.mxu0 %v2666
    %5943 = vmatprep.subr.bf16.mxu0 %v2675
    %5944 = vmatpush1.bf16.msra.mxu0 %v2674
    %5945 = vmatprep.subr.bf16.mxu0 %v2683
    %5946 = vmatpush1.bf16.msra.mxu0 %v2682
    %5947 = vmatprep.subr.bf16.mxu0 %v2691
    %5948 = vmatpush1.bf16.msra.mxu0 %v2690
    %5949 = vmatprep.subr.bf16.mxu0 %v2699
    %5950 = vmatpush1.bf16.msra.mxu0 %v2698
    %5951 = vmatprep.subr.bf16.mxu0 %v2707
    %5952 = vmatpush1.bf16.msra.mxu0 %v2706
    %5953 = vmatprep.subr.bf16.mxu0 %v2715
    %5954 = vmatpush1.bf16.msra.mxu0 %v2714
    %5955 = vmatprep.subr.bf16.mxu0 %v2723
    %5956 = vmatpush1.bf16.msra.mxu0 %v2722
    %5957 = vmatprep.subr.bf16.mxu0 %v2731
    %5958 = vmatpush1.bf16.msra.mxu0 %v2730
    %5959 = vmatprep.subr.bf16.mxu0 %v2739
    %5960 = vmatpush1.bf16.msra.mxu0 %v2738
    %5961 = vmatprep.subr.bf16.mxu0 %v2747
    %5962 = vmatpush1.bf16.msra.mxu0 %v2746
    %5963 = vmatprep.subr.bf16.mxu0 %v2755
    %5964 = vmatpush1.bf16.msra.mxu0 %v2754
    %5965 = vmatprep.subr.bf16.mxu0 %v2763
    %5966 = vmatpush1.bf16.msra.mxu0 %v2762
    %5967 = vmatprep.subr.bf16.mxu0 %v2771
    %5968 = vmatpush1.bf16.msra.mxu0 %v2770
    %5969 = vmatprep.subr.bf16.mxu0 %v2779
    %5970 = vmatpush1.bf16.msra.mxu0 %v2778
    %5971 = vmatprep.subr.bf16.mxu0 %v2787
    %5972 = vmatpush1.bf16.msra.mxu0 %v2786
    %5973 = vmatprep.mubr.bf16.mxu0 %v5817
    %5974 = vmatmul.mubr.bf16.gmra.mrb[0].mxu0 %v5816
    %v5975 = vpop.f32.mrb[0].mxu0
    %v5976 = vadd.f32 0.0, %v5975
    %v5977 = vpop.f32.mrb[0].mxu0
    %v5978 = vadd.f32 0.0, %v5977
    %v5979 = vpop.f32.mrb[0].mxu0
    %v5980 = vpop.f32.mrb[0].mxu0
    %5981 = vdwg.mxu0
    %v5982 = vld [vmem:[#allocation2 + $0x60] sm:$0x30]
    %v5983 = vld [vmem:[#allocation2 + $0x68] sm:$0x30]
    %v5984 = vld [vmem:[#allocation2 + $0x70] sm:$0x30]
    %v5985 = vld [vmem:[#allocation2 + $0x78] sm:$0x30]
    %v5990 = vrot.slane %v5982, 4
    %v5991 = vrot.slane %v5983, 4
    %v5992 = vrot.slane %v5984, 4
    %v5993 = vrot.slane %v5985, 4
    %v5998 = vadd.f32 %v5853, %v5990
    %v5999 = vadd.f32 %v5855, %v5991
    %v6000 = vadd.f32 %v5894, %v5992
    %v6001 = vadd.f32 %v5896, %v5993
    %v6002 = vmul.f32 %v5998, 0.5
    %v6003 = vmul.f32 %v5999, 0.5
    %v6004 = vmul.f32 %v6000, 0.5
    %v6005 = vtanh.pop %v6002
    %v6006 = vtanh.pop %v6003
    %v6007 = vtanh.pop %v6004
    %v6008 = vmul.f32 %v6005, 0.5
    %v6009 = vmul.f32 %v6006, 0.5
    %v6010 = vmul.f32 %v6007, 0.5
    %v6011 = vadd.f32 %v6008, 0.5
    %v6012 = vadd.f32 %v6009, 0.5
    %v6013 = vadd.f32 %v6010, 0.5
    %v6014 = vtanh.pop %v6001
    %v6015 = vmul.f32 %v6012, %v5791
    %v6016 = vmul.f32 %v6011, %v6014
    %v6017 = vadd.f32 %v6015, %v6016
    %v6018 = vtanh.pop %v6017
    %v6019 = vmul.f32 %v6013, %v6018
    %v6020 = vadd.f32 %v5935, %v2107
    %v6021 = vadd.f32 %v5937, %v2111
    %v6022 = vadd.f32 %v5976, %v2115
    %v6023 = vadd.f32 %v5978, %v2119
    %v6024 = vmul.f32 %v6020, 0.5
    %v6025 = vmul.f32 %v6021, 0.5
    %v6026 = vmul.f32 %v6022, 0.5
    %v6027 = vtanh.pop %v6024
    %v6028 = vtanh.pop %v6025
    %v6029 = vtanh.pop %v6026
    %v6030 = vmul.f32 %v6027, 0.5
    %v6031 = vmul.f32 %v6028, 0.5
    %v6032 = vmul.f32 %v6029, 0.5
    %v6033 = vadd.f32 %v6030, 0.5
    %v6034 = vadd.f32 %v6031, 0.5
    %v6035 = vadd.f32 %v6032, 0.5
    %v6036 = vtanh.pop %v6023
    %v6037 = vmul.f32 %v6034, %v5813
    %v6038 = vmul.f32 %v6033, %v6036
    %v6039 = vadd.f32 %v6037, %v6038
    %v6040 = vtanh.pop %v6039
    %v6041 = vmul.f32 %v6035, %v6040
    %v6042 = vpack.c.bf16 %v6019, %v6019
    %v6043 = vpack.c.bf16 %v6041, %v6041
    %6044 = vmatprep.subr.bf16.mxu0 %v2661
    %6045 = vmatpush1.bf16.msra.mxu0 %v2660
    %6046 = vmatprep.subr.bf16.mxu0 %v2669
    %6047 = vmatpush1.bf16.msra.mxu0 %v2668
    %6048 = vmatprep.subr.bf16.mxu0 %v2677
    %6049 = vmatpush1.bf16.msra.mxu0 %v2676
    %6050 = vmatprep.subr.bf16.mxu0 %v2685
    %6051 = vmatpush1.bf16.msra.mxu0 %v2684
    %6052 = vmatprep.subr.bf16.mxu0 %v2693
    %6053 = vmatpush1.bf16.msra.mxu0 %v2692
    %6054 = vmatprep.subr.bf16.mxu0 %v2701
    %6055 = vmatpush1.bf16.msra.mxu0 %v2700
    %6056 = vmatprep.subr.bf16.mxu0 %v2709
    %6057 = vmatpush1.bf16.msra.mxu0 %v2708
    %6058 = vmatprep.subr.bf16.mxu0 %v2717
    %6059 = vmatpush1.bf16.msra.mxu0 %v2716
    %6060 = vmatprep.subr.bf16.mxu0 %v2725
    %6061 = vmatpush1.bf16.msra.mxu0 %v2724
    %6062 = vmatprep.subr.bf16.mxu0 %v2733
    %6063 = vmatpush1.bf16.msra.mxu0 %v2732
    %6064 = vmatprep.subr.bf16.mxu0 %v2741
    %6065 = vmatpush1.bf16.msra.mxu0 %v2740
    %6066 = vmatprep.subr.bf16.mxu0 %v2749
    %6067 = vmatpush1.bf16.msra.mxu0 %v2748
    %6068 = vmatprep.subr.bf16.mxu0 %v2757
    %6069 = vmatpush1.bf16.msra.mxu0 %v2756
    %6070 = vmatprep.subr.bf16.mxu0 %v2765
    %6071 = vmatpush1.bf16.msra.mxu0 %v2764
    %6072 = vmatprep.subr.bf16.mxu0 %v2773
    %6073 = vmatpush1.bf16.msra.mxu0 %v2772
    %6074 = vmatprep.subr.bf16.mxu0 %v2781
    %6075 = vmatpush1.bf16.msra.mxu0 %v2780
    %6076 = vmatprep.mubr.bf16.mxu0 %v6043
    %6077 = vmatmul.mubr.bf16.gmra.mrb[0].mxu0 %v6042
    %v6078 = vpop.f32.mrb[0].mxu0
    %v6079 = vadd.f32 0.0, %v6078
    %v6080 = vpop.f32.mrb[0].mxu0
    %v6081 = vadd.f32 0.0, %v6080
    %v6082 = vpop.f32.mrb[0].mxu0
    %v6083 = vpop.f32.mrb[0].mxu0
    %6084 = vdwg.mxu0
    %6085 = vmatprep.subr.bf16.mxu0 %v2663
    %6086 = vmatpush1.bf16.msra.mxu0 %v2662
    %6087 = vmatprep.subr.bf16.mxu0 %v2671
    %6088 = vmatpush1.bf16.msra.mxu0 %v2670
    %6089 = vmatprep.subr.bf16.mxu0 %v2679
    %6090 = vmatpush1.bf16.msra.mxu0 %v2678
    %6091 = vmatprep.subr.bf16.mxu0 %v2687
    %6092 = vmatpush1.bf16.msra.mxu0 %v2686
    %6093 = vmatprep.subr.bf16.mxu0 %v2695
    %6094 = vmatpush1.bf16.msra.mxu0 %v2694
    %6095 = vmatprep.subr.bf16.mxu0 %v2703
    %6096 = vmatpush1.bf16.msra.mxu0 %v2702
    %6097 = vmatprep.subr.bf16.mxu0 %v2711
    %6098 = vmatpush1.bf16.msra.mxu0 %v2710
    %6099 = vmatprep.subr.bf16.mxu0 %v2719
    %6100 = vmatpush1.bf16.msra.mxu0 %v2718
    %6101 = vmatprep.subr.bf16.mxu0 %v2727
    %6102 = vmatpush1.bf16.msra.mxu0 %v2726
    %6103 = vmatprep.subr.bf16.mxu0 %v2735
    %6104 = vmatpush1.bf16.msra.mxu0 %v2734
    %6105 = vmatprep.subr.bf16.mxu0 %v2743
    %6106 = vmatpush1.bf16.msra.mxu0 %v2742
    %6107 = vmatprep.subr.bf16.mxu0 %v2751
    %6108 = vmatpush1.bf16.msra.mxu0 %v2750
    %6109 = vmatprep.subr.bf16.mxu0 %v2759
    %6110 = vmatpush1.bf16.msra.mxu0 %v2758
    %6111 = vmatprep.subr.bf16.mxu0 %v2767
    %6112 = vmatpush1.bf16.msra.mxu0 %v2766
    %6113 = vmatprep.subr.bf16.mxu0 %v2775
    %6114 = vmatpush1.bf16.msra.mxu0 %v2774
    %6115 = vmatprep.subr.bf16.mxu0 %v2783
    %6116 = vmatpush1.bf16.msra.mxu0 %v2782
    %6117 = vmatprep.mubr.bf16.mxu0 %v6043
    %6118 = vmatmul.mubr.bf16.gmra.mrb[0].mxu0 %v6042
    %v6119 = vpop.f32.mrb[0].mxu0
    %v6120 = vadd.f32 0.0, %v6119
    %v6121 = vpop.f32.mrb[0].mxu0
    %v6122 = vadd.f32 0.0, %v6121
    %v6123 = vpop.f32.mrb[0].mxu0
    %v6124 = vpop.f32.mrb[0].mxu0
    %6125 = vdwg.mxu0
    %6126 = vmatprep.subr.bf16.mxu0 %v2665
    %6127 = vmatpush1.bf16.msra.mxu0 %v2664
    %6128 = vmatprep.subr.bf16.mxu0 %v2673
    %6129 = vmatpush1.bf16.msra.mxu0 %v2672
    %6130 = vmatprep.subr.bf16.mxu0 %v2681
    %6131 = vmatpush1.bf16.msra.mxu0 %v2680
    %6132 = vmatprep.subr.bf16.mxu0 %v2689
    %6133 = vmatpush1.bf16.msra.mxu0 %v2688
    %6134 = vmatprep.subr.bf16.mxu0 %v2697
    %6135 = vmatpush1.bf16.msra.mxu0 %v2696
    %6136 = vmatprep.subr.bf16.mxu0 %v2705
    %6137 = vmatpush1.bf16.msra.mxu0 %v2704
    %6138 = vmatprep.subr.bf16.mxu0 %v2713
    %6139 = vmatpush1.bf16.msra.mxu0 %v2712
    %6140 = vmatprep.subr.bf16.mxu0 %v2721
    %6141 = vmatpush1.bf16.msra.mxu0 %v2720
    %6142 = vmatprep.subr.bf16.mxu0 %v2729
    %6143 = vmatpush1.bf16.msra.mxu0 %v2728
    %6144 = vmatprep.subr.bf16.mxu0 %v2737
    %6145 = vmatpush1.bf16.msra.mxu0 %v2736
    %6146 = vmatprep.subr.bf16.mxu0 %v2745
    %6147 = vmatpush1.bf16.msra.mxu0 %v2744
    %6148 = vmatprep.subr.bf16.mxu0 %v2753
    %6149 = vmatpush1.bf16.msra.mxu0 %v2752
    %6150 = vmatprep.subr.bf16.mxu0 %v2761
    %6151 = vmatpush1.bf16.msra.mxu0 %v2760
    %6152 = vmatprep.subr.bf16.mxu0 %v2769
    %6153 = vmatpush1.bf16.msra.mxu0 %v2768
    %6154 = vmatprep.subr.bf16.mxu0 %v2777
    %6155 = vmatpush1.bf16.msra.mxu0 %v2776
    %6156 = vmatprep.subr.bf16.mxu0 %v2785
    %6157 = vmatpush1.bf16.msra.mxu0 %v2784
    %6158 = vmatprep.mubr.bf16.mxu0 %v6043
    %6159 = vmatmul.mubr.bf16.gmra.mrb[0].mxu0 %v6042
    %v6160 = vpop.f32.mrb[0].mxu0
    %v6161 = vadd.f32 0.0, %v6160
    %v6162 = vpop.f32.mrb[0].mxu0
    %v6163 = vadd.f32 0.0, %v6162
    %v6164 = vpop.f32.mrb[0].mxu0
    %v6165 = vpop.f32.mrb[0].mxu0
    %6166 = vdwg.mxu0
    %6167 = vmatprep.subr.bf16.mxu0 %v2667
    %6168 = vmatpush1.bf16.msra.mxu0 %v2666
    %6169 = vmatprep.subr.bf16.mxu0 %v2675
    %6170 = vmatpush1.bf16.msra.mxu0 %v2674
    %6171 = vmatprep.subr.bf16.mxu0 %v2683
    %6172 = vmatpush1.bf16.msra.mxu0 %v2682
    %6173 = vmatprep.subr.bf16.mxu0 %v2691
    %6174 = vmatpush1.bf16.msra.mxu0 %v2690
    %6175 = vmatprep.subr.bf16.mxu0 %v2699
    %6176 = vmatpush1.bf16.msra.mxu0 %v2698
    %6177 = vmatprep.subr.bf16.mxu0 %v2707
    %6178 = vmatpush1.bf16.msra.mxu0 %v2706
    %6179 = vmatprep.subr.bf16.mxu0 %v2715
    %6180 = vmatpush1.bf16.msra.mxu0 %v2714
    %6181 = vmatprep.subr.bf16.mxu0 %v2723
    %6182 = vmatpush1.bf16.msra.mxu0 %v2722
    %6183 = vmatprep.subr.bf16.mxu0 %v2731
    %6184 = vmatpush1.bf16.msra.mxu0 %v2730
    %6185 = vmatprep.subr.bf16.mxu0 %v2739
    %6186 = vmatpush1.bf16.msra.mxu0 %v2738
    %6187 = vmatprep.subr.bf16.mxu0 %v2747
    %6188 = vmatpush1.bf16.msra.mxu0 %v2746
    %6189 = vmatprep.subr.bf16.mxu0 %v2755
    %6190 = vmatpush1.bf16.msra.mxu0 %v2754
    %6191 = vmatprep.subr.bf16.mxu0 %v2763
    %6192 = vmatpush1.bf16.msra.mxu0 %v2762
    %6193 = vmatprep.subr.bf16.mxu0 %v2771
    %6194 = vmatpush1.bf16.msra.mxu0 %v2770
    %6195 = vmatprep.subr.bf16.mxu0 %v2779
    %6196 = vmatpush1.bf16.msra.mxu0 %v2778
    %6197 = vmatprep.subr.bf16.mxu0 %v2787
    %6198 = vmatpush1.bf16.msra.mxu0 %v2786
    %6199 = vmatprep.mubr.bf16.mxu0 %v6043
    %6200 = vmatmul.mubr.bf16.gmra.mrb[0].mxu0 %v6042
    %v6201 = vpop.f32.mrb[0].mxu0
    %v6202 = vadd.f32 0.0, %v6201
    %v6203 = vpop.f32.mrb[0].mxu0
    %v6204 = vadd.f32 0.0, %v6203
    %v6205 = vpop.f32.mrb[0].mxu0
    %v6206 = vpop.f32.mrb[0].mxu0
    %6207 = vdwg.mxu0
    %v6208 = vld [vmem:[#allocation2 + $0x60] sm:$0xc0]
    %v6209 = vld [vmem:[#allocation2 + $0x68] sm:$0xc0]
    %v6210 = vld [vmem:[#allocation2 + $0x70] sm:$0xc0]
    %v6211 = vld [vmem:[#allocation2 + $0x78] sm:$0xc0]
    %v6216 = vrot.slane %v6208, 6
    %v6217 = vrot.slane %v6209, 6
    %v6218 = vrot.slane %v6210, 6
    %v6219 = vrot.slane %v6211, 6
    %v6224 = vadd.f32 %v6079, %v6216
    %v6225 = vadd.f32 %v6081, %v6217
    %v6226 = vadd.f32 %v6120, %v6218
    %v6227 = vadd.f32 %v6122, %v6219
    %v6228 = vmul.f32 %v6224, 0.5
    %v6229 = vmul.f32 %v6225, 0.5
    %v6230 = vmul.f32 %v6226, 0.5
    %v6231 = vtanh.pop %v6228
    %v6232 = vtanh.pop %v6229
    %v6233 = vtanh.pop %v6230
    %v6234 = vmul.f32 %v6231, 0.5
    %v6235 = vmul.f32 %v6232, 0.5
    %v6236 = vmul.f32 %v6233, 0.5
    %v6237 = vadd.f32 %v6234, 0.5
    %v6238 = vadd.f32 %v6235, 0.5
    %v6239 = vadd.f32 %v6236, 0.5
    %v6240 = vtanh.pop %v6227
    %v6241 = vmul.f32 %v6238, %v6017
    %v6242 = vmul.f32 %v6237, %v6240
    %v6243 = vadd.f32 %v6241, %v6242
    %v6244 = vtanh.pop %v6243
    %v6245 = vmul.f32 %v6239, %v6244
    %v6246 = vadd.f32 %v6161, %v2107
    %v6247 = vadd.f32 %v6163, %v2111
    %v6248 = vadd.f32 %v6202, %v2115
    %v6249 = vadd.f32 %v6204, %v2119
    %v6250 = vmul.f32 %v6246, 0.5
    %v6251 = vmul.f32 %v6247, 0.5
    %v6252 = vmul.f32 %v6248, 0.5
    %v6253 = vtanh.pop %v6250
    %v6254 = vtanh.pop %v6251
    %v6255 = vtanh.pop %v6252
    %v6256 = vmul.f32 %v6253, 0.5
    %v6257 = vmul.f32 %v6254, 0.5
    %v6258 = vmul.f32 %v6255, 0.5
    %v6259 = vadd.f32 %v6256, 0.5
    %v6260 = vadd.f32 %v6257, 0.5
    %v6261 = vadd.f32 %v6258, 0.5
    %v6262 = vtanh.pop %v6249
    %v6263 = vmul.f32 %v6260, %v6039
    %v6264 = vmul.f32 %v6259, %v6262
    %v6265 = vadd.f32 %v6263, %v6264
    %v6266 = vtanh.pop %v6265
    %v6267 = vmul.f32 %v6261, %v6266
    %v6268 = vpack.c.bf16 %v6245, %v6245
    %v6269 = vpack.c.bf16 %v6267, %v6267
    %6270 = vmatprep.subr.bf16.mxu0 %v2665
    %6271 = vmatpush1.bf16.msra.mxu0 %v2664
    %6272 = vmatprep.subr.bf16.mxu0 %v2673
    %6273 = vmatpush1.bf16.msra.mxu0 %v2672
    %6274 = vmatprep.subr.bf16.mxu0 %v2681
    %6275 = vmatpush1.bf16.msra.mxu0 %v2680
    %6276 = vmatprep.subr.bf16.mxu0 %v2689
    %6277 = vmatpush1.bf16.msra.mxu0 %v2688
    %6278 = vmatprep.subr.bf16.mxu0 %v2697
    %6279 = vmatpush1.bf16.msra.mxu0 %v2696
    %6280 = vmatprep.subr.bf16.mxu0 %v2705
    %6281 = vmatpush1.bf16.msra.mxu0 %v2704
    %6282 = vmatprep.subr.bf16.mxu0 %v2713
    %6283 = vmatpush1.bf16.msra.mxu0 %v2712
    %6284 = vmatprep.subr.bf16.mxu0 %v2721
    %6285 = vmatpush1.bf16.msra.mxu0 %v2720
    %6286 = vmatprep.subr.bf16.mxu0 %v2729
    %6287 = vmatpush1.bf16.msra.mxu0 %v2728
    %6288 = vmatprep.subr.bf16.mxu0 %v2737
    %6289 = vmatpush1.bf16.msra.mxu0 %v2736
    %6290 = vmatprep.subr.bf16.mxu0 %v2745
    %6291 = vmatpush1.bf16.msra.mxu0 %v2744
    %6292 = vmatprep.subr.bf16.mxu0 %v2753
    %6293 = vmatpush1.bf16.msra.mxu0 %v2752
    %6294 = vmatprep.subr.bf16.mxu0 %v2761
    %6295 = vmatpush1.bf16.msra.mxu0 %v2760
    %6296 = vmatprep.subr.bf16.mxu0 %v2769
    %6297 = vmatpush1.bf16.msra.mxu0 %v2768
    %6298 = vmatprep.subr.bf16.mxu0 %v2777
    %6299 = vmatpush1.bf16.msra.mxu0 %v2776
    %6300 = vmatprep.subr.bf16.mxu0 %v2785
    %6301 = vmatpush1.bf16.msra.mxu0 %v2784
    %6302 = vmatprep.mubr.bf16.mxu0 %v6269
    %6303 = vmatmul.mubr.bf16.gmra.mrb[0].mxu0 %v6268
    %v6304 = vpop.f32.mrb[0].mxu0
    %v6305 = vadd.f32 %v2107, %v6304
    %v6306 = vpop.f32.mrb[0].mxu0
    %v6307 = vadd.f32 %v2111, %v6306
    %v6308 = vpop.f32.mrb[0].mxu0
    %v6309 = vpop.f32.mrb[0].mxu0
    %6310 = vdwg.mxu0
    %6311 = vmatprep.subr.bf16.mxu0 %v2667
    %6312 = vmatpush1.bf16.msra.mxu0 %v2666
    %6313 = vmatprep.subr.bf16.mxu0 %v2675
    %6314 = vmatpush1.bf16.msra.mxu0 %v2674
    %6315 = vmatprep.subr.bf16.mxu0 %v2683
    %6316 = vmatpush1.bf16.msra.mxu0 %v2682
    %6317 = vmatprep.subr.bf16.mxu0 %v2691
    %6318 = vmatpush1.bf16.msra.mxu0 %v2690
    %6319 = vmatprep.subr.bf16.mxu0 %v2699
    %6320 = vmatpush1.bf16.msra.mxu0 %v2698
    %6321 = vmatprep.subr.bf16.mxu0 %v2707
    %6322 = vmatpush1.bf16.msra.mxu0 %v2706
    %6323 = vmatprep.subr.bf16.mxu0 %v2715
    %6324 = vmatpush1.bf16.msra.mxu0 %v2714
    %6325 = vmatprep.subr.bf16.mxu0 %v2723
    %6326 = vmatpush1.bf16.msra.mxu0 %v2722
    %6327 = vmatprep.subr.bf16.mxu0 %v2731
    %6328 = vmatpush1.bf16.msra.mxu0 %v2730
    %6329 = vmatprep.subr.bf16.mxu0 %v2739
    %6330 = vmatpush1.bf16.msra.mxu0 %v2738
    %6331 = vmatprep.subr.bf16.mxu0 %v2747
    %6332 = vmatpush1.bf16.msra.mxu0 %v2746
    %6333 = vmatprep.subr.bf16.mxu0 %v2755
    %6334 = vmatpush1.bf16.msra.mxu0 %v2754
    %6335 = vmatprep.subr.bf16.mxu0 %v2763
    %6336 = vmatpush1.bf16.msra.mxu0 %v2762
    %6337 = vmatprep.subr.bf16.mxu0 %v2771
    %6338 = vmatpush1.bf16.msra.mxu0 %v2770
    %6339 = vmatprep.subr.bf16.mxu0 %v2779
    %6340 = vmatpush1.bf16.msra.mxu0 %v2778
    %6341 = vmatprep.subr.bf16.mxu0 %v2787
    %6342 = vmatpush1.bf16.msra.mxu0 %v2786
    %6343 = vmatprep.mubr.bf16.mxu0 %v6269
    %6344 = vmatmul.mubr.bf16.gmra.mrb[0].mxu0 %v6268
    %v6345 = vpop.f32.mrb[0].mxu0
    %v6346 = vadd.f32 %v2115, %v6345
    %v6347 = vpop.f32.mrb[0].mxu0
    %v6348 = vadd.f32 %v2119, %v6347
    %v6349 = vpop.f32.mrb[0].mxu0
    %v6350 = vpop.f32.mrb[0].mxu0
    %6351 = vdwg.mxu0
    %v6352 = vmul.f32 %v6305, 0.5
    %v6353 = vmul.f32 %v6307, 0.5
    %v6354 = vmul.f32 %v6346, 0.5
    %v6355 = vtanh.pop %v6352
    %v6356 = vtanh.pop %v6353
    %v6357 = vtanh.pop %v6354
    %v6358 = vmul.f32 %v6355, 0.5
    %v6359 = vmul.f32 %v6356, 0.5
    %v6360 = vmul.f32 %v6357, 0.5
    %v6361 = vadd.f32 %v6358, 0.5
    %v6362 = vadd.f32 %v6359, 0.5
    %v6363 = vadd.f32 %v6360, 0.5
    %v6364 = vtanh.pop %v6348
    %v6365 = vmul.f32 %v6362, %v6265
    %v6366 = vmul.f32 %v6361, %v6364
    %v6367 = vadd.f32 %v6365, %v6366
    %v6368 = vtanh.pop %v6367
    %v6369 = vmul.f32 %v6363, %v6368
    %v6370 = vpack.c.bf16 %v6369, %v6369
    %v6371 = vld [vmem:[%s13] sm:$0xf]
    %v6372 = vld [vmem:[%s13 + $0x4] sm:$0xf]
    %v6373 = vld [vmem:[%s13 + $0x8] sm:$0xf]
    %v6374 = vld [vmem:[%s13 + $0xc] sm:$0xf]
    %v6375 = vld [vmem:[%s13 + $0x10] sm:$0xf]
    %v6376 = vld [vmem:[%s13 + $0x14] sm:$0xf]
    %v6377 = vld [vmem:[%s13 + $0x18] sm:$0xf]
    %v6378 = vld [vmem:[%s13 + $0x1c] sm:$0xf]
    %v6379 = vld [vmem:[%s13 + $0x20] sm:$0xf]
    %v6380 = vld [vmem:[%s13 + $0x24] sm:$0xf]
    %v6381 = vld [vmem:[%s13 + $0x28] sm:$0xf]
    %v6382 = vld [vmem:[%s13 + $0x2c] sm:$0xf]
    %v6383 = vld [vmem:[%s13 + $0x30] sm:$0xf]
    %v6384 = vld [vmem:[%s13 + $0x34] sm:$0xf]
    %v6385 = vld [vmem:[%s13 + $0x38] sm:$0xf]
    %v6386 = vld [vmem:[%s13 + $0x3c] sm:$0xf]
    %v6387 = vld [vmem:[%s14] sm:$0x1]
    %v6389 = vlaneseq
    %v6390 = vshrl.u32 %v6389, 7
    %v6391 = vsub.s32 0, %v6390
    %v6392 = vrot.slane %v6387, %v6391
    %v6410 = vunpack.c.l.b16 %v6371
    %v6411 = vunpack.c.l.b16 %v6372
    %v6412 = vunpack.c.l.b16 %v6373
    %v6413 = vunpack.c.l.b16 %v6374
    %v6414 = vunpack.c.l.b16 %v6375
    %v6415 = vunpack.c.l.b16 %v6376
    %v6416 = vunpack.c.l.b16 %v6377
    %v6417 = vunpack.c.l.b16 %v6378
    %v6418 = vunpack.c.l.b16 %v6379
    %v6419 = vunpack.c.l.b16 %v6380
    %v6420 = vunpack.c.l.b16 %v6381
    %v6421 = vunpack.c.l.b16 %v6382
    %v6422 = vunpack.c.l.b16 %v6383
    %v6423 = vunpack.c.l.b16 %v6384
    %v6424 = vunpack.c.l.b16 %v6385
    %v6425 = vunpack.c.l.b16 %v6386
    %v6426 = vpack.c.b16 %v6411, %v6410
    %v6427 = vpack.c.b16 %v6413, %v6412
    %v6428 = vpack.c.b16 %v6415, %v6414
    %v6429 = vpack.c.b16 %v6417, %v6416
    %v6430 = vpack.c.b16 %v6419, %v6418
    %v6431 = vpack.c.b16 %v6421, %v6420
    %v6432 = vpack.c.b16 %v6423, %v6422
    %v6433 = vpack.c.b16 %v6425, %v6424
    %6442 = vmatprep.subr.bf16.mxu0 0
    %6443 = vmatpush1.bf16.msra.mxu0 %v6426
    %6444 = vmatprep.subr.bf16.mxu0 0
    %6445 = vmatpush1.bf16.msra.mxu0 %v6427
    %6446 = vmatprep.subr.bf16.mxu0 0
    %6447 = vmatpush1.bf16.msra.mxu0 %v6428
    %6448 = vmatprep.subr.bf16.mxu0 0
    %6449 = vmatpush1.bf16.msra.mxu0 %v6429
    %6450 = vmatprep.subr.bf16.mxu0 0
    %6451 = vmatpush1.bf16.msra.mxu0 %v6430
    %6452 = vmatprep.subr.bf16.mxu0 0
    %6453 = vmatpush1.bf16.msra.mxu0 %v6431
    %6454 = vmatprep.subr.bf16.mxu0 0
    %6455 = vmatpush1.bf16.msra.mxu0 %v6432
    %6456 = vmatprep.subr.bf16.mxu0 0
    %6457 = vmatpush1.bf16.msra.mxu0 %v6433
    %6458 = vmatprep.subr.bf16.mxu0 0
    %6459 = vmatpush1.bf16.msra.mxu0 0
    %6460 = vmatprep.subr.bf16.mxu0 0
    %6461 = vmatpush1.bf16.msra.mxu0 0
    %6462 = vmatprep.subr.bf16.mxu0 0
    %6463 = vmatpush1.bf16.msra.mxu0 0
    %6464 = vmatprep.subr.bf16.mxu0 0
    %6465 = vmatpush1.bf16.msra.mxu0 0
    %6466 = vmatprep.subr.bf16.mxu0 0
    %6467 = vmatpush1.bf16.msra.mxu0 0
    %6468 = vmatprep.subr.bf16.mxu0 0
    %6469 = vmatpush1.bf16.msra.mxu0 0
    %6470 = vmatprep.subr.bf16.mxu0 0
    %6471 = vmatpush1.bf16.msra.mxu0 0
    %6472 = vmatprep.subr.bf16.mxu0 0
    %6473 = vmatpush1.bf16.msra.mxu0 0
    %6474 = vmatprep.mubr.bf16.mxu0 0
    %6475 = vmatmul.mubr.bf16.gmra.mrb[0].mxu0 %v6370
    %v6476 = vpop.f32.mrb[0].mxu0
    %v6477 = vadd.f32 %v6392, %v6476
    %v6478 = vpop.f32.mrb[0].mxu0
    %v6479 = vpop.f32.mrb[0].mxu0
    %v6480 = vpop.f32.mrb[0].mxu0
    %6481 = vdwg.mxu0
    %6482 = vst [vmem:[#allocation12] sm:$0x3] %v6477
    // Predicated region
    $region82: #{tpu_custom_call.1} parent=1 // pred_check
      _
    $region83: #{tpu_custom_call.1} parent=1 // pred_check_branch
      %6484 = sbr.rel (0) target = $region85
    $region84: #{tpu_custom_call.1} parent=1 // pred_region
      %s6486 = ssub.s32 32, 32
      %6487 = vsyncadd [#allocation5], %s6486
      %s6489 = sshll.u32 [#allocation12], 4
      %s6490 = int_to_ptr.vmem [resolvable:$true] %s6489
      %6492 = dma.vmem_to_hbm [thread:$0]  %s6490, 32, %s15, [#allocation5]
    $region85: #{tpu_custom_call.1} parent=1 // pred_fallthru
      _
    // Predicated region
    $region86: #{tpu_custom_call.1} parent=1 // pred_check
      _
    $region87: #{tpu_custom_call.1} parent=1 // pred_check_branch
      %6494 = sbr.rel (0) target = $region89
    $region88: #{tpu_custom_call.1} parent=1 // pred_region
      %6495 = dma.done [#allocation5], 32
    $region89: #{tpu_custom_call.1} parent=1 // pred_fallthru
      _
    %6496 = vsyncpa [#allocation4], 1
    %6497 = vsyncpa [#allocation7], 1
    %6498 = vsyncpa [#allocation10], 1
    %6499 = vsyncpa [#allocation5], 1

</llo_original>
